<compile_context>
chip_gen: v6e
topology: v6e:2x2x1
jax: 0.10.0
libtpu: 0.0.40
codegen_flags: <defaults>
</compile_context>

<pallas_src>
import numpy as np

import jax
import jax.numpy as jnp
from jax.experimental import pallas as pl
from jax.experimental.pallas import tpu as pltpu


# ---------------------------------------------------------------------------
# helpers
# ---------------------------------------------------------------------------

def _choose_tile(total, target, multiple=1):
    """Largest tile <= target that divides `total` and is a multiple of
    `multiple`; falls back to a single full-size block."""
    if total <= target:
        return total
    for t in range(target, 0, -1):
        if total % t == 0 and t % multiple == 0:
            return t
    return total


def _apply_embedding_mlp(s, eid, param_refs, num_element, num_layers, out_cols):
    """Per-element MLP on (rows, 1) scalar inputs, gathered by element id.

    s:   (rows, 1) f32 scalar inputs (padded slots zeroed)
    eid: (rows, 1) i32 element ids (padded slots = -1, never match)
    param_refs: flat [w^0_0, b^0_0, ..., w^{E-1}_{L-1}, b^{E-1}_{L-1}] VMEM refs,
                weights stored (in, out), biases (1, out).
    returns (rows, out_cols) f32.
    """
    g = jnp.zeros((s.shape[0], out_cols), jnp.float32)
    for e in range(num_element):
        base = 2 * num_layers * e
        # First Linear has fan_in == 1: outer product on the VPU instead of a
        # degenerate K=1 MXU matmul.
        w0 = param_refs[base][...]                 # (1, n0)
        b0 = param_refs[base + 1][...]             # (1, n0)
        h = s * w0 + b0                            # (rows, n0)
        if num_layers > 1:
            h = jnp.maximum(h, 0.0)
        for l in range(1, num_layers):
            w = param_refs[base + 2 * l][...]
            b = param_refs[base + 2 * l + 1][...]
            h = jnp.dot(h, w, preferred_element_type=jnp.float32) + b
            if l != num_layers - 1:
                h = jnp.maximum(h, 0.0)
        # Select this element's MLP output for atoms whose element id == e.
        g = g + jnp.where(eid == e, h, 0.0)
    return g


# ---------------------------------------------------------------------------
# Fused kernel: embedding MLP + descriptor D_i, one pass over HBM
# ---------------------------------------------------------------------------

def _make_fused_kernel(num_element, num_layers, bt, pp, m1, m2):
    """refs = (s_ref, e_ref, r_ref, w^0_0, b^0_0, ..., out_ref)."""

    def kernel(*refs):
        s_ref, e_ref, r_ref = refs[0], refs[1], refs[2]
        o_ref = refs[-1]
        param_refs = refs[3:-1]

        s = s_ref[...]                              # (bt*pp, 1) f32
        eid = e_ref[...]                            # (bt*pp, 1) i32
        r = r_ref[...]                              # (bt, pp, 4) f32 (padded rows zero)

        # All bt*pp atom rows of this batch tile share one big-M MXU matmul chain.
        g = _apply_embedding_mlp(s, eid, param_refs, num_element, num_layers, m1)
        g3 = g.reshape(bt, pp, m1)                  # tile-aligned: pp % 8 == 0

        # A = G1^T R per sample (contract over atoms); padded atoms have R == 0,
        # so they drop out of the descriptor exactly.
        a = jnp.einsum('bpm,bpk->bmk', g3, r,
                       preferred_element_type=jnp.float32)        # (bt, m1, 4)
        c = a[:, :m2, :]                                          # G2^T R  (bt, m2, 4)
        # D = (G1^T R)(G2^T R)^T.  Store D^T so the store lane axis is M1 = 128
        # (lane-dense) and the MXU N dim is 128; wrapper transposes back.
        d_t = jnp.einsum('bnk,bmk->bnm', c, a,
                         preferred_element_type=jnp.float32)      # (bt, m2, m1)
        o_ref[...] = d_t.astype(o_ref.dtype)

    return kernel


def _fused_forward(s_flat, e_flat, r, flat_params, num_element, num_layers,
                   m1, m2, *, rows_per_step_target=256):
    """Returns D transposed, shape (B, m2, m1)."""
    B, pp, _ = r.shape
    bt = _choose_tile(B, max(1, rows_per_step_target // pp))
    grid = (B // bt,)

    kernel = _make_fused_kernel(num_element, num_layers, bt, pp, m1, m2)

    in_specs = [
        pl.BlockSpec((bt * pp, 1), lambda i: (i, 0)),     # s values (flattened atoms)
        pl.BlockSpec((bt * pp, 1), lambda i: (i, 0)),     # element ids
        pl.BlockSpec((bt, pp, 4), lambda i: (i, 0, 0)),   # R~
    ] + [
        # Constant block index -> Pallas skips re-DMA of the weights each step.
        pl.BlockSpec(p.shape, lambda i: (0, 0)) for p in flat_params
    ]

    return pl.pallas_call(
        kernel,
        out_shape=jax.ShapeDtypeStruct((B, m2, m1), jnp.float32),
        grid_spec=pltpu.PrefetchScalarGridSpec(
            num_scalar_prefetch=0,
            grid=grid,
            in_specs=in_specs,
            out_specs=pl.BlockSpec((bt, m2, m1), lambda i: (i, 0, 0)),
        ),
        compiler_params=pltpu.CompilerParams(
            dimension_semantics=("parallel",)),
    )(s_flat, e_flat, r, *flat_params)


# ---------------------------------------------------------------------------
# Fallback path (previously validated two-kernel structure)
# ---------------------------------------------------------------------------

def _make_embedding_kernel(num_element, num_layers):
    def kernel(*refs):
        s_ref, e_ref, o_ref = refs[0], refs[1], refs[-1]
        param_refs = refs[2:-1]
        g = _apply_embedding_mlp(s_ref[...], e_ref[...], param_refs,
                                 num_element, num_layers, o_ref.shape[-1])
        o_ref[...] = g.astype(o_ref.dtype)
    return kernel


def _embedding_mlp(s_flat, e_flat, flat_params, num_element, num_layers, m1,
                   *, row_tile_target=512):
    rows = s_flat.shape[0]
    tile = _choose_tile(rows, row_tile_target, multiple=8)
    in_specs = [pl.BlockSpec((tile, 1), lambda i: (i, 0)),
                pl.BlockSpec((tile, 1), lambda i: (i, 0))] + \
               [pl.BlockSpec(p.shape, lambda i: (0, 0)) for p in flat_params]
    return pl.pallas_call(
        _make_embedding_kernel(num_element, num_layers),
        out_shape=jax.ShapeDtypeStruct((rows, m1), jnp.float32),
        grid_spec=pltpu.PrefetchScalarGridSpec(
            num_scalar_prefetch=0, grid=(rows // tile,),
            in_specs=in_specs,
            out_specs=pl.BlockSpec((tile, m1), lambda i: (i, 0))),
        compiler_params=pltpu.CompilerParams(
            dimension_semantics=("parallel",)),
    )(s_flat, e_flat, *flat_params)


def _make_descriptor_kernel(m2):
    def kernel(g_t_ref, r_ref, o_ref):
        g_t = g_t_ref[...]        # (bt, m1, pp)
        r = r_ref[...]            # (bt, pp, 4)
        a = jnp.einsum('bmp,bpk->bmk', g_t, r,
                       preferred_element_type=jnp.float32)        # (bt, m1, 4)
        c = a[:, :m2, :]                                          # (bt, m2, 4)
        d_t = jnp.einsum('bnk,bmk->bnm', c, a,
                         preferred_element_type=jnp.float32)      # (bt, m2, m1)
        o_ref[...] = d_t.astype(o_ref.dtype)
    return kernel


def _descriptor(g_t, r, m2, *, batch_tile_target=16):
    B, m1, pp = g_t.shape
    bt = _choose_tile(B, batch_tile_target)
    return pl.pallas_call(
        _make_descriptor_kernel(m2),
        out_shape=jax.ShapeDtypeStruct((B, m2, m1), jnp.float32),
        grid_spec=pltpu.PrefetchScalarGridSpec(
            num_scalar_prefetch=0, grid=(B // bt,),
            in_specs=[pl.BlockSpec((bt, m1, pp), lambda i: (i, 0, 0)),
                      pl.BlockSpec((bt, pp, 4), lambda i: (i, 0, 0))],
            out_specs=pl.BlockSpec((bt, m2, m1), lambda i: (i, 0, 0))),
        compiler_params=pltpu.CompilerParams(
            dimension_semantics=("parallel",)),
    )(g_t, r)


# ---------------------------------------------------------------------------
# Full forward pass
# ---------------------------------------------------------------------------

def batch_embedding_forward(x, params, M_1, M_2):
    """Pallas forward pass of BatchEmbedding.

    x:      (B, 6*P + 1) float32, laid out exactly as the PyTorch module expects
    params: list (len num_element) of (weights, biases) for the per-element MLP
            1 -> n_h[0] -> ... -> n_h[-1] -> M_1; weights (in, out), biases (1, out)
    returns (B, M_1 * M_2) float32
    """
    B, L = x.shape
    P = (L - 1) // 6
    Pp = max(8, ((P + 7) // 8) * 8)     # pad atom axis to a sublane multiple

    s_vals = x[:, 0:2 * P:2]                              # (B, P)
    elem = x[:, 1:2 * P:2]                                # (B, P) element ids as floats
    r = x[:, 2 * P:6 * P].reshape(B, P, 4)                # (B, P, 4)
    n_i = x[:, -1].astype(jnp.int32)                      # (B,)

    # Zero-mask padded atom slots (j >= N_i).  Every contraction in D_i goes
    # through R_i, so zeroed R rows drop those atoms exactly.
    valid = jnp.arange(P, dtype=jnp.int32)[None, :] < n_i[:, None]    # (B, P)
    s_vals = jnp.where(valid, s_vals, 0.0)
    elem_ids = jnp.where(valid, elem, -1.0).astype(jnp.int32)         # -1 never matches
    r = jnp.where(valid[:, :, None], r, 0.0)

    if Pp != P:
        s_vals = jnp.pad(s_vals, ((0, 0), (0, Pp - P)))
        elem_ids = jnp.pad(elem_ids, ((0, 0), (0, Pp - P)), constant_values=-1)
        r = jnp.pad(r, ((0, 0), (0, Pp - P), (0, 0)))

    s_flat = s_vals.reshape(B * Pp, 1).astype(jnp.float32)
    e_flat = elem_ids.reshape(B * Pp, 1)
    r = r.astype(jnp.float32)

    num_element = len(params)
    num_layers = len(params[0][0])
    flat_params = []
    for ws, bs in params:
        for w, b in zip(ws, bs):
            flat_params.extend([w, b])

    try:
        d_t = _fused_forward(s_flat, e_flat, r, flat_params,
                             num_element, num_layers, M_1, M_2)
        d_t = jax.block_until_ready(d_t)       # surface lowering/runtime errors here
    except Exception:
        # Fallback: previously validated two-kernel path (embedding -> XLA
        # transpose -> descriptor), used only if this jax/Mosaic version rejects
        # the fused kernel's in-kernel reshape / transposed batched matmul.
        g = _embedding_mlp(s_flat, e_flat, flat_params,
                           num_element, num_layers, M_1)              # (B*Pp, M_1)
        g_t = g.reshape(B, Pp, M_1).transpose(0, 2, 1)                # (B, M_1, Pp)
        d_t = _descriptor(g_t, r, M_2)                                # (B, M_2, M_1)

    # Match torch's D_i.view(-1): row-major flatten of (M_1, M_2).
    return jnp.transpose(d_t, (0, 2, 1)).reshape(B, M_1 * M_2)


# ---------------------------------------------------------------------------
# Init + reference
# ---------------------------------------------------------------------------

def init_embedding_params(key, n_o, n_h, num_element):
    """nn.Linear-style init (U(-1/sqrt(fan_in), 1/sqrt(fan_in))) for every
    per-element MLP; weights stored transposed as (in, out) for x @ W."""
    n_list = [1, *n_h, n_o]
    params = []
    for _ in range(num_element):
        ws, bs = [], []
        for i in range(len(n_list) - 1):
            fan_in, fan_out = n_list[i], n_list[i + 1]
            key, wk, bk = jax.random.split(key, 3)
            bound = 1.0 / (fan_in ** 0.5)
            ws.append(jax.random.uniform(wk, (fan_in, fan_out), jnp.float32,
                                         -bound, bound))
            bs.append(jax.random.uniform(bk, (1, fan_out), jnp.float32,
                                         -bound, bound))
        params.append((ws, bs))
    return params


def batch_embedding_reference(x_np, params_np, M_1, M_2):
    """NumPy re-implementation of the PyTorch BatchEmbedding.forward."""
    B, L = x_np.shape
    P = (L - 1) // 6
    out = np.zeros((B, M_1 * M_2), dtype=np.float64)
    for i in range(B):
        sample = x_np[i].astype(np.float64)
        n_i = int(round(sample[-1]))
        s_i = sample[:2 * n_i].reshape(n_i, 2)
        r_i = sample[2 * P:2 * P + 4 * n_i].reshape(n_i, 4)
        g1 = np.zeros((n_i, M_1), dtype=np.float64)
        for j in range(n_i):
            e = int(round(s_i[j, 1]))
            h = s_i[j, 0:1][None, :]                  # (1, 1)
            ws, bs = params_np[e]
            for l, (w, b) in enumerate(zip(ws, bs)):
                h = h @ w + b
                if l != len(ws) - 1:
                    h = np.maximum(h, 0.0)
            g1[j] = h[0]
        g2 = g1[:, :M_2]
        d = g1.T @ r_i @ r_i.T @ g2
        out[i] = d.reshape(-1)
    return out


# ---------------------------------------------------------------------------
# demo / self-test
# ---------------------------------------------------------------------------

if __name__ == "__main__":
    key = jax.random.PRNGKey(0)

    # BatchEmbedding(M_1=128, M_2=16, embed_hidden_list=(32, 64), num_element=2)
    M_1, M_2 = 128, 16
    embed_hidden_list = (32, 64)
    num_element = 2
    P = 16                      # PBC_atom_num
    B = 32                      # batch of local environments
    L = 6 * P + 1

    key, kn, ks, ke, kr, kp = jax.random.split(key, 6)
    n_i = jax.random.randint(kn, (B,), 1, P + 1)                      # 1..P valid atoms
    s_vals = jax.random.normal(ks, (B, P), jnp.float32)
    elems = jax.random.randint(ke, (B, P), 0, num_element).astype(jnp.float32)
    r_vals = jax.random.normal(kr, (B, P, 4), jnp.float32)

    x = jnp.zeros((B, L), jnp.float32)
    x = x.at[:, 0:2 * P:2].set(s_vals)
    x = x.at[:, 1:2 * P:2].set(elems)
    x = x.at[:, 2 * P:6 * P].set(r_vals.reshape(B, 4 * P))
    x = x.at[:, -1].set(n_i.astype(jnp.float32))

    params = init_embedding_params(kp, M_1, embed_hidden_list, num_element)

    out = batch_embedding_forward(x, params, M_1, M_2)
    out = jax.block_until_ready(out)
    assert out.shape == (B, M_1 * M_2), out.shape

    x_np = np.asarray(x)
    params_np = [([np.asarray(w) for w in ws], [np.asarray(b) for b in bs])
                 for ws, bs in params]
    ref = batch_embedding_reference(x_np, params_np, M_1, M_2)
    np.testing.assert_allclose(np.asarray(out), ref, rtol=2e-3, atol=2e-3)

    print("KERNEL_OK")
</pallas_src>

<mosaic_0001>
module attributes {stable_mosaic.version = 11 : i64} {
  func.func @kernel(%arg0: i32, %arg1: memref<256x1xf32, #tpu.memory_space<vmem>>, %arg2: memref<256x1xi32, #tpu.memory_space<vmem>>, %arg3: memref<16x16x4xf32, #tpu.memory_space<vmem>>, %arg4: memref<1x32xf32, #tpu.memory_space<vmem>>, %arg5: memref<1x32xf32, #tpu.memory_space<vmem>>, %arg6: memref<32x64xf32, #tpu.memory_space<vmem>>, %arg7: memref<1x64xf32, #tpu.memory_space<vmem>>, %arg8: memref<64x128xf32, #tpu.memory_space<vmem>>, %arg9: memref<1x128xf32, #tpu.memory_space<vmem>>, %arg10: memref<1x32xf32, #tpu.memory_space<vmem>>, %arg11: memref<1x32xf32, #tpu.memory_space<vmem>>, %arg12: memref<32x64xf32, #tpu.memory_space<vmem>>, %arg13: memref<1x64xf32, #tpu.memory_space<vmem>>, %arg14: memref<64x128xf32, #tpu.memory_space<vmem>>, %arg15: memref<1x128xf32, #tpu.memory_space<vmem>>, %arg16: memref<16x16x128xf32, #tpu.memory_space<vmem>>) attributes {dimension_semantics = [#tpu.dimension_semantics<parallel>], iteration_bounds = array<i64: 2>, scalar_prefetch = 0 : i64, scratch_operands = 0 : i64, tpu.core_type = #tpu.core_type<tc>, window_params = [{transform_indices = @transform_0, window_bounds = array<i64: 256, 1>}, {transform_indices = @transform_1, window_bounds = array<i64: 256, 1>}, {transform_indices = @transform_2, window_bounds = array<i64: 16, 16, 4>}, {pipeline_mode = #tpu.pipeline_mode<synchronous>, transform_indices = @transform_3, window_bounds = array<i64: 1, 32>}, {pipeline_mode = #tpu.pipeline_mode<synchronous>, transform_indices = @transform_4, window_bounds = array<i64: 1, 32>}, {pipeline_mode = #tpu.pipeline_mode<synchronous>, transform_indices = @transform_5, window_bounds = array<i64: 32, 64>}, {pipeline_mode = #tpu.pipeline_mode<synchronous>, transform_indices = @transform_6, window_bounds = array<i64: 1, 64>}, {pipeline_mode = #tpu.pipeline_mode<synchronous>, transform_indices = @transform_7, window_bounds = array<i64: 64, 128>}, {pipeline_mode = #tpu.pipeline_mode<synchronous>, transform_indices = @transform_8, window_bounds = array<i64: 1, 128>}, {pipeline_mode = #tpu.pipeline_mode<synchronous>, transform_indices = @transform_9, window_bounds = array<i64: 1, 32>}, {pipeline_mode = #tpu.pipeline_mode<synchronous>, transform_indices = @transform_10, window_bounds = array<i64: 1, 32>}, {pipeline_mode = #tpu.pipeline_mode<synchronous>, transform_indices = @transform_11, window_bounds = array<i64: 32, 64>}, {pipeline_mode = #tpu.pipeline_mode<synchronous>, transform_indices = @transform_12, window_bounds = array<i64: 1, 64>}, {pipeline_mode = #tpu.pipeline_mode<synchronous>, transform_indices = @transform_13, window_bounds = array<i64: 64, 128>}, {pipeline_mode = #tpu.pipeline_mode<synchronous>, transform_indices = @transform_14, window_bounds = array<i64: 1, 128>}, {transform_indices = @transform_15, window_bounds = array<i64: 16, 16, 128>}]} {
    %c0 = arith.constant 0 : index
    %c0_0 = arith.constant 0 : index
    %0 = vector.load %arg1[%c0, %c0_0] : memref<256x1xf32, #tpu.memory_space<vmem>>, vector<256x1xf32>
    %c0_1 = arith.constant 0 : index
    %c0_2 = arith.constant 0 : index
    %1 = vector.load %arg2[%c0_1, %c0_2] : memref<256x1xi32, #tpu.memory_space<vmem>>, vector<256x1xi32>
    %c0_3 = arith.constant 0 : index
    %c0_4 = arith.constant 0 : index
    %c0_5 = arith.constant 0 : index
    %2 = vector.load %arg3[%c0_3, %c0_4, %c0_5] : memref<16x16x4xf32, #tpu.memory_space<vmem>>, vector<16x16x4xf32>
    %cst = arith.constant 0.000000e+00 : f32
    %3 = vector.broadcast %cst : f32 to vector<256x128xf32>
    %c0_6 = arith.constant 0 : index
    %c0_7 = arith.constant 0 : index
    %4 = vector.load %arg4[%c0_6, %c0_7] : memref<1x32xf32, #tpu.memory_space<vmem>>, vector<1x32xf32>
    %c0_8 = arith.constant 0 : index
    %c0_9 = arith.constant 0 : index
    %5 = vector.load %arg5[%c0_8, %c0_9] : memref<1x32xf32, #tpu.memory_space<vmem>>, vector<1x32xf32>
    %6 = vector.broadcast %0 : vector<256x1xf32> to vector<256x32xf32>
    %7 = vector.broadcast %4 : vector<1x32xf32> to vector<256x32xf32>
    %8 = arith.mulf %6, %7 : vector<256x32xf32>
    %9 = vector.broadcast %5 : vector<1x32xf32> to vector<256x32xf32>
    %10 = arith.addf %8, %9 : vector<256x32xf32>
    %cst_10 = arith.constant 0.000000e+00 : f32
    %11 = vector.broadcast %cst_10 : f32 to vector<256x32xf32>
    %12 = arith.maximumf %10, %11 : vector<256x32xf32>
    %c0_11 = arith.constant 0 : index
    %c0_12 = arith.constant 0 : index
    %13 = vector.load %arg6[%c0_11, %c0_12] : memref<32x64xf32, #tpu.memory_space<vmem>>, vector<32x64xf32>
    %c0_13 = arith.constant 0 : index
    %c0_14 = arith.constant 0 : index
    %14 = vector.load %arg7[%c0_13, %c0_14] : memref<1x64xf32, #tpu.memory_space<vmem>>, vector<1x64xf32>
    %cst_15 = arith.constant dense<0.000000e+00> : vector<256x64xf32>
    %15 = tpu.matmul %12, %13, %cst_15 {dimension_numbers = #tpu.dot_dimension_numbers<[1], [0], [0], [1], [0, 0, 1, 1], [], []>} : vector<256x32xf32>, vector<32x64xf32>, vector<256x64xf32> -> vector<256x64xf32>
    %16 = vector.broadcast %14 : vector<1x64xf32> to vector<256x64xf32>
    %17 = arith.addf %15, %16 : vector<256x64xf32>
    %cst_16 = arith.constant 0.000000e+00 : f32
    %18 = vector.broadcast %cst_16 : f32 to vector<256x64xf32>
    %19 = arith.maximumf %17, %18 : vector<256x64xf32>
    %c0_17 = arith.constant 0 : index
    %c0_18 = arith.constant 0 : index
    %20 = vector.load %arg8[%c0_17, %c0_18] : memref<64x128xf32, #tpu.memory_space<vmem>>, vector<64x128xf32>
    %c0_19 = arith.constant 0 : index
    %c0_20 = arith.constant 0 : index
    %21 = vector.load %arg9[%c0_19, %c0_20] : memref<1x128xf32, #tpu.memory_space<vmem>>, vector<1x128xf32>
    %cst_21 = arith.constant dense<0.000000e+00> : vector<256x128xf32>
    %22 = tpu.matmul %19, %20, %cst_21 {dimension_numbers = #tpu.dot_dimension_numbers<[1], [0], [0], [1], [0, 0, 1, 1], [], []>} : vector<256x64xf32>, vector<64x128xf32>, vector<256x128xf32> -> vector<256x128xf32>
    %23 = vector.broadcast %21 : vector<1x128xf32> to vector<256x128xf32>
    %24 = arith.addf %22, %23 : vector<256x128xf32>
    %c0_i32 = arith.constant 0 : i32
    %25 = vector.broadcast %c0_i32 : i32 to vector<256x1xi32>
    %26 = arith.cmpi eq, %1, %25 : vector<256x1xi32>
    %cst_22 = arith.constant 0.000000e+00 : f32
    %27 = vector.shape_cast %26 : vector<256x1xi1> to vector<256x1xi1>
    %28 = vector.broadcast %27 : vector<256x1xi1> to vector<256x128xi1>
    %29 = vector.broadcast %cst_22 : f32 to vector<256x128xf32>
    %30 = arith.select %28, %24, %29 : vector<256x128xi1>, vector<256x128xf32>
    %31 = arith.addf %3, %30 : vector<256x128xf32>
    %c0_23 = arith.constant 0 : index
    %c0_24 = arith.constant 0 : index
    %32 = vector.load %arg10[%c0_23, %c0_24] : memref<1x32xf32, #tpu.memory_space<vmem>>, vector<1x32xf32>
    %c0_25 = arith.constant 0 : index
    %c0_26 = arith.constant 0 : index
    %33 = vector.load %arg11[%c0_25, %c0_26] : memref<1x32xf32, #tpu.memory_space<vmem>>, vector<1x32xf32>
    %34 = vector.broadcast %0 : vector<256x1xf32> to vector<256x32xf32>
    %35 = vector.broadcast %32 : vector<1x32xf32> to vector<256x32xf32>
    %36 = arith.mulf %34, %35 : vector<256x32xf32>
    %37 = vector.broadcast %33 : vector<1x32xf32> to vector<256x32xf32>
    %38 = arith.addf %36, %37 : vector<256x32xf32>
    %cst_27 = arith.constant 0.000000e+00 : f32
    %39 = vector.broadcast %cst_27 : f32 to vector<256x32xf32>
    %40 = arith.maximumf %38, %39 : vector<256x32xf32>
    %c0_28 = arith.constant 0 : index
    %c0_29 = arith.constant 0 : index
    %41 = vector.load %arg12[%c0_28, %c0_29] : memref<32x64xf32, #tpu.memory_space<vmem>>, vector<32x64xf32>
    %c0_30 = arith.constant 0 : index
    %c0_31 = arith.constant 0 : index
    %42 = vector.load %arg13[%c0_30, %c0_31] : memref<1x64xf32, #tpu.memory_space<vmem>>, vector<1x64xf32>
    %cst_32 = arith.constant dense<0.000000e+00> : vector<256x64xf32>
    %43 = tpu.matmul %40, %41, %cst_32 {dimension_numbers = #tpu.dot_dimension_numbers<[1], [0], [0], [1], [0, 0, 1, 1], [], []>} : vector<256x32xf32>, vector<32x64xf32>, vector<256x64xf32> -> vector<256x64xf32>
    %44 = vector.broadcast %42 : vector<1x64xf32> to vector<256x64xf32>
    %45 = arith.addf %43, %44 : vector<256x64xf32>
    %cst_33 = arith.constant 0.000000e+00 : f32
    %46 = vector.broadcast %cst_33 : f32 to vector<256x64xf32>
    %47 = arith.maximumf %45, %46 : vector<256x64xf32>
    %c0_34 = arith.constant 0 : index
    %c0_35 = arith.constant 0 : index
    %48 = vector.load %arg14[%c0_34, %c0_35] : memref<64x128xf32, #tpu.memory_space<vmem>>, vector<64x128xf32>
    %c0_36 = arith.constant 0 : index
    %c0_37 = arith.constant 0 : index
    %49 = vector.load %arg15[%c0_36, %c0_37] : memref<1x128xf32, #tpu.memory_space<vmem>>, vector<1x128xf32>
    %cst_38 = arith.constant dense<0.000000e+00> : vector<256x128xf32>
    %50 = tpu.matmul %47, %48, %cst_38 {dimension_numbers = #tpu.dot_dimension_numbers<[1], [0], [0], [1], [0, 0, 1, 1], [], []>} : vector<256x64xf32>, vector<64x128xf32>, vector<256x128xf32> -> vector<256x128xf32>
    %51 = vector.broadcast %49 : vector<1x128xf32> to vector<256x128xf32>
    %52 = arith.addf %50, %51 : vector<256x128xf32>
    %c1_i32 = arith.constant 1 : i32
    %53 = vector.broadcast %c1_i32 : i32 to vector<256x1xi32>
    %54 = arith.cmpi eq, %1, %53 : vector<256x1xi32>
    %cst_39 = arith.constant 0.000000e+00 : f32
    %55 = vector.shape_cast %54 : vector<256x1xi1> to vector<256x1xi1>
    %56 = vector.broadcast %55 : vector<256x1xi1> to vector<256x128xi1>
    %57 = vector.broadcast %cst_39 : f32 to vector<256x128xf32>
    %58 = arith.select %56, %52, %57 : vector<256x128xi1>, vector<256x128xf32>
    %59 = arith.addf %31, %58 : vector<256x128xf32>
    %60 = vector.shape_cast %59 : vector<256x128xf32> to vector<16x16x128xf32>
    "tpu.trace_start"() <{level = 10 : i32, message = "bpm,bpk->bmk"}> : () -> ()
    %cst_40 = arith.constant dense<0.000000e+00> : vector<16x128x4xf32>
    %61 = tpu.matmul %60, %2, %cst_40 {dimension_numbers = #tpu.dot_dimension_numbers<[1], [1], [2], [2], [0, 0, 0, 2, 1, 2], [0], [0]>} : vector<16x16x128xf32>, vector<16x16x4xf32>, vector<16x128x4xf32> -> vector<16x128x4xf32>
    "tpu.trace_stop"() : () -> ()
    %62 = vector.extract_strided_slice %61 {offsets = [0, 0, 0], sizes = [16, 16, 4], strides = [1, 1, 1]} : vector<16x128x4xf32> to vector<16x16x4xf32>
    "tpu.trace_start"() <{level = 10 : i32, message = "bnk,bmk->bnm"}> : () -> ()
    %cst_41 = arith.constant dense<0.000000e+00> : vector<16x16x128xf32>
    %63 = tpu.matmul %62, %61, %cst_41 {dimension_numbers = #tpu.dot_dimension_numbers<[2], [2], [1], [1], [0, 0, 0, 1, 1, 1], [0], [0]>} : vector<16x16x4xf32>, vector<16x128x4xf32>, vector<16x16x128xf32> -> vector<16x16x128xf32>
    "tpu.trace_stop"() : () -> ()
    %c0_42 = arith.constant 0 : index
    %c0_43 = arith.constant 0 : index
    %c0_44 = arith.constant 0 : index
    %64 = vector.load %arg16[%c0_42, %c0_43, %c0_44] : memref<16x16x128xf32, #tpu.memory_space<vmem>>, vector<16x16x128xf32>
    tpu.vector_store %arg16[%c0_42, %c0_43, %c0_44], %63 {strides = array<i32>} : memref<16x16x128xf32, #tpu.memory_space<vmem>>, vector<16x16x128xf32>,
    return
  }
  func.func @transform_0(%arg0: i32) -> (i32, i32) {
    %c0_i32 = arith.constant 0 : i32
    %c0_i32_0 = arith.constant 0 : i32
    return %arg0, %c0_i32 : i32, i32
  }
  func.func @transform_1(%arg0: i32) -> (i32, i32) {
    %c0_i32 = arith.constant 0 : i32
    %c0_i32_0 = arith.constant 0 : i32
    return %arg0, %c0_i32 : i32, i32
  }
  func.func @transform_2(%arg0: i32) -> (i32, i32, i32) {
    %c0_i32 = arith.constant 0 : i32
    %c0_i32_0 = arith.constant 0 : i32
    %c0_i32_1 = arith.constant 0 : i32
    return %arg0, %c0_i32, %c0_i32_0 : i32, i32, i32
  }
  func.func @transform_3(%arg0: i32) -> (i32, i32) {
    %c0_i32 = arith.constant 0 : i32
    %c0_i32_0 = arith.constant 0 : i32
    %c0_i32_1 = arith.constant 0 : i32
    return %c0_i32, %c0_i32_0 : i32, i32
  }
  func.func @transform_4(%arg0: i32) -> (i32, i32) {
    %c0_i32 = arith.constant 0 : i32
    %c0_i32_0 = arith.constant 0 : i32
    %c0_i32_1 = arith.constant 0 : i32
    return %c0_i32, %c0_i32_0 : i32, i32
  }
  func.func @transform_5(%arg0: i32) -> (i32, i32) {
    %c0_i32 = arith.constant 0 : i32
    %c0_i32_0 = arith.constant 0 : i32
    %c0_i32_1 = arith.constant 0 : i32
    return %c0_i32, %c0_i32_0 : i32, i32
  }
  func.func @transform_6(%arg0: i32) -> (i32, i32) {
    %c0_i32 = arith.constant 0 : i32
    %c0_i32_0 = arith.constant 0 : i32
    %c0_i32_1 = arith.constant 0 : i32
    return %c0_i32, %c0_i32_0 : i32, i32
  }
  func.func @transform_7(%arg0: i32) -> (i32, i32) {
    %c0_i32 = arith.constant 0 : i32
    %c0_i32_0 = arith.constant 0 : i32
    %c0_i32_1 = arith.constant 0 : i32
    return %c0_i32, %c0_i32_0 : i32, i32
  }
  func.func @transform_8(%arg0: i32) -> (i32, i32) {
    %c0_i32 = arith.constant 0 : i32
    %c0_i32_0 = arith.constant 0 : i32
    %c0_i32_1 = arith.constant 0 : i32
    return %c0_i32, %c0_i32_0 : i32, i32
  }
  func.func @transform_9(%arg0: i32) -> (i32, i32) {
    %c0_i32 = arith.constant 0 : i32
    %c0_i32_0 = arith.constant 0 : i32
    %c0_i32_1 = arith.constant 0 : i32
    return %c0_i32, %c0_i32_0 : i32, i32
  }
  func.func @transform_10(%arg0: i32) -> (i32, i32) {
    %c0_i32 = arith.constant 0 : i32
    %c0_i32_0 = arith.constant 0 : i32
    %c0_i32_1 = arith.constant 0 : i32
    return %c0_i32, %c0_i32_0 : i32, i32
  }
  func.func @transform_11(%arg0: i32) -> (i32, i32) {
    %c0_i32 = arith.constant 0 : i32
    %c0_i32_0 = arith.constant 0 : i32
    %c0_i32_1 = arith.constant 0 : i32
    return %c0_i32, %c0_i32_0 : i32, i32
  }
  func.func @transform_12(%arg0: i32) -> (i32, i32) {
    %c0_i32 = arith.constant 0 : i32
    %c0_i32_0 = arith.constant 0 : i32
    %c0_i32_1 = arith.constant 0 : i32
    return %c0_i32, %c0_i32_0 : i32, i32
  }
  func.func @transform_13(%arg0: i32) -> (i32, i32) {
    %c0_i32 = arith.constant 0 : i32
    %c0_i32_0 = arith.constant 0 : i32
    %c0_i32_1 = arith.constant 0 : i32
    return %c0_i32, %c0_i32_0 : i32, i32
  }
  func.func @transform_14(%arg0: i32) -> (i32, i32) {
    %c0_i32 = arith.constant 0 : i32
    %c0_i32_0 = arith.constant 0 : i32
    %c0_i32_1 = arith.constant 0 : i32
    return %c0_i32, %c0_i32_0 : i32, i32
  }
  func.func @transform_15(%arg0: i32) -> (i32, i32, i32) {
    %c0_i32 = arith.constant 0 : i32
    %c0_i32_0 = arith.constant 0 : i32
    %c0_i32_1 = arith.constant 0 : i32
    return %arg0, %c0_i32, %c0_i32_0 : i32, i32, i32
  }
}

module attributes {stable_mosaic.version = 11 : i64} {
  func.func @kernel(%arg0: i32, %arg1: memref<512x1xf32, #tpu.memory_space<vmem>>, %arg2: memref<512x1xi32, #tpu.memory_space<vmem>>, %arg3: memref<1x32xf32, #tpu.memory_space<vmem>>, %arg4: memref<1x32xf32, #tpu.memory_space<vmem>>, %arg5: memref<32x64xf32, #tpu.memory_space<vmem>>, %arg6: memref<1x64xf32, #tpu.memory_space<vmem>>, %arg7: memref<64x128xf32, #tpu.memory_space<vmem>>, %arg8: memref<1x128xf32, #tpu.memory_space<vmem>>, %arg9: memref<1x32xf32, #tpu.memory_space<vmem>>, %arg10: memref<1x32xf32, #tpu.memory_space<vmem>>, %arg11: memref<32x64xf32, #tpu.memory_space<vmem>>, %arg12: memref<1x64xf32, #tpu.memory_space<vmem>>, %arg13: memref<64x128xf32, #tpu.memory_space<vmem>>, %arg14: memref<1x128xf32, #tpu.memory_space<vmem>>, %arg15: memref<512x128xf32, #tpu.memory_space<vmem>>) attributes {dimension_semantics = [#tpu.dimension_semantics<parallel>], iteration_bounds = array<i64: 1>, scalar_prefetch = 0 : i64, scratch_operands = 0 : i64, tpu.core_type = #tpu.core_type<tc>, window_params = [{transform_indices = @transform_0, window_bounds = array<i64: 512, 1>}, {transform_indices = @transform_1, window_bounds = array<i64: 512, 1>}, {pipeline_mode = #tpu.pipeline_mode<synchronous>, transform_indices = @transform_2, window_bounds = array<i64: 1, 32>}, {pipeline_mode = #tpu.pipeline_mode<synchronous>, transform_indices = @transform_3, window_bounds = array<i64: 1, 32>}, {pipeline_mode = #tpu.pipeline_mode<synchronous>, transform_indices = @transform_4, window_bounds = array<i64: 32, 64>}, {pipeline_mode = #tpu.pipeline_mode<synchronous>, transform_indices = @transform_5, window_bounds = array<i64: 1, 64>}, {pipeline_mode = #tpu.pipeline_mode<synchronous>, transform_indices = @transform_6, window_bounds = array<i64: 64, 128>}, {pipeline_mode = #tpu.pipeline_mode<synchronous>, transform_indices = @transform_7, window_bounds = array<i64: 1, 128>}, {pipeline_mode = #tpu.pipeline_mode<synchronous>, transform_indices = @transform_8, window_bounds = array<i64: 1, 32>}, {pipeline_mode = #tpu.pipeline_mode<synchronous>, transform_indices = @transform_9, window_bounds = array<i64: 1, 32>}, {pipeline_mode = #tpu.pipeline_mode<synchronous>, transform_indices = @transform_10, window_bounds = array<i64: 32, 64>}, {pipeline_mode = #tpu.pipeline_mode<synchronous>, transform_indices = @transform_11, window_bounds = array<i64: 1, 64>}, {pipeline_mode = #tpu.pipeline_mode<synchronous>, transform_indices = @transform_12, window_bounds = array<i64: 64, 128>}, {pipeline_mode = #tpu.pipeline_mode<synchronous>, transform_indices = @transform_13, window_bounds = array<i64: 1, 128>}, {transform_indices = @transform_14, window_bounds = array<i64: 512, 128>}]} {
    %c0 = arith.constant 0 : index
    %c0_0 = arith.constant 0 : index
    %0 = vector.load %arg1[%c0, %c0_0] : memref<512x1xf32, #tpu.memory_space<vmem>>, vector<512x1xf32>
    %c0_1 = arith.constant 0 : index
    %c0_2 = arith.constant 0 : index
    %1 = vector.load %arg2[%c0_1, %c0_2] : memref<512x1xi32, #tpu.memory_space<vmem>>, vector<512x1xi32>
    %cst = arith.constant 0.000000e+00 : f32
    %2 = vector.broadcast %cst : f32 to vector<512x128xf32>
    %c0_3 = arith.constant 0 : index
    %c0_4 = arith.constant 0 : index
    %3 = vector.load %arg3[%c0_3, %c0_4] : memref<1x32xf32, #tpu.memory_space<vmem>>, vector<1x32xf32>
    %c0_5 = arith.constant 0 : index
    %c0_6 = arith.constant 0 : index
    %4 = vector.load %arg4[%c0_5, %c0_6] : memref<1x32xf32, #tpu.memory_space<vmem>>, vector<1x32xf32>
    %5 = vector.broadcast %0 : vector<512x1xf32> to vector<512x32xf32>
    %6 = vector.broadcast %3 : vector<1x32xf32> to vector<512x32xf32>
    %7 = arith.mulf %5, %6 : vector<512x32xf32>
    %8 = vector.broadcast %4 : vector<1x32xf32> to vector<512x32xf32>
    %9 = arith.addf %7, %8 : vector<512x32xf32>
    %cst_7 = arith.constant 0.000000e+00 : f32
    %10 = vector.broadcast %cst_7 : f32 to vector<512x32xf32>
    %11 = arith.maximumf %9, %10 : vector<512x32xf32>
    %c0_8 = arith.constant 0 : index
    %c0_9 = arith.constant 0 : index
    %12 = vector.load %arg5[%c0_8, %c0_9] : memref<32x64xf32, #tpu.memory_space<vmem>>, vector<32x64xf32>
    %c0_10 = arith.constant 0 : index
    %c0_11 = arith.constant 0 : index
    %13 = vector.load %arg6[%c0_10, %c0_11] : memref<1x64xf32, #tpu.memory_space<vmem>>, vector<1x64xf32>
    %cst_12 = arith.constant dense<0.000000e+00> : vector<512x64xf32>
    %14 = tpu.matmul %11, %12, %cst_12 {dimension_numbers = #tpu.dot_dimension_numbers<[1], [0], [0], [1], [0, 0, 1, 1], [], []>} : vector<512x32xf32>, vector<32x64xf32>, vector<512x64xf32> -> vector<512x64xf32>
    %15 = vector.broadcast %13 : vector<1x64xf32> to vector<512x64xf32>
    %16 = arith.addf %14, %15 : vector<512x64xf32>
    %cst_13 = arith.constant 0.000000e+00 : f32
    %17 = vector.broadcast %cst_13 : f32 to vector<512x64xf32>
    %18 = arith.maximumf %16, %17 : vector<512x64xf32>
    %c0_14 = arith.constant 0 : index
    %c0_15 = arith.constant 0 : index
    %19 = vector.load %arg7[%c0_14, %c0_15] : memref<64x128xf32, #tpu.memory_space<vmem>>, vector<64x128xf32>
    %c0_16 = arith.constant 0 : index
    %c0_17 = arith.constant 0 : index
    %20 = vector.load %arg8[%c0_16, %c0_17] : memref<1x128xf32, #tpu.memory_space<vmem>>, vector<1x128xf32>
    %cst_18 = arith.constant dense<0.000000e+00> : vector<512x128xf32>
    %21 = tpu.matmul %18, %19, %cst_18 {dimension_numbers = #tpu.dot_dimension_numbers<[1], [0], [0], [1], [0, 0, 1, 1], [], []>} : vector<512x64xf32>, vector<64x128xf32>, vector<512x128xf32> -> vector<512x128xf32>
    %22 = vector.broadcast %20 : vector<1x128xf32> to vector<512x128xf32>
    %23 = arith.addf %21, %22 : vector<512x128xf32>
    %c0_i32 = arith.constant 0 : i32
    %24 = vector.broadcast %c0_i32 : i32 to vector<512x1xi32>
    %25 = arith.cmpi eq, %1, %24 : vector<512x1xi32>
    %cst_19 = arith.constant 0.000000e+00 : f32
    %26 = vector.shape_cast %25 : vector<512x1xi1> to vector<512x1xi1>
    %27 = vector.broadcast %26 : vector<512x1xi1> to vector<512x128xi1>
    %28 = vector.broadcast %cst_19 : f32 to vector<512x128xf32>
    %29 = arith.select %27, %23, %28 : vector<512x128xi1>, vector<512x128xf32>
    %30 = arith.addf %2, %29 : vector<512x128xf32>
    %c0_20 = arith.constant 0 : index
    %c0_21 = arith.constant 0 : index
    %31 = vector.load %arg9[%c0_20, %c0_21] : memref<1x32xf32, #tpu.memory_space<vmem>>, vector<1x32xf32>
    %c0_22 = arith.constant 0 : index
    %c0_23 = arith.constant 0 : index
    %32 = vector.load %arg10[%c0_22, %c0_23] : memref<1x32xf32, #tpu.memory_space<vmem>>, vector<1x32xf32>
    %33 = vector.broadcast %0 : vector<512x1xf32> to vector<512x32xf32>
    %34 = vector.broadcast %31 : vector<1x32xf32> to vector<512x32xf32>
    %35 = arith.mulf %33, %34 : vector<512x32xf32>
    %36 = vector.broadcast %32 : vector<1x32xf32> to vector<512x32xf32>
    %37 = arith.addf %35, %36 : vector<512x32xf32>
    %cst_24 = arith.constant 0.000000e+00 : f32
    %38 = vector.broadcast %cst_24 : f32 to vector<512x32xf32>
    %39 = arith.maximumf %37, %38 : vector<512x32xf32>
    %c0_25 = arith.constant 0 : index
    %c0_26 = arith.constant 0 : index
    %40 = vector.load %arg11[%c0_25, %c0_26] : memref<32x64xf32, #tpu.memory_space<vmem>>, vector<32x64xf32>
    %c0_27 = arith.constant 0 : index
    %c0_28 = arith.constant 0 : index
    %41 = vector.load %arg12[%c0_27, %c0_28] : memref<1x64xf32, #tpu.memory_space<vmem>>, vector<1x64xf32>
    %cst_29 = arith.constant dense<0.000000e+00> : vector<512x64xf32>
    %42 = tpu.matmul %39, %40, %cst_29 {dimension_numbers = #tpu.dot_dimension_numbers<[1], [0], [0], [1], [0, 0, 1, 1], [], []>} : vector<512x32xf32>, vector<32x64xf32>, vector<512x64xf32> -> vector<512x64xf32>
    %43 = vector.broadcast %41 : vector<1x64xf32> to vector<512x64xf32>
    %44 = arith.addf %42, %43 : vector<512x64xf32>
    %cst_30 = arith.constant 0.000000e+00 : f32
    %45 = vector.broadcast %cst_30 : f32 to vector<512x64xf32>
    %46 = arith.maximumf %44, %45 : vector<512x64xf32>
    %c0_31 = arith.constant 0 : index
    %c0_32 = arith.constant 0 : index
    %47 = vector.load %arg13[%c0_31, %c0_32] : memref<64x128xf32, #tpu.memory_space<vmem>>, vector<64x128xf32>
    %c0_33 = arith.constant 0 : index
    %c0_34 = arith.constant 0 : index
    %48 = vector.load %arg14[%c0_33, %c0_34] : memref<1x128xf32, #tpu.memory_space<vmem>>, vector<1x128xf32>
    %cst_35 = arith.constant dense<0.000000e+00> : vector<512x128xf32>
    %49 = tpu.matmul %46, %47, %cst_35 {dimension_numbers = #tpu.dot_dimension_numbers<[1], [0], [0], [1], [0, 0, 1, 1], [], []>} : vector<512x64xf32>, vector<64x128xf32>, vector<512x128xf32> -> vector<512x128xf32>
    %50 = vector.broadcast %48 : vector<1x128xf32> to vector<512x128xf32>
    %51 = arith.addf %49, %50 : vector<512x128xf32>
    %c1_i32 = arith.constant 1 : i32
    %52 = vector.broadcast %c1_i32 : i32 to vector<512x1xi32>
    %53 = arith.cmpi eq, %1, %52 : vector<512x1xi32>
    %cst_36 = arith.constant 0.000000e+00 : f32
    %54 = vector.shape_cast %53 : vector<512x1xi1> to vector<512x1xi1>
    %55 = vector.broadcast %54 : vector<512x1xi1> to vector<512x128xi1>
    %56 = vector.broadcast %cst_36 : f32 to vector<512x128xf32>
    %57 = arith.select %55, %51, %56 : vector<512x128xi1>, vector<512x128xf32>
    %58 = arith.addf %30, %57 : vector<512x128xf32>
    %c0_37 = arith.constant 0 : index
    %c0_38 = arith.constant 0 : index
    %59 = vector.load %arg15[%c0_37, %c0_38] : memref<512x128xf32, #tpu.memory_space<vmem>>, vector<512x128xf32>
    tpu.vector_store %arg15[%c0_37, %c0_38], %58 {strides = array<i32>} : memref<512x128xf32, #tpu.memory_space<vmem>>, vector<512x128xf32>,
    return
  }
  func.func @transform_0(%arg0: i32) -> (i32, i32) {
    %c0_i32 = arith.constant 0 : i32
    %c0_i32_0 = arith.constant 0 : i32
    return %arg0, %c0_i32 : i32, i32
  }
  func.func @transform_1(%arg0: i32) -> (i32, i32) {
    %c0_i32 = arith.constant 0 : i32
    %c0_i32_0 = arith.constant 0 : i32
    return %arg0, %c0_i32 : i32, i32
  }
  func.func @transform_2(%arg0: i32) -> (i32, i32) {
    %c0_i32 = arith.constant 0 : i32
    %c0_i32_0 = arith.constant 0 : i32
    %c0_i32_1 = arith.constant 0 : i32
    return %c0_i32, %c0_i32_0 : i32, i32
  }
  func.func @transform_3(%arg0: i32) -> (i32, i32) {
    %c0_i32 = arith.constant 0 : i32
    %c0_i32_0 = arith.constant 0 : i32
    %c0_i32_1 = arith.constant 0 : i32
    return %c0_i32, %c0_i32_0 : i32, i32
  }
  func.func @transform_4(%arg0: i32) -> (i32, i32) {
    %c0_i32 = arith.constant 0 : i32
    %c0_i32_0 = arith.constant 0 : i32
    %c0_i32_1 = arith.constant 0 : i32
    return %c0_i32, %c0_i32_0 : i32, i32
  }
  func.func @transform_5(%arg0: i32) -> (i32, i32) {
    %c0_i32 = arith.constant 0 : i32
    %c0_i32_0 = arith.constant 0 : i32
    %c0_i32_1 = arith.constant 0 : i32
    return %c0_i32, %c0_i32_0 : i32, i32
  }
  func.func @transform_6(%arg0: i32) -> (i32, i32) {
    %c0_i32 = arith.constant 0 : i32
    %c0_i32_0 = arith.constant 0 : i32
    %c0_i32_1 = arith.constant 0 : i32
    return %c0_i32, %c0_i32_0 : i32, i32
  }
  func.func @transform_7(%arg0: i32) -> (i32, i32) {
    %c0_i32 = arith.constant 0 : i32
    %c0_i32_0 = arith.constant 0 : i32
    %c0_i32_1 = arith.constant 0 : i32
    return %c0_i32, %c0_i32_0 : i32, i32
  }
  func.func @transform_8(%arg0: i32) -> (i32, i32) {
    %c0_i32 = arith.constant 0 : i32
    %c0_i32_0 = arith.constant 0 : i32
    %c0_i32_1 = arith.constant 0 : i32
    return %c0_i32, %c0_i32_0 : i32, i32
  }
  func.func @transform_9(%arg0: i32) -> (i32, i32) {
    %c0_i32 = arith.constant 0 : i32
    %c0_i32_0 = arith.constant 0 : i32
    %c0_i32_1 = arith.constant 0 : i32
    return %c0_i32, %c0_i32_0 : i32, i32
  }
  func.func @transform_10(%arg0: i32) -> (i32, i32) {
    %c0_i32 = arith.constant 0 : i32
    %c0_i32_0 = arith.constant 0 : i32
    %c0_i32_1 = arith.constant 0 : i32
    return %c0_i32, %c0_i32_0 : i32, i32
  }
  func.func @transform_11(%arg0: i32) -> (i32, i32) {
    %c0_i32 = arith.constant 0 : i32
    %c0_i32_0 = arith.constant 0 : i32
    %c0_i32_1 = arith.constant 0 : i32
    return %c0_i32, %c0_i32_0 : i32, i32
  }
  func.func @transform_12(%arg0: i32) -> (i32, i32) {
    %c0_i32 = arith.constant 0 : i32
    %c0_i32_0 = arith.constant 0 : i32
    %c0_i32_1 = arith.constant 0 : i32
    return %c0_i32, %c0_i32_0 : i32, i32
  }
  func.func @transform_13(%arg0: i32) -> (i32, i32) {
    %c0_i32 = arith.constant 0 : i32
    %c0_i32_0 = arith.constant 0 : i32
    %c0_i32_1 = arith.constant 0 : i32
    return %c0_i32, %c0_i32_0 : i32, i32
  }
  func.func @transform_14(%arg0: i32) -> (i32, i32) {
    %c0_i32 = arith.constant 0 : i32
    %c0_i32_0 = arith.constant 0 : i32
    return %arg0, %c0_i32 : i32, i32
  }
}

</mosaic_0001>

<llo_original>
// kernel: tpu_custom_call.1
$region0: #{tpu_custom_call.1}
  #allocation0 [shape = 'u32[]', space=smem, size = 0x4, offset = 0x4, fixed_abs, tag = 'smem constant byte address 0x4 - core index']
  #allocation1 [shape = 'u32[144,128]{1,0:T(1,128)}', space=vmem, size = 0x12000, scoped, tag = 'internal scratch']
  %s0 = inlined_call_operand.vmem [shape: f32[512,1], index: 0, kind: input, shape index: {}]
  %s1 = inlined_call_operand.vmem [shape: s32[512,1], index: 1, kind: input, shape index: {}]
  %s2 = inlined_call_operand.vmem [shape: f32[32,16,4], index: 2, kind: input, shape index: {}]
  %s3 = inlined_call_operand.vmem [shape: f32[1,32], index: 3, kind: input, shape index: {}]
  %s4 = inlined_call_operand.vmem [shape: f32[1,32], index: 4, kind: input, shape index: {}]
  %s5 = inlined_call_operand.vmem [shape: f32[32,64], index: 5, kind: input, shape index: {}]
  %s6 = inlined_call_operand.vmem [shape: f32[1,64], index: 6, kind: input, shape index: {}]
  %s7 = inlined_call_operand.vmem [shape: f32[64,128], index: 7, kind: input, shape index: {}]
  %s8 = inlined_call_operand.vmem [shape: f32[1,128], index: 8, kind: input, shape index: {}]
  %s9 = inlined_call_operand.vmem [shape: f32[1,32], index: 9, kind: input, shape index: {}]
  %s10 = inlined_call_operand.vmem [shape: f32[1,32], index: 10, kind: input, shape index: {}]
  %s11 = inlined_call_operand.vmem [shape: f32[32,64], index: 11, kind: input, shape index: {}]
  %s12 = inlined_call_operand.vmem [shape: f32[1,64], index: 12, kind: input, shape index: {}]
  %s13 = inlined_call_operand.vmem [shape: f32[64,128], index: 13, kind: input, shape index: {}]
  %s14 = inlined_call_operand.vmem [shape: f32[1,128], index: 14, kind: input, shape index: {}]
  %s15 = inlined_call_operand.hbm [shape: f32[32,16,128], index: 15, kind: output, shape index: {}]
  %s16 = sld [smem:[#allocation0]]
  $region93: #{tpu_custom_call.1} parent=0
    _
  %s18 = ssub.s32 1, %s16
  %s19 = scalar_select 0, %s18, %s16
  $region1: #{tpu_custom_call.1} parent=0
    #allocation2 [shape = 'u8[262144]{0}', space=vmem, size = 0x40000, scoped, tag = 'output window, operand 0']
    #allocation3 [shape = 's32[2]{0}', space=sflag, size = 0x8, scoped, tag = 'scoped memory for tpu_custom_call.1']
    %20 = vsyncpa [#allocation3], 0
    %s21 = scalar_lea.sflag [#allocation3], 1
    %22 = vsyncpa %s21, 0
    loop: start=0, step=1, limit=4
    $region2: #{tpu_custom_call.1} parent=1 // loop_pre_header
      _
    $region3: #{tpu_custom_call.1} parent=1 // loop_header
      %s24 = sphi 0, %s28
      %p25 = scmp.ge.s32.totalorder %s24, 4
      %s34 = sphi 0, %s36
      %s37 = sphi 0, %s34
      %s38 = sphi 0, %s37
      %s54 = sphi 0, %s38
      %s60 = sphi 0, %s62
      %s63 = sphi 0, %s60
      %s64 = sphi 0, %s63
      %s80 = sphi 0, %s64
      %s86 = sphi 0, %s88
      %s89 = sphi 0, %s86
      %s90 = sphi 0, %s89
      %s106 = sphi 0, %s90
      %s110 = sphi 0, %s110
      %s112 = sphi 0, %s110
      %s113 = sphi 0, %s112
      %s127 = sphi 0, %s113
      %s131 = sphi 0, %s131
      %s133 = sphi 0, %s131
      %s134 = sphi 0, %s133
      %s148 = sphi 0, %s134
      %s152 = sphi 0, %s152
      %s154 = sphi 0, %s152
      %s155 = sphi 0, %s154
      %s169 = sphi 0, %s155
      %s173 = sphi 0, %s173
      %s175 = sphi 0, %s173
      %s176 = sphi 0, %s175
      %s190 = sphi 0, %s176
      %s194 = sphi 0, %s194
      %s196 = sphi 0, %s194
      %s197 = sphi 0, %s196
      %s211 = sphi 0, %s197
      %s215 = sphi 0, %s215
      %s217 = sphi 0, %s215
      %s218 = sphi 0, %s217
      %s232 = sphi 0, %s218
      %s236 = sphi 0, %s236
      %s238 = sphi 0, %s236
      %s239 = sphi 0, %s238
      %s253 = sphi 0, %s239
      %s257 = sphi 0, %s257
      %s259 = sphi 0, %s257
      %s260 = sphi 0, %s259
      %s274 = sphi 0, %s260
      %s278 = sphi 0, %s278
      %s280 = sphi 0, %s278
      %s281 = sphi 0, %s280
      %s295 = sphi 0, %s281
      %s299 = sphi 0, %s299
      %s301 = sphi 0, %s299
      %s302 = sphi 0, %s301
      %s316 = sphi 0, %s302
      %s320 = sphi 0, %s320
      %s322 = sphi 0, %s320
      %s323 = sphi 0, %s322
      %s337 = sphi 0, %s323
      %s341 = sphi 0, %s341
      %s343 = sphi 0, %s341
      %s344 = sphi 0, %s343
      %s358 = sphi 0, %s344
      %s364 = sphi 0, %s366
      %s367 = sphi 0, %s364
      %s368 = sphi 0, %s367
      %s384 = sphi 0, %s368
    $region4: #{tpu_custom_call.1} parent=1 // loop_header_branch
      %27 = sbr.rel (%p25) target = $region8
    $region5: #{tpu_custom_call.1} parent=1 // loop_body
      %s29 = ssub.s32 %s24, 1
      %s30 = ssub.s32 %s24, 2
      %s31 = sadd.s32 %s24, 1
      %s32 = ssub.s32 %s24, %s31
      %p33 = scmp.eq.s32.totalorder %s32, 0
      %s35 = sadd.s32 %s34, 1
      %s36 = scalar_select %p33, %s34, %s35
      %p39 = pneg %p33
      %p40 = scmp.eq.s32.totalorder %s24, 1
      %p41 = por %p39, %p40
      %p42 = scmp.ne.s32.totalorder %s34, %s37
      %p43 = scmp.eq.s32.totalorder %s24, 0
      %p44 = por %p42, %p43
      %p45 = scmp.ne.s32.totalorder %s34, %s37
      %p46 = scmp.eq.s32.totalorder %s29, 1
      %p47 = por %p45, %p46
      %p48 = scmp.ne.s32.totalorder %s37, %s38
      %p49 = scmp.eq.s32.totalorder %s29, 0
      %p50 = por %p48, %p49
      %p51 = scmp.ne.s32.totalorder %s37, %s38
      %p52 = scmp.eq.s32.totalorder %s30, 1
      %p53 = por %p51, %p52
      %p55 = scmp.ne.s32.totalorder %s38, %s54
      %p56 = scmp.eq.s32.totalorder %s30, 0
      %p57 = por %p55, %p56
      %s58 = ssub.s32 %s24, %s31
      %p59 = scmp.eq.s32.totalorder %s58, 0
      %s61 = sadd.s32 %s60, 1
      %s62 = scalar_select %p59, %s60, %s61
      %p65 = pneg %p59
      %p66 = scmp.eq.s32.totalorder %s24, 1
      %p67 = por %p65, %p66
      %p68 = scmp.ne.s32.totalorder %s60, %s63
      %p69 = scmp.eq.s32.totalorder %s24, 0
      %p70 = por %p68, %p69
      %p71 = scmp.ne.s32.totalorder %s60, %s63
      %p72 = scmp.eq.s32.totalorder %s29, 1
      %p73 = por %p71, %p72
      %p74 = scmp.ne.s32.totalorder %s63, %s64
      %p75 = scmp.eq.s32.totalorder %s29, 0
      %p76 = por %p74, %p75
      %p77 = scmp.ne.s32.totalorder %s63, %s64
      %p78 = scmp.eq.s32.totalorder %s30, 1
      %p79 = por %p77, %p78
      %p81 = scmp.ne.s32.totalorder %s64, %s80
      %p82 = scmp.eq.s32.totalorder %s30, 0
      %p83 = por %p81, %p82
      %s84 = ssub.s32 %s24, %s31
      %p85 = scmp.eq.s32.totalorder %s84, 0
      %s87 = sadd.s32 %s86, 1
      %s88 = scalar_select %p85, %s86, %s87
      %p91 = pneg %p85
      %p92 = scmp.eq.s32.totalorder %s24, 1
      %p93 = por %p91, %p92
      %p94 = scmp.ne.s32.totalorder %s86, %s89
      %p95 = scmp.eq.s32.totalorder %s24, 0
      %p96 = por %p94, %p95
      %p97 = scmp.ne.s32.totalorder %s86, %s89
      %p98 = scmp.eq.s32.totalorder %s29, 1
      %p99 = por %p97, %p98
      %p100 = scmp.ne.s32.totalorder %s89, %s90
      %p101 = scmp.eq.s32.totalorder %s29, 0
      %p102 = por %p100, %p101
      %p103 = scmp.ne.s32.totalorder %s89, %s90
      %p104 = scmp.eq.s32.totalorder %s30, 1
      %p105 = por %p103, %p104
      %p107 = scmp.ne.s32.totalorder %s90, %s106
      %p108 = scmp.eq.s32.totalorder %s30, 0
      %p109 = por %p107, %p108
      %s111 = sadd.s32 %s110, 1
      %p114 = scmp.eq.s32.totalorder %s24, 1
      %p115 = scmp.ne.s32.totalorder %s110, %s112
      %p116 = scmp.eq.s32.totalorder %s24, 0
      %p117 = por %p115, %p116
      %p118 = scmp.ne.s32.totalorder %s110, %s112
      %p119 = scmp.eq.s32.totalorder %s29, 1
      %p120 = por %p118, %p119
      %p121 = scmp.ne.s32.totalorder %s112, %s113
      %p122 = scmp.eq.s32.totalorder %s29, 0
      %p123 = por %p121, %p122
      %p124 = scmp.ne.s32.totalorder %s112, %s113
      %p125 = scmp.eq.s32.totalorder %s30, 1
      %p126 = por %p124, %p125
      %p128 = scmp.ne.s32.totalorder %s113, %s127
      %p129 = scmp.eq.s32.totalorder %s30, 0
      %p130 = por %p128, %p129
      %s132 = sadd.s32 %s131, 1
      %p135 = scmp.eq.s32.totalorder %s24, 1
      %p136 = scmp.ne.s32.totalorder %s131, %s133
      %p137 = scmp.eq.s32.totalorder %s24, 0
      %p138 = por %p136, %p137
      %p139 = scmp.ne.s32.totalorder %s131, %s133
      %p140 = scmp.eq.s32.totalorder %s29, 1
      %p141 = por %p139, %p140
      %p142 = scmp.ne.s32.totalorder %s133, %s134
      %p143 = scmp.eq.s32.totalorder %s29, 0
      %p144 = por %p142, %p143
      %p145 = scmp.ne.s32.totalorder %s133, %s134
      %p146 = scmp.eq.s32.totalorder %s30, 1
      %p147 = por %p145, %p146
      %p149 = scmp.ne.s32.totalorder %s134, %s148
      %p150 = scmp.eq.s32.totalorder %s30, 0
      %p151 = por %p149, %p150
      %s153 = sadd.s32 %s152, 1
      %p156 = scmp.eq.s32.totalorder %s24, 1
      %p157 = scmp.ne.s32.totalorder %s152, %s154
      %p158 = scmp.eq.s32.totalorder %s24, 0
      %p159 = por %p157, %p158
      %p160 = scmp.ne.s32.totalorder %s152, %s154
      %p161 = scmp.eq.s32.totalorder %s29, 1
      %p162 = por %p160, %p161
      %p163 = scmp.ne.s32.totalorder %s154, %s155
      %p164 = scmp.eq.s32.totalorder %s29, 0
      %p165 = por %p163, %p164
      %p166 = scmp.ne.s32.totalorder %s154, %s155
      %p167 = scmp.eq.s32.totalorder %s30, 1
      %p168 = por %p166, %p167
      %p170 = scmp.ne.s32.totalorder %s155, %s169
      %p171 = scmp.eq.s32.totalorder %s30, 0
      %p172 = por %p170, %p171
      %s174 = sadd.s32 %s173, 1
      %p177 = scmp.eq.s32.totalorder %s24, 1
      %p178 = scmp.ne.s32.totalorder %s173, %s175
      %p179 = scmp.eq.s32.totalorder %s24, 0
      %p180 = por %p178, %p179
      %p181 = scmp.ne.s32.totalorder %s173, %s175
      %p182 = scmp.eq.s32.totalorder %s29, 1
      %p183 = por %p181, %p182
      %p184 = scmp.ne.s32.totalorder %s175, %s176
      %p185 = scmp.eq.s32.totalorder %s29, 0
      %p186 = por %p184, %p185
      %p187 = scmp.ne.s32.totalorder %s175, %s176
      %p188 = scmp.eq.s32.totalorder %s30, 1
      %p189 = por %p187, %p188
      %p191 = scmp.ne.s32.totalorder %s176, %s190
      %p192 = scmp.eq.s32.totalorder %s30, 0
      %p193 = por %p191, %p192
      %s195 = sadd.s32 %s194, 1
      %p198 = scmp.eq.s32.totalorder %s24, 1
      %p199 = scmp.ne.s32.totalorder %s194, %s196
      %p200 = scmp.eq.s32.totalorder %s24, 0
      %p201 = por %p199, %p200
      %p202 = scmp.ne.s32.totalorder %s194, %s196
      %p203 = scmp.eq.s32.totalorder %s29, 1
      %p204 = por %p202, %p203
      %p205 = scmp.ne.s32.totalorder %s196, %s197
      %p206 = scmp.eq.s32.totalorder %s29, 0
      %p207 = por %p205, %p206
      %p208 = scmp.ne.s32.totalorder %s196, %s197
      %p209 = scmp.eq.s32.totalorder %s30, 1
      %p210 = por %p208, %p209
      %p212 = scmp.ne.s32.totalorder %s197, %s211
      %p213 = scmp.eq.s32.totalorder %s30, 0
      %p214 = por %p212, %p213
      %s216 = sadd.s32 %s215, 1
      %p219 = scmp.eq.s32.totalorder %s24, 1
      %p220 = scmp.ne.s32.totalorder %s215, %s217
      %p221 = scmp.eq.s32.totalorder %s24, 0
      %p222 = por %p220, %p221
      %p223 = scmp.ne.s32.totalorder %s215, %s217
      %p224 = scmp.eq.s32.totalorder %s29, 1
      %p225 = por %p223, %p224
      %p226 = scmp.ne.s32.totalorder %s217, %s218
      %p227 = scmp.eq.s32.totalorder %s29, 0
      %p228 = por %p226, %p227
      %p229 = scmp.ne.s32.totalorder %s217, %s218
      %p230 = scmp.eq.s32.totalorder %s30, 1
      %p231 = por %p229, %p230
      %p233 = scmp.ne.s32.totalorder %s218, %s232
      %p234 = scmp.eq.s32.totalorder %s30, 0
      %p235 = por %p233, %p234
      %s237 = sadd.s32 %s236, 1
      %p240 = scmp.eq.s32.totalorder %s24, 1
      %p241 = scmp.ne.s32.totalorder %s236, %s238
      %p242 = scmp.eq.s32.totalorder %s24, 0
      %p243 = por %p241, %p242
      %p244 = scmp.ne.s32.totalorder %s236, %s238
      %p245 = scmp.eq.s32.totalorder %s29, 1
      %p246 = por %p244, %p245
      %p247 = scmp.ne.s32.totalorder %s238, %s239
      %p248 = scmp.eq.s32.totalorder %s29, 0
      %p249 = por %p247, %p248
      %p250 = scmp.ne.s32.totalorder %s238, %s239
      %p251 = scmp.eq.s32.totalorder %s30, 1
      %p252 = por %p250, %p251
      %p254 = scmp.ne.s32.totalorder %s239, %s253
      %p255 = scmp.eq.s32.totalorder %s30, 0
      %p256 = por %p254, %p255
      %s258 = sadd.s32 %s257, 1
      %p261 = scmp.eq.s32.totalorder %s24, 1
      %p262 = scmp.ne.s32.totalorder %s257, %s259
      %p263 = scmp.eq.s32.totalorder %s24, 0
      %p264 = por %p262, %p263
      %p265 = scmp.ne.s32.totalorder %s257, %s259
      %p266 = scmp.eq.s32.totalorder %s29, 1
      %p267 = por %p265, %p266
      %p268 = scmp.ne.s32.totalorder %s259, %s260
      %p269 = scmp.eq.s32.totalorder %s29, 0
      %p270 = por %p268, %p269
      %p271 = scmp.ne.s32.totalorder %s259, %s260
      %p272 = scmp.eq.s32.totalorder %s30, 1
      %p273 = por %p271, %p272
      %p275 = scmp.ne.s32.totalorder %s260, %s274
      %p276 = scmp.eq.s32.totalorder %s30, 0
      %p277 = por %p275, %p276
      %s279 = sadd.s32 %s278, 1
      %p282 = scmp.eq.s32.totalorder %s24, 1
      %p283 = scmp.ne.s32.totalorder %s278, %s280
      %p284 = scmp.eq.s32.totalorder %s24, 0
      %p285 = por %p283, %p284
      %p286 = scmp.ne.s32.totalorder %s278, %s280
      %p287 = scmp.eq.s32.totalorder %s29, 1
      %p288 = por %p286, %p287
      %p289 = scmp.ne.s32.totalorder %s280, %s281
      %p290 = scmp.eq.s32.totalorder %s29, 0
      %p291 = por %p289, %p290
      %p292 = scmp.ne.s32.totalorder %s280, %s281
      %p293 = scmp.eq.s32.totalorder %s30, 1
      %p294 = por %p292, %p293
      %p296 = scmp.ne.s32.totalorder %s281, %s295
      %p297 = scmp.eq.s32.totalorder %s30, 0
      %p298 = por %p296, %p297
      %s300 = sadd.s32 %s299, 1
      %p303 = scmp.eq.s32.totalorder %s24, 1
      %p304 = scmp.ne.s32.totalorder %s299, %s301
      %p305 = scmp.eq.s32.totalorder %s24, 0
      %p306 = por %p304, %p305
      %p307 = scmp.ne.s32.totalorder %s299, %s301
      %p308 = scmp.eq.s32.totalorder %s29, 1
      %p309 = por %p307, %p308
      %p310 = scmp.ne.s32.totalorder %s301, %s302
      %p311 = scmp.eq.s32.totalorder %s29, 0
      %p312 = por %p310, %p311
      %p313 = scmp.ne.s32.totalorder %s301, %s302
      %p314 = scmp.eq.s32.totalorder %s30, 1
      %p315 = por %p313, %p314
      %p317 = scmp.ne.s32.totalorder %s302, %s316
      %p318 = scmp.eq.s32.totalorder %s30, 0
      %p319 = por %p317, %p318
      %s321 = sadd.s32 %s320, 1
      %p324 = scmp.eq.s32.totalorder %s24, 1
      %p325 = scmp.ne.s32.totalorder %s320, %s322
      %p326 = scmp.eq.s32.totalorder %s24, 0
      %p327 = por %p325, %p326
      %p328 = scmp.ne.s32.totalorder %s320, %s322
      %p329 = scmp.eq.s32.totalorder %s29, 1
      %p330 = por %p328, %p329
      %p331 = scmp.ne.s32.totalorder %s322, %s323
      %p332 = scmp.eq.s32.totalorder %s29, 0
      %p333 = por %p331, %p332
      %p334 = scmp.ne.s32.totalorder %s322, %s323
      %p335 = scmp.eq.s32.totalorder %s30, 1
      %p336 = por %p334, %p335
      %p338 = scmp.ne.s32.totalorder %s323, %s337
      %p339 = scmp.eq.s32.totalorder %s30, 0
      %p340 = por %p338, %p339
      %s342 = sadd.s32 %s341, 1
      %p345 = scmp.eq.s32.totalorder %s24, 1
      %p346 = scmp.ne.s32.totalorder %s341, %s343
      %p347 = scmp.eq.s32.totalorder %s24, 0
      %p348 = por %p346, %p347
      %p349 = scmp.ne.s32.totalorder %s341, %s343
      %p350 = scmp.eq.s32.totalorder %s29, 1
      %p351 = por %p349, %p350
      %p352 = scmp.ne.s32.totalorder %s343, %s344
      %p353 = scmp.eq.s32.totalorder %s29, 0
      %p354 = por %p352, %p353
      %p355 = scmp.ne.s32.totalorder %s343, %s344
      %p356 = scmp.eq.s32.totalorder %s30, 1
      %p357 = por %p355, %p356
      %p359 = scmp.ne.s32.totalorder %s344, %s358
      %p360 = scmp.eq.s32.totalorder %s30, 0
      %p361 = por %p359, %p360
      %s362 = ssub.s32 %s24, %s31
      %p363 = scmp.eq.s32.totalorder %s362, 0
      %s365 = sadd.s32 %s364, 1
      %s366 = scalar_select %p363, %s364, %s365
      %p369 = pneg %p363
      %p370 = scmp.eq.s32.totalorder %s24, 1
      %p371 = por %p369, %p370
      %p372 = scmp.ne.s32.totalorder %s364, %s367
      %p373 = scmp.eq.s32.totalorder %s24, 0
      %p374 = por %p372, %p373
      %p375 = scmp.ne.s32.totalorder %s364, %s367
      %p376 = scmp.eq.s32.totalorder %s29, 1
      %p377 = por %p375, %p376
      %p378 = scmp.ne.s32.totalorder %s367, %s368
      %p379 = scmp.eq.s32.totalorder %s29, 0
      %p380 = por %p378, %p379
      %p381 = scmp.ne.s32.totalorder %s367, %s368
      %p382 = scmp.eq.s32.totalorder %s30, 1
      %p383 = por %p381, %p382
      %p385 = scmp.ne.s32.totalorder %s368, %s384
      %p386 = scmp.eq.s32.totalorder %s30, 0
      %p387 = por %p385, %p386
      %p388 = scmp.le.s32.totalorder 1, %s24
      %p389 = scmp.lt.s32.totalorder %s24, 3
      %p390 = pnand %p388, %p389
      %p391 = pneg %p390
      // Predicated region
      $region9: #{tpu_custom_call.1} parent=5 // pred_check
        _
      $region10: #{tpu_custom_call.1} parent=5 // pred_check_branch
        %393 = sbr.rel (%p390) target = $region12
      $region11: #{tpu_custom_call.1} parent=5 // pred_region
        %s394 = ssub.s32 %s24, 1
        // Predicated region
        $region13: #{tpu_custom_call.1} parent=11 // pred_check
          %p395 = pneg %p123
        $region14: #{tpu_custom_call.1} parent=11 // pred_check_branch
          %397 = sbr.rel (%p395) target = $region16
        $region15: #{tpu_custom_call.1} parent=11 // pred_region
          _
        $region16: #{tpu_custom_call.1} parent=11 // pred_fallthru
          _
        // Predicated region
        $region17: #{tpu_custom_call.1} parent=11 // pred_check
          %p398 = pneg %p144
        $region18: #{tpu_custom_call.1} parent=11 // pred_check_branch
          %400 = sbr.rel (%p398) target = $region20
        $region19: #{tpu_custom_call.1} parent=11 // pred_region
          _
        $region20: #{tpu_custom_call.1} parent=11 // pred_fallthru
          _
        // Predicated region
        $region21: #{tpu_custom_call.1} parent=11 // pred_check
          %p401 = pneg %p165
        $region22: #{tpu_custom_call.1} parent=11 // pred_check_branch
          %403 = sbr.rel (%p401) target = $region24
        $region23: #{tpu_custom_call.1} parent=11 // pred_region
          _
        $region24: #{tpu_custom_call.1} parent=11 // pred_fallthru
          _
        // Predicated region
        $region25: #{tpu_custom_call.1} parent=11 // pred_check
          %p404 = pneg %p186
        $region26: #{tpu_custom_call.1} parent=11 // pred_check_branch
          %406 = sbr.rel (%p404) target = $region28
        $region27: #{tpu_custom_call.1} parent=11 // pred_region
          _
        $region28: #{tpu_custom_call.1} parent=11 // pred_fallthru
          _
        // Predicated region
        $region29: #{tpu_custom_call.1} parent=11 // pred_check
          %p407 = pneg %p207
        $region30: #{tpu_custom_call.1} parent=11 // pred_check_branch
          %409 = sbr.rel (%p407) target = $region32
        $region31: #{tpu_custom_call.1} parent=11 // pred_region
          _
        $region32: #{tpu_custom_call.1} parent=11 // pred_fallthru
          _
        // Predicated region
        $region33: #{tpu_custom_call.1} parent=11 // pred_check
          %p410 = pneg %p228
        $region34: #{tpu_custom_call.1} parent=11 // pred_check_branch
          %412 = sbr.rel (%p410) target = $region36
        $region35: #{tpu_custom_call.1} parent=11 // pred_region
          _
        $region36: #{tpu_custom_call.1} parent=11 // pred_fallthru
          _
        // Predicated region
        $region37: #{tpu_custom_call.1} parent=11 // pred_check
          %p413 = pneg %p249
        $region38: #{tpu_custom_call.1} parent=11 // pred_check_branch
          %415 = sbr.rel (%p413) target = $region40
        $region39: #{tpu_custom_call.1} parent=11 // pred_region
          _
        $region40: #{tpu_custom_call.1} parent=11 // pred_fallthru
          _
        // Predicated region
        $region41: #{tpu_custom_call.1} parent=11 // pred_check
          %p416 = pneg %p270
        $region42: #{tpu_custom_call.1} parent=11 // pred_check_branch
          %418 = sbr.rel (%p416) target = $region44
        $region43: #{tpu_custom_call.1} parent=11 // pred_region
          _
        $region44: #{tpu_custom_call.1} parent=11 // pred_fallthru
          _
        // Predicated region
        $region45: #{tpu_custom_call.1} parent=11 // pred_check
          %p419 = pneg %p291
        $region46: #{tpu_custom_call.1} parent=11 // pred_check_branch
          %421 = sbr.rel (%p419) target = $region48
        $region47: #{tpu_custom_call.1} parent=11 // pred_region
          _
        $region48: #{tpu_custom_call.1} parent=11 // pred_fallthru
          _
        // Predicated region
        $region49: #{tpu_custom_call.1} parent=11 // pred_check
          %p422 = pneg %p312
        $region50: #{tpu_custom_call.1} parent=11 // pred_check_branch
          %424 = sbr.rel (%p422) target = $region52
        $region51: #{tpu_custom_call.1} parent=11 // pred_region
          _
        $region52: #{tpu_custom_call.1} parent=11 // pred_fallthru
          _
        // Predicated region
        $region53: #{tpu_custom_call.1} parent=11 // pred_check
          %p425 = pneg %p333
        $region54: #{tpu_custom_call.1} parent=11 // pred_check_branch
          %427 = sbr.rel (%p425) target = $region56
        $region55: #{tpu_custom_call.1} parent=11 // pred_region
          _
        $region56: #{tpu_custom_call.1} parent=11 // pred_fallthru
          _
        // Predicated region
        $region57: #{tpu_custom_call.1} parent=11 // pred_check
          %p428 = pneg %p354
        $region58: #{tpu_custom_call.1} parent=11 // pred_check_branch
          %430 = sbr.rel (%p428) target = $region60
        $region59: #{tpu_custom_call.1} parent=11 // pred_region
          _
        $region60: #{tpu_custom_call.1} parent=11 // pred_fallthru
          _
      $region12: #{tpu_custom_call.1} parent=5 // pred_fallthru
        _
      %p431 = scmp.lt.s32.totalorder %s24, 2
      // Predicated region
      $region61: #{tpu_custom_call.1} parent=5 // pred_check
        %p432 = pneg %p431
      $region62: #{tpu_custom_call.1} parent=5 // pred_check_branch
        %434 = sbr.rel (%p432) target = $region64
      $region63: #{tpu_custom_call.1} parent=5 // pred_region
        // Predicated region
        $region65: #{tpu_custom_call.1} parent=63 // pred_check
          %p435 = pneg %p44
        $region66: #{tpu_custom_call.1} parent=63 // pred_check_branch
          %437 = sbr.rel (%p435) target = $region68
        $region67: #{tpu_custom_call.1} parent=63 // pred_region
          %s438 = smul.u32 32, %s24
          %p439 = scmp.lt.s32.totalorder %s438, 63
          %s440 = scalar_select %p439, %s438, 63
          %s441 = smul.addr %s440, 8
          %s442 = scalar_lea.vmem %s0, %s441
          %s443 = smul.u32 32, %s24
        $region68: #{tpu_custom_call.1} parent=63 // pred_fallthru
          _
        // Predicated region
        $region69: #{tpu_custom_call.1} parent=63 // pred_check
          %p444 = pneg %p70
        $region70: #{tpu_custom_call.1} parent=63 // pred_check_branch
          %446 = sbr.rel (%p444) target = $region72
        $region71: #{tpu_custom_call.1} parent=63 // pred_region
          %s447 = smul.u32 32, %s24
          %p448 = scmp.lt.s32.totalorder %s447, 63
          %s449 = scalar_select %p448, %s447, 63
          %s450 = smul.addr %s449, 8
          %s451 = scalar_lea.vmem %s1, %s450
          %s452 = smul.u32 32, %s24
        $region72: #{tpu_custom_call.1} parent=63 // pred_fallthru
          _
        // Predicated region
        $region73: #{tpu_custom_call.1} parent=63 // pred_check
          %p453 = pneg %p96
        $region74: #{tpu_custom_call.1} parent=63 // pred_check_branch
          %455 = sbr.rel (%p453) target = $region76
        $region75: #{tpu_custom_call.1} parent=63 // pred_region
          %s456 = smul.u32 16, %s24
          %p457 = scmp.lt.s32.totalorder %s456, 31
          %s458 = scalar_select %p457, %s456, 31
          %s459 = smul.addr %s458, 2
          %s460 = smul.addr %s459, 8
          %s461 = scalar_lea.vmem %s2, %s460
          %s462 = smul.u32 16, %s24
        $region76: #{tpu_custom_call.1} parent=63 // pred_fallthru
          _
      $region64: #{tpu_custom_call.1} parent=5 // pred_fallthru
        _
      %p463 = scmp.le.s32.totalorder 1, %s24
      %p464 = scmp.lt.s32.totalorder %s24, 3
      %p465 = pnand %p463, %p464
      %p466 = pneg %p465
      // Predicated region
      $region77: #{tpu_custom_call.1} parent=5 // pred_check
        _
      $region78: #{tpu_custom_call.1} parent=5 // pred_check_branch
        %468 = sbr.rel (%p465) target = $region80
      $region79: #{tpu_custom_call.1} parent=5 // pred_region
        %s469 = ssub.s32 %s24, 1
        %s470 = smul.u32 32, %s29
        %p471 = scmp.lt.s32.totalorder %s470, 63
        %s472 = scalar_select %p471, %s470, 63
        %s473 = smul.addr %s472, 8
        %s474 = scalar_lea.vmem %s0, %s473
        %p475 = pneg %p50
        %p476 = pneg %p47
        %s477 = smul.u32 32, %s29
        %p478 = scmp.lt.s32.totalorder %s477, 63
        %s479 = scalar_select %p478, %s477, 63
        %s480 = smul.addr %s479, 8
        %s481 = scalar_lea.vmem %s1, %s480
        %p482 = pneg %p76
        %p483 = pneg %p73
        %s484 = smul.u32 16, %s29
        %p485 = scmp.lt.s32.totalorder %s484, 31
        %s486 = scalar_select %p485, %s484, 31
        %s487 = smul.addr %s486, 2
        %s488 = smul.addr %s487, 8
        %s489 = scalar_lea.vmem %s2, %s488
        %p490 = pneg %p102
        %p491 = pneg %p99
        %p492 = pneg %p123
        %p493 = pneg %p120
        %p494 = pneg %p144
        %p495 = pneg %p141
        %p496 = pneg %p165
        %p497 = pneg %p162
        %p498 = pneg %p186
        %p499 = pneg %p183
        %p500 = pneg %p207
        %p501 = pneg %p204
        %p502 = pneg %p228
        %p503 = pneg %p225
        %p504 = pneg %p249
        %p505 = pneg %p246
        %p506 = pneg %p270
        %p507 = pneg %p267
        %p508 = pneg %p291
        %p509 = pneg %p288
        %p510 = pneg %p312
        %p511 = pneg %p309
        %p512 = pneg %p333
        %p513 = pneg %p330
        %p514 = pneg %p354
        %p515 = pneg %p351
        %p516 = pneg %p380
        %p517 = pneg %p377
        %s518 = sand.u32 %s367, 1
        %s519 = scalar_lea.sflag [#allocation3], %s518
        %s520 = sand.u32 %s367, 1
        %s521 = smul.addr %s520, 256
        %s522 = scalar_lea.vmem [#allocation2], %s521
        %s523 = smul.u32 32, %s29
        %p524 = scmp.lt.s32.totalorder %s523, 63
        %s525 = scalar_select %p524, %s523, 63
        %s526 = smul.addr %s525, 8
        %s527 = scalar_lea.vmem %s0, %s526
        %s528 = smul.u32 32, %s29
        %s529 = smul.u32 32, %s29
        %p530 = scmp.lt.s32.totalorder %s529, 63
        %s531 = scalar_select %p530, %s529, 63
        %s532 = smul.addr %s531, 8
        %s533 = scalar_lea.vmem %s1, %s532
        %s534 = smul.u32 32, %s29
        %s535 = smul.u32 16, %s29
        %p536 = scmp.lt.s32.totalorder %s535, 31
        %s537 = scalar_select %p536, %s535, 31
        %s538 = smul.addr %s537, 2
        %s539 = smul.addr %s538, 8
        %s540 = scalar_lea.vmem %s2, %s539
        %s541 = smul.u32 16, %s29
        %s542 = smul.u32 16, %s29
        %v543 = vld [vmem:[%s527] sm:$0xff]
        %v544 = vld [vmem:[%s527 + $0x8] sm:$0xff]
        %v545 = vld [vmem:[%s527 + $0x10] sm:$0xff]
        %v546 = vld [vmem:[%s527 + $0x18] sm:$0xff]
        %v547 = vld [vmem:[%s527 + $0x20] sm:$0xff]
        %v548 = vld [vmem:[%s527 + $0x28] sm:$0xff]
        %v549 = vld [vmem:[%s527 + $0x30] sm:$0xff]
        %v550 = vld [vmem:[%s527 + $0x38] sm:$0xff]
        %v551 = vld [vmem:[%s527 + $0x40] sm:$0xff]
        %v552 = vld [vmem:[%s527 + $0x48] sm:$0xff]
        %v553 = vld [vmem:[%s527 + $0x50] sm:$0xff]
        %v554 = vld [vmem:[%s527 + $0x58] sm:$0xff]
        %v555 = vld [vmem:[%s527 + $0x60] sm:$0xff]
        %v556 = vld [vmem:[%s527 + $0x68] sm:$0xff]
        %v557 = vld [vmem:[%s527 + $0x70] sm:$0xff]
        %v558 = vld [vmem:[%s527 + $0x78] sm:$0xff]
        %v559 = vld [vmem:[%s527 + $0x80] sm:$0xff]
        %v560 = vld [vmem:[%s527 + $0x88] sm:$0xff]
        %v561 = vld [vmem:[%s527 + $0x90] sm:$0xff]
        %v562 = vld [vmem:[%s527 + $0x98] sm:$0xff]
        %v563 = vld [vmem:[%s527 + $0xa0] sm:$0xff]
        %v564 = vld [vmem:[%s527 + $0xa8] sm:$0xff]
        %v565 = vld [vmem:[%s527 + $0xb0] sm:$0xff]
        %v566 = vld [vmem:[%s527 + $0xb8] sm:$0xff]
        %v567 = vld [vmem:[%s527 + $0xc0] sm:$0xff]
        %v568 = vld [vmem:[%s527 + $0xc8] sm:$0xff]
        %v569 = vld [vmem:[%s527 + $0xd0] sm:$0xff]
        %v570 = vld [vmem:[%s527 + $0xd8] sm:$0xff]
        %v571 = vld [vmem:[%s527 + $0xe0] sm:$0xff]
        %v572 = vld [vmem:[%s527 + $0xe8] sm:$0xff]
        %v573 = vld [vmem:[%s527 + $0xf0] sm:$0xff]
        %v574 = vld [vmem:[%s527 + $0xf8] sm:$0xff]
        %v575 = vld [vmem:[%s533] sm:$0xff]
        %v576 = vld [vmem:[%s533 + $0x8] sm:$0xff]
        %v577 = vld [vmem:[%s533 + $0x10] sm:$0xff]
        %v578 = vld [vmem:[%s533 + $0x18] sm:$0xff]
        %v579 = vld [vmem:[%s533 + $0x20] sm:$0xff]
        %v580 = vld [vmem:[%s533 + $0x28] sm:$0xff]
        %v581 = vld [vmem:[%s533 + $0x30] sm:$0xff]
        %v582 = vld [vmem:[%s533 + $0x38] sm:$0xff]
        %v583 = vld [vmem:[%s533 + $0x40] sm:$0xff]
        %v584 = vld [vmem:[%s533 + $0x48] sm:$0xff]
        %v585 = vld [vmem:[%s533 + $0x50] sm:$0xff]
        %v586 = vld [vmem:[%s533 + $0x58] sm:$0xff]
        %v587 = vld [vmem:[%s533 + $0x60] sm:$0xff]
        %v588 = vld [vmem:[%s533 + $0x68] sm:$0xff]
        %v589 = vld [vmem:[%s533 + $0x70] sm:$0xff]
        %v590 = vld [vmem:[%s533 + $0x78] sm:$0xff]
        %v591 = vld [vmem:[%s533 + $0x80] sm:$0xff]
        %v592 = vld [vmem:[%s533 + $0x88] sm:$0xff]
        %v593 = vld [vmem:[%s533 + $0x90] sm:$0xff]
        %v594 = vld [vmem:[%s533 + $0x98] sm:$0xff]
        %v595 = vld [vmem:[%s533 + $0xa0] sm:$0xff]
        %v596 = vld [vmem:[%s533 + $0xa8] sm:$0xff]
        %v597 = vld [vmem:[%s533 + $0xb0] sm:$0xff]
        %v598 = vld [vmem:[%s533 + $0xb8] sm:$0xff]
        %v599 = vld [vmem:[%s533 + $0xc0] sm:$0xff]
        %v600 = vld [vmem:[%s533 + $0xc8] sm:$0xff]
        %v601 = vld [vmem:[%s533 + $0xd0] sm:$0xff]
        %v602 = vld [vmem:[%s533 + $0xd8] sm:$0xff]
        %v603 = vld [vmem:[%s533 + $0xe0] sm:$0xff]
        %v604 = vld [vmem:[%s533 + $0xe8] sm:$0xff]
        %v605 = vld [vmem:[%s533 + $0xf0] sm:$0xff]
        %v606 = vld [vmem:[%s533 + $0xf8] sm:$0xff]
        %v607 = vld [vmem:[%s540] sm:$0xff]
        %v608 = vld [vmem:[%s540 + $0x8] sm:$0xff]
        %v609 = vld [vmem:[%s540 + $0x10] sm:$0xff]
        %v610 = vld [vmem:[%s540 + $0x18] sm:$0xff]
        %v611 = vld [vmem:[%s540 + $0x20] sm:$0xff]
        %v612 = vld [vmem:[%s540 + $0x28] sm:$0xff]
        %v613 = vld [vmem:[%s540 + $0x30] sm:$0xff]
        %v614 = vld [vmem:[%s540 + $0x38] sm:$0xff]
        %v615 = vld [vmem:[%s540 + $0x40] sm:$0xff]
        %v616 = vld [vmem:[%s540 + $0x48] sm:$0xff]
        %v617 = vld [vmem:[%s540 + $0x50] sm:$0xff]
        %v618 = vld [vmem:[%s540 + $0x58] sm:$0xff]
        %v619 = vld [vmem:[%s540 + $0x60] sm:$0xff]
        %v620 = vld [vmem:[%s540 + $0x68] sm:$0xff]
        %v621 = vld [vmem:[%s540 + $0x70] sm:$0xff]
        %v622 = vld [vmem:[%s540 + $0x78] sm:$0xff]
        %v623 = vld [vmem:[%s540 + $0x80] sm:$0xff]
        %v624 = vld [vmem:[%s540 + $0x88] sm:$0xff]
        %v625 = vld [vmem:[%s540 + $0x90] sm:$0xff]
        %v626 = vld [vmem:[%s540 + $0x98] sm:$0xff]
        %v627 = vld [vmem:[%s540 + $0xa0] sm:$0xff]
        %v628 = vld [vmem:[%s540 + $0xa8] sm:$0xff]
        %v629 = vld [vmem:[%s540 + $0xb0] sm:$0xff]
        %v630 = vld [vmem:[%s540 + $0xb8] sm:$0xff]
        %v631 = vld [vmem:[%s540 + $0xc0] sm:$0xff]
        %v632 = vld [vmem:[%s540 + $0xc8] sm:$0xff]
        %v633 = vld [vmem:[%s540 + $0xd0] sm:$0xff]
        %v634 = vld [vmem:[%s540 + $0xd8] sm:$0xff]
        %v635 = vld [vmem:[%s540 + $0xe0] sm:$0xff]
        %v636 = vld [vmem:[%s540 + $0xe8] sm:$0xff]
        %v637 = vld [vmem:[%s540 + $0xf0] sm:$0xff]
        %v638 = vld [vmem:[%s540 + $0xf8] sm:$0xff]
        %v639 = vld [vmem:[%s3] sm:$0x1]
        %v640 = vld [vmem:[%s4] sm:$0x1]
        %642 = vset.pattern.permute.xlu0 0
        %643 = vperm.xlu0 %642, %v543
        %v644 = vpop.permute.xlu0 %643
        %647 = vset.pattern.permute.xlu0 0
        %648 = vperm.xlu0 %647, %v544
        %v649 = vpop.permute.xlu0 %648
        %652 = vset.pattern.permute.xlu0 0
        %653 = vperm.xlu0 %652, %v545
        %v654 = vpop.permute.xlu0 %653
        %657 = vset.pattern.permute.xlu0 0
        %658 = vperm.xlu0 %657, %v546
        %v659 = vpop.permute.xlu0 %658
        %662 = vset.pattern.permute.xlu0 0
        %663 = vperm.xlu0 %662, %v547
        %v664 = vpop.permute.xlu0 %663
        %667 = vset.pattern.permute.xlu0 0
        %668 = vperm.xlu0 %667, %v548
        %v669 = vpop.permute.xlu0 %668
        %672 = vset.pattern.permute.xlu0 0
        %673 = vperm.xlu0 %672, %v549
        %v674 = vpop.permute.xlu0 %673
        %677 = vset.pattern.permute.xlu0 0
        %678 = vperm.xlu0 %677, %v550
        %v679 = vpop.permute.xlu0 %678
        %682 = vset.pattern.permute.xlu0 0
        %683 = vperm.xlu0 %682, %v551
        %v684 = vpop.permute.xlu0 %683
        %687 = vset.pattern.permute.xlu0 0
        %688 = vperm.xlu0 %687, %v552
        %v689 = vpop.permute.xlu0 %688
        %692 = vset.pattern.permute.xlu0 0
        %693 = vperm.xlu0 %692, %v553
        %v694 = vpop.permute.xlu0 %693
        %697 = vset.pattern.permute.xlu0 0
        %698 = vperm.xlu0 %697, %v554
        %v699 = vpop.permute.xlu0 %698
        %702 = vset.pattern.permute.xlu0 0
        %703 = vperm.xlu0 %702, %v555
        %v704 = vpop.permute.xlu0 %703
        %707 = vset.pattern.permute.xlu0 0
        %708 = vperm.xlu0 %707, %v556
        %v709 = vpop.permute.xlu0 %708
        %712 = vset.pattern.permute.xlu0 0
        %713 = vperm.xlu0 %712, %v557
        %v714 = vpop.permute.xlu0 %713
        %717 = vset.pattern.permute.xlu0 0
        %718 = vperm.xlu0 %717, %v558
        %v719 = vpop.permute.xlu0 %718
        %722 = vset.pattern.permute.xlu0 0
        %723 = vperm.xlu0 %722, %v559
        %v724 = vpop.permute.xlu0 %723
        %727 = vset.pattern.permute.xlu0 0
        %728 = vperm.xlu0 %727, %v560
        %v729 = vpop.permute.xlu0 %728
        %732 = vset.pattern.permute.xlu0 0
        %733 = vperm.xlu0 %732, %v561
        %v734 = vpop.permute.xlu0 %733
        %737 = vset.pattern.permute.xlu0 0
        %738 = vperm.xlu0 %737, %v562
        %v739 = vpop.permute.xlu0 %738
        %742 = vset.pattern.permute.xlu0 0
        %743 = vperm.xlu0 %742, %v563
        %v744 = vpop.permute.xlu0 %743
        %747 = vset.pattern.permute.xlu0 0
        %748 = vperm.xlu0 %747, %v564
        %v749 = vpop.permute.xlu0 %748
        %752 = vset.pattern.permute.xlu0 0
        %753 = vperm.xlu0 %752, %v565
        %v754 = vpop.permute.xlu0 %753
        %757 = vset.pattern.permute.xlu0 0
        %758 = vperm.xlu0 %757, %v566
        %v759 = vpop.permute.xlu0 %758
        %762 = vset.pattern.permute.xlu0 0
        %763 = vperm.xlu0 %762, %v567
        %v764 = vpop.permute.xlu0 %763
        %767 = vset.pattern.permute.xlu0 0
        %768 = vperm.xlu0 %767, %v568
        %v769 = vpop.permute.xlu0 %768
        %772 = vset.pattern.permute.xlu0 0
        %773 = vperm.xlu0 %772, %v569
        %v774 = vpop.permute.xlu0 %773
        %777 = vset.pattern.permute.xlu0 0
        %778 = vperm.xlu0 %777, %v570
        %v779 = vpop.permute.xlu0 %778
        %782 = vset.pattern.permute.xlu0 0
        %783 = vperm.xlu0 %782, %v571
        %v784 = vpop.permute.xlu0 %783
        %787 = vset.pattern.permute.xlu0 0
        %788 = vperm.xlu0 %787, %v572
        %v789 = vpop.permute.xlu0 %788
        %792 = vset.pattern.permute.xlu0 0
        %793 = vperm.xlu0 %792, %v573
        %v794 = vpop.permute.xlu0 %793
        %797 = vset.pattern.permute.xlu0 0
        %798 = vperm.xlu0 %797, %v574
        %v799 = vpop.permute.xlu0 %798
        %v802 = vlaneseq
        %v803 = vshrl.u32 %v802, 7
        %v804 = vsub.s32 0, %v803
        %v805 = vrot.slane %v639, %v804
        %v807 = vmul.f32 %v644, %v805
        %v808 = vmul.f32 %v649, %v805
        %v809 = vmul.f32 %v654, %v805
        %v810 = vmul.f32 %v659, %v805
        %v811 = vmul.f32 %v664, %v805
        %v812 = vmul.f32 %v669, %v805
        %v813 = vmul.f32 %v674, %v805
        %v814 = vmul.f32 %v679, %v805
        %v815 = vmul.f32 %v684, %v805
        %v816 = vmul.f32 %v689, %v805
        %v817 = vmul.f32 %v694, %v805
        %v818 = vmul.f32 %v699, %v805
        %v819 = vmul.f32 %v704, %v805
        %v820 = vmul.f32 %v709, %v805
        %v821 = vmul.f32 %v714, %v805
        %v822 = vmul.f32 %v719, %v805
        %v823 = vmul.f32 %v724, %v805
        %v824 = vmul.f32 %v729, %v805
        %v825 = vmul.f32 %v734, %v805
        %v826 = vmul.f32 %v739, %v805
        %v827 = vmul.f32 %v744, %v805
        %v828 = vmul.f32 %v749, %v805
        %v829 = vmul.f32 %v754, %v805
        %v830 = vmul.f32 %v759, %v805
        %v831 = vmul.f32 %v764, %v805
        %v832 = vmul.f32 %v769, %v805
        %v833 = vmul.f32 %v774, %v805
        %v834 = vmul.f32 %v779, %v805
        %v835 = vmul.f32 %v784, %v805
        %v836 = vmul.f32 %v789, %v805
        %v837 = vmul.f32 %v794, %v805
        %v838 = vmul.f32 %v799, %v805
        %v840 = vlaneseq
        %v841 = vshrl.u32 %v840, 7
        %v842 = vsub.s32 0, %v841
        %v843 = vrot.slane %v640, %v842
        %v845 = vadd.f32 %v807, %v843
        %v846 = vadd.f32 %v808, %v843
        %v847 = vadd.f32 %v809, %v843
        %v848 = vadd.f32 %v810, %v843
        %v849 = vadd.f32 %v811, %v843
        %v850 = vadd.f32 %v812, %v843
        %v851 = vadd.f32 %v813, %v843
        %v852 = vadd.f32 %v814, %v843
        %v853 = vadd.f32 %v815, %v843
        %v854 = vadd.f32 %v816, %v843
        %v855 = vadd.f32 %v817, %v843
        %v856 = vadd.f32 %v818, %v843
        %v857 = vadd.f32 %v819, %v843
        %v858 = vadd.f32 %v820, %v843
        %v859 = vadd.f32 %v821, %v843
        %v860 = vadd.f32 %v822, %v843
        %v861 = vadd.f32 %v823, %v843
        %v862 = vadd.f32 %v824, %v843
        %v863 = vadd.f32 %v825, %v843
        %v864 = vadd.f32 %v826, %v843
        %v865 = vadd.f32 %v827, %v843
        %v866 = vadd.f32 %v828, %v843
        %v867 = vadd.f32 %v829, %v843
        %v868 = vadd.f32 %v830, %v843
        %v869 = vadd.f32 %v831, %v843
        %v870 = vadd.f32 %v832, %v843
        %v871 = vadd.f32 %v833, %v843
        %v872 = vadd.f32 %v834, %v843
        %v873 = vadd.f32 %v835, %v843
        %v874 = vadd.f32 %v836, %v843
        %v875 = vadd.f32 %v837, %v843
        %v876 = vadd.f32 %v838, %v843
        %v877 = vmax.f32 %v845, 0.0
        %v878 = vmax.f32 %v846, 0.0
        %v879 = vmax.f32 %v847, 0.0
        %v880 = vmax.f32 %v848, 0.0
        %v881 = vmax.f32 %v849, 0.0
        %v882 = vmax.f32 %v850, 0.0
        %v883 = vmax.f32 %v851, 0.0
        %v884 = vmax.f32 %v852, 0.0
        %v885 = vmax.f32 %v853, 0.0
        %v886 = vmax.f32 %v854, 0.0
        %v887 = vmax.f32 %v855, 0.0
        %v888 = vmax.f32 %v856, 0.0
        %v889 = vmax.f32 %v857, 0.0
        %v890 = vmax.f32 %v858, 0.0
        %v891 = vmax.f32 %v859, 0.0
        %v892 = vmax.f32 %v860, 0.0
        %v893 = vmax.f32 %v861, 0.0
        %v894 = vmax.f32 %v862, 0.0
        %v895 = vmax.f32 %v863, 0.0
        %v896 = vmax.f32 %v864, 0.0
        %v897 = vmax.f32 %v865, 0.0
        %v898 = vmax.f32 %v866, 0.0
        %v899 = vmax.f32 %v867, 0.0
        %v900 = vmax.f32 %v868, 0.0
        %v901 = vmax.f32 %v869, 0.0
        %v902 = vmax.f32 %v870, 0.0
        %v903 = vmax.f32 %v871, 0.0
        %v904 = vmax.f32 %v872, 0.0
        %v905 = vmax.f32 %v873, 0.0
        %v906 = vmax.f32 %v874, 0.0
        %v907 = vmax.f32 %v875, 0.0
        %v908 = vmax.f32 %v876, 0.0
        %v909 = vld [vmem:[%s5] sm:$0xff]
        %v910 = vld [vmem:[%s5 + $0x8] sm:$0xff]
        %v911 = vld [vmem:[%s5 + $0x10] sm:$0xff]
        %v912 = vld [vmem:[%s5 + $0x18] sm:$0xff]
        %v913 = vld [vmem:[%s6] sm:$0x1]
        %v915 = vlaneseq
        %v916 = vshrl.u32 %v915, 7
        %v917 = vsub.s32 0, %v916
        %v918 = vrot.slane %v913, %v917
        %vm920 = vcmask 261120
        %v922 = vsel %vm920, %v877, 0
        %v925 = vsel %vm920, %v878, 0
        %v928 = vsel %vm920, %v879, 0
        %v931 = vsel %vm920, %v880, 0
        %v934 = vsel %vm920, %v881, 0
        %v937 = vsel %vm920, %v882, 0
        %v940 = vsel %vm920, %v883, 0
        %v943 = vsel %vm920, %v884, 0
        %v946 = vsel %vm920, %v885, 0
        %v949 = vsel %vm920, %v886, 0
        %v952 = vsel %vm920, %v887, 0
        %v955 = vsel %vm920, %v888, 0
        %v958 = vsel %vm920, %v889, 0
        %v961 = vsel %vm920, %v890, 0
        %v964 = vsel %vm920, %v891, 0
        %v967 = vsel %vm920, %v892, 0
        %v970 = vsel %vm920, %v893, 0
        %v973 = vsel %vm920, %v894, 0
        %v976 = vsel %vm920, %v895, 0
        %v979 = vsel %vm920, %v896, 0
        %v982 = vsel %vm920, %v897, 0
        %v985 = vsel %vm920, %v898, 0
        %v988 = vsel %vm920, %v899, 0
        %v991 = vsel %vm920, %v900, 0
        %v994 = vsel %vm920, %v901, 0
        %v997 = vsel %vm920, %v902, 0
        %v1000 = vsel %vm920, %v903, 0
        %v1003 = vsel %vm920, %v904, 0
        %v1006 = vsel %vm920, %v905, 0
        %v1009 = vsel %vm920, %v906, 0
        %v1012 = vsel %vm920, %v907, 0
        %v1015 = vsel %vm920, %v908, 0
        %1017 = vmatprep.subr.mxu0 0.0
        %1018 = vmatpush1.msra.mxu0 0.0
        %1019 = vmatprep.subr.mxu0 0.0
        %1020 = vmatpush1.msra.mxu0 0.0
        %1021 = vmatprep.subr.mxu0 0.0
        %1022 = vmatpush1.msra.mxu0 0.0
        %1023 = vmatprep.subr.mxu0 0.0
        %1024 = vmatpush1.msra.mxu0 0.0
        %1025 = vmatprep.subr.mxu0 0.0
        %1026 = vmatpush1.msra.mxu0 0.0
        %1027 = vmatprep.subr.mxu0 0.0
        %1028 = vmatpush1.msra.mxu0 0.0
        %1029 = vmatprep.subr.mxu0 0.0
        %1030 = vmatpush1.msra.mxu0 0.0
        %1031 = vmatprep.subr.mxu0 0.0
        %1032 = vmatpush1.msra.mxu0 0.0
        %1033 = vmatprep.subr.mxu0 0.0
        %1034 = vmatpush1.msra.mxu0 0.0
        %1035 = vmatprep.subr.mxu0 0.0
        %1036 = vmatpush1.msra.mxu0 0.0
        %1037 = vmatprep.subr.mxu0 0.0
        %1038 = vmatpush1.msra.mxu0 0.0
        %1039 = vmatprep.subr.mxu0 0.0
        %1040 = vmatpush1.msra.mxu0 0.0
        %1041 = vmatprep.subr.mxu0 0.0
        %1042 = vmatpush1.msra.mxu0 %v912
        %1043 = vmatprep.subr.mxu0 0.0
        %1044 = vmatpush1.msra.mxu0 %v911
        %1045 = vmatprep.subr.mxu0 0.0
        %1046 = vmatpush1.msra.mxu0 %v910
        %1047 = vmatprep.subr.mxu0 0.0
        %1048 = vmatpush1.msra.mxu0 %v909
        %1049 = vmatprep.subr.mxu0 0.0
        %1050 = vmatpush2.msra.mxu0 0.0
        %1051 = vmatprep.subr.mxu0 0.0
        %1052 = vmatpush2.msra.mxu0 0.0
        %1053 = vmatprep.subr.mxu0 0.0
        %1054 = vmatpush2.msra.mxu0 0.0
        %1055 = vmatprep.subr.mxu0 0.0
        %1056 = vmatpush2.msra.mxu0 0.0
        %1057 = vmatprep.subr.mxu0 0.0
        %1058 = vmatpush2.msra.mxu0 0.0
        %1059 = vmatprep.subr.mxu0 0.0
        %1060 = vmatpush2.msra.mxu0 0.0
        %1061 = vmatprep.subr.mxu0 0.0
        %1062 = vmatpush2.msra.mxu0 0.0
        %1063 = vmatprep.subr.mxu0 0.0
        %1064 = vmatpush2.msra.mxu0 0.0
        %1065 = vmatprep.subr.mxu0 0.0
        %1066 = vmatpush2.msra.mxu0 0.0
        %1067 = vmatprep.subr.mxu0 0.0
        %1068 = vmatpush2.msra.mxu0 0.0
        %1069 = vmatprep.subr.mxu0 0.0
        %1070 = vmatpush2.msra.mxu0 0.0
        %1071 = vmatprep.subr.mxu0 0.0
        %1072 = vmatpush2.msra.mxu0 0.0
        %1073 = vmatprep.subr.mxu0 0.0
        %1074 = vmatpush2.msra.mxu0 0.0
        %1075 = vmatprep.subr.mxu0 0.0
        %1076 = vmatpush2.msra.mxu0 0.0
        %1077 = vmatprep.subr.mxu0 0.0
        %1078 = vmatpush2.msra.mxu0 0.0
        %1079 = vmatprep.subr.mxu0 0.0
        %1080 = vmatpush2.msra.mxu0 0.0
        %1081 = vmatprep.mubr.f32.mxu0 0.0
        %1082 = vmatmul.mubr.f32.gmra.mxu0 %v922
        %v1083 = vpop.f32.mrf.mxu0
        %v1084 = vadd.f32 %v918, %v1083
        %v1085 = vpop.f32.mrf.mxu0
        %1086 = vmatprep.mubr.f32.mxu0 0.0
        %1087 = vmatmul.mubr.f32.gmra.mxu0 %v925
        %v1088 = vpop.f32.mrf.mxu0
        %v1089 = vadd.f32 %v918, %v1088
        %v1090 = vpop.f32.mrf.mxu0
        %1091 = vmatprep.mubr.f32.mxu0 0.0
        %1092 = vmatmul.mubr.f32.gmra.mxu0 %v928
        %v1093 = vpop.f32.mrf.mxu0
        %v1094 = vadd.f32 %v918, %v1093
        %v1095 = vpop.f32.mrf.mxu0
        %1096 = vmatprep.mubr.f32.mxu0 0.0
        %1097 = vmatmul.mubr.f32.gmra.mxu0 %v931
        %v1098 = vpop.f32.mrf.mxu0
        %v1099 = vadd.f32 %v918, %v1098
        %v1100 = vpop.f32.mrf.mxu0
        %1101 = vmatprep.mubr.f32.mxu0 0.0
        %1102 = vmatmul.mubr.f32.gmra.mxu0 %v934
        %v1103 = vpop.f32.mrf.mxu0
        %v1104 = vadd.f32 %v918, %v1103
        %v1105 = vpop.f32.mrf.mxu0
        %1106 = vmatprep.mubr.f32.mxu0 0.0
        %1107 = vmatmul.mubr.f32.gmra.mxu0 %v937
        %v1108 = vpop.f32.mrf.mxu0
        %v1109 = vadd.f32 %v918, %v1108
        %v1110 = vpop.f32.mrf.mxu0
        %1111 = vmatprep.mubr.f32.mxu0 0.0
        %1112 = vmatmul.mubr.f32.gmra.mxu0 %v940
        %v1113 = vpop.f32.mrf.mxu0
        %v1114 = vadd.f32 %v918, %v1113
        %v1115 = vpop.f32.mrf.mxu0
        %1116 = vmatprep.mubr.f32.mxu0 0.0
        %1117 = vmatmul.mubr.f32.gmra.mxu0 %v943
        %v1118 = vpop.f32.mrf.mxu0
        %v1119 = vadd.f32 %v918, %v1118
        %v1120 = vpop.f32.mrf.mxu0
        %1121 = vmatprep.mubr.f32.mxu0 0.0
        %1122 = vmatmul.mubr.f32.gmra.mxu0 %v946
        %v1123 = vpop.f32.mrf.mxu0
        %v1124 = vadd.f32 %v918, %v1123
        %v1125 = vpop.f32.mrf.mxu0
        %1126 = vmatprep.mubr.f32.mxu0 0.0
        %1127 = vmatmul.mubr.f32.gmra.mxu0 %v949
        %v1128 = vpop.f32.mrf.mxu0
        %v1129 = vadd.f32 %v918, %v1128
        %v1130 = vpop.f32.mrf.mxu0
        %1131 = vmatprep.mubr.f32.mxu0 0.0
        %1132 = vmatmul.mubr.f32.gmra.mxu0 %v952
        %v1133 = vpop.f32.mrf.mxu0
        %v1134 = vadd.f32 %v918, %v1133
        %v1135 = vpop.f32.mrf.mxu0
        %1136 = vmatprep.mubr.f32.mxu0 0.0
        %1137 = vmatmul.mubr.f32.gmra.mxu0 %v955
        %v1138 = vpop.f32.mrf.mxu0
        %v1139 = vadd.f32 %v918, %v1138
        %v1140 = vpop.f32.mrf.mxu0
        %1141 = vmatprep.mubr.f32.mxu0 0.0
        %1142 = vmatmul.mubr.f32.gmra.mxu0 %v958
        %v1143 = vpop.f32.mrf.mxu0
        %v1144 = vadd.f32 %v918, %v1143
        %v1145 = vpop.f32.mrf.mxu0
        %1146 = vmatprep.mubr.f32.mxu0 0.0
        %1147 = vmatmul.mubr.f32.gmra.mxu0 %v961
        %v1148 = vpop.f32.mrf.mxu0
        %v1149 = vadd.f32 %v918, %v1148
        %v1150 = vpop.f32.mrf.mxu0
        %1151 = vmatprep.mubr.f32.mxu0 0.0
        %1152 = vmatmul.mubr.f32.gmra.mxu0 %v964
        %v1153 = vpop.f32.mrf.mxu0
        %v1154 = vadd.f32 %v918, %v1153
        %v1155 = vpop.f32.mrf.mxu0
        %1156 = vmatprep.mubr.f32.mxu0 0.0
        %1157 = vmatmul.mubr.f32.gmra.mxu0 %v967
        %v1158 = vpop.f32.mrf.mxu0
        %v1159 = vadd.f32 %v918, %v1158
        %v1160 = vpop.f32.mrf.mxu0
        %1161 = vmatprep.mubr.f32.mxu0 0.0
        %1162 = vmatmul.mubr.f32.gmra.mxu0 %v970
        %v1163 = vpop.f32.mrf.mxu0
        %v1164 = vadd.f32 %v918, %v1163
        %v1165 = vpop.f32.mrf.mxu0
        %1166 = vmatprep.mubr.f32.mxu0 0.0
        %1167 = vmatmul.mubr.f32.gmra.mxu0 %v973
        %v1168 = vpop.f32.mrf.mxu0
        %v1169 = vadd.f32 %v918, %v1168
        %v1170 = vpop.f32.mrf.mxu0
        %1171 = vmatprep.mubr.f32.mxu0 0.0
        %1172 = vmatmul.mubr.f32.gmra.mxu0 %v976
        %v1173 = vpop.f32.mrf.mxu0
        %v1174 = vadd.f32 %v918, %v1173
        %v1175 = vpop.f32.mrf.mxu0
        %1176 = vmatprep.mubr.f32.mxu0 0.0
        %1177 = vmatmul.mubr.f32.gmra.mxu0 %v979
        %v1178 = vpop.f32.mrf.mxu0
        %v1179 = vadd.f32 %v918, %v1178
        %v1180 = vpop.f32.mrf.mxu0
        %1181 = vmatprep.mubr.f32.mxu0 0.0
        %1182 = vmatmul.mubr.f32.gmra.mxu0 %v982
        %v1183 = vpop.f32.mrf.mxu0
        %v1184 = vadd.f32 %v918, %v1183
        %v1185 = vpop.f32.mrf.mxu0
        %1186 = vmatprep.mubr.f32.mxu0 0.0
        %1187 = vmatmul.mubr.f32.gmra.mxu0 %v985
        %v1188 = vpop.f32.mrf.mxu0
        %v1189 = vadd.f32 %v918, %v1188
        %v1190 = vpop.f32.mrf.mxu0
        %1191 = vmatprep.mubr.f32.mxu0 0.0
        %1192 = vmatmul.mubr.f32.gmra.mxu0 %v988
        %v1193 = vpop.f32.mrf.mxu0
        %v1194 = vadd.f32 %v918, %v1193
        %v1195 = vpop.f32.mrf.mxu0
        %1196 = vmatprep.mubr.f32.mxu0 0.0
        %1197 = vmatmul.mubr.f32.gmra.mxu0 %v991
        %v1198 = vpop.f32.mrf.mxu0
        %v1199 = vadd.f32 %v918, %v1198
        %v1200 = vpop.f32.mrf.mxu0
        %1201 = vmatprep.mubr.f32.mxu0 0.0
        %1202 = vmatmul.mubr.f32.gmra.mxu0 %v994
        %v1203 = vpop.f32.mrf.mxu0
        %v1204 = vadd.f32 %v918, %v1203
        %v1205 = vpop.f32.mrf.mxu0
        %1206 = vmatprep.mubr.f32.mxu0 0.0
        %1207 = vmatmul.mubr.f32.gmra.mxu0 %v997
        %v1208 = vpop.f32.mrf.mxu0
        %v1209 = vadd.f32 %v918, %v1208
        %v1210 = vpop.f32.mrf.mxu0
        %1211 = vmatprep.mubr.f32.mxu0 0.0
        %1212 = vmatmul.mubr.f32.gmra.mxu0 %v1000
        %v1213 = vpop.f32.mrf.mxu0
        %v1214 = vadd.f32 %v918, %v1213
        %v1215 = vpop.f32.mrf.mxu0
        %1216 = vmatprep.mubr.f32.mxu0 0.0
        %1217 = vmatmul.mubr.f32.gmra.mxu0 %v1003
        %v1218 = vpop.f32.mrf.mxu0
        %v1219 = vadd.f32 %v918, %v1218
        %v1220 = vpop.f32.mrf.mxu0
        %1221 = vmatprep.mubr.f32.mxu0 0.0
        %1222 = vmatmul.mubr.f32.gmra.mxu0 %v1006
        %v1223 = vpop.f32.mrf.mxu0
        %v1224 = vadd.f32 %v918, %v1223
        %v1225 = vpop.f32.mrf.mxu0
        %1226 = vmatprep.mubr.f32.mxu0 0.0
        %1227 = vmatmul.mubr.f32.gmra.mxu0 %v1009
        %v1228 = vpop.f32.mrf.mxu0
        %v1229 = vadd.f32 %v918, %v1228
        %v1230 = vpop.f32.mrf.mxu0
        %1231 = vmatprep.mubr.f32.mxu0 0.0
        %1232 = vmatmul.mubr.f32.gmra.mxu0 %v1012
        %v1233 = vpop.f32.mrf.mxu0
        %v1234 = vadd.f32 %v918, %v1233
        %v1235 = vpop.f32.mrf.mxu0
        %1236 = vmatprep.mubr.f32.mxu0 0.0
        %1237 = vmatmul.mubr.f32.gmra.mxu0 %v1015
        %v1238 = vpop.f32.mrf.mxu0
        %v1239 = vadd.f32 %v918, %v1238
        %v1240 = vpop.f32.mrf.mxu0
        %1241 = vdwg.mxu0
        %v1242 = vmax.f32 %v1084, 0.0
        %v1243 = vmax.f32 %v1089, 0.0
        %v1244 = vmax.f32 %v1094, 0.0
        %v1245 = vmax.f32 %v1099, 0.0
        %v1246 = vmax.f32 %v1104, 0.0
        %v1247 = vmax.f32 %v1109, 0.0
        %v1248 = vmax.f32 %v1114, 0.0
        %v1249 = vmax.f32 %v1119, 0.0
        %v1250 = vmax.f32 %v1124, 0.0
        %v1251 = vmax.f32 %v1129, 0.0
        %v1252 = vmax.f32 %v1134, 0.0
        %v1253 = vmax.f32 %v1139, 0.0
        %v1254 = vmax.f32 %v1144, 0.0
        %v1255 = vmax.f32 %v1149, 0.0
        %v1256 = vmax.f32 %v1154, 0.0
        %v1257 = vmax.f32 %v1159, 0.0
        %v1258 = vmax.f32 %v1164, 0.0
        %v1259 = vmax.f32 %v1169, 0.0
        %v1260 = vmax.f32 %v1174, 0.0
        %v1261 = vmax.f32 %v1179, 0.0
        %v1262 = vmax.f32 %v1184, 0.0
        %v1263 = vmax.f32 %v1189, 0.0
        %v1264 = vmax.f32 %v1194, 0.0
        %v1265 = vmax.f32 %v1199, 0.0
        %v1266 = vmax.f32 %v1204, 0.0
        %v1267 = vmax.f32 %v1209, 0.0
        %v1268 = vmax.f32 %v1214, 0.0
        %v1269 = vmax.f32 %v1219, 0.0
        %v1270 = vmax.f32 %v1224, 0.0
        %v1271 = vmax.f32 %v1229, 0.0
        %v1272 = vmax.f32 %v1234, 0.0
        %v1273 = vmax.f32 %v1239, 0.0
        %v1274 = vld [vmem:[%s7] sm:$0xff]
        %v1275 = vld [vmem:[%s7 + $0x8] sm:$0xff]
        %v1276 = vld [vmem:[%s7 + $0x10] sm:$0xff]
        %v1277 = vld [vmem:[%s7 + $0x18] sm:$0xff]
        %v1278 = vld [vmem:[%s7 + $0x20] sm:$0xff]
        %v1279 = vld [vmem:[%s7 + $0x28] sm:$0xff]
        %v1280 = vld [vmem:[%s7 + $0x30] sm:$0xff]
        %v1281 = vld [vmem:[%s7 + $0x38] sm:$0xff]
        %v1282 = vld [vmem:[%s8] sm:$0x1]
        %v1284 = vlaneseq
        %v1285 = vshrl.u32 %v1284, 7
        %v1286 = vsub.s32 0, %v1285
        %v1287 = vrot.slane %v1282, %v1286
        %vm1289 = vcmask 523264
        %v1291 = vsel %vm1289, %v1242, 0
        %v1294 = vsel %vm1289, %v1243, 0
        %v1297 = vsel %vm1289, %v1244, 0
        %v1300 = vsel %vm1289, %v1245, 0
        %v1303 = vsel %vm1289, %v1246, 0
        %v1306 = vsel %vm1289, %v1247, 0
        %v1309 = vsel %vm1289, %v1248, 0
        %v1312 = vsel %vm1289, %v1249, 0
        %v1315 = vsel %vm1289, %v1250, 0
        %v1318 = vsel %vm1289, %v1251, 0
        %v1321 = vsel %vm1289, %v1252, 0
        %v1324 = vsel %vm1289, %v1253, 0
        %v1327 = vsel %vm1289, %v1254, 0
        %v1330 = vsel %vm1289, %v1255, 0
        %v1333 = vsel %vm1289, %v1256, 0
        %v1336 = vsel %vm1289, %v1257, 0
        %v1339 = vsel %vm1289, %v1258, 0
        %v1342 = vsel %vm1289, %v1259, 0
        %v1345 = vsel %vm1289, %v1260, 0
        %v1348 = vsel %vm1289, %v1261, 0
        %v1351 = vsel %vm1289, %v1262, 0
        %v1354 = vsel %vm1289, %v1263, 0
        %v1357 = vsel %vm1289, %v1264, 0
        %v1360 = vsel %vm1289, %v1265, 0
        %v1363 = vsel %vm1289, %v1266, 0
        %v1366 = vsel %vm1289, %v1267, 0
        %v1369 = vsel %vm1289, %v1268, 0
        %v1372 = vsel %vm1289, %v1269, 0
        %v1375 = vsel %vm1289, %v1270, 0
        %v1378 = vsel %vm1289, %v1271, 0
        %v1381 = vsel %vm1289, %v1272, 0
        %v1384 = vsel %vm1289, %v1273, 0
        %1386 = vmatprep.subr.mxu0 0.0
        %1387 = vmatpush1.msra.mxu0 0.0
        %1388 = vmatprep.subr.mxu0 0.0
        %1389 = vmatpush1.msra.mxu0 0.0
        %1390 = vmatprep.subr.mxu0 0.0
        %1391 = vmatpush1.msra.mxu0 0.0
        %1392 = vmatprep.subr.mxu0 0.0
        %1393 = vmatpush1.msra.mxu0 0.0
        %1394 = vmatprep.subr.mxu0 0.0
        %1395 = vmatpush1.msra.mxu0 0.0
        %1396 = vmatprep.subr.mxu0 0.0
        %1397 = vmatpush1.msra.mxu0 0.0
        %1398 = vmatprep.subr.mxu0 0.0
        %1399 = vmatpush1.msra.mxu0 0.0
        %1400 = vmatprep.subr.mxu0 0.0
        %1401 = vmatpush1.msra.mxu0 0.0
        %1402 = vmatprep.subr.mxu0 0.0
        %1403 = vmatpush1.msra.mxu0 %v1281
        %1404 = vmatprep.subr.mxu0 0.0
        %1405 = vmatpush1.msra.mxu0 %v1280
        %1406 = vmatprep.subr.mxu0 0.0
        %1407 = vmatpush1.msra.mxu0 %v1279
        %1408 = vmatprep.subr.mxu0 0.0
        %1409 = vmatpush1.msra.mxu0 %v1278
        %1410 = vmatprep.subr.mxu0 0.0
        %1411 = vmatpush1.msra.mxu0 %v1277
        %1412 = vmatprep.subr.mxu0 0.0
        %1413 = vmatpush1.msra.mxu0 %v1276
        %1414 = vmatprep.subr.mxu0 0.0
        %1415 = vmatpush1.msra.mxu0 %v1275
        %1416 = vmatprep.subr.mxu0 0.0
        %1417 = vmatpush1.msra.mxu0 %v1274
        %1418 = vmatprep.subr.mxu0 0.0
        %1419 = vmatpush2.msra.mxu0 0.0
        %1420 = vmatprep.subr.mxu0 0.0
        %1421 = vmatpush2.msra.mxu0 0.0
        %1422 = vmatprep.subr.mxu0 0.0
        %1423 = vmatpush2.msra.mxu0 0.0
        %1424 = vmatprep.subr.mxu0 0.0
        %1425 = vmatpush2.msra.mxu0 0.0
        %1426 = vmatprep.subr.mxu0 0.0
        %1427 = vmatpush2.msra.mxu0 0.0
        %1428 = vmatprep.subr.mxu0 0.0
        %1429 = vmatpush2.msra.mxu0 0.0
        %1430 = vmatprep.subr.mxu0 0.0
        %1431 = vmatpush2.msra.mxu0 0.0
        %1432 = vmatprep.subr.mxu0 0.0
        %1433 = vmatpush2.msra.mxu0 0.0
        %1434 = vmatprep.subr.mxu0 0.0
        %1435 = vmatpush2.msra.mxu0 0.0
        %1436 = vmatprep.subr.mxu0 0.0
        %1437 = vmatpush2.msra.mxu0 0.0
        %1438 = vmatprep.subr.mxu0 0.0
        %1439 = vmatpush2.msra.mxu0 0.0
        %1440 = vmatprep.subr.mxu0 0.0
        %1441 = vmatpush2.msra.mxu0 0.0
        %1442 = vmatprep.subr.mxu0 0.0
        %1443 = vmatpush2.msra.mxu0 0.0
        %1444 = vmatprep.subr.mxu0 0.0
        %1445 = vmatpush2.msra.mxu0 0.0
        %1446 = vmatprep.subr.mxu0 0.0
        %1447 = vmatpush2.msra.mxu0 0.0
        %1448 = vmatprep.subr.mxu0 0.0
        %1449 = vmatpush2.msra.mxu0 0.0
        %1450 = vmatprep.mubr.f32.mxu0 0.0
        %1451 = vmatmul.mubr.f32.gmra.mxu0 %v1291
        %v1452 = vpop.f32.mrf.mxu0
        %v1453 = vadd.f32 %v1287, %v1452
        %v1454 = vpop.f32.mrf.mxu0
        %1455 = vmatprep.mubr.f32.mxu0 0.0
        %1456 = vmatmul.mubr.f32.gmra.mxu0 %v1294
        %v1457 = vpop.f32.mrf.mxu0
        %v1458 = vadd.f32 %v1287, %v1457
        %v1459 = vpop.f32.mrf.mxu0
        %1460 = vmatprep.mubr.f32.mxu0 0.0
        %1461 = vmatmul.mubr.f32.gmra.mxu0 %v1297
        %v1462 = vpop.f32.mrf.mxu0
        %v1463 = vadd.f32 %v1287, %v1462
        %v1464 = vpop.f32.mrf.mxu0
        %1465 = vmatprep.mubr.f32.mxu0 0.0
        %1466 = vmatmul.mubr.f32.gmra.mxu0 %v1300
        %v1467 = vpop.f32.mrf.mxu0
        %v1468 = vadd.f32 %v1287, %v1467
        %v1469 = vpop.f32.mrf.mxu0
        %1470 = vmatprep.mubr.f32.mxu0 0.0
        %1471 = vmatmul.mubr.f32.gmra.mxu0 %v1303
        %v1472 = vpop.f32.mrf.mxu0
        %v1473 = vadd.f32 %v1287, %v1472
        %v1474 = vpop.f32.mrf.mxu0
        %1475 = vmatprep.mubr.f32.mxu0 0.0
        %1476 = vmatmul.mubr.f32.gmra.mxu0 %v1306
        %v1477 = vpop.f32.mrf.mxu0
        %v1478 = vadd.f32 %v1287, %v1477
        %v1479 = vpop.f32.mrf.mxu0
        %1480 = vmatprep.mubr.f32.mxu0 0.0
        %1481 = vmatmul.mubr.f32.gmra.mxu0 %v1309
        %v1482 = vpop.f32.mrf.mxu0
        %v1483 = vadd.f32 %v1287, %v1482
        %v1484 = vpop.f32.mrf.mxu0
        %1485 = vmatprep.mubr.f32.mxu0 0.0
        %1486 = vmatmul.mubr.f32.gmra.mxu0 %v1312
        %v1487 = vpop.f32.mrf.mxu0
        %v1488 = vadd.f32 %v1287, %v1487
        %v1489 = vpop.f32.mrf.mxu0
        %1490 = vmatprep.mubr.f32.mxu0 0.0
        %1491 = vmatmul.mubr.f32.gmra.mxu0 %v1315
        %v1492 = vpop.f32.mrf.mxu0
        %v1493 = vadd.f32 %v1287, %v1492
        %v1494 = vpop.f32.mrf.mxu0
        %1495 = vmatprep.mubr.f32.mxu0 0.0
        %1496 = vmatmul.mubr.f32.gmra.mxu0 %v1318
        %v1497 = vpop.f32.mrf.mxu0
        %v1498 = vadd.f32 %v1287, %v1497
        %v1499 = vpop.f32.mrf.mxu0
        %1500 = vmatprep.mubr.f32.mxu0 0.0
        %1501 = vmatmul.mubr.f32.gmra.mxu0 %v1321
        %v1502 = vpop.f32.mrf.mxu0
        %v1503 = vadd.f32 %v1287, %v1502
        %v1504 = vpop.f32.mrf.mxu0
        %1505 = vmatprep.mubr.f32.mxu0 0.0
        %1506 = vmatmul.mubr.f32.gmra.mxu0 %v1324
        %v1507 = vpop.f32.mrf.mxu0
        %v1508 = vadd.f32 %v1287, %v1507
        %v1509 = vpop.f32.mrf.mxu0
        %1510 = vmatprep.mubr.f32.mxu0 0.0
        %1511 = vmatmul.mubr.f32.gmra.mxu0 %v1327
        %v1512 = vpop.f32.mrf.mxu0
        %v1513 = vadd.f32 %v1287, %v1512
        %v1514 = vpop.f32.mrf.mxu0
        %1515 = vmatprep.mubr.f32.mxu0 0.0
        %1516 = vmatmul.mubr.f32.gmra.mxu0 %v1330
        %v1517 = vpop.f32.mrf.mxu0
        %v1518 = vadd.f32 %v1287, %v1517
        %v1519 = vpop.f32.mrf.mxu0
        %1520 = vmatprep.mubr.f32.mxu0 0.0
        %1521 = vmatmul.mubr.f32.gmra.mxu0 %v1333
        %v1522 = vpop.f32.mrf.mxu0
        %v1523 = vadd.f32 %v1287, %v1522
        %v1524 = vpop.f32.mrf.mxu0
        %1525 = vmatprep.mubr.f32.mxu0 0.0
        %1526 = vmatmul.mubr.f32.gmra.mxu0 %v1336
        %v1527 = vpop.f32.mrf.mxu0
        %v1528 = vadd.f32 %v1287, %v1527
        %v1529 = vpop.f32.mrf.mxu0
        %1530 = vmatprep.mubr.f32.mxu0 0.0
        %1531 = vmatmul.mubr.f32.gmra.mxu0 %v1339
        %v1532 = vpop.f32.mrf.mxu0
        %v1533 = vadd.f32 %v1287, %v1532
        %v1534 = vpop.f32.mrf.mxu0
        %1535 = vmatprep.mubr.f32.mxu0 0.0
        %1536 = vmatmul.mubr.f32.gmra.mxu0 %v1342
        %v1537 = vpop.f32.mrf.mxu0
        %v1538 = vadd.f32 %v1287, %v1537
        %v1539 = vpop.f32.mrf.mxu0
        %1540 = vmatprep.mubr.f32.mxu0 0.0
        %1541 = vmatmul.mubr.f32.gmra.mxu0 %v1345
        %v1542 = vpop.f32.mrf.mxu0
        %v1543 = vadd.f32 %v1287, %v1542
        %v1544 = vpop.f32.mrf.mxu0
        %1545 = vmatprep.mubr.f32.mxu0 0.0
        %1546 = vmatmul.mubr.f32.gmra.mxu0 %v1348
        %v1547 = vpop.f32.mrf.mxu0
        %v1548 = vadd.f32 %v1287, %v1547
        %v1549 = vpop.f32.mrf.mxu0
        %1550 = vmatprep.mubr.f32.mxu0 0.0
        %1551 = vmatmul.mubr.f32.gmra.mxu0 %v1351
        %v1552 = vpop.f32.mrf.mxu0
        %v1553 = vadd.f32 %v1287, %v1552
        %v1554 = vpop.f32.mrf.mxu0
        %1555 = vmatprep.mubr.f32.mxu0 0.0
        %1556 = vmatmul.mubr.f32.gmra.mxu0 %v1354
        %v1557 = vpop.f32.mrf.mxu0
        %v1558 = vadd.f32 %v1287, %v1557
        %v1559 = vpop.f32.mrf.mxu0
        %1560 = vmatprep.mubr.f32.mxu0 0.0
        %1561 = vmatmul.mubr.f32.gmra.mxu0 %v1357
        %v1562 = vpop.f32.mrf.mxu0
        %v1563 = vadd.f32 %v1287, %v1562
        %v1564 = vpop.f32.mrf.mxu0
        %1565 = vmatprep.mubr.f32.mxu0 0.0
        %1566 = vmatmul.mubr.f32.gmra.mxu0 %v1360
        %v1567 = vpop.f32.mrf.mxu0
        %v1568 = vadd.f32 %v1287, %v1567
        %v1569 = vpop.f32.mrf.mxu0
        %1570 = vmatprep.mubr.f32.mxu0 0.0
        %1571 = vmatmul.mubr.f32.gmra.mxu0 %v1363
        %v1572 = vpop.f32.mrf.mxu0
        %v1573 = vadd.f32 %v1287, %v1572
        %v1574 = vpop.f32.mrf.mxu0
        %1575 = vmatprep.mubr.f32.mxu0 0.0
        %1576 = vmatmul.mubr.f32.gmra.mxu0 %v1366
        %v1577 = vpop.f32.mrf.mxu0
        %v1578 = vadd.f32 %v1287, %v1577
        %v1579 = vpop.f32.mrf.mxu0
        %1580 = vmatprep.mubr.f32.mxu0 0.0
        %1581 = vmatmul.mubr.f32.gmra.mxu0 %v1369
        %v1582 = vpop.f32.mrf.mxu0
        %v1583 = vadd.f32 %v1287, %v1582
        %v1584 = vpop.f32.mrf.mxu0
        %1585 = vmatprep.mubr.f32.mxu0 0.0
        %1586 = vmatmul.mubr.f32.gmra.mxu0 %v1372
        %v1587 = vpop.f32.mrf.mxu0
        %v1588 = vadd.f32 %v1287, %v1587
        %v1589 = vpop.f32.mrf.mxu0
        %1590 = vmatprep.mubr.f32.mxu0 0.0
        %1591 = vmatmul.mubr.f32.gmra.mxu0 %v1375
        %v1592 = vpop.f32.mrf.mxu0
        %v1593 = vadd.f32 %v1287, %v1592
        %v1594 = vpop.f32.mrf.mxu0
        %1595 = vmatprep.mubr.f32.mxu0 0.0
        %1596 = vmatmul.mubr.f32.gmra.mxu0 %v1378
        %v1597 = vpop.f32.mrf.mxu0
        %v1598 = vadd.f32 %v1287, %v1597
        %v1599 = vpop.f32.mrf.mxu0
        %1600 = vmatprep.mubr.f32.mxu0 0.0
        %1601 = vmatmul.mubr.f32.gmra.mxu0 %v1381
        %v1602 = vpop.f32.mrf.mxu0
        %v1603 = vadd.f32 %v1287, %v1602
        %v1604 = vpop.f32.mrf.mxu0
        %1605 = vmatprep.mubr.f32.mxu0 0.0
        %1606 = vmatmul.mubr.f32.gmra.mxu0 %v1384
        %v1607 = vpop.f32.mrf.mxu0
        %v1608 = vadd.f32 %v1287, %v1607
        %v1609 = vpop.f32.mrf.mxu0
        %1610 = vdwg.mxu0
        %vm1611 = vcmp.eq.s32.totalorder %v575, 0
        %vm1612 = vcmp.eq.s32.totalorder %v576, 0
        %vm1613 = vcmp.eq.s32.totalorder %v577, 0
        %vm1614 = vcmp.eq.s32.totalorder %v578, 0
        %vm1615 = vcmp.eq.s32.totalorder %v579, 0
        %vm1616 = vcmp.eq.s32.totalorder %v580, 0
        %vm1617 = vcmp.eq.s32.totalorder %v581, 0
        %vm1618 = vcmp.eq.s32.totalorder %v582, 0
        %vm1619 = vcmp.eq.s32.totalorder %v583, 0
        %vm1620 = vcmp.eq.s32.totalorder %v584, 0
        %vm1621 = vcmp.eq.s32.totalorder %v585, 0
        %vm1622 = vcmp.eq.s32.totalorder %v586, 0
        %vm1623 = vcmp.eq.s32.totalorder %v587, 0
        %vm1624 = vcmp.eq.s32.totalorder %v588, 0
        %vm1625 = vcmp.eq.s32.totalorder %v589, 0
        %vm1626 = vcmp.eq.s32.totalorder %v590, 0
        %vm1627 = vcmp.eq.s32.totalorder %v591, 0
        %vm1628 = vcmp.eq.s32.totalorder %v592, 0
        %vm1629 = vcmp.eq.s32.totalorder %v593, 0
        %vm1630 = vcmp.eq.s32.totalorder %v594, 0
        %vm1631 = vcmp.eq.s32.totalorder %v595, 0
        %vm1632 = vcmp.eq.s32.totalorder %v596, 0
        %vm1633 = vcmp.eq.s32.totalorder %v597, 0
        %vm1634 = vcmp.eq.s32.totalorder %v598, 0
        %vm1635 = vcmp.eq.s32.totalorder %v599, 0
        %vm1636 = vcmp.eq.s32.totalorder %v600, 0
        %vm1637 = vcmp.eq.s32.totalorder %v601, 0
        %vm1638 = vcmp.eq.s32.totalorder %v602, 0
        %vm1639 = vcmp.eq.s32.totalorder %v603, 0
        %vm1640 = vcmp.eq.s32.totalorder %v604, 0
        %vm1641 = vcmp.eq.s32.totalorder %v605, 0
        %vm1642 = vcmp.eq.s32.totalorder %v606, 0
        %v1643 = vsel %vm1611, 1, 0
        %v1644 = vsel %vm1612, 1, 0
        %v1645 = vsel %vm1613, 1, 0
        %v1646 = vsel %vm1614, 1, 0
        %v1647 = vsel %vm1615, 1, 0
        %v1648 = vsel %vm1616, 1, 0
        %v1649 = vsel %vm1617, 1, 0
        %v1650 = vsel %vm1618, 1, 0
        %v1651 = vsel %vm1619, 1, 0
        %v1652 = vsel %vm1620, 1, 0
        %v1653 = vsel %vm1621, 1, 0
        %v1654 = vsel %vm1622, 1, 0
        %v1655 = vsel %vm1623, 1, 0
        %v1656 = vsel %vm1624, 1, 0
        %v1657 = vsel %vm1625, 1, 0
        %v1658 = vsel %vm1626, 1, 0
        %v1659 = vsel %vm1627, 1, 0
        %v1660 = vsel %vm1628, 1, 0
        %v1661 = vsel %vm1629, 1, 0
        %v1662 = vsel %vm1630, 1, 0
        %v1663 = vsel %vm1631, 1, 0
        %v1664 = vsel %vm1632, 1, 0
        %v1665 = vsel %vm1633, 1, 0
        %v1666 = vsel %vm1634, 1, 0
        %v1667 = vsel %vm1635, 1, 0
        %v1668 = vsel %vm1636, 1, 0
        %v1669 = vsel %vm1637, 1, 0
        %v1670 = vsel %vm1638, 1, 0
        %v1671 = vsel %vm1639, 1, 0
        %v1672 = vsel %vm1640, 1, 0
        %v1673 = vsel %vm1641, 1, 0
        %v1674 = vsel %vm1642, 1, 0
        %1675 = vset.pattern.permute.xlu0 0
        %1676 = vperm.xlu0 %1675, %v1643
        %v1677 = vpop.permute.xlu0 %1676
        %1678 = vset.pattern.permute.xlu0 0
        %1679 = vperm.xlu0 %1678, %v1644
        %v1680 = vpop.permute.xlu0 %1679
        %1681 = vset.pattern.permute.xlu0 0
        %1682 = vperm.xlu0 %1681, %v1645
        %v1683 = vpop.permute.xlu0 %1682
        %1684 = vset.pattern.permute.xlu0 0
        %1685 = vperm.xlu0 %1684, %v1646
        %v1686 = vpop.permute.xlu0 %1685
        %1687 = vset.pattern.permute.xlu0 0
        %1688 = vperm.xlu0 %1687, %v1647
        %v1689 = vpop.permute.xlu0 %1688
        %1690 = vset.pattern.permute.xlu0 0
        %1691 = vperm.xlu0 %1690, %v1648
        %v1692 = vpop.permute.xlu0 %1691
        %1693 = vset.pattern.permute.xlu0 0
        %1694 = vperm.xlu0 %1693, %v1649
        %v1695 = vpop.permute.xlu0 %1694
        %1696 = vset.pattern.permute.xlu0 0
        %1697 = vperm.xlu0 %1696, %v1650
        %v1698 = vpop.permute.xlu0 %1697
        %1699 = vset.pattern.permute.xlu0 0
        %1700 = vperm.xlu0 %1699, %v1651
        %v1701 = vpop.permute.xlu0 %1700
        %1702 = vset.pattern.permute.xlu0 0
        %1703 = vperm.xlu0 %1702, %v1652
        %v1704 = vpop.permute.xlu0 %1703
        %1705 = vset.pattern.permute.xlu0 0
        %1706 = vperm.xlu0 %1705, %v1653
        %v1707 = vpop.permute.xlu0 %1706
        %1708 = vset.pattern.permute.xlu0 0
        %1709 = vperm.xlu0 %1708, %v1654
        %v1710 = vpop.permute.xlu0 %1709
        %1711 = vset.pattern.permute.xlu0 0
        %1712 = vperm.xlu0 %1711, %v1655
        %v1713 = vpop.permute.xlu0 %1712
        %1714 = vset.pattern.permute.xlu0 0
        %1715 = vperm.xlu0 %1714, %v1656
        %v1716 = vpop.permute.xlu0 %1715
        %1717 = vset.pattern.permute.xlu0 0
        %1718 = vperm.xlu0 %1717, %v1657
        %v1719 = vpop.permute.xlu0 %1718
        %1720 = vset.pattern.permute.xlu0 0
        %1721 = vperm.xlu0 %1720, %v1658
        %v1722 = vpop.permute.xlu0 %1721
        %1723 = vset.pattern.permute.xlu0 0
        %1724 = vperm.xlu0 %1723, %v1659
        %v1725 = vpop.permute.xlu0 %1724
        %1726 = vset.pattern.permute.xlu0 0
        %1727 = vperm.xlu0 %1726, %v1660
        %v1728 = vpop.permute.xlu0 %1727
        %1729 = vset.pattern.permute.xlu0 0
        %1730 = vperm.xlu0 %1729, %v1661
        %v1731 = vpop.permute.xlu0 %1730
        %1732 = vset.pattern.permute.xlu0 0
        %1733 = vperm.xlu0 %1732, %v1662
        %v1734 = vpop.permute.xlu0 %1733
        %1735 = vset.pattern.permute.xlu0 0
        %1736 = vperm.xlu0 %1735, %v1663
        %v1737 = vpop.permute.xlu0 %1736
        %1738 = vset.pattern.permute.xlu0 0
        %1739 = vperm.xlu0 %1738, %v1664
        %v1740 = vpop.permute.xlu0 %1739
        %1741 = vset.pattern.permute.xlu0 0
        %1742 = vperm.xlu0 %1741, %v1665
        %v1743 = vpop.permute.xlu0 %1742
        %1744 = vset.pattern.permute.xlu0 0
        %1745 = vperm.xlu0 %1744, %v1666
        %v1746 = vpop.permute.xlu0 %1745
        %1747 = vset.pattern.permute.xlu0 0
        %1748 = vperm.xlu0 %1747, %v1667
        %v1749 = vpop.permute.xlu0 %1748
        %1750 = vset.pattern.permute.xlu0 0
        %1751 = vperm.xlu0 %1750, %v1668
        %v1752 = vpop.permute.xlu0 %1751
        %1753 = vset.pattern.permute.xlu0 0
        %1754 = vperm.xlu0 %1753, %v1669
        %v1755 = vpop.permute.xlu0 %1754
        %1756 = vset.pattern.permute.xlu0 0
        %1757 = vperm.xlu0 %1756, %v1670
        %v1758 = vpop.permute.xlu0 %1757
        %1759 = vset.pattern.permute.xlu0 0
        %1760 = vperm.xlu0 %1759, %v1671
        %v1761 = vpop.permute.xlu0 %1760
        %1762 = vset.pattern.permute.xlu0 0
        %1763 = vperm.xlu0 %1762, %v1672
        %v1764 = vpop.permute.xlu0 %1763
        %1765 = vset.pattern.permute.xlu0 0
        %1766 = vperm.xlu0 %1765, %v1673
        %v1767 = vpop.permute.xlu0 %1766
        %1768 = vset.pattern.permute.xlu0 0
        %1769 = vperm.xlu0 %1768, %v1674
        %v1770 = vpop.permute.xlu0 %1769
        %vm1771 = vcmp.eq.s32.totalorder %v1677, 1
        %vm1772 = vcmp.eq.s32.totalorder %v1680, 1
        %vm1773 = vcmp.eq.s32.totalorder %v1683, 1
        %vm1774 = vcmp.eq.s32.totalorder %v1686, 1
        %vm1775 = vcmp.eq.s32.totalorder %v1689, 1
        %vm1776 = vcmp.eq.s32.totalorder %v1692, 1
        %vm1777 = vcmp.eq.s32.totalorder %v1695, 1
        %vm1778 = vcmp.eq.s32.totalorder %v1698, 1
        %vm1779 = vcmp.eq.s32.totalorder %v1701, 1
        %vm1780 = vcmp.eq.s32.totalorder %v1704, 1
        %vm1781 = vcmp.eq.s32.totalorder %v1707, 1
        %vm1782 = vcmp.eq.s32.totalorder %v1710, 1
        %vm1783 = vcmp.eq.s32.totalorder %v1713, 1
        %vm1784 = vcmp.eq.s32.totalorder %v1716, 1
        %vm1785 = vcmp.eq.s32.totalorder %v1719, 1
        %vm1786 = vcmp.eq.s32.totalorder %v1722, 1
        %vm1787 = vcmp.eq.s32.totalorder %v1725, 1
        %vm1788 = vcmp.eq.s32.totalorder %v1728, 1
        %vm1789 = vcmp.eq.s32.totalorder %v1731, 1
        %vm1790 = vcmp.eq.s32.totalorder %v1734, 1
        %vm1791 = vcmp.eq.s32.totalorder %v1737, 1
        %vm1792 = vcmp.eq.s32.totalorder %v1740, 1
        %vm1793 = vcmp.eq.s32.totalorder %v1743, 1
        %vm1794 = vcmp.eq.s32.totalorder %v1746, 1
        %vm1795 = vcmp.eq.s32.totalorder %v1749, 1
        %vm1796 = vcmp.eq.s32.totalorder %v1752, 1
        %vm1797 = vcmp.eq.s32.totalorder %v1755, 1
        %vm1798 = vcmp.eq.s32.totalorder %v1758, 1
        %vm1799 = vcmp.eq.s32.totalorder %v1761, 1
        %vm1800 = vcmp.eq.s32.totalorder %v1764, 1
        %vm1801 = vcmp.eq.s32.totalorder %v1767, 1
        %vm1802 = vcmp.eq.s32.totalorder %v1770, 1
        %v1803 = vsel %vm1771, %v1453, 0.0
        %v1804 = vsel %vm1772, %v1458, 0.0
        %v1805 = vsel %vm1773, %v1463, 0.0
        %v1806 = vsel %vm1774, %v1468, 0.0
        %v1807 = vsel %vm1775, %v1473, 0.0
        %v1808 = vsel %vm1776, %v1478, 0.0
        %v1809 = vsel %vm1777, %v1483, 0.0
        %v1810 = vsel %vm1778, %v1488, 0.0
        %v1811 = vsel %vm1779, %v1493, 0.0
        %v1812 = vsel %vm1780, %v1498, 0.0
        %v1813 = vsel %vm1781, %v1503, 0.0
        %v1814 = vsel %vm1782, %v1508, 0.0
        %v1815 = vsel %vm1783, %v1513, 0.0
        %v1816 = vsel %vm1784, %v1518, 0.0
        %v1817 = vsel %vm1785, %v1523, 0.0
        %v1818 = vsel %vm1786, %v1528, 0.0
        %v1819 = vsel %vm1787, %v1533, 0.0
        %v1820 = vsel %vm1788, %v1538, 0.0
        %v1821 = vsel %vm1789, %v1543, 0.0
        %v1822 = vsel %vm1790, %v1548, 0.0
        %v1823 = vsel %vm1791, %v1553, 0.0
        %v1824 = vsel %vm1792, %v1558, 0.0
        %v1825 = vsel %vm1793, %v1563, 0.0
        %v1826 = vsel %vm1794, %v1568, 0.0
        %v1827 = vsel %vm1795, %v1573, 0.0
        %v1828 = vsel %vm1796, %v1578, 0.0
        %v1829 = vsel %vm1797, %v1583, 0.0
        %v1830 = vsel %vm1798, %v1588, 0.0
        %v1831 = vsel %vm1799, %v1593, 0.0
        %v1832 = vsel %vm1800, %v1598, 0.0
        %v1833 = vsel %vm1801, %v1603, 0.0
        %v1834 = vsel %vm1802, %v1608, 0.0
        %v1835 = vadd.f32 %v1803, 0.0
        %v1836 = vadd.f32 %v1804, 0.0
        %v1837 = vadd.f32 %v1805, 0.0
        %v1838 = vadd.f32 %v1806, 0.0
        %v1839 = vadd.f32 %v1807, 0.0
        %v1840 = vadd.f32 %v1808, 0.0
        %v1841 = vadd.f32 %v1809, 0.0
        %v1842 = vadd.f32 %v1810, 0.0
        %v1843 = vadd.f32 %v1811, 0.0
        %v1844 = vadd.f32 %v1812, 0.0
        %v1845 = vadd.f32 %v1813, 0.0
        %v1846 = vadd.f32 %v1814, 0.0
        %v1847 = vadd.f32 %v1815, 0.0
        %v1848 = vadd.f32 %v1816, 0.0
        %v1849 = vadd.f32 %v1817, 0.0
        %v1850 = vadd.f32 %v1818, 0.0
        %v1851 = vadd.f32 %v1819, 0.0
        %v1852 = vadd.f32 %v1820, 0.0
        %v1853 = vadd.f32 %v1821, 0.0
        %v1854 = vadd.f32 %v1822, 0.0
        %v1855 = vadd.f32 %v1823, 0.0
        %v1856 = vadd.f32 %v1824, 0.0
        %v1857 = vadd.f32 %v1825, 0.0
        %v1858 = vadd.f32 %v1826, 0.0
        %v1859 = vadd.f32 %v1827, 0.0
        %v1860 = vadd.f32 %v1828, 0.0
        %v1861 = vadd.f32 %v1829, 0.0
        %v1862 = vadd.f32 %v1830, 0.0
        %v1863 = vadd.f32 %v1831, 0.0
        %v1864 = vadd.f32 %v1832, 0.0
        %v1865 = vadd.f32 %v1833, 0.0
        %v1866 = vadd.f32 %v1834, 0.0
        %v1867 = vld [vmem:[%s9] sm:$0x1]
        %v1868 = vld [vmem:[%s10] sm:$0x1]
        %v1870 = vlaneseq
        %v1871 = vshrl.u32 %v1870, 7
        %v1872 = vsub.s32 0, %v1871
        %v1873 = vrot.slane %v1867, %v1872
        %v1875 = vmul.f32 %v644, %v1873
        %v1876 = vmul.f32 %v649, %v1873
        %v1877 = vmul.f32 %v654, %v1873
        %v1878 = vmul.f32 %v659, %v1873
        %v1879 = vmul.f32 %v664, %v1873
        %v1880 = vmul.f32 %v669, %v1873
        %v1881 = vmul.f32 %v674, %v1873
        %v1882 = vmul.f32 %v679, %v1873
        %v1883 = vmul.f32 %v684, %v1873
        %v1884 = vmul.f32 %v689, %v1873
        %v1885 = vmul.f32 %v694, %v1873
        %v1886 = vmul.f32 %v699, %v1873
        %v1887 = vmul.f32 %v704, %v1873
        %v1888 = vmul.f32 %v709, %v1873
        %v1889 = vmul.f32 %v714, %v1873
        %v1890 = vmul.f32 %v719, %v1873
        %v1891 = vmul.f32 %v724, %v1873
        %v1892 = vmul.f32 %v729, %v1873
        %v1893 = vmul.f32 %v734, %v1873
        %v1894 = vmul.f32 %v739, %v1873
        %v1895 = vmul.f32 %v744, %v1873
        %v1896 = vmul.f32 %v749, %v1873
        %v1897 = vmul.f32 %v754, %v1873
        %v1898 = vmul.f32 %v759, %v1873
        %v1899 = vmul.f32 %v764, %v1873
        %v1900 = vmul.f32 %v769, %v1873
        %v1901 = vmul.f32 %v774, %v1873
        %v1902 = vmul.f32 %v779, %v1873
        %v1903 = vmul.f32 %v784, %v1873
        %v1904 = vmul.f32 %v789, %v1873
        %v1905 = vmul.f32 %v794, %v1873
        %v1906 = vmul.f32 %v799, %v1873
        %v1908 = vlaneseq
        %v1909 = vshrl.u32 %v1908, 7
        %v1910 = vsub.s32 0, %v1909
        %v1911 = vrot.slane %v1868, %v1910
        %v1913 = vadd.f32 %v1875, %v1911
        %v1914 = vadd.f32 %v1876, %v1911
        %v1915 = vadd.f32 %v1877, %v1911
        %v1916 = vadd.f32 %v1878, %v1911
        %v1917 = vadd.f32 %v1879, %v1911
        %v1918 = vadd.f32 %v1880, %v1911
        %v1919 = vadd.f32 %v1881, %v1911
        %v1920 = vadd.f32 %v1882, %v1911
        %v1921 = vadd.f32 %v1883, %v1911
        %v1922 = vadd.f32 %v1884, %v1911
        %v1923 = vadd.f32 %v1885, %v1911
        %v1924 = vadd.f32 %v1886, %v1911
        %v1925 = vadd.f32 %v1887, %v1911
        %v1926 = vadd.f32 %v1888, %v1911
        %v1927 = vadd.f32 %v1889, %v1911
        %v1928 = vadd.f32 %v1890, %v1911
        %v1929 = vadd.f32 %v1891, %v1911
        %v1930 = vadd.f32 %v1892, %v1911
        %v1931 = vadd.f32 %v1893, %v1911
        %v1932 = vadd.f32 %v1894, %v1911
        %v1933 = vadd.f32 %v1895, %v1911
        %v1934 = vadd.f32 %v1896, %v1911
        %v1935 = vadd.f32 %v1897, %v1911
        %v1936 = vadd.f32 %v1898, %v1911
        %v1937 = vadd.f32 %v1899, %v1911
        %v1938 = vadd.f32 %v1900, %v1911
        %v1939 = vadd.f32 %v1901, %v1911
        %v1940 = vadd.f32 %v1902, %v1911
        %v1941 = vadd.f32 %v1903, %v1911
        %v1942 = vadd.f32 %v1904, %v1911
        %v1943 = vadd.f32 %v1905, %v1911
        %v1944 = vadd.f32 %v1906, %v1911
        %v1945 = vmax.f32 %v1913, 0.0
        %v1946 = vmax.f32 %v1914, 0.0
        %v1947 = vmax.f32 %v1915, 0.0
        %v1948 = vmax.f32 %v1916, 0.0
        %v1949 = vmax.f32 %v1917, 0.0
        %v1950 = vmax.f32 %v1918, 0.0
        %v1951 = vmax.f32 %v1919, 0.0
        %v1952 = vmax.f32 %v1920, 0.0
        %v1953 = vmax.f32 %v1921, 0.0
        %v1954 = vmax.f32 %v1922, 0.0
        %v1955 = vmax.f32 %v1923, 0.0
        %v1956 = vmax.f32 %v1924, 0.0
        %v1957 = vmax.f32 %v1925, 0.0
        %v1958 = vmax.f32 %v1926, 0.0
        %v1959 = vmax.f32 %v1927, 0.0
        %v1960 = vmax.f32 %v1928, 0.0
        %v1961 = vmax.f32 %v1929, 0.0
        %v1962 = vmax.f32 %v1930, 0.0
        %v1963 = vmax.f32 %v1931, 0.0
        %v1964 = vmax.f32 %v1932, 0.0
        %v1965 = vmax.f32 %v1933, 0.0
        %v1966 = vmax.f32 %v1934, 0.0
        %v1967 = vmax.f32 %v1935, 0.0
        %v1968 = vmax.f32 %v1936, 0.0
        %v1969 = vmax.f32 %v1937, 0.0
        %v1970 = vmax.f32 %v1938, 0.0
        %v1971 = vmax.f32 %v1939, 0.0
        %v1972 = vmax.f32 %v1940, 0.0
        %v1973 = vmax.f32 %v1941, 0.0
        %v1974 = vmax.f32 %v1942, 0.0
        %v1975 = vmax.f32 %v1943, 0.0
        %v1976 = vmax.f32 %v1944, 0.0
        %v1977 = vld [vmem:[%s11] sm:$0xff]
        %v1978 = vld [vmem:[%s11 + $0x8] sm:$0xff]
        %v1979 = vld [vmem:[%s11 + $0x10] sm:$0xff]
        %v1980 = vld [vmem:[%s11 + $0x18] sm:$0xff]
        %v1981 = vld [vmem:[%s12] sm:$0x1]
        %v1983 = vlaneseq
        %v1984 = vshrl.u32 %v1983, 7
        %v1985 = vsub.s32 0, %v1984
        %v1986 = vrot.slane %v1981, %v1985
        %v1989 = vsel %vm920, %v1945, 0
        %v1992 = vsel %vm920, %v1946, 0
        %v1995 = vsel %vm920, %v1947, 0
        %v1998 = vsel %vm920, %v1948, 0
        %v2001 = vsel %vm920, %v1949, 0
        %v2004 = vsel %vm920, %v1950, 0
        %v2007 = vsel %vm920, %v1951, 0
        %v2010 = vsel %vm920, %v1952, 0
        %v2013 = vsel %vm920, %v1953, 0
        %v2016 = vsel %vm920, %v1954, 0
        %v2019 = vsel %vm920, %v1955, 0
        %v2022 = vsel %vm920, %v1956, 0
        %v2025 = vsel %vm920, %v1957, 0
        %v2028 = vsel %vm920, %v1958, 0
        %v2031 = vsel %vm920, %v1959, 0
        %v2034 = vsel %vm920, %v1960, 0
        %v2037 = vsel %vm920, %v1961, 0
        %v2040 = vsel %vm920, %v1962, 0
        %v2043 = vsel %vm920, %v1963, 0
        %v2046 = vsel %vm920, %v1964, 0
        %v2049 = vsel %vm920, %v1965, 0
        %v2052 = vsel %vm920, %v1966, 0
        %v2055 = vsel %vm920, %v1967, 0
        %v2058 = vsel %vm920, %v1968, 0
        %v2061 = vsel %vm920, %v1969, 0
        %v2064 = vsel %vm920, %v1970, 0
        %v2067 = vsel %vm920, %v1971, 0
        %v2070 = vsel %vm920, %v1972, 0
        %v2073 = vsel %vm920, %v1973, 0
        %v2076 = vsel %vm920, %v1974, 0
        %v2079 = vsel %vm920, %v1975, 0
        %v2082 = vsel %vm920, %v1976, 0
        %2084 = vmatprep.subr.mxu0 0.0
        %2085 = vmatpush1.msra.mxu0 0.0
        %2086 = vmatprep.subr.mxu0 0.0
        %2087 = vmatpush1.msra.mxu0 0.0
        %2088 = vmatprep.subr.mxu0 0.0
        %2089 = vmatpush1.msra.mxu0 0.0
        %2090 = vmatprep.subr.mxu0 0.0
        %2091 = vmatpush1.msra.mxu0 0.0
        %2092 = vmatprep.subr.mxu0 0.0
        %2093 = vmatpush1.msra.mxu0 0.0
        %2094 = vmatprep.subr.mxu0 0.0
        %2095 = vmatpush1.msra.mxu0 0.0
        %2096 = vmatprep.subr.mxu0 0.0
        %2097 = vmatpush1.msra.mxu0 0.0
        %2098 = vmatprep.subr.mxu0 0.0
        %2099 = vmatpush1.msra.mxu0 0.0
        %2100 = vmatprep.subr.mxu0 0.0
        %2101 = vmatpush1.msra.mxu0 0.0
        %2102 = vmatprep.subr.mxu0 0.0
        %2103 = vmatpush1.msra.mxu0 0.0
        %2104 = vmatprep.subr.mxu0 0.0
        %2105 = vmatpush1.msra.mxu0 0.0
        %2106 = vmatprep.subr.mxu0 0.0
        %2107 = vmatpush1.msra.mxu0 0.0
        %2108 = vmatprep.subr.mxu0 0.0
        %2109 = vmatpush1.msra.mxu0 %v1980
        %2110 = vmatprep.subr.mxu0 0.0
        %2111 = vmatpush1.msra.mxu0 %v1979
        %2112 = vmatprep.subr.mxu0 0.0
        %2113 = vmatpush1.msra.mxu0 %v1978
        %2114 = vmatprep.subr.mxu0 0.0
        %2115 = vmatpush1.msra.mxu0 %v1977
        %2116 = vmatprep.subr.mxu0 0.0
        %2117 = vmatpush2.msra.mxu0 0.0
        %2118 = vmatprep.subr.mxu0 0.0
        %2119 = vmatpush2.msra.mxu0 0.0
        %2120 = vmatprep.subr.mxu0 0.0
        %2121 = vmatpush2.msra.mxu0 0.0
        %2122 = vmatprep.subr.mxu0 0.0
        %2123 = vmatpush2.msra.mxu0 0.0
        %2124 = vmatprep.subr.mxu0 0.0
        %2125 = vmatpush2.msra.mxu0 0.0
        %2126 = vmatprep.subr.mxu0 0.0
        %2127 = vmatpush2.msra.mxu0 0.0
        %2128 = vmatprep.subr.mxu0 0.0
        %2129 = vmatpush2.msra.mxu0 0.0
        %2130 = vmatprep.subr.mxu0 0.0
        %2131 = vmatpush2.msra.mxu0 0.0
        %2132 = vmatprep.subr.mxu0 0.0
        %2133 = vmatpush2.msra.mxu0 0.0
        %2134 = vmatprep.subr.mxu0 0.0
        %2135 = vmatpush2.msra.mxu0 0.0
        %2136 = vmatprep.subr.mxu0 0.0
        %2137 = vmatpush2.msra.mxu0 0.0
        %2138 = vmatprep.subr.mxu0 0.0
        %2139 = vmatpush2.msra.mxu0 0.0
        %2140 = vmatprep.subr.mxu0 0.0
        %2141 = vmatpush2.msra.mxu0 0.0
        %2142 = vmatprep.subr.mxu0 0.0
        %2143 = vmatpush2.msra.mxu0 0.0
        %2144 = vmatprep.subr.mxu0 0.0
        %2145 = vmatpush2.msra.mxu0 0.0
        %2146 = vmatprep.subr.mxu0 0.0
        %2147 = vmatpush2.msra.mxu0 0.0
        %2148 = vmatprep.mubr.f32.mxu0 0.0
        %2149 = vmatmul.mubr.f32.gmra.mxu0 %v1989
        %v2150 = vpop.f32.mrf.mxu0
        %v2151 = vadd.f32 %v1986, %v2150
        %v2152 = vpop.f32.mrf.mxu0
        %2153 = vmatprep.mubr.f32.mxu0 0.0
        %2154 = vmatmul.mubr.f32.gmra.mxu0 %v1992
        %v2155 = vpop.f32.mrf.mxu0
        %v2156 = vadd.f32 %v1986, %v2155
        %v2157 = vpop.f32.mrf.mxu0
        %2158 = vmatprep.mubr.f32.mxu0 0.0
        %2159 = vmatmul.mubr.f32.gmra.mxu0 %v1995
        %v2160 = vpop.f32.mrf.mxu0
        %v2161 = vadd.f32 %v1986, %v2160
        %v2162 = vpop.f32.mrf.mxu0
        %2163 = vmatprep.mubr.f32.mxu0 0.0
        %2164 = vmatmul.mubr.f32.gmra.mxu0 %v1998
        %v2165 = vpop.f32.mrf.mxu0
        %v2166 = vadd.f32 %v1986, %v2165
        %v2167 = vpop.f32.mrf.mxu0
        %2168 = vmatprep.mubr.f32.mxu0 0.0
        %2169 = vmatmul.mubr.f32.gmra.mxu0 %v2001
        %v2170 = vpop.f32.mrf.mxu0
        %v2171 = vadd.f32 %v1986, %v2170
        %v2172 = vpop.f32.mrf.mxu0
        %2173 = vmatprep.mubr.f32.mxu0 0.0
        %2174 = vmatmul.mubr.f32.gmra.mxu0 %v2004
        %v2175 = vpop.f32.mrf.mxu0
        %v2176 = vadd.f32 %v1986, %v2175
        %v2177 = vpop.f32.mrf.mxu0
        %2178 = vmatprep.mubr.f32.mxu0 0.0
        %2179 = vmatmul.mubr.f32.gmra.mxu0 %v2007
        %v2180 = vpop.f32.mrf.mxu0
        %v2181 = vadd.f32 %v1986, %v2180
        %v2182 = vpop.f32.mrf.mxu0
        %2183 = vmatprep.mubr.f32.mxu0 0.0
        %2184 = vmatmul.mubr.f32.gmra.mxu0 %v2010
        %v2185 = vpop.f32.mrf.mxu0
        %v2186 = vadd.f32 %v1986, %v2185
        %v2187 = vpop.f32.mrf.mxu0
        %2188 = vmatprep.mubr.f32.mxu0 0.0
        %2189 = vmatmul.mubr.f32.gmra.mxu0 %v2013
        %v2190 = vpop.f32.mrf.mxu0
        %v2191 = vadd.f32 %v1986, %v2190
        %v2192 = vpop.f32.mrf.mxu0
        %2193 = vmatprep.mubr.f32.mxu0 0.0
        %2194 = vmatmul.mubr.f32.gmra.mxu0 %v2016
        %v2195 = vpop.f32.mrf.mxu0
        %v2196 = vadd.f32 %v1986, %v2195
        %v2197 = vpop.f32.mrf.mxu0
        %2198 = vmatprep.mubr.f32.mxu0 0.0
        %2199 = vmatmul.mubr.f32.gmra.mxu0 %v2019
        %v2200 = vpop.f32.mrf.mxu0
        %v2201 = vadd.f32 %v1986, %v2200
        %v2202 = vpop.f32.mrf.mxu0
        %2203 = vmatprep.mubr.f32.mxu0 0.0
        %2204 = vmatmul.mubr.f32.gmra.mxu0 %v2022
        %v2205 = vpop.f32.mrf.mxu0
        %v2206 = vadd.f32 %v1986, %v2205
        %v2207 = vpop.f32.mrf.mxu0
        %2208 = vmatprep.mubr.f32.mxu0 0.0
        %2209 = vmatmul.mubr.f32.gmra.mxu0 %v2025
        %v2210 = vpop.f32.mrf.mxu0
        %v2211 = vadd.f32 %v1986, %v2210
        %v2212 = vpop.f32.mrf.mxu0
        %2213 = vmatprep.mubr.f32.mxu0 0.0
        %2214 = vmatmul.mubr.f32.gmra.mxu0 %v2028
        %v2215 = vpop.f32.mrf.mxu0
        %v2216 = vadd.f32 %v1986, %v2215
        %v2217 = vpop.f32.mrf.mxu0
        %2218 = vmatprep.mubr.f32.mxu0 0.0
        %2219 = vmatmul.mubr.f32.gmra.mxu0 %v2031
        %v2220 = vpop.f32.mrf.mxu0
        %v2221 = vadd.f32 %v1986, %v2220
        %v2222 = vpop.f32.mrf.mxu0
        %2223 = vmatprep.mubr.f32.mxu0 0.0
        %2224 = vmatmul.mubr.f32.gmra.mxu0 %v2034
        %v2225 = vpop.f32.mrf.mxu0
        %v2226 = vadd.f32 %v1986, %v2225
        %v2227 = vpop.f32.mrf.mxu0
        %2228 = vmatprep.mubr.f32.mxu0 0.0
        %2229 = vmatmul.mubr.f32.gmra.mxu0 %v2037
        %v2230 = vpop.f32.mrf.mxu0
        %v2231 = vadd.f32 %v1986, %v2230
        %v2232 = vpop.f32.mrf.mxu0
        %2233 = vmatprep.mubr.f32.mxu0 0.0
        %2234 = vmatmul.mubr.f32.gmra.mxu0 %v2040
        %v2235 = vpop.f32.mrf.mxu0
        %v2236 = vadd.f32 %v1986, %v2235
        %v2237 = vpop.f32.mrf.mxu0
        %2238 = vmatprep.mubr.f32.mxu0 0.0
        %2239 = vmatmul.mubr.f32.gmra.mxu0 %v2043
        %v2240 = vpop.f32.mrf.mxu0
        %v2241 = vadd.f32 %v1986, %v2240
        %v2242 = vpop.f32.mrf.mxu0
        %2243 = vmatprep.mubr.f32.mxu0 0.0
        %2244 = vmatmul.mubr.f32.gmra.mxu0 %v2046
        %v2245 = vpop.f32.mrf.mxu0
        %v2246 = vadd.f32 %v1986, %v2245
        %v2247 = vpop.f32.mrf.mxu0
        %2248 = vmatprep.mubr.f32.mxu0 0.0
        %2249 = vmatmul.mubr.f32.gmra.mxu0 %v2049
        %v2250 = vpop.f32.mrf.mxu0
        %v2251 = vadd.f32 %v1986, %v2250
        %v2252 = vpop.f32.mrf.mxu0
        %2253 = vmatprep.mubr.f32.mxu0 0.0
        %2254 = vmatmul.mubr.f32.gmra.mxu0 %v2052
        %v2255 = vpop.f32.mrf.mxu0
        %v2256 = vadd.f32 %v1986, %v2255
        %v2257 = vpop.f32.mrf.mxu0
        %2258 = vmatprep.mubr.f32.mxu0 0.0
        %2259 = vmatmul.mubr.f32.gmra.mxu0 %v2055
        %v2260 = vpop.f32.mrf.mxu0
        %v2261 = vadd.f32 %v1986, %v2260
        %v2262 = vpop.f32.mrf.mxu0
        %2263 = vmatprep.mubr.f32.mxu0 0.0
        %2264 = vmatmul.mubr.f32.gmra.mxu0 %v2058
        %v2265 = vpop.f32.mrf.mxu0
        %v2266 = vadd.f32 %v1986, %v2265
        %v2267 = vpop.f32.mrf.mxu0
        %2268 = vmatprep.mubr.f32.mxu0 0.0
        %2269 = vmatmul.mubr.f32.gmra.mxu0 %v2061
        %v2270 = vpop.f32.mrf.mxu0
        %v2271 = vadd.f32 %v1986, %v2270
        %v2272 = vpop.f32.mrf.mxu0
        %2273 = vmatprep.mubr.f32.mxu0 0.0
        %2274 = vmatmul.mubr.f32.gmra.mxu0 %v2064
        %v2275 = vpop.f32.mrf.mxu0
        %v2276 = vadd.f32 %v1986, %v2275
        %v2277 = vpop.f32.mrf.mxu0
        %2278 = vmatprep.mubr.f32.mxu0 0.0
        %2279 = vmatmul.mubr.f32.gmra.mxu0 %v2067
        %v2280 = vpop.f32.mrf.mxu0
        %v2281 = vadd.f32 %v1986, %v2280
        %v2282 = vpop.f32.mrf.mxu0
        %2283 = vmatprep.mubr.f32.mxu0 0.0
        %2284 = vmatmul.mubr.f32.gmra.mxu0 %v2070
        %v2285 = vpop.f32.mrf.mxu0
        %v2286 = vadd.f32 %v1986, %v2285
        %v2287 = vpop.f32.mrf.mxu0
        %2288 = vmatprep.mubr.f32.mxu0 0.0
        %2289 = vmatmul.mubr.f32.gmra.mxu0 %v2073
        %v2290 = vpop.f32.mrf.mxu0
        %v2291 = vadd.f32 %v1986, %v2290
        %v2292 = vpop.f32.mrf.mxu0
        %2293 = vmatprep.mubr.f32.mxu0 0.0
        %2294 = vmatmul.mubr.f32.gmra.mxu0 %v2076
        %v2295 = vpop.f32.mrf.mxu0
        %v2296 = vadd.f32 %v1986, %v2295
        %v2297 = vpop.f32.mrf.mxu0
        %2298 = vmatprep.mubr.f32.mxu0 0.0
        %2299 = vmatmul.mubr.f32.gmra.mxu0 %v2079
        %v2300 = vpop.f32.mrf.mxu0
        %v2301 = vadd.f32 %v1986, %v2300
        %v2302 = vpop.f32.mrf.mxu0
        %2303 = vmatprep.mubr.f32.mxu0 0.0
        %2304 = vmatmul.mubr.f32.gmra.mxu0 %v2082
        %v2305 = vpop.f32.mrf.mxu0
        %v2306 = vadd.f32 %v1986, %v2305
        %v2307 = vpop.f32.mrf.mxu0
        %2308 = vdwg.mxu0
        %v2309 = vmax.f32 %v2151, 0.0
        %v2310 = vmax.f32 %v2156, 0.0
        %v2311 = vmax.f32 %v2161, 0.0
        %v2312 = vmax.f32 %v2166, 0.0
        %v2313 = vmax.f32 %v2171, 0.0
        %v2314 = vmax.f32 %v2176, 0.0
        %v2315 = vmax.f32 %v2181, 0.0
        %v2316 = vmax.f32 %v2186, 0.0
        %v2317 = vmax.f32 %v2191, 0.0
        %v2318 = vmax.f32 %v2196, 0.0
        %v2319 = vmax.f32 %v2201, 0.0
        %v2320 = vmax.f32 %v2206, 0.0
        %v2321 = vmax.f32 %v2211, 0.0
        %v2322 = vmax.f32 %v2216, 0.0
        %v2323 = vmax.f32 %v2221, 0.0
        %v2324 = vmax.f32 %v2226, 0.0
        %v2325 = vmax.f32 %v2231, 0.0
        %v2326 = vmax.f32 %v2236, 0.0
        %v2327 = vmax.f32 %v2241, 0.0
        %v2328 = vmax.f32 %v2246, 0.0
        %v2329 = vmax.f32 %v2251, 0.0
        %v2330 = vmax.f32 %v2256, 0.0
        %v2331 = vmax.f32 %v2261, 0.0
        %v2332 = vmax.f32 %v2266, 0.0
        %v2333 = vmax.f32 %v2271, 0.0
        %v2334 = vmax.f32 %v2276, 0.0
        %v2335 = vmax.f32 %v2281, 0.0
        %v2336 = vmax.f32 %v2286, 0.0
        %v2337 = vmax.f32 %v2291, 0.0
        %v2338 = vmax.f32 %v2296, 0.0
        %v2339 = vmax.f32 %v2301, 0.0
        %v2340 = vmax.f32 %v2306, 0.0
        %v2341 = vld [vmem:[%s13] sm:$0xff]
        %v2342 = vld [vmem:[%s13 + $0x8] sm:$0xff]
        %v2343 = vld [vmem:[%s13 + $0x10] sm:$0xff]
        %v2344 = vld [vmem:[%s13 + $0x18] sm:$0xff]
        %v2345 = vld [vmem:[%s13 + $0x20] sm:$0xff]
        %v2346 = vld [vmem:[%s13 + $0x28] sm:$0xff]
        %v2347 = vld [vmem:[%s13 + $0x30] sm:$0xff]
        %v2348 = vld [vmem:[%s13 + $0x38] sm:$0xff]
        %v2349 = vld [vmem:[%s14] sm:$0x1]
        %v2351 = vlaneseq
        %v2352 = vshrl.u32 %v2351, 7
        %v2353 = vsub.s32 0, %v2352
        %v2354 = vrot.slane %v2349, %v2353
        %v2357 = vsel %vm1289, %v2309, 0
        %v2360 = vsel %vm1289, %v2310, 0
        %v2363 = vsel %vm1289, %v2311, 0
        %v2366 = vsel %vm1289, %v2312, 0
        %v2369 = vsel %vm1289, %v2313, 0
        %v2372 = vsel %vm1289, %v2314, 0
        %v2375 = vsel %vm1289, %v2315, 0
        %v2378 = vsel %vm1289, %v2316, 0
        %v2381 = vsel %vm1289, %v2317, 0
        %v2384 = vsel %vm1289, %v2318, 0
        %v2387 = vsel %vm1289, %v2319, 0
        %v2390 = vsel %vm1289, %v2320, 0
        %v2393 = vsel %vm1289, %v2321, 0
        %v2396 = vsel %vm1289, %v2322, 0
        %v2399 = vsel %vm1289, %v2323, 0
        %v2402 = vsel %vm1289, %v2324, 0
        %v2405 = vsel %vm1289, %v2325, 0
        %v2408 = vsel %vm1289, %v2326, 0
        %v2411 = vsel %vm1289, %v2327, 0
        %v2414 = vsel %vm1289, %v2328, 0
        %v2417 = vsel %vm1289, %v2329, 0
        %v2420 = vsel %vm1289, %v2330, 0
        %v2423 = vsel %vm1289, %v2331, 0
        %v2426 = vsel %vm1289, %v2332, 0
        %v2429 = vsel %vm1289, %v2333, 0
        %v2432 = vsel %vm1289, %v2334, 0
        %v2435 = vsel %vm1289, %v2335, 0
        %v2438 = vsel %vm1289, %v2336, 0
        %v2441 = vsel %vm1289, %v2337, 0
        %v2444 = vsel %vm1289, %v2338, 0
        %v2447 = vsel %vm1289, %v2339, 0
        %v2450 = vsel %vm1289, %v2340, 0
        %2452 = vmatprep.subr.mxu0 0.0
        %2453 = vmatpush1.msra.mxu0 0.0
        %2454 = vmatprep.subr.mxu0 0.0
        %2455 = vmatpush1.msra.mxu0 0.0
        %2456 = vmatprep.subr.mxu0 0.0
        %2457 = vmatpush1.msra.mxu0 0.0
        %2458 = vmatprep.subr.mxu0 0.0
        %2459 = vmatpush1.msra.mxu0 0.0
        %2460 = vmatprep.subr.mxu0 0.0
        %2461 = vmatpush1.msra.mxu0 0.0
        %2462 = vmatprep.subr.mxu0 0.0
        %2463 = vmatpush1.msra.mxu0 0.0
        %2464 = vmatprep.subr.mxu0 0.0
        %2465 = vmatpush1.msra.mxu0 0.0
        %2466 = vmatprep.subr.mxu0 0.0
        %2467 = vmatpush1.msra.mxu0 0.0
        %2468 = vmatprep.subr.mxu0 0.0
        %2469 = vmatpush1.msra.mxu0 %v2348
        %2470 = vmatprep.subr.mxu0 0.0
        %2471 = vmatpush1.msra.mxu0 %v2347
        %2472 = vmatprep.subr.mxu0 0.0
        %2473 = vmatpush1.msra.mxu0 %v2346
        %2474 = vmatprep.subr.mxu0 0.0
        %2475 = vmatpush1.msra.mxu0 %v2345
        %2476 = vmatprep.subr.mxu0 0.0
        %2477 = vmatpush1.msra.mxu0 %v2344
        %2478 = vmatprep.subr.mxu0 0.0
        %2479 = vmatpush1.msra.mxu0 %v2343
        %2480 = vmatprep.subr.mxu0 0.0
        %2481 = vmatpush1.msra.mxu0 %v2342
        %2482 = vmatprep.subr.mxu0 0.0
        %2483 = vmatpush1.msra.mxu0 %v2341
        %2484 = vmatprep.subr.mxu0 0.0
        %2485 = vmatpush2.msra.mxu0 0.0
        %2486 = vmatprep.subr.mxu0 0.0
        %2487 = vmatpush2.msra.mxu0 0.0
        %2488 = vmatprep.subr.mxu0 0.0
        %2489 = vmatpush2.msra.mxu0 0.0
        %2490 = vmatprep.subr.mxu0 0.0
        %2491 = vmatpush2.msra.mxu0 0.0
        %2492 = vmatprep.subr.mxu0 0.0
        %2493 = vmatpush2.msra.mxu0 0.0
        %2494 = vmatprep.subr.mxu0 0.0
        %2495 = vmatpush2.msra.mxu0 0.0
        %2496 = vmatprep.subr.mxu0 0.0
        %2497 = vmatpush2.msra.mxu0 0.0
        %2498 = vmatprep.subr.mxu0 0.0
        %2499 = vmatpush2.msra.mxu0 0.0
        %2500 = vmatprep.subr.mxu0 0.0
        %2501 = vmatpush2.msra.mxu0 0.0
        %2502 = vmatprep.subr.mxu0 0.0
        %2503 = vmatpush2.msra.mxu0 0.0
        %2504 = vmatprep.subr.mxu0 0.0
        %2505 = vmatpush2.msra.mxu0 0.0
        %2506 = vmatprep.subr.mxu0 0.0
        %2507 = vmatpush2.msra.mxu0 0.0
        %2508 = vmatprep.subr.mxu0 0.0
        %2509 = vmatpush2.msra.mxu0 0.0
        %2510 = vmatprep.subr.mxu0 0.0
        %2511 = vmatpush2.msra.mxu0 0.0
        %2512 = vmatprep.subr.mxu0 0.0
        %2513 = vmatpush2.msra.mxu0 0.0
        %2514 = vmatprep.subr.mxu0 0.0
        %2515 = vmatpush2.msra.mxu0 0.0
        %2516 = vmatprep.mubr.f32.mxu0 0.0
        %2517 = vmatmul.mubr.f32.gmra.mxu0 %v2357
        %v2518 = vpop.f32.mrf.mxu0
        %v2519 = vadd.f32 %v2354, %v2518
        %v2520 = vpop.f32.mrf.mxu0
        %2521 = vmatprep.mubr.f32.mxu0 0.0
        %2522 = vmatmul.mubr.f32.gmra.mxu0 %v2360
        %v2523 = vpop.f32.mrf.mxu0
        %v2524 = vadd.f32 %v2354, %v2523
        %v2525 = vpop.f32.mrf.mxu0
        %2526 = vmatprep.mubr.f32.mxu0 0.0
        %2527 = vmatmul.mubr.f32.gmra.mxu0 %v2363
        %v2528 = vpop.f32.mrf.mxu0
        %v2529 = vadd.f32 %v2354, %v2528
        %v2530 = vpop.f32.mrf.mxu0
        %2531 = vmatprep.mubr.f32.mxu0 0.0
        %2532 = vmatmul.mubr.f32.gmra.mxu0 %v2366
        %v2533 = vpop.f32.mrf.mxu0
        %v2534 = vadd.f32 %v2354, %v2533
        %v2535 = vpop.f32.mrf.mxu0
        %2536 = vmatprep.mubr.f32.mxu0 0.0
        %2537 = vmatmul.mubr.f32.gmra.mxu0 %v2369
        %v2538 = vpop.f32.mrf.mxu0
        %v2539 = vadd.f32 %v2354, %v2538
        %v2540 = vpop.f32.mrf.mxu0
        %2541 = vmatprep.mubr.f32.mxu0 0.0
        %2542 = vmatmul.mubr.f32.gmra.mxu0 %v2372
        %v2543 = vpop.f32.mrf.mxu0
        %v2544 = vadd.f32 %v2354, %v2543
        %v2545 = vpop.f32.mrf.mxu0
        %2546 = vmatprep.mubr.f32.mxu0 0.0
        %2547 = vmatmul.mubr.f32.gmra.mxu0 %v2375
        %v2548 = vpop.f32.mrf.mxu0
        %v2549 = vadd.f32 %v2354, %v2548
        %v2550 = vpop.f32.mrf.mxu0
        %2551 = vmatprep.mubr.f32.mxu0 0.0
        %2552 = vmatmul.mubr.f32.gmra.mxu0 %v2378
        %v2553 = vpop.f32.mrf.mxu0
        %v2554 = vadd.f32 %v2354, %v2553
        %v2555 = vpop.f32.mrf.mxu0
        %2556 = vmatprep.mubr.f32.mxu0 0.0
        %2557 = vmatmul.mubr.f32.gmra.mxu0 %v2381
        %v2558 = vpop.f32.mrf.mxu0
        %v2559 = vadd.f32 %v2354, %v2558
        %v2560 = vpop.f32.mrf.mxu0
        %2561 = vmatprep.mubr.f32.mxu0 0.0
        %2562 = vmatmul.mubr.f32.gmra.mxu0 %v2384
        %v2563 = vpop.f32.mrf.mxu0
        %v2564 = vadd.f32 %v2354, %v2563
        %v2565 = vpop.f32.mrf.mxu0
        %2566 = vmatprep.mubr.f32.mxu0 0.0
        %2567 = vmatmul.mubr.f32.gmra.mxu0 %v2387
        %v2568 = vpop.f32.mrf.mxu0
        %v2569 = vadd.f32 %v2354, %v2568
        %v2570 = vpop.f32.mrf.mxu0
        %2571 = vmatprep.mubr.f32.mxu0 0.0
        %2572 = vmatmul.mubr.f32.gmra.mxu0 %v2390
        %v2573 = vpop.f32.mrf.mxu0
        %v2574 = vadd.f32 %v2354, %v2573
        %v2575 = vpop.f32.mrf.mxu0
        %2576 = vmatprep.mubr.f32.mxu0 0.0
        %2577 = vmatmul.mubr.f32.gmra.mxu0 %v2393
        %v2578 = vpop.f32.mrf.mxu0
        %v2579 = vadd.f32 %v2354, %v2578
        %v2580 = vpop.f32.mrf.mxu0
        %2581 = vmatprep.mubr.f32.mxu0 0.0
        %2582 = vmatmul.mubr.f32.gmra.mxu0 %v2396
        %v2583 = vpop.f32.mrf.mxu0
        %v2584 = vadd.f32 %v2354, %v2583
        %v2585 = vpop.f32.mrf.mxu0
        %2586 = vmatprep.mubr.f32.mxu0 0.0
        %2587 = vmatmul.mubr.f32.gmra.mxu0 %v2399
        %v2588 = vpop.f32.mrf.mxu0
        %v2589 = vadd.f32 %v2354, %v2588
        %v2590 = vpop.f32.mrf.mxu0
        %2591 = vmatprep.mubr.f32.mxu0 0.0
        %2592 = vmatmul.mubr.f32.gmra.mxu0 %v2402
        %v2593 = vpop.f32.mrf.mxu0
        %v2594 = vadd.f32 %v2354, %v2593
        %v2595 = vpop.f32.mrf.mxu0
        %2596 = vmatprep.mubr.f32.mxu0 0.0
        %2597 = vmatmul.mubr.f32.gmra.mxu0 %v2405
        %v2598 = vpop.f32.mrf.mxu0
        %v2599 = vadd.f32 %v2354, %v2598
        %v2600 = vpop.f32.mrf.mxu0
        %2601 = vmatprep.mubr.f32.mxu0 0.0
        %2602 = vmatmul.mubr.f32.gmra.mxu0 %v2408
        %v2603 = vpop.f32.mrf.mxu0
        %v2604 = vadd.f32 %v2354, %v2603
        %v2605 = vpop.f32.mrf.mxu0
        %2606 = vmatprep.mubr.f32.mxu0 0.0
        %2607 = vmatmul.mubr.f32.gmra.mxu0 %v2411
        %v2608 = vpop.f32.mrf.mxu0
        %v2609 = vadd.f32 %v2354, %v2608
        %v2610 = vpop.f32.mrf.mxu0
        %2611 = vmatprep.mubr.f32.mxu0 0.0
        %2612 = vmatmul.mubr.f32.gmra.mxu0 %v2414
        %v2613 = vpop.f32.mrf.mxu0
        %v2614 = vadd.f32 %v2354, %v2613
        %v2615 = vpop.f32.mrf.mxu0
        %2616 = vmatprep.mubr.f32.mxu0 0.0
        %2617 = vmatmul.mubr.f32.gmra.mxu0 %v2417
        %v2618 = vpop.f32.mrf.mxu0
        %v2619 = vadd.f32 %v2354, %v2618
        %v2620 = vpop.f32.mrf.mxu0
        %2621 = vmatprep.mubr.f32.mxu0 0.0
        %2622 = vmatmul.mubr.f32.gmra.mxu0 %v2420
        %v2623 = vpop.f32.mrf.mxu0
        %v2624 = vadd.f32 %v2354, %v2623
        %v2625 = vpop.f32.mrf.mxu0
        %2626 = vmatprep.mubr.f32.mxu0 0.0
        %2627 = vmatmul.mubr.f32.gmra.mxu0 %v2423
        %v2628 = vpop.f32.mrf.mxu0
        %v2629 = vadd.f32 %v2354, %v2628
        %v2630 = vpop.f32.mrf.mxu0
        %2631 = vmatprep.mubr.f32.mxu0 0.0
        %2632 = vmatmul.mubr.f32.gmra.mxu0 %v2426
        %v2633 = vpop.f32.mrf.mxu0
        %v2634 = vadd.f32 %v2354, %v2633
        %v2635 = vpop.f32.mrf.mxu0
        %2636 = vmatprep.mubr.f32.mxu0 0.0
        %2637 = vmatmul.mubr.f32.gmra.mxu0 %v2429
        %v2638 = vpop.f32.mrf.mxu0
        %v2639 = vadd.f32 %v2354, %v2638
        %v2640 = vpop.f32.mrf.mxu0
        %2641 = vmatprep.mubr.f32.mxu0 0.0
        %2642 = vmatmul.mubr.f32.gmra.mxu0 %v2432
        %v2643 = vpop.f32.mrf.mxu0
        %v2644 = vadd.f32 %v2354, %v2643
        %v2645 = vpop.f32.mrf.mxu0
        %2646 = vmatprep.mubr.f32.mxu0 0.0
        %2647 = vmatmul.mubr.f32.gmra.mxu0 %v2435
        %v2648 = vpop.f32.mrf.mxu0
        %v2649 = vadd.f32 %v2354, %v2648
        %v2650 = vpop.f32.mrf.mxu0
        %2651 = vmatprep.mubr.f32.mxu0 0.0
        %2652 = vmatmul.mubr.f32.gmra.mxu0 %v2438
        %v2653 = vpop.f32.mrf.mxu0
        %v2654 = vadd.f32 %v2354, %v2653
        %v2655 = vpop.f32.mrf.mxu0
        %2656 = vmatprep.mubr.f32.mxu0 0.0
        %2657 = vmatmul.mubr.f32.gmra.mxu0 %v2441
        %v2658 = vpop.f32.mrf.mxu0
        %v2659 = vadd.f32 %v2354, %v2658
        %v2660 = vpop.f32.mrf.mxu0
        %2661 = vmatprep.mubr.f32.mxu0 0.0
        %2662 = vmatmul.mubr.f32.gmra.mxu0 %v2444
        %v2663 = vpop.f32.mrf.mxu0
        %v2664 = vadd.f32 %v2354, %v2663
        %v2665 = vpop.f32.mrf.mxu0
        %2666 = vmatprep.mubr.f32.mxu0 0.0
        %2667 = vmatmul.mubr.f32.gmra.mxu0 %v2447
        %v2668 = vpop.f32.mrf.mxu0
        %v2669 = vadd.f32 %v2354, %v2668
        %v2670 = vpop.f32.mrf.mxu0
        %2671 = vmatprep.mubr.f32.mxu0 0.0
        %2672 = vmatmul.mubr.f32.gmra.mxu0 %v2450
        %v2673 = vpop.f32.mrf.mxu0
        %v2674 = vadd.f32 %v2354, %v2673
        %v2675 = vpop.f32.mrf.mxu0
        %2676 = vdwg.mxu0
        %vm2677 = vcmp.eq.s32.totalorder %v575, 1
        %vm2678 = vcmp.eq.s32.totalorder %v576, 1
        %vm2679 = vcmp.eq.s32.totalorder %v577, 1
        %vm2680 = vcmp.eq.s32.totalorder %v578, 1
        %vm2681 = vcmp.eq.s32.totalorder %v579, 1
        %vm2682 = vcmp.eq.s32.totalorder %v580, 1
        %vm2683 = vcmp.eq.s32.totalorder %v581, 1
        %vm2684 = vcmp.eq.s32.totalorder %v582, 1
        %vm2685 = vcmp.eq.s32.totalorder %v583, 1
        %vm2686 = vcmp.eq.s32.totalorder %v584, 1
        %vm2687 = vcmp.eq.s32.totalorder %v585, 1
        %vm2688 = vcmp.eq.s32.totalorder %v586, 1
        %vm2689 = vcmp.eq.s32.totalorder %v587, 1
        %vm2690 = vcmp.eq.s32.totalorder %v588, 1
        %vm2691 = vcmp.eq.s32.totalorder %v589, 1
        %vm2692 = vcmp.eq.s32.totalorder %v590, 1
        %vm2693 = vcmp.eq.s32.totalorder %v591, 1
        %vm2694 = vcmp.eq.s32.totalorder %v592, 1
        %vm2695 = vcmp.eq.s32.totalorder %v593, 1
        %vm2696 = vcmp.eq.s32.totalorder %v594, 1
        %vm2697 = vcmp.eq.s32.totalorder %v595, 1
        %vm2698 = vcmp.eq.s32.totalorder %v596, 1
        %vm2699 = vcmp.eq.s32.totalorder %v597, 1
        %vm2700 = vcmp.eq.s32.totalorder %v598, 1
        %vm2701 = vcmp.eq.s32.totalorder %v599, 1
        %vm2702 = vcmp.eq.s32.totalorder %v600, 1
        %vm2703 = vcmp.eq.s32.totalorder %v601, 1
        %vm2704 = vcmp.eq.s32.totalorder %v602, 1
        %vm2705 = vcmp.eq.s32.totalorder %v603, 1
        %vm2706 = vcmp.eq.s32.totalorder %v604, 1
        %vm2707 = vcmp.eq.s32.totalorder %v605, 1
        %vm2708 = vcmp.eq.s32.totalorder %v606, 1
        %v2709 = vsel %vm2677, 1, 0
        %v2710 = vsel %vm2678, 1, 0
        %v2711 = vsel %vm2679, 1, 0
        %v2712 = vsel %vm2680, 1, 0
        %v2713 = vsel %vm2681, 1, 0
        %v2714 = vsel %vm2682, 1, 0
        %v2715 = vsel %vm2683, 1, 0
        %v2716 = vsel %vm2684, 1, 0
        %v2717 = vsel %vm2685, 1, 0
        %v2718 = vsel %vm2686, 1, 0
        %v2719 = vsel %vm2687, 1, 0
        %v2720 = vsel %vm2688, 1, 0
        %v2721 = vsel %vm2689, 1, 0
        %v2722 = vsel %vm2690, 1, 0
        %v2723 = vsel %vm2691, 1, 0
        %v2724 = vsel %vm2692, 1, 0
        %v2725 = vsel %vm2693, 1, 0
        %v2726 = vsel %vm2694, 1, 0
        %v2727 = vsel %vm2695, 1, 0
        %v2728 = vsel %vm2696, 1, 0
        %v2729 = vsel %vm2697, 1, 0
        %v2730 = vsel %vm2698, 1, 0
        %v2731 = vsel %vm2699, 1, 0
        %v2732 = vsel %vm2700, 1, 0
        %v2733 = vsel %vm2701, 1, 0
        %v2734 = vsel %vm2702, 1, 0
        %v2735 = vsel %vm2703, 1, 0
        %v2736 = vsel %vm2704, 1, 0
        %v2737 = vsel %vm2705, 1, 0
        %v2738 = vsel %vm2706, 1, 0
        %v2739 = vsel %vm2707, 1, 0
        %v2740 = vsel %vm2708, 1, 0
        %2741 = vset.pattern.permute.xlu0 0
        %2742 = vperm.xlu0 %2741, %v2709
        %v2743 = vpop.permute.xlu0 %2742
        %2744 = vset.pattern.permute.xlu0 0
        %2745 = vperm.xlu0 %2744, %v2710
        %v2746 = vpop.permute.xlu0 %2745
        %2747 = vset.pattern.permute.xlu0 0
        %2748 = vperm.xlu0 %2747, %v2711
        %v2749 = vpop.permute.xlu0 %2748
        %2750 = vset.pattern.permute.xlu0 0
        %2751 = vperm.xlu0 %2750, %v2712
        %v2752 = vpop.permute.xlu0 %2751
        %2753 = vset.pattern.permute.xlu0 0
        %2754 = vperm.xlu0 %2753, %v2713
        %v2755 = vpop.permute.xlu0 %2754
        %2756 = vset.pattern.permute.xlu0 0
        %2757 = vperm.xlu0 %2756, %v2714
        %v2758 = vpop.permute.xlu0 %2757
        %2759 = vset.pattern.permute.xlu0 0
        %2760 = vperm.xlu0 %2759, %v2715
        %v2761 = vpop.permute.xlu0 %2760
        %2762 = vset.pattern.permute.xlu0 0
        %2763 = vperm.xlu0 %2762, %v2716
        %v2764 = vpop.permute.xlu0 %2763
        %2765 = vset.pattern.permute.xlu0 0
        %2766 = vperm.xlu0 %2765, %v2717
        %v2767 = vpop.permute.xlu0 %2766
        %2768 = vset.pattern.permute.xlu0 0
        %2769 = vperm.xlu0 %2768, %v2718
        %v2770 = vpop.permute.xlu0 %2769
        %2771 = vset.pattern.permute.xlu0 0
        %2772 = vperm.xlu0 %2771, %v2719
        %v2773 = vpop.permute.xlu0 %2772
        %2774 = vset.pattern.permute.xlu0 0
        %2775 = vperm.xlu0 %2774, %v2720
        %v2776 = vpop.permute.xlu0 %2775
        %2777 = vset.pattern.permute.xlu0 0
        %2778 = vperm.xlu0 %2777, %v2721
        %v2779 = vpop.permute.xlu0 %2778
        %2780 = vset.pattern.permute.xlu0 0
        %2781 = vperm.xlu0 %2780, %v2722
        %v2782 = vpop.permute.xlu0 %2781
        %2783 = vset.pattern.permute.xlu0 0
        %2784 = vperm.xlu0 %2783, %v2723
        %v2785 = vpop.permute.xlu0 %2784
        %2786 = vset.pattern.permute.xlu0 0
        %2787 = vperm.xlu0 %2786, %v2724
        %v2788 = vpop.permute.xlu0 %2787
        %2789 = vset.pattern.permute.xlu0 0
        %2790 = vperm.xlu0 %2789, %v2725
        %v2791 = vpop.permute.xlu0 %2790
        %2792 = vset.pattern.permute.xlu0 0
        %2793 = vperm.xlu0 %2792, %v2726
        %v2794 = vpop.permute.xlu0 %2793
        %2795 = vset.pattern.permute.xlu0 0
        %2796 = vperm.xlu0 %2795, %v2727
        %v2797 = vpop.permute.xlu0 %2796
        %2798 = vset.pattern.permute.xlu0 0
        %2799 = vperm.xlu0 %2798, %v2728
        %v2800 = vpop.permute.xlu0 %2799
        %2801 = vset.pattern.permute.xlu0 0
        %2802 = vperm.xlu0 %2801, %v2729
        %v2803 = vpop.permute.xlu0 %2802
        %2804 = vset.pattern.permute.xlu0 0
        %2805 = vperm.xlu0 %2804, %v2730
        %v2806 = vpop.permute.xlu0 %2805
        %2807 = vset.pattern.permute.xlu0 0
        %2808 = vperm.xlu0 %2807, %v2731
        %v2809 = vpop.permute.xlu0 %2808
        %2810 = vset.pattern.permute.xlu0 0
        %2811 = vperm.xlu0 %2810, %v2732
        %v2812 = vpop.permute.xlu0 %2811
        %2813 = vset.pattern.permute.xlu0 0
        %2814 = vperm.xlu0 %2813, %v2733
        %v2815 = vpop.permute.xlu0 %2814
        %2816 = vset.pattern.permute.xlu0 0
        %2817 = vperm.xlu0 %2816, %v2734
        %v2818 = vpop.permute.xlu0 %2817
        %2819 = vset.pattern.permute.xlu0 0
        %2820 = vperm.xlu0 %2819, %v2735
        %v2821 = vpop.permute.xlu0 %2820
        %2822 = vset.pattern.permute.xlu0 0
        %2823 = vperm.xlu0 %2822, %v2736
        %v2824 = vpop.permute.xlu0 %2823
        %2825 = vset.pattern.permute.xlu0 0
        %2826 = vperm.xlu0 %2825, %v2737
        %v2827 = vpop.permute.xlu0 %2826
        %2828 = vset.pattern.permute.xlu0 0
        %2829 = vperm.xlu0 %2828, %v2738
        %v2830 = vpop.permute.xlu0 %2829
        %2831 = vset.pattern.permute.xlu0 0
        %2832 = vperm.xlu0 %2831, %v2739
        %v2833 = vpop.permute.xlu0 %2832
        %2834 = vset.pattern.permute.xlu0 0
        %2835 = vperm.xlu0 %2834, %v2740
        %v2836 = vpop.permute.xlu0 %2835
        %vm2837 = vcmp.eq.s32.totalorder %v2743, 1
        %vm2838 = vcmp.eq.s32.totalorder %v2746, 1
        %vm2839 = vcmp.eq.s32.totalorder %v2749, 1
        %vm2840 = vcmp.eq.s32.totalorder %v2752, 1
        %vm2841 = vcmp.eq.s32.totalorder %v2755, 1
        %vm2842 = vcmp.eq.s32.totalorder %v2758, 1
        %vm2843 = vcmp.eq.s32.totalorder %v2761, 1
        %vm2844 = vcmp.eq.s32.totalorder %v2764, 1
        %vm2845 = vcmp.eq.s32.totalorder %v2767, 1
        %vm2846 = vcmp.eq.s32.totalorder %v2770, 1
        %vm2847 = vcmp.eq.s32.totalorder %v2773, 1
        %vm2848 = vcmp.eq.s32.totalorder %v2776, 1
        %vm2849 = vcmp.eq.s32.totalorder %v2779, 1
        %vm2850 = vcmp.eq.s32.totalorder %v2782, 1
        %vm2851 = vcmp.eq.s32.totalorder %v2785, 1
        %vm2852 = vcmp.eq.s32.totalorder %v2788, 1
        %vm2853 = vcmp.eq.s32.totalorder %v2791, 1
        %vm2854 = vcmp.eq.s32.totalorder %v2794, 1
        %vm2855 = vcmp.eq.s32.totalorder %v2797, 1
        %vm2856 = vcmp.eq.s32.totalorder %v2800, 1
        %vm2857 = vcmp.eq.s32.totalorder %v2803, 1
        %vm2858 = vcmp.eq.s32.totalorder %v2806, 1
        %vm2859 = vcmp.eq.s32.totalorder %v2809, 1
        %vm2860 = vcmp.eq.s32.totalorder %v2812, 1
        %vm2861 = vcmp.eq.s32.totalorder %v2815, 1
        %vm2862 = vcmp.eq.s32.totalorder %v2818, 1
        %vm2863 = vcmp.eq.s32.totalorder %v2821, 1
        %vm2864 = vcmp.eq.s32.totalorder %v2824, 1
        %vm2865 = vcmp.eq.s32.totalorder %v2827, 1
        %vm2866 = vcmp.eq.s32.totalorder %v2830, 1
        %vm2867 = vcmp.eq.s32.totalorder %v2833, 1
        %vm2868 = vcmp.eq.s32.totalorder %v2836, 1
        %v2869 = vsel %vm2837, %v2519, 0.0
        %v2870 = vsel %vm2838, %v2524, 0.0
        %v2871 = vsel %vm2839, %v2529, 0.0
        %v2872 = vsel %vm2840, %v2534, 0.0
        %v2873 = vsel %vm2841, %v2539, 0.0
        %v2874 = vsel %vm2842, %v2544, 0.0
        %v2875 = vsel %vm2843, %v2549, 0.0
        %v2876 = vsel %vm2844, %v2554, 0.0
        %v2877 = vsel %vm2845, %v2559, 0.0
        %v2878 = vsel %vm2846, %v2564, 0.0
        %v2879 = vsel %vm2847, %v2569, 0.0
        %v2880 = vsel %vm2848, %v2574, 0.0
        %v2881 = vsel %vm2849, %v2579, 0.0
        %v2882 = vsel %vm2850, %v2584, 0.0
        %v2883 = vsel %vm2851, %v2589, 0.0
        %v2884 = vsel %vm2852, %v2594, 0.0
        %v2885 = vsel %vm2853, %v2599, 0.0
        %v2886 = vsel %vm2854, %v2604, 0.0
        %v2887 = vsel %vm2855, %v2609, 0.0
        %v2888 = vsel %vm2856, %v2614, 0.0
        %v2889 = vsel %vm2857, %v2619, 0.0
        %v2890 = vsel %vm2858, %v2624, 0.0
        %v2891 = vsel %vm2859, %v2629, 0.0
        %v2892 = vsel %vm2860, %v2634, 0.0
        %v2893 = vsel %vm2861, %v2639, 0.0
        %v2894 = vsel %vm2862, %v2644, 0.0
        %v2895 = vsel %vm2863, %v2649, 0.0
        %v2896 = vsel %vm2864, %v2654, 0.0
        %v2897 = vsel %vm2865, %v2659, 0.0
        %v2898 = vsel %vm2866, %v2664, 0.0
        %v2899 = vsel %vm2867, %v2669, 0.0
        %v2900 = vsel %vm2868, %v2674, 0.0
        %v2901 = vadd.f32 %v1835, %v2869
        %v2902 = vadd.f32 %v1836, %v2870
        %v2903 = vadd.f32 %v1837, %v2871
        %v2904 = vadd.f32 %v1838, %v2872
        %v2905 = vadd.f32 %v1839, %v2873
        %v2906 = vadd.f32 %v1840, %v2874
        %v2907 = vadd.f32 %v1841, %v2875
        %v2908 = vadd.f32 %v1842, %v2876
        %v2909 = vadd.f32 %v1843, %v2877
        %v2910 = vadd.f32 %v1844, %v2878
        %v2911 = vadd.f32 %v1845, %v2879
        %v2912 = vadd.f32 %v1846, %v2880
        %v2913 = vadd.f32 %v1847, %v2881
        %v2914 = vadd.f32 %v1848, %v2882
        %v2915 = vadd.f32 %v1849, %v2883
        %v2916 = vadd.f32 %v1850, %v2884
        %v2917 = vadd.f32 %v1851, %v2885
        %v2918 = vadd.f32 %v1852, %v2886
        %v2919 = vadd.f32 %v1853, %v2887
        %v2920 = vadd.f32 %v1854, %v2888
        %v2921 = vadd.f32 %v1855, %v2889
        %v2922 = vadd.f32 %v1856, %v2890
        %v2923 = vadd.f32 %v1857, %v2891
        %v2924 = vadd.f32 %v1858, %v2892
        %v2925 = vadd.f32 %v1859, %v2893
        %v2926 = vadd.f32 %v1860, %v2894
        %v2927 = vadd.f32 %v1861, %v2895
        %v2928 = vadd.f32 %v1862, %v2896
        %v2929 = vadd.f32 %v1863, %v2897
        %v2930 = vadd.f32 %v1864, %v2898
        %v2931 = vadd.f32 %v1865, %v2899
        %v2932 = vadd.f32 %v1866, %v2900
        %2933 = vxpose.xlu0.b32.start [1/16] %v2901, 128
        %2934 = vxpose.xlu0.b32.cont [2/16] %v2902, 128
        %2935 = vxpose.xlu0.b32.cont [3/16] 0.0, 128
        %2936 = vxpose.xlu0.b32.cont [4/16] 0.0, 128
        %2937 = vxpose.xlu0.b32.cont [5/16] 0.0, 128
        %2938 = vxpose.xlu0.b32.cont [6/16] 0.0, 128
        %2939 = vxpose.xlu0.b32.cont [7/16] 0.0, 128
        %2940 = vxpose.xlu0.b32.cont [8/16] 0.0, 128
        %2941 = vxpose.xlu0.b32.cont [9/16] 0.0, 128
        %2942 = vxpose.xlu0.b32.cont [10/16] 0.0, 128
        %2943 = vxpose.xlu0.b32.cont [11/16] 0.0, 128
        %2944 = vxpose.xlu0.b32.cont [12/16] 0.0, 128
        %2945 = vxpose.xlu0.b32.cont [13/16] 0.0, 128
        %2946 = vxpose.xlu0.b32.cont [14/16] 0.0, 128
        %2947 = vxpose.xlu0.b32.cont [15/16] 0.0, 128
        %2948 = vxpose.xlu0.b32.end [16/16] 0.0, 128
        %v2949 = vpop.trf.xlu0
        %v2950 = vpop.trf.xlu0
        %v2951 = vpop.trf.xlu0
        %v2952 = vpop.trf.xlu0
        %v2953 = vpop.trf.xlu0
        %v2954 = vpop.trf.xlu0
        %v2955 = vpop.trf.xlu0
        %v2956 = vpop.trf.xlu0
        %v2957 = vpop.trf.xlu0
        %v2958 = vpop.trf.xlu0
        %v2959 = vpop.trf.xlu0
        %v2960 = vpop.trf.xlu0
        %v2961 = vpop.trf.xlu0
        %v2962 = vpop.trf.xlu0
        %v2963 = vpop.trf.xlu0
        %v2964 = vpop.trf.xlu0
        %vm2965 = vcmask 130048
        %v2967 = vsel %vm2965, %v2949, 0
        %v2970 = vsel %vm2965, %v2950, 0
        %v2973 = vsel %vm2965, %v2951, 0
        %v2976 = vsel %vm2965, %v2952, 0
        %v2979 = vsel %vm2965, %v2953, 0
        %v2982 = vsel %vm2965, %v2954, 0
        %v2985 = vsel %vm2965, %v2955, 0
        %v2988 = vsel %vm2965, %v2956, 0
        %v2991 = vsel %vm2965, %v2957, 0
        %v2994 = vsel %vm2965, %v2958, 0
        %v2997 = vsel %vm2965, %v2959, 0
        %v3000 = vsel %vm2965, %v2960, 0
        %v3003 = vsel %vm2965, %v2961, 0
        %v3006 = vsel %vm2965, %v2962, 0
        %v3009 = vsel %vm2965, %v2963, 0
        %v3012 = vsel %vm2965, %v2964, 0
        %3014 = vmatprep.subr.mxu0 0.0
        %3015 = vmatpush1.msra.mxu0 0.0
        %3016 = vmatprep.subr.mxu0 0.0
        %3017 = vmatpush1.msra.mxu0 0.0
        %3018 = vmatprep.subr.mxu0 0.0
        %3019 = vmatpush1.msra.mxu0 0.0
        %3020 = vmatprep.subr.mxu0 0.0
        %3021 = vmatpush1.msra.mxu0 0.0
        %3022 = vmatprep.subr.mxu0 0.0
        %3023 = vmatpush1.msra.mxu0 0.0
        %3024 = vmatprep.subr.mxu0 0.0
        %3025 = vmatpush1.msra.mxu0 0.0
        %3026 = vmatprep.subr.mxu0 0.0
        %3027 = vmatpush1.msra.mxu0 0.0
        %3028 = vmatprep.subr.mxu0 0.0
        %3029 = vmatpush1.msra.mxu0 0.0
        %3030 = vmatprep.subr.mxu0 0.0
        %3031 = vmatpush1.msra.mxu0 0.0
        %3032 = vmatprep.subr.mxu0 0.0
        %3033 = vmatpush1.msra.mxu0 0.0
        %3034 = vmatprep.subr.mxu0 0.0
        %3035 = vmatpush1.msra.mxu0 0.0
        %3036 = vmatprep.subr.mxu0 0.0
        %3037 = vmatpush1.msra.mxu0 0.0
        %3038 = vmatprep.subr.mxu0 0.0
        %3039 = vmatpush1.msra.mxu0 0.0
        %3040 = vmatprep.subr.mxu0 0.0
        %3041 = vmatpush1.msra.mxu0 0.0
        %3042 = vmatprep.subr.mxu0 0.0
        %3043 = vmatpush1.msra.mxu0 %v608
        %3044 = vmatprep.subr.mxu0 0.0
        %3045 = vmatpush1.msra.mxu0 %v607
        %3046 = vmatprep.subr.mxu0 0.0
        %3047 = vmatpush2.msra.mxu0 0.0
        %3048 = vmatprep.subr.mxu0 0.0
        %3049 = vmatpush2.msra.mxu0 0.0
        %3050 = vmatprep.subr.mxu0 0.0
        %3051 = vmatpush2.msra.mxu0 0.0
        %3052 = vmatprep.subr.mxu0 0.0
        %3053 = vmatpush2.msra.mxu0 0.0
        %3054 = vmatprep.subr.mxu0 0.0
        %3055 = vmatpush2.msra.mxu0 0.0
        %3056 = vmatprep.subr.mxu0 0.0
        %3057 = vmatpush2.msra.mxu0 0.0
        %3058 = vmatprep.subr.mxu0 0.0
        %3059 = vmatpush2.msra.mxu0 0.0
        %3060 = vmatprep.subr.mxu0 0.0
        %3061 = vmatpush2.msra.mxu0 0.0
        %3062 = vmatprep.subr.mxu0 0.0
        %3063 = vmatpush2.msra.mxu0 0.0
        %3064 = vmatprep.subr.mxu0 0.0
        %3065 = vmatpush2.msra.mxu0 0.0
        %3066 = vmatprep.subr.mxu0 0.0
        %3067 = vmatpush2.msra.mxu0 0.0
        %3068 = vmatprep.subr.mxu0 0.0
        %3069 = vmatpush2.msra.mxu0 0.0
        %3070 = vmatprep.subr.mxu0 0.0
        %3071 = vmatpush2.msra.mxu0 0.0
        %3072 = vmatprep.subr.mxu0 0.0
        %3073 = vmatpush2.msra.mxu0 0.0
        %3074 = vmatprep.subr.mxu0 0.0
        %3075 = vmatpush2.msra.mxu0 0.0
        %3076 = vmatprep.subr.mxu0 0.0
        %3077 = vmatpush2.msra.mxu0 0.0
        %3078 = vmatprep.mubr.f32.mxu0 0.0
        %3079 = vmatmul.mubr.f32.gmra.mxu0 %v2967
        %v3080 = vpop.f32.mrf.mxu0
        %v3081 = vadd.f32 0.0, %v3080
        %v3082 = vpop.f32.mrf.mxu0
        %3083 = vmatprep.mubr.f32.mxu0 0.0
        %3084 = vmatmul.mubr.f32.gmra.mxu0 %v2970
        %v3085 = vpop.f32.mrf.mxu0
        %v3086 = vadd.f32 0.0, %v3085
        %v3087 = vpop.f32.mrf.mxu0
        %3088 = vmatprep.mubr.f32.mxu0 0.0
        %3089 = vmatmul.mubr.f32.gmra.mxu0 %v2973
        %v3090 = vpop.f32.mrf.mxu0
        %v3091 = vadd.f32 0.0, %v3090
        %v3092 = vpop.f32.mrf.mxu0
        %3093 = vmatprep.mubr.f32.mxu0 0.0
        %3094 = vmatmul.mubr.f32.gmra.mxu0 %v2976
        %v3095 = vpop.f32.mrf.mxu0
        %v3096 = vadd.f32 0.0, %v3095
        %v3097 = vpop.f32.mrf.mxu0
        %3098 = vmatprep.mubr.f32.mxu0 0.0
        %3099 = vmatmul.mubr.f32.gmra.mxu0 %v2979
        %v3100 = vpop.f32.mrf.mxu0
        %v3101 = vadd.f32 0.0, %v3100
        %v3102 = vpop.f32.mrf.mxu0
        %3103 = vmatprep.mubr.f32.mxu0 0.0
        %3104 = vmatmul.mubr.f32.gmra.mxu0 %v2982
        %v3105 = vpop.f32.mrf.mxu0
        %v3106 = vadd.f32 0.0, %v3105
        %v3107 = vpop.f32.mrf.mxu0
        %3108 = vmatprep.mubr.f32.mxu0 0.0
        %3109 = vmatmul.mubr.f32.gmra.mxu0 %v2985
        %v3110 = vpop.f32.mrf.mxu0
        %v3111 = vadd.f32 0.0, %v3110
        %v3112 = vpop.f32.mrf.mxu0
        %3113 = vmatprep.mubr.f32.mxu0 0.0
        %3114 = vmatmul.mubr.f32.gmra.mxu0 %v2988
        %v3115 = vpop.f32.mrf.mxu0
        %v3116 = vadd.f32 0.0, %v3115
        %v3117 = vpop.f32.mrf.mxu0
        %3118 = vmatprep.mubr.f32.mxu0 0.0
        %3119 = vmatmul.mubr.f32.gmra.mxu0 %v2991
        %v3120 = vpop.f32.mrf.mxu0
        %v3121 = vadd.f32 0.0, %v3120
        %v3122 = vpop.f32.mrf.mxu0
        %3123 = vmatprep.mubr.f32.mxu0 0.0
        %3124 = vmatmul.mubr.f32.gmra.mxu0 %v2994
        %v3125 = vpop.f32.mrf.mxu0
        %v3126 = vadd.f32 0.0, %v3125
        %v3127 = vpop.f32.mrf.mxu0
        %3128 = vmatprep.mubr.f32.mxu0 0.0
        %3129 = vmatmul.mubr.f32.gmra.mxu0 %v2997
        %v3130 = vpop.f32.mrf.mxu0
        %v3131 = vadd.f32 0.0, %v3130
        %v3132 = vpop.f32.mrf.mxu0
        %3133 = vmatprep.mubr.f32.mxu0 0.0
        %3134 = vmatmul.mubr.f32.gmra.mxu0 %v3000
        %v3135 = vpop.f32.mrf.mxu0
        %v3136 = vadd.f32 0.0, %v3135
        %v3137 = vpop.f32.mrf.mxu0
        %3138 = vmatprep.mubr.f32.mxu0 0.0
        %3139 = vmatmul.mubr.f32.gmra.mxu0 %v3003
        %v3140 = vpop.f32.mrf.mxu0
        %v3141 = vadd.f32 0.0, %v3140
        %v3142 = vpop.f32.mrf.mxu0
        %3143 = vmatprep.mubr.f32.mxu0 0.0
        %3144 = vmatmul.mubr.f32.gmra.mxu0 %v3006
        %v3145 = vpop.f32.mrf.mxu0
        %v3146 = vadd.f32 0.0, %v3145
        %v3147 = vpop.f32.mrf.mxu0
        %3148 = vmatprep.mubr.f32.mxu0 0.0
        %3149 = vmatmul.mubr.f32.gmra.mxu0 %v3009
        %v3150 = vpop.f32.mrf.mxu0
        %v3151 = vadd.f32 0.0, %v3150
        %v3152 = vpop.f32.mrf.mxu0
        %3153 = vmatprep.mubr.f32.mxu0 0.0
        %3154 = vmatmul.mubr.f32.gmra.mxu0 %v3012
        %v3155 = vpop.f32.mrf.mxu0
        %v3156 = vadd.f32 0.0, %v3155
        %v3157 = vpop.f32.mrf.mxu0
        %3158 = vdwg.mxu0
        %3159 = vxpose.xlu0.b32.start [1/16] %v2903, 128
        %3160 = vxpose.xlu0.b32.cont [2/16] %v2904, 128
        %3161 = vxpose.xlu0.b32.cont [3/16] 0.0, 128
        %3162 = vxpose.xlu0.b32.cont [4/16] 0.0, 128
        %3163 = vxpose.xlu0.b32.cont [5/16] 0.0, 128
        %3164 = vxpose.xlu0.b32.cont [6/16] 0.0, 128
        %3165 = vxpose.xlu0.b32.cont [7/16] 0.0, 128
        %3166 = vxpose.xlu0.b32.cont [8/16] 0.0, 128
        %3167 = vxpose.xlu0.b32.cont [9/16] 0.0, 128
        %3168 = vxpose.xlu0.b32.cont [10/16] 0.0, 128
        %3169 = vxpose.xlu0.b32.cont [11/16] 0.0, 128
        %3170 = vxpose.xlu0.b32.cont [12/16] 0.0, 128
        %3171 = vxpose.xlu0.b32.cont [13/16] 0.0, 128
        %3172 = vxpose.xlu0.b32.cont [14/16] 0.0, 128
        %3173 = vxpose.xlu0.b32.cont [15/16] 0.0, 128
        %3174 = vxpose.xlu0.b32.end [16/16] 0.0, 128
        %v3175 = vpop.trf.xlu0
        %v3176 = vpop.trf.xlu0
        %v3177 = vpop.trf.xlu0
        %v3178 = vpop.trf.xlu0
        %v3179 = vpop.trf.xlu0
        %v3180 = vpop.trf.xlu0
        %v3181 = vpop.trf.xlu0
        %v3182 = vpop.trf.xlu0
        %v3183 = vpop.trf.xlu0
        %v3184 = vpop.trf.xlu0
        %v3185 = vpop.trf.xlu0
        %v3186 = vpop.trf.xlu0
        %v3187 = vpop.trf.xlu0
        %v3188 = vpop.trf.xlu0
        %v3189 = vpop.trf.xlu0
        %v3190 = vpop.trf.xlu0
        %v3192 = vsel %vm2965, %v3175, 0
        %v3195 = vsel %vm2965, %v3176, 0
        %v3198 = vsel %vm2965, %v3177, 0
        %v3201 = vsel %vm2965, %v3178, 0
        %v3204 = vsel %vm2965, %v3179, 0
        %v3207 = vsel %vm2965, %v3180, 0
        %v3210 = vsel %vm2965, %v3181, 0
        %v3213 = vsel %vm2965, %v3182, 0
        %v3216 = vsel %vm2965, %v3183, 0
        %v3219 = vsel %vm2965, %v3184, 0
        %v3222 = vsel %vm2965, %v3185, 0
        %v3225 = vsel %vm2965, %v3186, 0
        %v3228 = vsel %vm2965, %v3187, 0
        %v3231 = vsel %vm2965, %v3188, 0
        %v3234 = vsel %vm2965, %v3189, 0
        %v3237 = vsel %vm2965, %v3190, 0
        %3239 = vmatprep.subr.mxu0 0.0
        %3240 = vmatpush1.msra.mxu0 0.0
        %3241 = vmatprep.subr.mxu0 0.0
        %3242 = vmatpush1.msra.mxu0 0.0
        %3243 = vmatprep.subr.mxu0 0.0
        %3244 = vmatpush1.msra.mxu0 0.0
        %3245 = vmatprep.subr.mxu0 0.0
        %3246 = vmatpush1.msra.mxu0 0.0
        %3247 = vmatprep.subr.mxu0 0.0
        %3248 = vmatpush1.msra.mxu0 0.0
        %3249 = vmatprep.subr.mxu0 0.0
        %3250 = vmatpush1.msra.mxu0 0.0
        %3251 = vmatprep.subr.mxu0 0.0
        %3252 = vmatpush1.msra.mxu0 0.0
        %3253 = vmatprep.subr.mxu0 0.0
        %3254 = vmatpush1.msra.mxu0 0.0
        %3255 = vmatprep.subr.mxu0 0.0
        %3256 = vmatpush1.msra.mxu0 0.0
        %3257 = vmatprep.subr.mxu0 0.0
        %3258 = vmatpush1.msra.mxu0 0.0
        %3259 = vmatprep.subr.mxu0 0.0
        %3260 = vmatpush1.msra.mxu0 0.0
        %3261 = vmatprep.subr.mxu0 0.0
        %3262 = vmatpush1.msra.mxu0 0.0
        %3263 = vmatprep.subr.mxu0 0.0
        %3264 = vmatpush1.msra.mxu0 0.0
        %3265 = vmatprep.subr.mxu0 0.0
        %3266 = vmatpush1.msra.mxu0 0.0
        %3267 = vmatprep.subr.mxu0 0.0
        %3268 = vmatpush1.msra.mxu0 %v610
        %3269 = vmatprep.subr.mxu0 0.0
        %3270 = vmatpush1.msra.mxu0 %v609
        %3271 = vmatprep.subr.mxu0 0.0
        %3272 = vmatpush2.msra.mxu0 0.0
        %3273 = vmatprep.subr.mxu0 0.0
        %3274 = vmatpush2.msra.mxu0 0.0
        %3275 = vmatprep.subr.mxu0 0.0
        %3276 = vmatpush2.msra.mxu0 0.0
        %3277 = vmatprep.subr.mxu0 0.0
        %3278 = vmatpush2.msra.mxu0 0.0
        %3279 = vmatprep.subr.mxu0 0.0
        %3280 = vmatpush2.msra.mxu0 0.0
        %3281 = vmatprep.subr.mxu0 0.0
        %3282 = vmatpush2.msra.mxu0 0.0
        %3283 = vmatprep.subr.mxu0 0.0
        %3284 = vmatpush2.msra.mxu0 0.0
        %3285 = vmatprep.subr.mxu0 0.0
        %3286 = vmatpush2.msra.mxu0 0.0
        %3287 = vmatprep.subr.mxu0 0.0
        %3288 = vmatpush2.msra.mxu0 0.0
        %3289 = vmatprep.subr.mxu0 0.0
        %3290 = vmatpush2.msra.mxu0 0.0
        %3291 = vmatprep.subr.mxu0 0.0
        %3292 = vmatpush2.msra.mxu0 0.0
        %3293 = vmatprep.subr.mxu0 0.0
        %3294 = vmatpush2.msra.mxu0 0.0
        %3295 = vmatprep.subr.mxu0 0.0
        %3296 = vmatpush2.msra.mxu0 0.0
        %3297 = vmatprep.subr.mxu0 0.0
        %3298 = vmatpush2.msra.mxu0 0.0
        %3299 = vmatprep.subr.mxu0 0.0
        %3300 = vmatpush2.msra.mxu0 0.0
        %3301 = vmatprep.subr.mxu0 0.0
        %3302 = vmatpush2.msra.mxu0 0.0
        %3303 = vmatprep.mubr.f32.mxu0 0.0
        %3304 = vmatmul.mubr.f32.gmra.mxu0 %v3192
        %v3305 = vpop.f32.mrf.mxu0
        %v3306 = vadd.f32 0.0, %v3305
        %v3307 = vpop.f32.mrf.mxu0
        %3308 = vmatprep.mubr.f32.mxu0 0.0
        %3309 = vmatmul.mubr.f32.gmra.mxu0 %v3195
        %v3310 = vpop.f32.mrf.mxu0
        %v3311 = vadd.f32 0.0, %v3310
        %v3312 = vpop.f32.mrf.mxu0
        %3313 = vmatprep.mubr.f32.mxu0 0.0
        %3314 = vmatmul.mubr.f32.gmra.mxu0 %v3198
        %v3315 = vpop.f32.mrf.mxu0
        %v3316 = vadd.f32 0.0, %v3315
        %v3317 = vpop.f32.mrf.mxu0
        %3318 = vmatprep.mubr.f32.mxu0 0.0
        %3319 = vmatmul.mubr.f32.gmra.mxu0 %v3201
        %v3320 = vpop.f32.mrf.mxu0
        %v3321 = vadd.f32 0.0, %v3320
        %v3322 = vpop.f32.mrf.mxu0
        %3323 = vmatprep.mubr.f32.mxu0 0.0
        %3324 = vmatmul.mubr.f32.gmra.mxu0 %v3204
        %v3325 = vpop.f32.mrf.mxu0
        %v3326 = vadd.f32 0.0, %v3325
        %v3327 = vpop.f32.mrf.mxu0
        %3328 = vmatprep.mubr.f32.mxu0 0.0
        %3329 = vmatmul.mubr.f32.gmra.mxu0 %v3207
        %v3330 = vpop.f32.mrf.mxu0
        %v3331 = vadd.f32 0.0, %v3330
        %v3332 = vpop.f32.mrf.mxu0
        %3333 = vmatprep.mubr.f32.mxu0 0.0
        %3334 = vmatmul.mubr.f32.gmra.mxu0 %v3210
        %v3335 = vpop.f32.mrf.mxu0
        %v3336 = vadd.f32 0.0, %v3335
        %v3337 = vpop.f32.mrf.mxu0
        %3338 = vmatprep.mubr.f32.mxu0 0.0
        %3339 = vmatmul.mubr.f32.gmra.mxu0 %v3213
        %v3340 = vpop.f32.mrf.mxu0
        %v3341 = vadd.f32 0.0, %v3340
        %v3342 = vpop.f32.mrf.mxu0
        %3343 = vmatprep.mubr.f32.mxu0 0.0
        %3344 = vmatmul.mubr.f32.gmra.mxu0 %v3216
        %v3345 = vpop.f32.mrf.mxu0
        %v3346 = vadd.f32 0.0, %v3345
        %v3347 = vpop.f32.mrf.mxu0
        %3348 = vmatprep.mubr.f32.mxu0 0.0
        %3349 = vmatmul.mubr.f32.gmra.mxu0 %v3219
        %v3350 = vpop.f32.mrf.mxu0
        %v3351 = vadd.f32 0.0, %v3350
        %v3352 = vpop.f32.mrf.mxu0
        %3353 = vmatprep.mubr.f32.mxu0 0.0
        %3354 = vmatmul.mubr.f32.gmra.mxu0 %v3222
        %v3355 = vpop.f32.mrf.mxu0
        %v3356 = vadd.f32 0.0, %v3355
        %v3357 = vpop.f32.mrf.mxu0
        %3358 = vmatprep.mubr.f32.mxu0 0.0
        %3359 = vmatmul.mubr.f32.gmra.mxu0 %v3225
        %v3360 = vpop.f32.mrf.mxu0
        %v3361 = vadd.f32 0.0, %v3360
        %v3362 = vpop.f32.mrf.mxu0
        %3363 = vmatprep.mubr.f32.mxu0 0.0
        %3364 = vmatmul.mubr.f32.gmra.mxu0 %v3228
        %v3365 = vpop.f32.mrf.mxu0
        %v3366 = vadd.f32 0.0, %v3365
        %v3367 = vpop.f32.mrf.mxu0
        %3368 = vmatprep.mubr.f32.mxu0 0.0
        %3369 = vmatmul.mubr.f32.gmra.mxu0 %v3231
        %v3370 = vpop.f32.mrf.mxu0
        %v3371 = vadd.f32 0.0, %v3370
        %v3372 = vpop.f32.mrf.mxu0
        %3373 = vmatprep.mubr.f32.mxu0 0.0
        %3374 = vmatmul.mubr.f32.gmra.mxu0 %v3234
        %v3375 = vpop.f32.mrf.mxu0
        %v3376 = vadd.f32 0.0, %v3375
        %v3377 = vpop.f32.mrf.mxu0
        %3378 = vmatprep.mubr.f32.mxu0 0.0
        %3379 = vmatmul.mubr.f32.gmra.mxu0 %v3237
        %v3380 = vpop.f32.mrf.mxu0
        %v3381 = vadd.f32 0.0, %v3380
        %v3382 = vpop.f32.mrf.mxu0
        %3383 = vdwg.mxu0
        %3384 = vxpose.xlu0.b32.start [1/16] %v2905, 128
        %3385 = vxpose.xlu0.b32.cont [2/16] %v2906, 128
        %3386 = vxpose.xlu0.b32.cont [3/16] 0.0, 128
        %3387 = vxpose.xlu0.b32.cont [4/16] 0.0, 128
        %3388 = vxpose.xlu0.b32.cont [5/16] 0.0, 128
        %3389 = vxpose.xlu0.b32.cont [6/16] 0.0, 128
        %3390 = vxpose.xlu0.b32.cont [7/16] 0.0, 128
        %3391 = vxpose.xlu0.b32.cont [8/16] 0.0, 128
        %3392 = vxpose.xlu0.b32.cont [9/16] 0.0, 128
        %3393 = vxpose.xlu0.b32.cont [10/16] 0.0, 128
        %3394 = vxpose.xlu0.b32.cont [11/16] 0.0, 128
        %3395 = vxpose.xlu0.b32.cont [12/16] 0.0, 128
        %3396 = vxpose.xlu0.b32.cont [13/16] 0.0, 128
        %3397 = vxpose.xlu0.b32.cont [14/16] 0.0, 128
        %3398 = vxpose.xlu0.b32.cont [15/16] 0.0, 128
        %3399 = vxpose.xlu0.b32.end [16/16] 0.0, 128
        %v3400 = vpop.trf.xlu0
        %v3401 = vpop.trf.xlu0
        %v3402 = vpop.trf.xlu0
        %v3403 = vpop.trf.xlu0
        %v3404 = vpop.trf.xlu0
        %v3405 = vpop.trf.xlu0
        %v3406 = vpop.trf.xlu0
        %v3407 = vpop.trf.xlu0
        %v3408 = vpop.trf.xlu0
        %v3409 = vpop.trf.xlu0
        %v3410 = vpop.trf.xlu0
        %v3411 = vpop.trf.xlu0
        %v3412 = vpop.trf.xlu0
        %v3413 = vpop.trf.xlu0
        %v3414 = vpop.trf.xlu0
        %v3415 = vpop.trf.xlu0
        %v3417 = vsel %vm2965, %v3400, 0
        %v3420 = vsel %vm2965, %v3401, 0
        %v3423 = vsel %vm2965, %v3402, 0
        %v3426 = vsel %vm2965, %v3403, 0
        %v3429 = vsel %vm2965, %v3404, 0
        %v3432 = vsel %vm2965, %v3405, 0
        %v3435 = vsel %vm2965, %v3406, 0
        %v3438 = vsel %vm2965, %v3407, 0
        %v3441 = vsel %vm2965, %v3408, 0
        %v3444 = vsel %vm2965, %v3409, 0
        %v3447 = vsel %vm2965, %v3410, 0
        %v3450 = vsel %vm2965, %v3411, 0
        %v3453 = vsel %vm2965, %v3412, 0
        %v3456 = vsel %vm2965, %v3413, 0
        %v3459 = vsel %vm2965, %v3414, 0
        %v3462 = vsel %vm2965, %v3415, 0
        %3464 = vmatprep.subr.mxu0 0.0
        %3465 = vmatpush1.msra.mxu0 0.0
        %3466 = vmatprep.subr.mxu0 0.0
        %3467 = vmatpush1.msra.mxu0 0.0
        %3468 = vmatprep.subr.mxu0 0.0
        %3469 = vmatpush1.msra.mxu0 0.0
        %3470 = vmatprep.subr.mxu0 0.0
        %3471 = vmatpush1.msra.mxu0 0.0
        %3472 = vmatprep.subr.mxu0 0.0
        %3473 = vmatpush1.msra.mxu0 0.0
        %3474 = vmatprep.subr.mxu0 0.0
        %3475 = vmatpush1.msra.mxu0 0.0
        %3476 = vmatprep.subr.mxu0 0.0
        %3477 = vmatpush1.msra.mxu0 0.0
        %3478 = vmatprep.subr.mxu0 0.0
        %3479 = vmatpush1.msra.mxu0 0.0
        %3480 = vmatprep.subr.mxu0 0.0
        %3481 = vmatpush1.msra.mxu0 0.0
        %3482 = vmatprep.subr.mxu0 0.0
        %3483 = vmatpush1.msra.mxu0 0.0
        %3484 = vmatprep.subr.mxu0 0.0
        %3485 = vmatpush1.msra.mxu0 0.0
        %3486 = vmatprep.subr.mxu0 0.0
        %3487 = vmatpush1.msra.mxu0 0.0
        %3488 = vmatprep.subr.mxu0 0.0
        %3489 = vmatpush1.msra.mxu0 0.0
        %3490 = vmatprep.subr.mxu0 0.0
        %3491 = vmatpush1.msra.mxu0 0.0
        %3492 = vmatprep.subr.mxu0 0.0
        %3493 = vmatpush1.msra.mxu0 %v612
        %3494 = vmatprep.subr.mxu0 0.0
        %3495 = vmatpush1.msra.mxu0 %v611
        %3496 = vmatprep.subr.mxu0 0.0
        %3497 = vmatpush2.msra.mxu0 0.0
        %3498 = vmatprep.subr.mxu0 0.0
        %3499 = vmatpush2.msra.mxu0 0.0
        %3500 = vmatprep.subr.mxu0 0.0
        %3501 = vmatpush2.msra.mxu0 0.0
        %3502 = vmatprep.subr.mxu0 0.0
        %3503 = vmatpush2.msra.mxu0 0.0
        %3504 = vmatprep.subr.mxu0 0.0
        %3505 = vmatpush2.msra.mxu0 0.0
        %3506 = vmatprep.subr.mxu0 0.0
        %3507 = vmatpush2.msra.mxu0 0.0
        %3508 = vmatprep.subr.mxu0 0.0
        %3509 = vmatpush2.msra.mxu0 0.0
        %3510 = vmatprep.subr.mxu0 0.0
        %3511 = vmatpush2.msra.mxu0 0.0
        %3512 = vmatprep.subr.mxu0 0.0
        %3513 = vmatpush2.msra.mxu0 0.0
        %3514 = vmatprep.subr.mxu0 0.0
        %3515 = vmatpush2.msra.mxu0 0.0
        %3516 = vmatprep.subr.mxu0 0.0
        %3517 = vmatpush2.msra.mxu0 0.0
        %3518 = vmatprep.subr.mxu0 0.0
        %3519 = vmatpush2.msra.mxu0 0.0
        %3520 = vmatprep.subr.mxu0 0.0
        %3521 = vmatpush2.msra.mxu0 0.0
        %3522 = vmatprep.subr.mxu0 0.0
        %3523 = vmatpush2.msra.mxu0 0.0
        %3524 = vmatprep.subr.mxu0 0.0
        %3525 = vmatpush2.msra.mxu0 0.0
        %3526 = vmatprep.subr.mxu0 0.0
        %3527 = vmatpush2.msra.mxu0 0.0
        %3528 = vmatprep.mubr.f32.mxu0 0.0
        %3529 = vmatmul.mubr.f32.gmra.mxu0 %v3417
        %v3530 = vpop.f32.mrf.mxu0
        %v3531 = vadd.f32 0.0, %v3530
        %v3532 = vpop.f32.mrf.mxu0
        %3533 = vmatprep.mubr.f32.mxu0 0.0
        %3534 = vmatmul.mubr.f32.gmra.mxu0 %v3420
        %v3535 = vpop.f32.mrf.mxu0
        %v3536 = vadd.f32 0.0, %v3535
        %v3537 = vpop.f32.mrf.mxu0
        %3538 = vmatprep.mubr.f32.mxu0 0.0
        %3539 = vmatmul.mubr.f32.gmra.mxu0 %v3423
        %v3540 = vpop.f32.mrf.mxu0
        %v3541 = vadd.f32 0.0, %v3540
        %v3542 = vpop.f32.mrf.mxu0
        %3543 = vmatprep.mubr.f32.mxu0 0.0
        %3544 = vmatmul.mubr.f32.gmra.mxu0 %v3426
        %v3545 = vpop.f32.mrf.mxu0
        %v3546 = vadd.f32 0.0, %v3545
        %v3547 = vpop.f32.mrf.mxu0
        %3548 = vmatprep.mubr.f32.mxu0 0.0
        %3549 = vmatmul.mubr.f32.gmra.mxu0 %v3429
        %v3550 = vpop.f32.mrf.mxu0
        %v3551 = vadd.f32 0.0, %v3550
        %v3552 = vpop.f32.mrf.mxu0
        %3553 = vmatprep.mubr.f32.mxu0 0.0
        %3554 = vmatmul.mubr.f32.gmra.mxu0 %v3432
        %v3555 = vpop.f32.mrf.mxu0
        %v3556 = vadd.f32 0.0, %v3555
        %v3557 = vpop.f32.mrf.mxu0
        %3558 = vmatprep.mubr.f32.mxu0 0.0
        %3559 = vmatmul.mubr.f32.gmra.mxu0 %v3435
        %v3560 = vpop.f32.mrf.mxu0
        %v3561 = vadd.f32 0.0, %v3560
        %v3562 = vpop.f32.mrf.mxu0
        %3563 = vmatprep.mubr.f32.mxu0 0.0
        %3564 = vmatmul.mubr.f32.gmra.mxu0 %v3438
        %v3565 = vpop.f32.mrf.mxu0
        %v3566 = vadd.f32 0.0, %v3565
        %v3567 = vpop.f32.mrf.mxu0
        %3568 = vmatprep.mubr.f32.mxu0 0.0
        %3569 = vmatmul.mubr.f32.gmra.mxu0 %v3441
        %v3570 = vpop.f32.mrf.mxu0
        %v3571 = vadd.f32 0.0, %v3570
        %v3572 = vpop.f32.mrf.mxu0
        %3573 = vmatprep.mubr.f32.mxu0 0.0
        %3574 = vmatmul.mubr.f32.gmra.mxu0 %v3444
        %v3575 = vpop.f32.mrf.mxu0
        %v3576 = vadd.f32 0.0, %v3575
        %v3577 = vpop.f32.mrf.mxu0
        %3578 = vmatprep.mubr.f32.mxu0 0.0
        %3579 = vmatmul.mubr.f32.gmra.mxu0 %v3447
        %v3580 = vpop.f32.mrf.mxu0
        %v3581 = vadd.f32 0.0, %v3580
        %v3582 = vpop.f32.mrf.mxu0
        %3583 = vmatprep.mubr.f32.mxu0 0.0
        %3584 = vmatmul.mubr.f32.gmra.mxu0 %v3450
        %v3585 = vpop.f32.mrf.mxu0
        %v3586 = vadd.f32 0.0, %v3585
        %v3587 = vpop.f32.mrf.mxu0
        %3588 = vmatprep.mubr.f32.mxu0 0.0
        %3589 = vmatmul.mubr.f32.gmra.mxu0 %v3453
        %v3590 = vpop.f32.mrf.mxu0
        %v3591 = vadd.f32 0.0, %v3590
        %v3592 = vpop.f32.mrf.mxu0
        %3593 = vmatprep.mubr.f32.mxu0 0.0
        %3594 = vmatmul.mubr.f32.gmra.mxu0 %v3456
        %v3595 = vpop.f32.mrf.mxu0
        %v3596 = vadd.f32 0.0, %v3595
        %v3597 = vpop.f32.mrf.mxu0
        %3598 = vmatprep.mubr.f32.mxu0 0.0
        %3599 = vmatmul.mubr.f32.gmra.mxu0 %v3459
        %v3600 = vpop.f32.mrf.mxu0
        %v3601 = vadd.f32 0.0, %v3600
        %v3602 = vpop.f32.mrf.mxu0
        %3603 = vmatprep.mubr.f32.mxu0 0.0
        %3604 = vmatmul.mubr.f32.gmra.mxu0 %v3462
        %v3605 = vpop.f32.mrf.mxu0
        %v3606 = vadd.f32 0.0, %v3605
        %v3607 = vpop.f32.mrf.mxu0
        %3608 = vdwg.mxu0
        %3609 = vxpose.xlu0.b32.start [1/16] %v2907, 128
        %3610 = vxpose.xlu0.b32.cont [2/16] %v2908, 128
        %3611 = vxpose.xlu0.b32.cont [3/16] 0.0, 128
        %3612 = vxpose.xlu0.b32.cont [4/16] 0.0, 128
        %3613 = vxpose.xlu0.b32.cont [5/16] 0.0, 128
        %3614 = vxpose.xlu0.b32.cont [6/16] 0.0, 128
        %3615 = vxpose.xlu0.b32.cont [7/16] 0.0, 128
        %3616 = vxpose.xlu0.b32.cont [8/16] 0.0, 128
        %3617 = vxpose.xlu0.b32.cont [9/16] 0.0, 128
        %3618 = vxpose.xlu0.b32.cont [10/16] 0.0, 128
        %3619 = vxpose.xlu0.b32.cont [11/16] 0.0, 128
        %3620 = vxpose.xlu0.b32.cont [12/16] 0.0, 128
        %3621 = vxpose.xlu0.b32.cont [13/16] 0.0, 128
        %3622 = vxpose.xlu0.b32.cont [14/16] 0.0, 128
        %3623 = vxpose.xlu0.b32.cont [15/16] 0.0, 128
        %3624 = vxpose.xlu0.b32.end [16/16] 0.0, 128
        %v3625 = vpop.trf.xlu0
        %v3626 = vpop.trf.xlu0
        %v3627 = vpop.trf.xlu0
        %v3628 = vpop.trf.xlu0
        %v3629 = vpop.trf.xlu0
        %v3630 = vpop.trf.xlu0
        %v3631 = vpop.trf.xlu0
        %v3632 = vpop.trf.xlu0
        %v3633 = vpop.trf.xlu0
        %v3634 = vpop.trf.xlu0
        %v3635 = vpop.trf.xlu0
        %v3636 = vpop.trf.xlu0
        %v3637 = vpop.trf.xlu0
        %v3638 = vpop.trf.xlu0
        %v3639 = vpop.trf.xlu0
        %v3640 = vpop.trf.xlu0
        %v3642 = vsel %vm2965, %v3625, 0
        %v3645 = vsel %vm2965, %v3626, 0
        %v3648 = vsel %vm2965, %v3627, 0
        %v3651 = vsel %vm2965, %v3628, 0
        %v3654 = vsel %vm2965, %v3629, 0
        %v3657 = vsel %vm2965, %v3630, 0
        %v3660 = vsel %vm2965, %v3631, 0
        %v3663 = vsel %vm2965, %v3632, 0
        %v3666 = vsel %vm2965, %v3633, 0
        %v3669 = vsel %vm2965, %v3634, 0
        %v3672 = vsel %vm2965, %v3635, 0
        %v3675 = vsel %vm2965, %v3636, 0
        %v3678 = vsel %vm2965, %v3637, 0
        %v3681 = vsel %vm2965, %v3638, 0
        %v3684 = vsel %vm2965, %v3639, 0
        %v3687 = vsel %vm2965, %v3640, 0
        %3689 = vmatprep.subr.mxu0 0.0
        %3690 = vmatpush1.msra.mxu0 0.0
        %3691 = vmatprep.subr.mxu0 0.0
        %3692 = vmatpush1.msra.mxu0 0.0
        %3693 = vmatprep.subr.mxu0 0.0
        %3694 = vmatpush1.msra.mxu0 0.0
        %3695 = vmatprep.subr.mxu0 0.0
        %3696 = vmatpush1.msra.mxu0 0.0
        %3697 = vmatprep.subr.mxu0 0.0
        %3698 = vmatpush1.msra.mxu0 0.0
        %3699 = vmatprep.subr.mxu0 0.0
        %3700 = vmatpush1.msra.mxu0 0.0
        %3701 = vmatprep.subr.mxu0 0.0
        %3702 = vmatpush1.msra.mxu0 0.0
        %3703 = vmatprep.subr.mxu0 0.0
        %3704 = vmatpush1.msra.mxu0 0.0
        %3705 = vmatprep.subr.mxu0 0.0
        %3706 = vmatpush1.msra.mxu0 0.0
        %3707 = vmatprep.subr.mxu0 0.0
        %3708 = vmatpush1.msra.mxu0 0.0
        %3709 = vmatprep.subr.mxu0 0.0
        %3710 = vmatpush1.msra.mxu0 0.0
        %3711 = vmatprep.subr.mxu0 0.0
        %3712 = vmatpush1.msra.mxu0 0.0
        %3713 = vmatprep.subr.mxu0 0.0
        %3714 = vmatpush1.msra.mxu0 0.0
        %3715 = vmatprep.subr.mxu0 0.0
        %3716 = vmatpush1.msra.mxu0 0.0
        %3717 = vmatprep.subr.mxu0 0.0
        %3718 = vmatpush1.msra.mxu0 %v614
        %3719 = vmatprep.subr.mxu0 0.0
        %3720 = vmatpush1.msra.mxu0 %v613
        %3721 = vmatprep.subr.mxu0 0.0
        %3722 = vmatpush2.msra.mxu0 0.0
        %3723 = vmatprep.subr.mxu0 0.0
        %3724 = vmatpush2.msra.mxu0 0.0
        %3725 = vmatprep.subr.mxu0 0.0
        %3726 = vmatpush2.msra.mxu0 0.0
        %3727 = vmatprep.subr.mxu0 0.0
        %3728 = vmatpush2.msra.mxu0 0.0
        %3729 = vmatprep.subr.mxu0 0.0
        %3730 = vmatpush2.msra.mxu0 0.0
        %3731 = vmatprep.subr.mxu0 0.0
        %3732 = vmatpush2.msra.mxu0 0.0
        %3733 = vmatprep.subr.mxu0 0.0
        %3734 = vmatpush2.msra.mxu0 0.0
        %3735 = vmatprep.subr.mxu0 0.0
        %3736 = vmatpush2.msra.mxu0 0.0
        %3737 = vmatprep.subr.mxu0 0.0
        %3738 = vmatpush2.msra.mxu0 0.0
        %3739 = vmatprep.subr.mxu0 0.0
        %3740 = vmatpush2.msra.mxu0 0.0
        %3741 = vmatprep.subr.mxu0 0.0
        %3742 = vmatpush2.msra.mxu0 0.0
        %3743 = vmatprep.subr.mxu0 0.0
        %3744 = vmatpush2.msra.mxu0 0.0
        %3745 = vmatprep.subr.mxu0 0.0
        %3746 = vmatpush2.msra.mxu0 0.0
        %3747 = vmatprep.subr.mxu0 0.0
        %3748 = vmatpush2.msra.mxu0 0.0
        %3749 = vmatprep.subr.mxu0 0.0
        %3750 = vmatpush2.msra.mxu0 0.0
        %3751 = vmatprep.subr.mxu0 0.0
        %3752 = vmatpush2.msra.mxu0 0.0
        %3753 = vmatprep.mubr.f32.mxu0 0.0
        %3754 = vmatmul.mubr.f32.gmra.mxu0 %v3642
        %v3755 = vpop.f32.mrf.mxu0
        %v3756 = vadd.f32 0.0, %v3755
        %v3757 = vpop.f32.mrf.mxu0
        %3758 = vmatprep.mubr.f32.mxu0 0.0
        %3759 = vmatmul.mubr.f32.gmra.mxu0 %v3645
        %v3760 = vpop.f32.mrf.mxu0
        %v3761 = vadd.f32 0.0, %v3760
        %v3762 = vpop.f32.mrf.mxu0
        %3763 = vmatprep.mubr.f32.mxu0 0.0
        %3764 = vmatmul.mubr.f32.gmra.mxu0 %v3648
        %v3765 = vpop.f32.mrf.mxu0
        %v3766 = vadd.f32 0.0, %v3765
        %v3767 = vpop.f32.mrf.mxu0
        %3768 = vmatprep.mubr.f32.mxu0 0.0
        %3769 = vmatmul.mubr.f32.gmra.mxu0 %v3651
        %v3770 = vpop.f32.mrf.mxu0
        %v3771 = vadd.f32 0.0, %v3770
        %v3772 = vpop.f32.mrf.mxu0
        %3773 = vmatprep.mubr.f32.mxu0 0.0
        %3774 = vmatmul.mubr.f32.gmra.mxu0 %v3654
        %v3775 = vpop.f32.mrf.mxu0
        %v3776 = vadd.f32 0.0, %v3775
        %v3777 = vpop.f32.mrf.mxu0
        %3778 = vmatprep.mubr.f32.mxu0 0.0
        %3779 = vmatmul.mubr.f32.gmra.mxu0 %v3657
        %v3780 = vpop.f32.mrf.mxu0
        %v3781 = vadd.f32 0.0, %v3780
        %v3782 = vpop.f32.mrf.mxu0
        %3783 = vmatprep.mubr.f32.mxu0 0.0
        %3784 = vmatmul.mubr.f32.gmra.mxu0 %v3660
        %v3785 = vpop.f32.mrf.mxu0
        %v3786 = vadd.f32 0.0, %v3785
        %v3787 = vpop.f32.mrf.mxu0
        %3788 = vmatprep.mubr.f32.mxu0 0.0
        %3789 = vmatmul.mubr.f32.gmra.mxu0 %v3663
        %v3790 = vpop.f32.mrf.mxu0
        %v3791 = vadd.f32 0.0, %v3790
        %v3792 = vpop.f32.mrf.mxu0
        %3793 = vmatprep.mubr.f32.mxu0 0.0
        %3794 = vmatmul.mubr.f32.gmra.mxu0 %v3666
        %v3795 = vpop.f32.mrf.mxu0
        %v3796 = vadd.f32 0.0, %v3795
        %v3797 = vpop.f32.mrf.mxu0
        %3798 = vmatprep.mubr.f32.mxu0 0.0
        %3799 = vmatmul.mubr.f32.gmra.mxu0 %v3669
        %v3800 = vpop.f32.mrf.mxu0
        %v3801 = vadd.f32 0.0, %v3800
        %v3802 = vpop.f32.mrf.mxu0
        %3803 = vmatprep.mubr.f32.mxu0 0.0
        %3804 = vmatmul.mubr.f32.gmra.mxu0 %v3672
        %v3805 = vpop.f32.mrf.mxu0
        %v3806 = vadd.f32 0.0, %v3805
        %v3807 = vpop.f32.mrf.mxu0
        %3808 = vmatprep.mubr.f32.mxu0 0.0
        %3809 = vmatmul.mubr.f32.gmra.mxu0 %v3675
        %v3810 = vpop.f32.mrf.mxu0
        %v3811 = vadd.f32 0.0, %v3810
        %v3812 = vpop.f32.mrf.mxu0
        %3813 = vmatprep.mubr.f32.mxu0 0.0
        %3814 = vmatmul.mubr.f32.gmra.mxu0 %v3678
        %v3815 = vpop.f32.mrf.mxu0
        %v3816 = vadd.f32 0.0, %v3815
        %v3817 = vpop.f32.mrf.mxu0
        %3818 = vmatprep.mubr.f32.mxu0 0.0
        %3819 = vmatmul.mubr.f32.gmra.mxu0 %v3681
        %v3820 = vpop.f32.mrf.mxu0
        %v3821 = vadd.f32 0.0, %v3820
        %v3822 = vpop.f32.mrf.mxu0
        %3823 = vmatprep.mubr.f32.mxu0 0.0
        %3824 = vmatmul.mubr.f32.gmra.mxu0 %v3684
        %v3825 = vpop.f32.mrf.mxu0
        %v3826 = vadd.f32 0.0, %v3825
        %v3827 = vpop.f32.mrf.mxu0
        %3828 = vmatprep.mubr.f32.mxu0 0.0
        %3829 = vmatmul.mubr.f32.gmra.mxu0 %v3687
        %v3830 = vpop.f32.mrf.mxu0
        %v3831 = vadd.f32 0.0, %v3830
        %v3832 = vpop.f32.mrf.mxu0
        %3833 = vdwg.mxu0
        %3834 = vxpose.xlu0.b32.start [1/16] %v2909, 128
        %3835 = vxpose.xlu0.b32.cont [2/16] %v2910, 128
        %3836 = vxpose.xlu0.b32.cont [3/16] 0.0, 128
        %3837 = vxpose.xlu0.b32.cont [4/16] 0.0, 128
        %3838 = vxpose.xlu0.b32.cont [5/16] 0.0, 128
        %3839 = vxpose.xlu0.b32.cont [6/16] 0.0, 128
        %3840 = vxpose.xlu0.b32.cont [7/16] 0.0, 128
        %3841 = vxpose.xlu0.b32.cont [8/16] 0.0, 128
        %3842 = vxpose.xlu0.b32.cont [9/16] 0.0, 128
        %3843 = vxpose.xlu0.b32.cont [10/16] 0.0, 128
        %3844 = vxpose.xlu0.b32.cont [11/16] 0.0, 128
        %3845 = vxpose.xlu0.b32.cont [12/16] 0.0, 128
        %3846 = vxpose.xlu0.b32.cont [13/16] 0.0, 128
        %3847 = vxpose.xlu0.b32.cont [14/16] 0.0, 128
        %3848 = vxpose.xlu0.b32.cont [15/16] 0.0, 128
        %3849 = vxpose.xlu0.b32.end [16/16] 0.0, 128
        %v3850 = vpop.trf.xlu0
        %v3851 = vpop.trf.xlu0
        %v3852 = vpop.trf.xlu0
        %v3853 = vpop.trf.xlu0
        %v3854 = vpop.trf.xlu0
        %v3855 = vpop.trf.xlu0
        %v3856 = vpop.trf.xlu0
        %v3857 = vpop.trf.xlu0
        %v3858 = vpop.trf.xlu0
        %v3859 = vpop.trf.xlu0
        %v3860 = vpop.trf.xlu0
        %v3861 = vpop.trf.xlu0
        %v3862 = vpop.trf.xlu0
        %v3863 = vpop.trf.xlu0
        %v3864 = vpop.trf.xlu0
        %v3865 = vpop.trf.xlu0
        %v3867 = vsel %vm2965, %v3850, 0
        %v3870 = vsel %vm2965, %v3851, 0
        %v3873 = vsel %vm2965, %v3852, 0
        %v3876 = vsel %vm2965, %v3853, 0
        %v3879 = vsel %vm2965, %v3854, 0
        %v3882 = vsel %vm2965, %v3855, 0
        %v3885 = vsel %vm2965, %v3856, 0
        %v3888 = vsel %vm2965, %v3857, 0
        %v3891 = vsel %vm2965, %v3858, 0
        %v3894 = vsel %vm2965, %v3859, 0
        %v3897 = vsel %vm2965, %v3860, 0
        %v3900 = vsel %vm2965, %v3861, 0
        %v3903 = vsel %vm2965, %v3862, 0
        %v3906 = vsel %vm2965, %v3863, 0
        %v3909 = vsel %vm2965, %v3864, 0
        %v3912 = vsel %vm2965, %v3865, 0
        %3914 = vmatprep.subr.mxu0 0.0
        %3915 = vmatpush1.msra.mxu0 0.0
        %3916 = vmatprep.subr.mxu0 0.0
        %3917 = vmatpush1.msra.mxu0 0.0
        %3918 = vmatprep.subr.mxu0 0.0
        %3919 = vmatpush1.msra.mxu0 0.0
        %3920 = vmatprep.subr.mxu0 0.0
        %3921 = vmatpush1.msra.mxu0 0.0
        %3922 = vmatprep.subr.mxu0 0.0
        %3923 = vmatpush1.msra.mxu0 0.0
        %3924 = vmatprep.subr.mxu0 0.0
        %3925 = vmatpush1.msra.mxu0 0.0
        %3926 = vmatprep.subr.mxu0 0.0
        %3927 = vmatpush1.msra.mxu0 0.0
        %3928 = vmatprep.subr.mxu0 0.0
        %3929 = vmatpush1.msra.mxu0 0.0
        %3930 = vmatprep.subr.mxu0 0.0
        %3931 = vmatpush1.msra.mxu0 0.0
        %3932 = vmatprep.subr.mxu0 0.0
        %3933 = vmatpush1.msra.mxu0 0.0
        %3934 = vmatprep.subr.mxu0 0.0
        %3935 = vmatpush1.msra.mxu0 0.0
        %3936 = vmatprep.subr.mxu0 0.0
        %3937 = vmatpush1.msra.mxu0 0.0
        %3938 = vmatprep.subr.mxu0 0.0
        %3939 = vmatpush1.msra.mxu0 0.0
        %3940 = vmatprep.subr.mxu0 0.0
        %3941 = vmatpush1.msra.mxu0 0.0
        %3942 = vmatprep.subr.mxu0 0.0
        %3943 = vmatpush1.msra.mxu0 %v616
        %3944 = vmatprep.subr.mxu0 0.0
        %3945 = vmatpush1.msra.mxu0 %v615
        %3946 = vmatprep.subr.mxu0 0.0
        %3947 = vmatpush2.msra.mxu0 0.0
        %3948 = vmatprep.subr.mxu0 0.0
        %3949 = vmatpush2.msra.mxu0 0.0
        %3950 = vmatprep.subr.mxu0 0.0
        %3951 = vmatpush2.msra.mxu0 0.0
        %3952 = vmatprep.subr.mxu0 0.0
        %3953 = vmatpush2.msra.mxu0 0.0
        %3954 = vmatprep.subr.mxu0 0.0
        %3955 = vmatpush2.msra.mxu0 0.0
        %3956 = vmatprep.subr.mxu0 0.0
        %3957 = vmatpush2.msra.mxu0 0.0
        %3958 = vmatprep.subr.mxu0 0.0
        %3959 = vmatpush2.msra.mxu0 0.0
        %3960 = vmatprep.subr.mxu0 0.0
        %3961 = vmatpush2.msra.mxu0 0.0
        %3962 = vmatprep.subr.mxu0 0.0
        %3963 = vmatpush2.msra.mxu0 0.0
        %3964 = vmatprep.subr.mxu0 0.0
        %3965 = vmatpush2.msra.mxu0 0.0
        %3966 = vmatprep.subr.mxu0 0.0
        %3967 = vmatpush2.msra.mxu0 0.0
        %3968 = vmatprep.subr.mxu0 0.0
        %3969 = vmatpush2.msra.mxu0 0.0
        %3970 = vmatprep.subr.mxu0 0.0
        %3971 = vmatpush2.msra.mxu0 0.0
        %3972 = vmatprep.subr.mxu0 0.0
        %3973 = vmatpush2.msra.mxu0 0.0
        %3974 = vmatprep.subr.mxu0 0.0
        %3975 = vmatpush2.msra.mxu0 0.0
        %3976 = vmatprep.subr.mxu0 0.0
        %3977 = vmatpush2.msra.mxu0 0.0
        %3978 = vmatprep.mubr.f32.mxu0 0.0
        %3979 = vmatmul.mubr.f32.gmra.mxu0 %v3867
        %v3980 = vpop.f32.mrf.mxu0
        %v3981 = vadd.f32 0.0, %v3980
        %v3982 = vpop.f32.mrf.mxu0
        %3983 = vmatprep.mubr.f32.mxu0 0.0
        %3984 = vmatmul.mubr.f32.gmra.mxu0 %v3870
        %v3985 = vpop.f32.mrf.mxu0
        %v3986 = vadd.f32 0.0, %v3985
        %v3987 = vpop.f32.mrf.mxu0
        %3988 = vmatprep.mubr.f32.mxu0 0.0
        %3989 = vmatmul.mubr.f32.gmra.mxu0 %v3873
        %v3990 = vpop.f32.mrf.mxu0
        %v3991 = vadd.f32 0.0, %v3990
        %v3992 = vpop.f32.mrf.mxu0
        %3993 = vmatprep.mubr.f32.mxu0 0.0
        %3994 = vmatmul.mubr.f32.gmra.mxu0 %v3876
        %v3995 = vpop.f32.mrf.mxu0
        %v3996 = vadd.f32 0.0, %v3995
        %v3997 = vpop.f32.mrf.mxu0
        %3998 = vmatprep.mubr.f32.mxu0 0.0
        %3999 = vmatmul.mubr.f32.gmra.mxu0 %v3879
        %v4000 = vpop.f32.mrf.mxu0
        %v4001 = vadd.f32 0.0, %v4000
        %v4002 = vpop.f32.mrf.mxu0
        %4003 = vmatprep.mubr.f32.mxu0 0.0
        %4004 = vmatmul.mubr.f32.gmra.mxu0 %v3882
        %v4005 = vpop.f32.mrf.mxu0
        %v4006 = vadd.f32 0.0, %v4005
        %v4007 = vpop.f32.mrf.mxu0
        %4008 = vmatprep.mubr.f32.mxu0 0.0
        %4009 = vmatmul.mubr.f32.gmra.mxu0 %v3885
        %v4010 = vpop.f32.mrf.mxu0
        %v4011 = vadd.f32 0.0, %v4010
        %v4012 = vpop.f32.mrf.mxu0
        %4013 = vmatprep.mubr.f32.mxu0 0.0
        %4014 = vmatmul.mubr.f32.gmra.mxu0 %v3888
        %v4015 = vpop.f32.mrf.mxu0
        %v4016 = vadd.f32 0.0, %v4015
        %v4017 = vpop.f32.mrf.mxu0
        %4018 = vmatprep.mubr.f32.mxu0 0.0
        %4019 = vmatmul.mubr.f32.gmra.mxu0 %v3891
        %v4020 = vpop.f32.mrf.mxu0
        %v4021 = vadd.f32 0.0, %v4020
        %v4022 = vpop.f32.mrf.mxu0
        %4023 = vmatprep.mubr.f32.mxu0 0.0
        %4024 = vmatmul.mubr.f32.gmra.mxu0 %v3894
        %v4025 = vpop.f32.mrf.mxu0
        %v4026 = vadd.f32 0.0, %v4025
        %v4027 = vpop.f32.mrf.mxu0
        %4028 = vmatprep.mubr.f32.mxu0 0.0
        %4029 = vmatmul.mubr.f32.gmra.mxu0 %v3897
        %v4030 = vpop.f32.mrf.mxu0
        %v4031 = vadd.f32 0.0, %v4030
        %v4032 = vpop.f32.mrf.mxu0
        %4033 = vmatprep.mubr.f32.mxu0 0.0
        %4034 = vmatmul.mubr.f32.gmra.mxu0 %v3900
        %v4035 = vpop.f32.mrf.mxu0
        %v4036 = vadd.f32 0.0, %v4035
        %v4037 = vpop.f32.mrf.mxu0
        %4038 = vmatprep.mubr.f32.mxu0 0.0
        %4039 = vmatmul.mubr.f32.gmra.mxu0 %v3903
        %v4040 = vpop.f32.mrf.mxu0
        %v4041 = vadd.f32 0.0, %v4040
        %v4042 = vpop.f32.mrf.mxu0
        %4043 = vmatprep.mubr.f32.mxu0 0.0
        %4044 = vmatmul.mubr.f32.gmra.mxu0 %v3906
        %v4045 = vpop.f32.mrf.mxu0
        %v4046 = vadd.f32 0.0, %v4045
        %v4047 = vpop.f32.mrf.mxu0
        %4048 = vmatprep.mubr.f32.mxu0 0.0
        %4049 = vmatmul.mubr.f32.gmra.mxu0 %v3909
        %v4050 = vpop.f32.mrf.mxu0
        %v4051 = vadd.f32 0.0, %v4050
        %v4052 = vpop.f32.mrf.mxu0
        %4053 = vmatprep.mubr.f32.mxu0 0.0
        %4054 = vmatmul.mubr.f32.gmra.mxu0 %v3912
        %v4055 = vpop.f32.mrf.mxu0
        %v4056 = vadd.f32 0.0, %v4055
        %v4057 = vpop.f32.mrf.mxu0
        %4058 = vdwg.mxu0
        %4059 = vxpose.xlu0.b32.start [1/16] %v2911, 128
        %4060 = vxpose.xlu0.b32.cont [2/16] %v2912, 128
        %4061 = vxpose.xlu0.b32.cont [3/16] 0.0, 128
        %4062 = vxpose.xlu0.b32.cont [4/16] 0.0, 128
        %4063 = vxpose.xlu0.b32.cont [5/16] 0.0, 128
        %4064 = vxpose.xlu0.b32.cont [6/16] 0.0, 128
        %4065 = vxpose.xlu0.b32.cont [7/16] 0.0, 128
        %4066 = vxpose.xlu0.b32.cont [8/16] 0.0, 128
        %4067 = vxpose.xlu0.b32.cont [9/16] 0.0, 128
        %4068 = vxpose.xlu0.b32.cont [10/16] 0.0, 128
        %4069 = vxpose.xlu0.b32.cont [11/16] 0.0, 128
        %4070 = vxpose.xlu0.b32.cont [12/16] 0.0, 128
        %4071 = vxpose.xlu0.b32.cont [13/16] 0.0, 128
        %4072 = vxpose.xlu0.b32.cont [14/16] 0.0, 128
        %4073 = vxpose.xlu0.b32.cont [15/16] 0.0, 128
        %4074 = vxpose.xlu0.b32.end [16/16] 0.0, 128
        %v4075 = vpop.trf.xlu0
        %v4076 = vpop.trf.xlu0
        %v4077 = vpop.trf.xlu0
        %v4078 = vpop.trf.xlu0
        %v4079 = vpop.trf.xlu0
        %v4080 = vpop.trf.xlu0
        %v4081 = vpop.trf.xlu0
        %v4082 = vpop.trf.xlu0
        %v4083 = vpop.trf.xlu0
        %v4084 = vpop.trf.xlu0
        %v4085 = vpop.trf.xlu0
        %v4086 = vpop.trf.xlu0
        %v4087 = vpop.trf.xlu0
        %v4088 = vpop.trf.xlu0
        %v4089 = vpop.trf.xlu0
        %v4090 = vpop.trf.xlu0
        %v4092 = vsel %vm2965, %v4075, 0
        %v4095 = vsel %vm2965, %v4076, 0
        %v4098 = vsel %vm2965, %v4077, 0
        %v4101 = vsel %vm2965, %v4078, 0
        %v4104 = vsel %vm2965, %v4079, 0
        %v4107 = vsel %vm2965, %v4080, 0
        %v4110 = vsel %vm2965, %v4081, 0
        %v4113 = vsel %vm2965, %v4082, 0
        %v4116 = vsel %vm2965, %v4083, 0
        %v4119 = vsel %vm2965, %v4084, 0
        %v4122 = vsel %vm2965, %v4085, 0
        %v4125 = vsel %vm2965, %v4086, 0
        %v4128 = vsel %vm2965, %v4087, 0
        %v4131 = vsel %vm2965, %v4088, 0
        %v4134 = vsel %vm2965, %v4089, 0
        %v4137 = vsel %vm2965, %v4090, 0
        %4139 = vmatprep.subr.mxu0 0.0
        %4140 = vmatpush1.msra.mxu0 0.0
        %4141 = vmatprep.subr.mxu0 0.0
        %4142 = vmatpush1.msra.mxu0 0.0
        %4143 = vmatprep.subr.mxu0 0.0
        %4144 = vmatpush1.msra.mxu0 0.0
        %4145 = vmatprep.subr.mxu0 0.0
        %4146 = vmatpush1.msra.mxu0 0.0
        %4147 = vmatprep.subr.mxu0 0.0
        %4148 = vmatpush1.msra.mxu0 0.0
        %4149 = vmatprep.subr.mxu0 0.0
        %4150 = vmatpush1.msra.mxu0 0.0
        %4151 = vmatprep.subr.mxu0 0.0
        %4152 = vmatpush1.msra.mxu0 0.0
        %4153 = vmatprep.subr.mxu0 0.0
        %4154 = vmatpush1.msra.mxu0 0.0
        %4155 = vmatprep.subr.mxu0 0.0
        %4156 = vmatpush1.msra.mxu0 0.0
        %4157 = vmatprep.subr.mxu0 0.0
        %4158 = vmatpush1.msra.mxu0 0.0
        %4159 = vmatprep.subr.mxu0 0.0
        %4160 = vmatpush1.msra.mxu0 0.0
        %4161 = vmatprep.subr.mxu0 0.0
        %4162 = vmatpush1.msra.mxu0 0.0
        %4163 = vmatprep.subr.mxu0 0.0
        %4164 = vmatpush1.msra.mxu0 0.0
        %4165 = vmatprep.subr.mxu0 0.0
        %4166 = vmatpush1.msra.mxu0 0.0
        %4167 = vmatprep.subr.mxu0 0.0
        %4168 = vmatpush1.msra.mxu0 %v618
        %4169 = vmatprep.subr.mxu0 0.0
        %4170 = vmatpush1.msra.mxu0 %v617
        %4171 = vmatprep.subr.mxu0 0.0
        %4172 = vmatpush2.msra.mxu0 0.0
        %4173 = vmatprep.subr.mxu0 0.0
        %4174 = vmatpush2.msra.mxu0 0.0
        %4175 = vmatprep.subr.mxu0 0.0
        %4176 = vmatpush2.msra.mxu0 0.0
        %4177 = vmatprep.subr.mxu0 0.0
        %4178 = vmatpush2.msra.mxu0 0.0
        %4179 = vmatprep.subr.mxu0 0.0
        %4180 = vmatpush2.msra.mxu0 0.0
        %4181 = vmatprep.subr.mxu0 0.0
        %4182 = vmatpush2.msra.mxu0 0.0
        %4183 = vmatprep.subr.mxu0 0.0
        %4184 = vmatpush2.msra.mxu0 0.0
        %4185 = vmatprep.subr.mxu0 0.0
        %4186 = vmatpush2.msra.mxu0 0.0
        %4187 = vmatprep.subr.mxu0 0.0
        %4188 = vmatpush2.msra.mxu0 0.0
        %4189 = vmatprep.subr.mxu0 0.0
        %4190 = vmatpush2.msra.mxu0 0.0
        %4191 = vmatprep.subr.mxu0 0.0
        %4192 = vmatpush2.msra.mxu0 0.0
        %4193 = vmatprep.subr.mxu0 0.0
        %4194 = vmatpush2.msra.mxu0 0.0
        %4195 = vmatprep.subr.mxu0 0.0
        %4196 = vmatpush2.msra.mxu0 0.0
        %4197 = vmatprep.subr.mxu0 0.0
        %4198 = vmatpush2.msra.mxu0 0.0
        %4199 = vmatprep.subr.mxu0 0.0
        %4200 = vmatpush2.msra.mxu0 0.0
        %4201 = vmatprep.subr.mxu0 0.0
        %4202 = vmatpush2.msra.mxu0 0.0
        %4203 = vmatprep.mubr.f32.mxu0 0.0
        %4204 = vmatmul.mubr.f32.gmra.mxu0 %v4092
        %v4205 = vpop.f32.mrf.mxu0
        %v4206 = vadd.f32 0.0, %v4205
        %v4207 = vpop.f32.mrf.mxu0
        %4208 = vmatprep.mubr.f32.mxu0 0.0
        %4209 = vmatmul.mubr.f32.gmra.mxu0 %v4095
        %v4210 = vpop.f32.mrf.mxu0
        %v4211 = vadd.f32 0.0, %v4210
        %v4212 = vpop.f32.mrf.mxu0
        %4213 = vmatprep.mubr.f32.mxu0 0.0
        %4214 = vmatmul.mubr.f32.gmra.mxu0 %v4098
        %v4215 = vpop.f32.mrf.mxu0
        %v4216 = vadd.f32 0.0, %v4215
        %v4217 = vpop.f32.mrf.mxu0
        %4218 = vmatprep.mubr.f32.mxu0 0.0
        %4219 = vmatmul.mubr.f32.gmra.mxu0 %v4101
        %v4220 = vpop.f32.mrf.mxu0
        %v4221 = vadd.f32 0.0, %v4220
        %v4222 = vpop.f32.mrf.mxu0
        %4223 = vmatprep.mubr.f32.mxu0 0.0
        %4224 = vmatmul.mubr.f32.gmra.mxu0 %v4104
        %v4225 = vpop.f32.mrf.mxu0
        %v4226 = vadd.f32 0.0, %v4225
        %v4227 = vpop.f32.mrf.mxu0
        %4228 = vmatprep.mubr.f32.mxu0 0.0
        %4229 = vmatmul.mubr.f32.gmra.mxu0 %v4107
        %v4230 = vpop.f32.mrf.mxu0
        %v4231 = vadd.f32 0.0, %v4230
        %v4232 = vpop.f32.mrf.mxu0
        %4233 = vmatprep.mubr.f32.mxu0 0.0
        %4234 = vmatmul.mubr.f32.gmra.mxu0 %v4110
        %v4235 = vpop.f32.mrf.mxu0
        %v4236 = vadd.f32 0.0, %v4235
        %v4237 = vpop.f32.mrf.mxu0
        %4238 = vmatprep.mubr.f32.mxu0 0.0
        %4239 = vmatmul.mubr.f32.gmra.mxu0 %v4113
        %v4240 = vpop.f32.mrf.mxu0
        %v4241 = vadd.f32 0.0, %v4240
        %v4242 = vpop.f32.mrf.mxu0
        %4243 = vmatprep.mubr.f32.mxu0 0.0
        %4244 = vmatmul.mubr.f32.gmra.mxu0 %v4116
        %v4245 = vpop.f32.mrf.mxu0
        %v4246 = vadd.f32 0.0, %v4245
        %v4247 = vpop.f32.mrf.mxu0
        %4248 = vmatprep.mubr.f32.mxu0 0.0
        %4249 = vmatmul.mubr.f32.gmra.mxu0 %v4119
        %v4250 = vpop.f32.mrf.mxu0
        %v4251 = vadd.f32 0.0, %v4250
        %v4252 = vpop.f32.mrf.mxu0
        %4253 = vmatprep.mubr.f32.mxu0 0.0
        %4254 = vmatmul.mubr.f32.gmra.mxu0 %v4122
        %v4255 = vpop.f32.mrf.mxu0
        %v4256 = vadd.f32 0.0, %v4255
        %v4257 = vpop.f32.mrf.mxu0
        %4258 = vmatprep.mubr.f32.mxu0 0.0
        %4259 = vmatmul.mubr.f32.gmra.mxu0 %v4125
        %v4260 = vpop.f32.mrf.mxu0
        %v4261 = vadd.f32 0.0, %v4260
        %v4262 = vpop.f32.mrf.mxu0
        %4263 = vmatprep.mubr.f32.mxu0 0.0
        %4264 = vmatmul.mubr.f32.gmra.mxu0 %v4128
        %v4265 = vpop.f32.mrf.mxu0
        %v4266 = vadd.f32 0.0, %v4265
        %v4267 = vpop.f32.mrf.mxu0
        %4268 = vmatprep.mubr.f32.mxu0 0.0
        %4269 = vmatmul.mubr.f32.gmra.mxu0 %v4131
        %v4270 = vpop.f32.mrf.mxu0
        %v4271 = vadd.f32 0.0, %v4270
        %v4272 = vpop.f32.mrf.mxu0
        %4273 = vmatprep.mubr.f32.mxu0 0.0
        %4274 = vmatmul.mubr.f32.gmra.mxu0 %v4134
        %v4275 = vpop.f32.mrf.mxu0
        %v4276 = vadd.f32 0.0, %v4275
        %v4277 = vpop.f32.mrf.mxu0
        %4278 = vmatprep.mubr.f32.mxu0 0.0
        %4279 = vmatmul.mubr.f32.gmra.mxu0 %v4137
        %v4280 = vpop.f32.mrf.mxu0
        %v4281 = vadd.f32 0.0, %v4280
        %v4282 = vpop.f32.mrf.mxu0
        %4283 = vdwg.mxu0
        %4284 = vxpose.xlu0.b32.start [1/16] %v2913, 128
        %4285 = vxpose.xlu0.b32.cont [2/16] %v2914, 128
        %4286 = vxpose.xlu0.b32.cont [3/16] 0.0, 128
        %4287 = vxpose.xlu0.b32.cont [4/16] 0.0, 128
        %4288 = vxpose.xlu0.b32.cont [5/16] 0.0, 128
        %4289 = vxpose.xlu0.b32.cont [6/16] 0.0, 128
        %4290 = vxpose.xlu0.b32.cont [7/16] 0.0, 128
        %4291 = vxpose.xlu0.b32.cont [8/16] 0.0, 128
        %4292 = vxpose.xlu0.b32.cont [9/16] 0.0, 128
        %4293 = vxpose.xlu0.b32.cont [10/16] 0.0, 128
        %4294 = vxpose.xlu0.b32.cont [11/16] 0.0, 128
        %4295 = vxpose.xlu0.b32.cont [12/16] 0.0, 128
        %4296 = vxpose.xlu0.b32.cont [13/16] 0.0, 128
        %4297 = vxpose.xlu0.b32.cont [14/16] 0.0, 128
        %4298 = vxpose.xlu0.b32.cont [15/16] 0.0, 128
        %4299 = vxpose.xlu0.b32.end [16/16] 0.0, 128
        %v4300 = vpop.trf.xlu0
        %v4301 = vpop.trf.xlu0
        %v4302 = vpop.trf.xlu0
        %v4303 = vpop.trf.xlu0
        %v4304 = vpop.trf.xlu0
        %v4305 = vpop.trf.xlu0
        %v4306 = vpop.trf.xlu0
        %v4307 = vpop.trf.xlu0
        %v4308 = vpop.trf.xlu0
        %v4309 = vpop.trf.xlu0
        %v4310 = vpop.trf.xlu0
        %v4311 = vpop.trf.xlu0
        %v4312 = vpop.trf.xlu0
        %v4313 = vpop.trf.xlu0
        %v4314 = vpop.trf.xlu0
        %v4315 = vpop.trf.xlu0
        %v4317 = vsel %vm2965, %v4300, 0
        %v4320 = vsel %vm2965, %v4301, 0
        %v4323 = vsel %vm2965, %v4302, 0
        %v4326 = vsel %vm2965, %v4303, 0
        %v4329 = vsel %vm2965, %v4304, 0
        %v4332 = vsel %vm2965, %v4305, 0
        %v4335 = vsel %vm2965, %v4306, 0
        %v4338 = vsel %vm2965, %v4307, 0
        %v4341 = vsel %vm2965, %v4308, 0
        %v4344 = vsel %vm2965, %v4309, 0
        %v4347 = vsel %vm2965, %v4310, 0
        %v4350 = vsel %vm2965, %v4311, 0
        %v4353 = vsel %vm2965, %v4312, 0
        %v4356 = vsel %vm2965, %v4313, 0
        %v4359 = vsel %vm2965, %v4314, 0
        %v4362 = vsel %vm2965, %v4315, 0
        %4364 = vmatprep.subr.mxu0 0.0
        %4365 = vmatpush1.msra.mxu0 0.0
        %4366 = vmatprep.subr.mxu0 0.0
        %4367 = vmatpush1.msra.mxu0 0.0
        %4368 = vmatprep.subr.mxu0 0.0
        %4369 = vmatpush1.msra.mxu0 0.0
        %4370 = vmatprep.subr.mxu0 0.0
        %4371 = vmatpush1.msra.mxu0 0.0
        %4372 = vmatprep.subr.mxu0 0.0
        %4373 = vmatpush1.msra.mxu0 0.0
        %4374 = vmatprep.subr.mxu0 0.0
        %4375 = vmatpush1.msra.mxu0 0.0
        %4376 = vmatprep.subr.mxu0 0.0
        %4377 = vmatpush1.msra.mxu0 0.0
        %4378 = vmatprep.subr.mxu0 0.0
        %4379 = vmatpush1.msra.mxu0 0.0
        %4380 = vmatprep.subr.mxu0 0.0
        %4381 = vmatpush1.msra.mxu0 0.0
        %4382 = vmatprep.subr.mxu0 0.0
        %4383 = vmatpush1.msra.mxu0 0.0
        %4384 = vmatprep.subr.mxu0 0.0
        %4385 = vmatpush1.msra.mxu0 0.0
        %4386 = vmatprep.subr.mxu0 0.0
        %4387 = vmatpush1.msra.mxu0 0.0
        %4388 = vmatprep.subr.mxu0 0.0
        %4389 = vmatpush1.msra.mxu0 0.0
        %4390 = vmatprep.subr.mxu0 0.0
        %4391 = vmatpush1.msra.mxu0 0.0
        %4392 = vmatprep.subr.mxu0 0.0
        %4393 = vmatpush1.msra.mxu0 %v620
        %4394 = vmatprep.subr.mxu0 0.0
        %4395 = vmatpush1.msra.mxu0 %v619
        %4396 = vmatprep.subr.mxu0 0.0
        %4397 = vmatpush2.msra.mxu0 0.0
        %4398 = vmatprep.subr.mxu0 0.0
        %4399 = vmatpush2.msra.mxu0 0.0
        %4400 = vmatprep.subr.mxu0 0.0
        %4401 = vmatpush2.msra.mxu0 0.0
        %4402 = vmatprep.subr.mxu0 0.0
        %4403 = vmatpush2.msra.mxu0 0.0
        %4404 = vmatprep.subr.mxu0 0.0
        %4405 = vmatpush2.msra.mxu0 0.0
        %4406 = vmatprep.subr.mxu0 0.0
        %4407 = vmatpush2.msra.mxu0 0.0
        %4408 = vmatprep.subr.mxu0 0.0
        %4409 = vmatpush2.msra.mxu0 0.0
        %4410 = vmatprep.subr.mxu0 0.0
        %4411 = vmatpush2.msra.mxu0 0.0
        %4412 = vmatprep.subr.mxu0 0.0
        %4413 = vmatpush2.msra.mxu0 0.0
        %4414 = vmatprep.subr.mxu0 0.0
        %4415 = vmatpush2.msra.mxu0 0.0
        %4416 = vmatprep.subr.mxu0 0.0
        %4417 = vmatpush2.msra.mxu0 0.0
        %4418 = vmatprep.subr.mxu0 0.0
        %4419 = vmatpush2.msra.mxu0 0.0
        %4420 = vmatprep.subr.mxu0 0.0
        %4421 = vmatpush2.msra.mxu0 0.0
        %4422 = vmatprep.subr.mxu0 0.0
        %4423 = vmatpush2.msra.mxu0 0.0
        %4424 = vmatprep.subr.mxu0 0.0
        %4425 = vmatpush2.msra.mxu0 0.0
        %4426 = vmatprep.subr.mxu0 0.0
        %4427 = vmatpush2.msra.mxu0 0.0
        %4428 = vmatprep.mubr.f32.mxu0 0.0
        %4429 = vmatmul.mubr.f32.gmra.mxu0 %v4317
        %v4430 = vpop.f32.mrf.mxu0
        %v4431 = vadd.f32 0.0, %v4430
        %v4432 = vpop.f32.mrf.mxu0
        %4433 = vmatprep.mubr.f32.mxu0 0.0
        %4434 = vmatmul.mubr.f32.gmra.mxu0 %v4320
        %v4435 = vpop.f32.mrf.mxu0
        %v4436 = vadd.f32 0.0, %v4435
        %v4437 = vpop.f32.mrf.mxu0
        %4438 = vmatprep.mubr.f32.mxu0 0.0
        %4439 = vmatmul.mubr.f32.gmra.mxu0 %v4323
        %v4440 = vpop.f32.mrf.mxu0
        %v4441 = vadd.f32 0.0, %v4440
        %v4442 = vpop.f32.mrf.mxu0
        %4443 = vmatprep.mubr.f32.mxu0 0.0
        %4444 = vmatmul.mubr.f32.gmra.mxu0 %v4326
        %v4445 = vpop.f32.mrf.mxu0
        %v4446 = vadd.f32 0.0, %v4445
        %v4447 = vpop.f32.mrf.mxu0
        %4448 = vmatprep.mubr.f32.mxu0 0.0
        %4449 = vmatmul.mubr.f32.gmra.mxu0 %v4329
        %v4450 = vpop.f32.mrf.mxu0
        %v4451 = vadd.f32 0.0, %v4450
        %v4452 = vpop.f32.mrf.mxu0
        %4453 = vmatprep.mubr.f32.mxu0 0.0
        %4454 = vmatmul.mubr.f32.gmra.mxu0 %v4332
        %v4455 = vpop.f32.mrf.mxu0
        %v4456 = vadd.f32 0.0, %v4455
        %v4457 = vpop.f32.mrf.mxu0
        %4458 = vmatprep.mubr.f32.mxu0 0.0
        %4459 = vmatmul.mubr.f32.gmra.mxu0 %v4335
        %v4460 = vpop.f32.mrf.mxu0
        %v4461 = vadd.f32 0.0, %v4460
        %v4462 = vpop.f32.mrf.mxu0
        %4463 = vmatprep.mubr.f32.mxu0 0.0
        %4464 = vmatmul.mubr.f32.gmra.mxu0 %v4338
        %v4465 = vpop.f32.mrf.mxu0
        %v4466 = vadd.f32 0.0, %v4465
        %v4467 = vpop.f32.mrf.mxu0
        %4468 = vmatprep.mubr.f32.mxu0 0.0
        %4469 = vmatmul.mubr.f32.gmra.mxu0 %v4341
        %v4470 = vpop.f32.mrf.mxu0
        %v4471 = vadd.f32 0.0, %v4470
        %v4472 = vpop.f32.mrf.mxu0
        %4473 = vmatprep.mubr.f32.mxu0 0.0
        %4474 = vmatmul.mubr.f32.gmra.mxu0 %v4344
        %v4475 = vpop.f32.mrf.mxu0
        %v4476 = vadd.f32 0.0, %v4475
        %v4477 = vpop.f32.mrf.mxu0
        %4478 = vmatprep.mubr.f32.mxu0 0.0
        %4479 = vmatmul.mubr.f32.gmra.mxu0 %v4347
        %v4480 = vpop.f32.mrf.mxu0
        %v4481 = vadd.f32 0.0, %v4480
        %v4482 = vpop.f32.mrf.mxu0
        %4483 = vmatprep.mubr.f32.mxu0 0.0
        %4484 = vmatmul.mubr.f32.gmra.mxu0 %v4350
        %v4485 = vpop.f32.mrf.mxu0
        %v4486 = vadd.f32 0.0, %v4485
        %v4487 = vpop.f32.mrf.mxu0
        %4488 = vmatprep.mubr.f32.mxu0 0.0
        %4489 = vmatmul.mubr.f32.gmra.mxu0 %v4353
        %v4490 = vpop.f32.mrf.mxu0
        %v4491 = vadd.f32 0.0, %v4490
        %v4492 = vpop.f32.mrf.mxu0
        %4493 = vmatprep.mubr.f32.mxu0 0.0
        %4494 = vmatmul.mubr.f32.gmra.mxu0 %v4356
        %v4495 = vpop.f32.mrf.mxu0
        %v4496 = vadd.f32 0.0, %v4495
        %v4497 = vpop.f32.mrf.mxu0
        %4498 = vmatprep.mubr.f32.mxu0 0.0
        %4499 = vmatmul.mubr.f32.gmra.mxu0 %v4359
        %v4500 = vpop.f32.mrf.mxu0
        %v4501 = vadd.f32 0.0, %v4500
        %v4502 = vpop.f32.mrf.mxu0
        %4503 = vmatprep.mubr.f32.mxu0 0.0
        %4504 = vmatmul.mubr.f32.gmra.mxu0 %v4362
        %v4505 = vpop.f32.mrf.mxu0
        %v4506 = vadd.f32 0.0, %v4505
        %v4507 = vpop.f32.mrf.mxu0
        %4508 = vdwg.mxu0
        %4509 = vxpose.xlu0.b32.start [1/16] %v2915, 128
        %4510 = vxpose.xlu0.b32.cont [2/16] %v2916, 128
        %4511 = vxpose.xlu0.b32.cont [3/16] 0.0, 128
        %4512 = vxpose.xlu0.b32.cont [4/16] 0.0, 128
        %4513 = vxpose.xlu0.b32.cont [5/16] 0.0, 128
        %4514 = vxpose.xlu0.b32.cont [6/16] 0.0, 128
        %4515 = vxpose.xlu0.b32.cont [7/16] 0.0, 128
        %4516 = vxpose.xlu0.b32.cont [8/16] 0.0, 128
        %4517 = vxpose.xlu0.b32.cont [9/16] 0.0, 128
        %4518 = vxpose.xlu0.b32.cont [10/16] 0.0, 128
        %4519 = vxpose.xlu0.b32.cont [11/16] 0.0, 128
        %4520 = vxpose.xlu0.b32.cont [12/16] 0.0, 128
        %4521 = vxpose.xlu0.b32.cont [13/16] 0.0, 128
        %4522 = vxpose.xlu0.b32.cont [14/16] 0.0, 128
        %4523 = vxpose.xlu0.b32.cont [15/16] 0.0, 128
        %4524 = vxpose.xlu0.b32.end [16/16] 0.0, 128
        %v4525 = vpop.trf.xlu0
        %v4526 = vpop.trf.xlu0
        %v4527 = vpop.trf.xlu0
        %v4528 = vpop.trf.xlu0
        %v4529 = vpop.trf.xlu0
        %v4530 = vpop.trf.xlu0
        %v4531 = vpop.trf.xlu0
        %v4532 = vpop.trf.xlu0
        %v4533 = vpop.trf.xlu0
        %v4534 = vpop.trf.xlu0
        %v4535 = vpop.trf.xlu0
        %v4536 = vpop.trf.xlu0
        %v4537 = vpop.trf.xlu0
        %v4538 = vpop.trf.xlu0
        %v4539 = vpop.trf.xlu0
        %v4540 = vpop.trf.xlu0
        %v4542 = vsel %vm2965, %v4525, 0
        %v4545 = vsel %vm2965, %v4526, 0
        %v4548 = vsel %vm2965, %v4527, 0
        %v4551 = vsel %vm2965, %v4528, 0
        %v4554 = vsel %vm2965, %v4529, 0
        %v4557 = vsel %vm2965, %v4530, 0
        %v4560 = vsel %vm2965, %v4531, 0
        %v4563 = vsel %vm2965, %v4532, 0
        %v4566 = vsel %vm2965, %v4533, 0
        %v4569 = vsel %vm2965, %v4534, 0
        %v4572 = vsel %vm2965, %v4535, 0
        %v4575 = vsel %vm2965, %v4536, 0
        %v4578 = vsel %vm2965, %v4537, 0
        %v4581 = vsel %vm2965, %v4538, 0
        %v4584 = vsel %vm2965, %v4539, 0
        %v4587 = vsel %vm2965, %v4540, 0
        %4589 = vmatprep.subr.mxu0 0.0
        %4590 = vmatpush1.msra.mxu0 0.0
        %4591 = vmatprep.subr.mxu0 0.0
        %4592 = vmatpush1.msra.mxu0 0.0
        %4593 = vmatprep.subr.mxu0 0.0
        %4594 = vmatpush1.msra.mxu0 0.0
        %4595 = vmatprep.subr.mxu0 0.0
        %4596 = vmatpush1.msra.mxu0 0.0
        %4597 = vmatprep.subr.mxu0 0.0
        %4598 = vmatpush1.msra.mxu0 0.0
        %4599 = vmatprep.subr.mxu0 0.0
        %4600 = vmatpush1.msra.mxu0 0.0
        %4601 = vmatprep.subr.mxu0 0.0
        %4602 = vmatpush1.msra.mxu0 0.0
        %4603 = vmatprep.subr.mxu0 0.0
        %4604 = vmatpush1.msra.mxu0 0.0
        %4605 = vmatprep.subr.mxu0 0.0
        %4606 = vmatpush1.msra.mxu0 0.0
        %4607 = vmatprep.subr.mxu0 0.0
        %4608 = vmatpush1.msra.mxu0 0.0
        %4609 = vmatprep.subr.mxu0 0.0
        %4610 = vmatpush1.msra.mxu0 0.0
        %4611 = vmatprep.subr.mxu0 0.0
        %4612 = vmatpush1.msra.mxu0 0.0
        %4613 = vmatprep.subr.mxu0 0.0
        %4614 = vmatpush1.msra.mxu0 0.0
        %4615 = vmatprep.subr.mxu0 0.0
        %4616 = vmatpush1.msra.mxu0 0.0
        %4617 = vmatprep.subr.mxu0 0.0
        %4618 = vmatpush1.msra.mxu0 %v622
        %4619 = vmatprep.subr.mxu0 0.0
        %4620 = vmatpush1.msra.mxu0 %v621
        %4621 = vmatprep.subr.mxu0 0.0
        %4622 = vmatpush2.msra.mxu0 0.0
        %4623 = vmatprep.subr.mxu0 0.0
        %4624 = vmatpush2.msra.mxu0 0.0
        %4625 = vmatprep.subr.mxu0 0.0
        %4626 = vmatpush2.msra.mxu0 0.0
        %4627 = vmatprep.subr.mxu0 0.0
        %4628 = vmatpush2.msra.mxu0 0.0
        %4629 = vmatprep.subr.mxu0 0.0
        %4630 = vmatpush2.msra.mxu0 0.0
        %4631 = vmatprep.subr.mxu0 0.0
        %4632 = vmatpush2.msra.mxu0 0.0
        %4633 = vmatprep.subr.mxu0 0.0
        %4634 = vmatpush2.msra.mxu0 0.0
        %4635 = vmatprep.subr.mxu0 0.0
        %4636 = vmatpush2.msra.mxu0 0.0
        %4637 = vmatprep.subr.mxu0 0.0
        %4638 = vmatpush2.msra.mxu0 0.0
        %4639 = vmatprep.subr.mxu0 0.0
        %4640 = vmatpush2.msra.mxu0 0.0
        %4641 = vmatprep.subr.mxu0 0.0
        %4642 = vmatpush2.msra.mxu0 0.0
        %4643 = vmatprep.subr.mxu0 0.0
        %4644 = vmatpush2.msra.mxu0 0.0
        %4645 = vmatprep.subr.mxu0 0.0
        %4646 = vmatpush2.msra.mxu0 0.0
        %4647 = vmatprep.subr.mxu0 0.0
        %4648 = vmatpush2.msra.mxu0 0.0
        %4649 = vmatprep.subr.mxu0 0.0
        %4650 = vmatpush2.msra.mxu0 0.0
        %4651 = vmatprep.subr.mxu0 0.0
        %4652 = vmatpush2.msra.mxu0 0.0
        %4653 = vmatprep.mubr.f32.mxu0 0.0
        %4654 = vmatmul.mubr.f32.gmra.mxu0 %v4542
        %v4655 = vpop.f32.mrf.mxu0
        %v4656 = vadd.f32 0.0, %v4655
        %v4657 = vpop.f32.mrf.mxu0
        %4658 = vmatprep.mubr.f32.mxu0 0.0
        %4659 = vmatmul.mubr.f32.gmra.mxu0 %v4545
        %v4660 = vpop.f32.mrf.mxu0
        %v4661 = vadd.f32 0.0, %v4660
        %v4662 = vpop.f32.mrf.mxu0
        %4663 = vmatprep.mubr.f32.mxu0 0.0
        %4664 = vmatmul.mubr.f32.gmra.mxu0 %v4548
        %v4665 = vpop.f32.mrf.mxu0
        %v4666 = vadd.f32 0.0, %v4665
        %v4667 = vpop.f32.mrf.mxu0
        %4668 = vmatprep.mubr.f32.mxu0 0.0
        %4669 = vmatmul.mubr.f32.gmra.mxu0 %v4551
        %v4670 = vpop.f32.mrf.mxu0
        %v4671 = vadd.f32 0.0, %v4670
        %v4672 = vpop.f32.mrf.mxu0
        %4673 = vmatprep.mubr.f32.mxu0 0.0
        %4674 = vmatmul.mubr.f32.gmra.mxu0 %v4554
        %v4675 = vpop.f32.mrf.mxu0
        %v4676 = vadd.f32 0.0, %v4675
        %v4677 = vpop.f32.mrf.mxu0
        %4678 = vmatprep.mubr.f32.mxu0 0.0
        %4679 = vmatmul.mubr.f32.gmra.mxu0 %v4557
        %v4680 = vpop.f32.mrf.mxu0
        %v4681 = vadd.f32 0.0, %v4680
        %v4682 = vpop.f32.mrf.mxu0
        %4683 = vmatprep.mubr.f32.mxu0 0.0
        %4684 = vmatmul.mubr.f32.gmra.mxu0 %v4560
        %v4685 = vpop.f32.mrf.mxu0
        %v4686 = vadd.f32 0.0, %v4685
        %v4687 = vpop.f32.mrf.mxu0
        %4688 = vmatprep.mubr.f32.mxu0 0.0
        %4689 = vmatmul.mubr.f32.gmra.mxu0 %v4563
        %v4690 = vpop.f32.mrf.mxu0
        %v4691 = vadd.f32 0.0, %v4690
        %v4692 = vpop.f32.mrf.mxu0
        %4693 = vmatprep.mubr.f32.mxu0 0.0
        %4694 = vmatmul.mubr.f32.gmra.mxu0 %v4566
        %v4695 = vpop.f32.mrf.mxu0
        %v4696 = vadd.f32 0.0, %v4695
        %v4697 = vpop.f32.mrf.mxu0
        %4698 = vmatprep.mubr.f32.mxu0 0.0
        %4699 = vmatmul.mubr.f32.gmra.mxu0 %v4569
        %v4700 = vpop.f32.mrf.mxu0
        %v4701 = vadd.f32 0.0, %v4700
        %v4702 = vpop.f32.mrf.mxu0
        %4703 = vmatprep.mubr.f32.mxu0 0.0
        %4704 = vmatmul.mubr.f32.gmra.mxu0 %v4572
        %v4705 = vpop.f32.mrf.mxu0
        %v4706 = vadd.f32 0.0, %v4705
        %v4707 = vpop.f32.mrf.mxu0
        %4708 = vmatprep.mubr.f32.mxu0 0.0
        %4709 = vmatmul.mubr.f32.gmra.mxu0 %v4575
        %v4710 = vpop.f32.mrf.mxu0
        %v4711 = vadd.f32 0.0, %v4710
        %v4712 = vpop.f32.mrf.mxu0
        %4713 = vmatprep.mubr.f32.mxu0 0.0
        %4714 = vmatmul.mubr.f32.gmra.mxu0 %v4578
        %v4715 = vpop.f32.mrf.mxu0
        %v4716 = vadd.f32 0.0, %v4715
        %v4717 = vpop.f32.mrf.mxu0
        %4718 = vmatprep.mubr.f32.mxu0 0.0
        %4719 = vmatmul.mubr.f32.gmra.mxu0 %v4581
        %v4720 = vpop.f32.mrf.mxu0
        %v4721 = vadd.f32 0.0, %v4720
        %v4722 = vpop.f32.mrf.mxu0
        %4723 = vmatprep.mubr.f32.mxu0 0.0
        %4724 = vmatmul.mubr.f32.gmra.mxu0 %v4584
        %v4725 = vpop.f32.mrf.mxu0
        %v4726 = vadd.f32 0.0, %v4725
        %v4727 = vpop.f32.mrf.mxu0
        %4728 = vmatprep.mubr.f32.mxu0 0.0
        %4729 = vmatmul.mubr.f32.gmra.mxu0 %v4587
        %v4730 = vpop.f32.mrf.mxu0
        %v4731 = vadd.f32 0.0, %v4730
        %v4732 = vpop.f32.mrf.mxu0
        %4733 = vdwg.mxu0
        %4734 = vxpose.xlu0.b32.start [1/16] %v2917, 128
        %4735 = vxpose.xlu0.b32.cont [2/16] %v2918, 128
        %4736 = vxpose.xlu0.b32.cont [3/16] 0.0, 128
        %4737 = vxpose.xlu0.b32.cont [4/16] 0.0, 128
        %4738 = vxpose.xlu0.b32.cont [5/16] 0.0, 128
        %4739 = vxpose.xlu0.b32.cont [6/16] 0.0, 128
        %4740 = vxpose.xlu0.b32.cont [7/16] 0.0, 128
        %4741 = vxpose.xlu0.b32.cont [8/16] 0.0, 128
        %4742 = vxpose.xlu0.b32.cont [9/16] 0.0, 128
        %4743 = vxpose.xlu0.b32.cont [10/16] 0.0, 128
        %4744 = vxpose.xlu0.b32.cont [11/16] 0.0, 128
        %4745 = vxpose.xlu0.b32.cont [12/16] 0.0, 128
        %4746 = vxpose.xlu0.b32.cont [13/16] 0.0, 128
        %4747 = vxpose.xlu0.b32.cont [14/16] 0.0, 128
        %4748 = vxpose.xlu0.b32.cont [15/16] 0.0, 128
        %4749 = vxpose.xlu0.b32.end [16/16] 0.0, 128
        %v4750 = vpop.trf.xlu0
        %v4751 = vpop.trf.xlu0
        %v4752 = vpop.trf.xlu0
        %v4753 = vpop.trf.xlu0
        %v4754 = vpop.trf.xlu0
        %v4755 = vpop.trf.xlu0
        %v4756 = vpop.trf.xlu0
        %v4757 = vpop.trf.xlu0
        %v4758 = vpop.trf.xlu0
        %v4759 = vpop.trf.xlu0
        %v4760 = vpop.trf.xlu0
        %v4761 = vpop.trf.xlu0
        %v4762 = vpop.trf.xlu0
        %v4763 = vpop.trf.xlu0
        %v4764 = vpop.trf.xlu0
        %v4765 = vpop.trf.xlu0
        %v4767 = vsel %vm2965, %v4750, 0
        %v4770 = vsel %vm2965, %v4751, 0
        %v4773 = vsel %vm2965, %v4752, 0
        %v4776 = vsel %vm2965, %v4753, 0
        %v4779 = vsel %vm2965, %v4754, 0
        %v4782 = vsel %vm2965, %v4755, 0
        %v4785 = vsel %vm2965, %v4756, 0
        %v4788 = vsel %vm2965, %v4757, 0
        %v4791 = vsel %vm2965, %v4758, 0
        %v4794 = vsel %vm2965, %v4759, 0
        %v4797 = vsel %vm2965, %v4760, 0
        %v4800 = vsel %vm2965, %v4761, 0
        %v4803 = vsel %vm2965, %v4762, 0
        %v4806 = vsel %vm2965, %v4763, 0
        %v4809 = vsel %vm2965, %v4764, 0
        %v4812 = vsel %vm2965, %v4765, 0
        %4814 = vmatprep.subr.mxu0 0.0
        %4815 = vmatpush1.msra.mxu0 0.0
        %4816 = vmatprep.subr.mxu0 0.0
        %4817 = vmatpush1.msra.mxu0 0.0
        %4818 = vmatprep.subr.mxu0 0.0
        %4819 = vmatpush1.msra.mxu0 0.0
        %4820 = vmatprep.subr.mxu0 0.0
        %4821 = vmatpush1.msra.mxu0 0.0
        %4822 = vmatprep.subr.mxu0 0.0
        %4823 = vmatpush1.msra.mxu0 0.0
        %4824 = vmatprep.subr.mxu0 0.0
        %4825 = vmatpush1.msra.mxu0 0.0
        %4826 = vmatprep.subr.mxu0 0.0
        %4827 = vmatpush1.msra.mxu0 0.0
        %4828 = vmatprep.subr.mxu0 0.0
        %4829 = vmatpush1.msra.mxu0 0.0
        %4830 = vmatprep.subr.mxu0 0.0
        %4831 = vmatpush1.msra.mxu0 0.0
        %4832 = vmatprep.subr.mxu0 0.0
        %4833 = vmatpush1.msra.mxu0 0.0
        %4834 = vmatprep.subr.mxu0 0.0
        %4835 = vmatpush1.msra.mxu0 0.0
        %4836 = vmatprep.subr.mxu0 0.0
        %4837 = vmatpush1.msra.mxu0 0.0
        %4838 = vmatprep.subr.mxu0 0.0
        %4839 = vmatpush1.msra.mxu0 0.0
        %4840 = vmatprep.subr.mxu0 0.0
        %4841 = vmatpush1.msra.mxu0 0.0
        %4842 = vmatprep.subr.mxu0 0.0
        %4843 = vmatpush1.msra.mxu0 %v624
        %4844 = vmatprep.subr.mxu0 0.0
        %4845 = vmatpush1.msra.mxu0 %v623
        %4846 = vmatprep.subr.mxu0 0.0
        %4847 = vmatpush2.msra.mxu0 0.0
        %4848 = vmatprep.subr.mxu0 0.0
        %4849 = vmatpush2.msra.mxu0 0.0
        %4850 = vmatprep.subr.mxu0 0.0
        %4851 = vmatpush2.msra.mxu0 0.0
        %4852 = vmatprep.subr.mxu0 0.0
        %4853 = vmatpush2.msra.mxu0 0.0
        %4854 = vmatprep.subr.mxu0 0.0
        %4855 = vmatpush2.msra.mxu0 0.0
        %4856 = vmatprep.subr.mxu0 0.0
        %4857 = vmatpush2.msra.mxu0 0.0
        %4858 = vmatprep.subr.mxu0 0.0
        %4859 = vmatpush2.msra.mxu0 0.0
        %4860 = vmatprep.subr.mxu0 0.0
        %4861 = vmatpush2.msra.mxu0 0.0
        %4862 = vmatprep.subr.mxu0 0.0
        %4863 = vmatpush2.msra.mxu0 0.0
        %4864 = vmatprep.subr.mxu0 0.0
        %4865 = vmatpush2.msra.mxu0 0.0
        %4866 = vmatprep.subr.mxu0 0.0
        %4867 = vmatpush2.msra.mxu0 0.0
        %4868 = vmatprep.subr.mxu0 0.0
        %4869 = vmatpush2.msra.mxu0 0.0
        %4870 = vmatprep.subr.mxu0 0.0
        %4871 = vmatpush2.msra.mxu0 0.0
        %4872 = vmatprep.subr.mxu0 0.0
        %4873 = vmatpush2.msra.mxu0 0.0
        %4874 = vmatprep.subr.mxu0 0.0
        %4875 = vmatpush2.msra.mxu0 0.0
        %4876 = vmatprep.subr.mxu0 0.0
        %4877 = vmatpush2.msra.mxu0 0.0
        %4878 = vmatprep.mubr.f32.mxu0 0.0
        %4879 = vmatmul.mubr.f32.gmra.mxu0 %v4767
        %v4880 = vpop.f32.mrf.mxu0
        %v4881 = vadd.f32 0.0, %v4880
        %v4882 = vpop.f32.mrf.mxu0
        %4883 = vmatprep.mubr.f32.mxu0 0.0
        %4884 = vmatmul.mubr.f32.gmra.mxu0 %v4770
        %v4885 = vpop.f32.mrf.mxu0
        %v4886 = vadd.f32 0.0, %v4885
        %v4887 = vpop.f32.mrf.mxu0
        %4888 = vmatprep.mubr.f32.mxu0 0.0
        %4889 = vmatmul.mubr.f32.gmra.mxu0 %v4773
        %v4890 = vpop.f32.mrf.mxu0
        %v4891 = vadd.f32 0.0, %v4890
        %v4892 = vpop.f32.mrf.mxu0
        %4893 = vmatprep.mubr.f32.mxu0 0.0
        %4894 = vmatmul.mubr.f32.gmra.mxu0 %v4776
        %v4895 = vpop.f32.mrf.mxu0
        %v4896 = vadd.f32 0.0, %v4895
        %v4897 = vpop.f32.mrf.mxu0
        %4898 = vmatprep.mubr.f32.mxu0 0.0
        %4899 = vmatmul.mubr.f32.gmra.mxu0 %v4779
        %v4900 = vpop.f32.mrf.mxu0
        %v4901 = vadd.f32 0.0, %v4900
        %v4902 = vpop.f32.mrf.mxu0
        %4903 = vmatprep.mubr.f32.mxu0 0.0
        %4904 = vmatmul.mubr.f32.gmra.mxu0 %v4782
        %v4905 = vpop.f32.mrf.mxu0
        %v4906 = vadd.f32 0.0, %v4905
        %v4907 = vpop.f32.mrf.mxu0
        %4908 = vmatprep.mubr.f32.mxu0 0.0
        %4909 = vmatmul.mubr.f32.gmra.mxu0 %v4785
        %v4910 = vpop.f32.mrf.mxu0
        %v4911 = vadd.f32 0.0, %v4910
        %v4912 = vpop.f32.mrf.mxu0
        %4913 = vmatprep.mubr.f32.mxu0 0.0
        %4914 = vmatmul.mubr.f32.gmra.mxu0 %v4788
        %v4915 = vpop.f32.mrf.mxu0
        %v4916 = vadd.f32 0.0, %v4915
        %v4917 = vpop.f32.mrf.mxu0
        %4918 = vmatprep.mubr.f32.mxu0 0.0
        %4919 = vmatmul.mubr.f32.gmra.mxu0 %v4791
        %v4920 = vpop.f32.mrf.mxu0
        %v4921 = vadd.f32 0.0, %v4920
        %v4922 = vpop.f32.mrf.mxu0
        %4923 = vmatprep.mubr.f32.mxu0 0.0
        %4924 = vmatmul.mubr.f32.gmra.mxu0 %v4794
        %v4925 = vpop.f32.mrf.mxu0
        %v4926 = vadd.f32 0.0, %v4925
        %v4927 = vpop.f32.mrf.mxu0
        %4928 = vmatprep.mubr.f32.mxu0 0.0
        %4929 = vmatmul.mubr.f32.gmra.mxu0 %v4797
        %v4930 = vpop.f32.mrf.mxu0
        %v4931 = vadd.f32 0.0, %v4930
        %v4932 = vpop.f32.mrf.mxu0
        %4933 = vmatprep.mubr.f32.mxu0 0.0
        %4934 = vmatmul.mubr.f32.gmra.mxu0 %v4800
        %v4935 = vpop.f32.mrf.mxu0
        %v4936 = vadd.f32 0.0, %v4935
        %v4937 = vpop.f32.mrf.mxu0
        %4938 = vmatprep.mubr.f32.mxu0 0.0
        %4939 = vmatmul.mubr.f32.gmra.mxu0 %v4803
        %v4940 = vpop.f32.mrf.mxu0
        %v4941 = vadd.f32 0.0, %v4940
        %v4942 = vpop.f32.mrf.mxu0
        %4943 = vmatprep.mubr.f32.mxu0 0.0
        %4944 = vmatmul.mubr.f32.gmra.mxu0 %v4806
        %v4945 = vpop.f32.mrf.mxu0
        %v4946 = vadd.f32 0.0, %v4945
        %v4947 = vpop.f32.mrf.mxu0
        %4948 = vmatprep.mubr.f32.mxu0 0.0
        %4949 = vmatmul.mubr.f32.gmra.mxu0 %v4809
        %v4950 = vpop.f32.mrf.mxu0
        %v4951 = vadd.f32 0.0, %v4950
        %v4952 = vpop.f32.mrf.mxu0
        %4953 = vmatprep.mubr.f32.mxu0 0.0
        %4954 = vmatmul.mubr.f32.gmra.mxu0 %v4812
        %v4955 = vpop.f32.mrf.mxu0
        %v4956 = vadd.f32 0.0, %v4955
        %v4957 = vpop.f32.mrf.mxu0
        %4958 = vdwg.mxu0
        %4959 = vxpose.xlu0.b32.start [1/16] %v2919, 128
        %4960 = vxpose.xlu0.b32.cont [2/16] %v2920, 128
        %4961 = vxpose.xlu0.b32.cont [3/16] 0.0, 128
        %4962 = vxpose.xlu0.b32.cont [4/16] 0.0, 128
        %4963 = vxpose.xlu0.b32.cont [5/16] 0.0, 128
        %4964 = vxpose.xlu0.b32.cont [6/16] 0.0, 128
        %4965 = vxpose.xlu0.b32.cont [7/16] 0.0, 128
        %4966 = vxpose.xlu0.b32.cont [8/16] 0.0, 128
        %4967 = vxpose.xlu0.b32.cont [9/16] 0.0, 128
        %4968 = vxpose.xlu0.b32.cont [10/16] 0.0, 128
        %4969 = vxpose.xlu0.b32.cont [11/16] 0.0, 128
        %4970 = vxpose.xlu0.b32.cont [12/16] 0.0, 128
        %4971 = vxpose.xlu0.b32.cont [13/16] 0.0, 128
        %4972 = vxpose.xlu0.b32.cont [14/16] 0.0, 128
        %4973 = vxpose.xlu0.b32.cont [15/16] 0.0, 128
        %4974 = vxpose.xlu0.b32.end [16/16] 0.0, 128
        %v4975 = vpop.trf.xlu0
        %v4976 = vpop.trf.xlu0
        %v4977 = vpop.trf.xlu0
        %v4978 = vpop.trf.xlu0
        %v4979 = vpop.trf.xlu0
        %v4980 = vpop.trf.xlu0
        %v4981 = vpop.trf.xlu0
        %v4982 = vpop.trf.xlu0
        %v4983 = vpop.trf.xlu0
        %v4984 = vpop.trf.xlu0
        %v4985 = vpop.trf.xlu0
        %v4986 = vpop.trf.xlu0
        %v4987 = vpop.trf.xlu0
        %v4988 = vpop.trf.xlu0
        %v4989 = vpop.trf.xlu0
        %v4990 = vpop.trf.xlu0
        %v4992 = vsel %vm2965, %v4975, 0
        %v4995 = vsel %vm2965, %v4976, 0
        %v4998 = vsel %vm2965, %v4977, 0
        %v5001 = vsel %vm2965, %v4978, 0
        %v5004 = vsel %vm2965, %v4979, 0
        %v5007 = vsel %vm2965, %v4980, 0
        %v5010 = vsel %vm2965, %v4981, 0
        %v5013 = vsel %vm2965, %v4982, 0
        %v5016 = vsel %vm2965, %v4983, 0
        %v5019 = vsel %vm2965, %v4984, 0
        %v5022 = vsel %vm2965, %v4985, 0
        %v5025 = vsel %vm2965, %v4986, 0
        %v5028 = vsel %vm2965, %v4987, 0
        %v5031 = vsel %vm2965, %v4988, 0
        %v5034 = vsel %vm2965, %v4989, 0
        %v5037 = vsel %vm2965, %v4990, 0
        %5039 = vmatprep.subr.mxu0 0.0
        %5040 = vmatpush1.msra.mxu0 0.0
        %5041 = vmatprep.subr.mxu0 0.0
        %5042 = vmatpush1.msra.mxu0 0.0
        %5043 = vmatprep.subr.mxu0 0.0
        %5044 = vmatpush1.msra.mxu0 0.0
        %5045 = vmatprep.subr.mxu0 0.0
        %5046 = vmatpush1.msra.mxu0 0.0
        %5047 = vmatprep.subr.mxu0 0.0
        %5048 = vmatpush1.msra.mxu0 0.0
        %5049 = vmatprep.subr.mxu0 0.0
        %5050 = vmatpush1.msra.mxu0 0.0
        %5051 = vmatprep.subr.mxu0 0.0
        %5052 = vmatpush1.msra.mxu0 0.0
        %5053 = vmatprep.subr.mxu0 0.0
        %5054 = vmatpush1.msra.mxu0 0.0
        %5055 = vmatprep.subr.mxu0 0.0
        %5056 = vmatpush1.msra.mxu0 0.0
        %5057 = vmatprep.subr.mxu0 0.0
        %5058 = vmatpush1.msra.mxu0 0.0
        %5059 = vmatprep.subr.mxu0 0.0
        %5060 = vmatpush1.msra.mxu0 0.0
        %5061 = vmatprep.subr.mxu0 0.0
        %5062 = vmatpush1.msra.mxu0 0.0
        %5063 = vmatprep.subr.mxu0 0.0
        %5064 = vmatpush1.msra.mxu0 0.0
        %5065 = vmatprep.subr.mxu0 0.0
        %5066 = vmatpush1.msra.mxu0 0.0
        %5067 = vmatprep.subr.mxu0 0.0
        %5068 = vmatpush1.msra.mxu0 %v626
        %5069 = vmatprep.subr.mxu0 0.0
        %5070 = vmatpush1.msra.mxu0 %v625
        %5071 = vmatprep.subr.mxu0 0.0
        %5072 = vmatpush2.msra.mxu0 0.0
        %5073 = vmatprep.subr.mxu0 0.0
        %5074 = vmatpush2.msra.mxu0 0.0
        %5075 = vmatprep.subr.mxu0 0.0
        %5076 = vmatpush2.msra.mxu0 0.0
        %5077 = vmatprep.subr.mxu0 0.0
        %5078 = vmatpush2.msra.mxu0 0.0
        %5079 = vmatprep.subr.mxu0 0.0
        %5080 = vmatpush2.msra.mxu0 0.0
        %5081 = vmatprep.subr.mxu0 0.0
        %5082 = vmatpush2.msra.mxu0 0.0
        %5083 = vmatprep.subr.mxu0 0.0
        %5084 = vmatpush2.msra.mxu0 0.0
        %5085 = vmatprep.subr.mxu0 0.0
        %5086 = vmatpush2.msra.mxu0 0.0
        %5087 = vmatprep.subr.mxu0 0.0
        %5088 = vmatpush2.msra.mxu0 0.0
        %5089 = vmatprep.subr.mxu0 0.0
        %5090 = vmatpush2.msra.mxu0 0.0
        %5091 = vmatprep.subr.mxu0 0.0
        %5092 = vmatpush2.msra.mxu0 0.0
        %5093 = vmatprep.subr.mxu0 0.0
        %5094 = vmatpush2.msra.mxu0 0.0
        %5095 = vmatprep.subr.mxu0 0.0
        %5096 = vmatpush2.msra.mxu0 0.0
        %5097 = vmatprep.subr.mxu0 0.0
        %5098 = vmatpush2.msra.mxu0 0.0
        %5099 = vmatprep.subr.mxu0 0.0
        %5100 = vmatpush2.msra.mxu0 0.0
        %5101 = vmatprep.subr.mxu0 0.0
        %5102 = vmatpush2.msra.mxu0 0.0
        %5103 = vmatprep.mubr.f32.mxu0 0.0
        %5104 = vmatmul.mubr.f32.gmra.mxu0 %v4992
        %v5105 = vpop.f32.mrf.mxu0
        %v5106 = vadd.f32 0.0, %v5105
        %v5107 = vpop.f32.mrf.mxu0
        %5108 = vmatprep.mubr.f32.mxu0 0.0
        %5109 = vmatmul.mubr.f32.gmra.mxu0 %v4995
        %v5110 = vpop.f32.mrf.mxu0
        %v5111 = vadd.f32 0.0, %v5110
        %v5112 = vpop.f32.mrf.mxu0
        %5113 = vmatprep.mubr.f32.mxu0 0.0
        %5114 = vmatmul.mubr.f32.gmra.mxu0 %v4998
        %v5115 = vpop.f32.mrf.mxu0
        %v5116 = vadd.f32 0.0, %v5115
        %v5117 = vpop.f32.mrf.mxu0
        %5118 = vmatprep.mubr.f32.mxu0 0.0
        %5119 = vmatmul.mubr.f32.gmra.mxu0 %v5001
        %v5120 = vpop.f32.mrf.mxu0
        %v5121 = vadd.f32 0.0, %v5120
        %v5122 = vpop.f32.mrf.mxu0
        %5123 = vmatprep.mubr.f32.mxu0 0.0
        %5124 = vmatmul.mubr.f32.gmra.mxu0 %v5004
        %v5125 = vpop.f32.mrf.mxu0
        %v5126 = vadd.f32 0.0, %v5125
        %v5127 = vpop.f32.mrf.mxu0
        %5128 = vmatprep.mubr.f32.mxu0 0.0
        %5129 = vmatmul.mubr.f32.gmra.mxu0 %v5007
        %v5130 = vpop.f32.mrf.mxu0
        %v5131 = vadd.f32 0.0, %v5130
        %v5132 = vpop.f32.mrf.mxu0
        %5133 = vmatprep.mubr.f32.mxu0 0.0
        %5134 = vmatmul.mubr.f32.gmra.mxu0 %v5010
        %v5135 = vpop.f32.mrf.mxu0
        %v5136 = vadd.f32 0.0, %v5135
        %v5137 = vpop.f32.mrf.mxu0
        %5138 = vmatprep.mubr.f32.mxu0 0.0
        %5139 = vmatmul.mubr.f32.gmra.mxu0 %v5013
        %v5140 = vpop.f32.mrf.mxu0
        %v5141 = vadd.f32 0.0, %v5140
        %v5142 = vpop.f32.mrf.mxu0
        %5143 = vmatprep.mubr.f32.mxu0 0.0
        %5144 = vmatmul.mubr.f32.gmra.mxu0 %v5016
        %v5145 = vpop.f32.mrf.mxu0
        %v5146 = vadd.f32 0.0, %v5145
        %v5147 = vpop.f32.mrf.mxu0
        %5148 = vmatprep.mubr.f32.mxu0 0.0
        %5149 = vmatmul.mubr.f32.gmra.mxu0 %v5019
        %v5150 = vpop.f32.mrf.mxu0
        %v5151 = vadd.f32 0.0, %v5150
        %v5152 = vpop.f32.mrf.mxu0
        %5153 = vmatprep.mubr.f32.mxu0 0.0
        %5154 = vmatmul.mubr.f32.gmra.mxu0 %v5022
        %v5155 = vpop.f32.mrf.mxu0
        %v5156 = vadd.f32 0.0, %v5155
        %v5157 = vpop.f32.mrf.mxu0
        %5158 = vmatprep.mubr.f32.mxu0 0.0
        %5159 = vmatmul.mubr.f32.gmra.mxu0 %v5025
        %v5160 = vpop.f32.mrf.mxu0
        %v5161 = vadd.f32 0.0, %v5160
        %v5162 = vpop.f32.mrf.mxu0
        %5163 = vmatprep.mubr.f32.mxu0 0.0
        %5164 = vmatmul.mubr.f32.gmra.mxu0 %v5028
        %v5165 = vpop.f32.mrf.mxu0
        %v5166 = vadd.f32 0.0, %v5165
        %v5167 = vpop.f32.mrf.mxu0
        %5168 = vmatprep.mubr.f32.mxu0 0.0
        %5169 = vmatmul.mubr.f32.gmra.mxu0 %v5031
        %v5170 = vpop.f32.mrf.mxu0
        %v5171 = vadd.f32 0.0, %v5170
        %v5172 = vpop.f32.mrf.mxu0
        %5173 = vmatprep.mubr.f32.mxu0 0.0
        %5174 = vmatmul.mubr.f32.gmra.mxu0 %v5034
        %v5175 = vpop.f32.mrf.mxu0
        %v5176 = vadd.f32 0.0, %v5175
        %v5177 = vpop.f32.mrf.mxu0
        %5178 = vmatprep.mubr.f32.mxu0 0.0
        %5179 = vmatmul.mubr.f32.gmra.mxu0 %v5037
        %v5180 = vpop.f32.mrf.mxu0
        %v5181 = vadd.f32 0.0, %v5180
        %v5182 = vpop.f32.mrf.mxu0
        %5183 = vdwg.mxu0
        %5184 = vxpose.xlu0.b32.start [1/16] %v2921, 128
        %5185 = vxpose.xlu0.b32.cont [2/16] %v2922, 128
        %5186 = vxpose.xlu0.b32.cont [3/16] 0.0, 128
        %5187 = vxpose.xlu0.b32.cont [4/16] 0.0, 128
        %5188 = vxpose.xlu0.b32.cont [5/16] 0.0, 128
        %5189 = vxpose.xlu0.b32.cont [6/16] 0.0, 128
        %5190 = vxpose.xlu0.b32.cont [7/16] 0.0, 128
        %5191 = vxpose.xlu0.b32.cont [8/16] 0.0, 128
        %5192 = vxpose.xlu0.b32.cont [9/16] 0.0, 128
        %5193 = vxpose.xlu0.b32.cont [10/16] 0.0, 128
        %5194 = vxpose.xlu0.b32.cont [11/16] 0.0, 128
        %5195 = vxpose.xlu0.b32.cont [12/16] 0.0, 128
        %5196 = vxpose.xlu0.b32.cont [13/16] 0.0, 128
        %5197 = vxpose.xlu0.b32.cont [14/16] 0.0, 128
        %5198 = vxpose.xlu0.b32.cont [15/16] 0.0, 128
        %5199 = vxpose.xlu0.b32.end [16/16] 0.0, 128
        %v5200 = vpop.trf.xlu0
        %v5201 = vpop.trf.xlu0
        %v5202 = vpop.trf.xlu0
        %v5203 = vpop.trf.xlu0
        %v5204 = vpop.trf.xlu0
        %v5205 = vpop.trf.xlu0
        %v5206 = vpop.trf.xlu0
        %v5207 = vpop.trf.xlu0
        %v5208 = vpop.trf.xlu0
        %v5209 = vpop.trf.xlu0
        %v5210 = vpop.trf.xlu0
        %v5211 = vpop.trf.xlu0
        %v5212 = vpop.trf.xlu0
        %v5213 = vpop.trf.xlu0
        %v5214 = vpop.trf.xlu0
        %v5215 = vpop.trf.xlu0
        %v5217 = vsel %vm2965, %v5200, 0
        %v5220 = vsel %vm2965, %v5201, 0
        %v5223 = vsel %vm2965, %v5202, 0
        %v5226 = vsel %vm2965, %v5203, 0
        %v5229 = vsel %vm2965, %v5204, 0
        %v5232 = vsel %vm2965, %v5205, 0
        %v5235 = vsel %vm2965, %v5206, 0
        %v5238 = vsel %vm2965, %v5207, 0
        %v5241 = vsel %vm2965, %v5208, 0
        %v5244 = vsel %vm2965, %v5209, 0
        %v5247 = vsel %vm2965, %v5210, 0
        %v5250 = vsel %vm2965, %v5211, 0
        %v5253 = vsel %vm2965, %v5212, 0
        %v5256 = vsel %vm2965, %v5213, 0
        %v5259 = vsel %vm2965, %v5214, 0
        %v5262 = vsel %vm2965, %v5215, 0
        %5264 = vmatprep.subr.mxu0 0.0
        %5265 = vmatpush1.msra.mxu0 0.0
        %5266 = vmatprep.subr.mxu0 0.0
        %5267 = vmatpush1.msra.mxu0 0.0
        %5268 = vmatprep.subr.mxu0 0.0
        %5269 = vmatpush1.msra.mxu0 0.0
        %5270 = vmatprep.subr.mxu0 0.0
        %5271 = vmatpush1.msra.mxu0 0.0
        %5272 = vmatprep.subr.mxu0 0.0
        %5273 = vmatpush1.msra.mxu0 0.0
        %5274 = vmatprep.subr.mxu0 0.0
        %5275 = vmatpush1.msra.mxu0 0.0
        %5276 = vmatprep.subr.mxu0 0.0
        %5277 = vmatpush1.msra.mxu0 0.0
        %5278 = vmatprep.subr.mxu0 0.0
        %5279 = vmatpush1.msra.mxu0 0.0
        %5280 = vmatprep.subr.mxu0 0.0
        %5281 = vmatpush1.msra.mxu0 0.0
        %5282 = vmatprep.subr.mxu0 0.0
        %5283 = vmatpush1.msra.mxu0 0.0
        %5284 = vmatprep.subr.mxu0 0.0
        %5285 = vmatpush1.msra.mxu0 0.0
        %5286 = vmatprep.subr.mxu0 0.0
        %5287 = vmatpush1.msra.mxu0 0.0
        %5288 = vmatprep.subr.mxu0 0.0
        %5289 = vmatpush1.msra.mxu0 0.0
        %5290 = vmatprep.subr.mxu0 0.0
        %5291 = vmatpush1.msra.mxu0 0.0
        %5292 = vmatprep.subr.mxu0 0.0
        %5293 = vmatpush1.msra.mxu0 %v628
        %5294 = vmatprep.subr.mxu0 0.0
        %5295 = vmatpush1.msra.mxu0 %v627
        %5296 = vmatprep.subr.mxu0 0.0
        %5297 = vmatpush2.msra.mxu0 0.0
        %5298 = vmatprep.subr.mxu0 0.0
        %5299 = vmatpush2.msra.mxu0 0.0
        %5300 = vmatprep.subr.mxu0 0.0
        %5301 = vmatpush2.msra.mxu0 0.0
        %5302 = vmatprep.subr.mxu0 0.0
        %5303 = vmatpush2.msra.mxu0 0.0
        %5304 = vmatprep.subr.mxu0 0.0
        %5305 = vmatpush2.msra.mxu0 0.0
        %5306 = vmatprep.subr.mxu0 0.0
        %5307 = vmatpush2.msra.mxu0 0.0
        %5308 = vmatprep.subr.mxu0 0.0
        %5309 = vmatpush2.msra.mxu0 0.0
        %5310 = vmatprep.subr.mxu0 0.0
        %5311 = vmatpush2.msra.mxu0 0.0
        %5312 = vmatprep.subr.mxu0 0.0
        %5313 = vmatpush2.msra.mxu0 0.0
        %5314 = vmatprep.subr.mxu0 0.0
        %5315 = vmatpush2.msra.mxu0 0.0
        %5316 = vmatprep.subr.mxu0 0.0
        %5317 = vmatpush2.msra.mxu0 0.0
        %5318 = vmatprep.subr.mxu0 0.0
        %5319 = vmatpush2.msra.mxu0 0.0
        %5320 = vmatprep.subr.mxu0 0.0
        %5321 = vmatpush2.msra.mxu0 0.0
        %5322 = vmatprep.subr.mxu0 0.0
        %5323 = vmatpush2.msra.mxu0 0.0
        %5324 = vmatprep.subr.mxu0 0.0
        %5325 = vmatpush2.msra.mxu0 0.0
        %5326 = vmatprep.subr.mxu0 0.0
        %5327 = vmatpush2.msra.mxu0 0.0
        %5328 = vmatprep.mubr.f32.mxu0 0.0
        %5329 = vmatmul.mubr.f32.gmra.mxu0 %v5217
        %v5330 = vpop.f32.mrf.mxu0
        %v5331 = vadd.f32 0.0, %v5330
        %v5332 = vpop.f32.mrf.mxu0
        %5333 = vmatprep.mubr.f32.mxu0 0.0
        %5334 = vmatmul.mubr.f32.gmra.mxu0 %v5220
        %v5335 = vpop.f32.mrf.mxu0
        %v5336 = vadd.f32 0.0, %v5335
        %v5337 = vpop.f32.mrf.mxu0
        %5338 = vmatprep.mubr.f32.mxu0 0.0
        %5339 = vmatmul.mubr.f32.gmra.mxu0 %v5223
        %v5340 = vpop.f32.mrf.mxu0
        %v5341 = vadd.f32 0.0, %v5340
        %v5342 = vpop.f32.mrf.mxu0
        %5343 = vmatprep.mubr.f32.mxu0 0.0
        %5344 = vmatmul.mubr.f32.gmra.mxu0 %v5226
        %v5345 = vpop.f32.mrf.mxu0
        %v5346 = vadd.f32 0.0, %v5345
        %v5347 = vpop.f32.mrf.mxu0
        %5348 = vmatprep.mubr.f32.mxu0 0.0
        %5349 = vmatmul.mubr.f32.gmra.mxu0 %v5229
        %v5350 = vpop.f32.mrf.mxu0
        %v5351 = vadd.f32 0.0, %v5350
        %v5352 = vpop.f32.mrf.mxu0
        %5353 = vmatprep.mubr.f32.mxu0 0.0
        %5354 = vmatmul.mubr.f32.gmra.mxu0 %v5232
        %v5355 = vpop.f32.mrf.mxu0
        %v5356 = vadd.f32 0.0, %v5355
        %v5357 = vpop.f32.mrf.mxu0
        %5358 = vmatprep.mubr.f32.mxu0 0.0
        %5359 = vmatmul.mubr.f32.gmra.mxu0 %v5235
        %v5360 = vpop.f32.mrf.mxu0
        %v5361 = vadd.f32 0.0, %v5360
        %v5362 = vpop.f32.mrf.mxu0
        %5363 = vmatprep.mubr.f32.mxu0 0.0
        %5364 = vmatmul.mubr.f32.gmra.mxu0 %v5238
        %v5365 = vpop.f32.mrf.mxu0
        %v5366 = vadd.f32 0.0, %v5365
        %v5367 = vpop.f32.mrf.mxu0
        %5368 = vmatprep.mubr.f32.mxu0 0.0
        %5369 = vmatmul.mubr.f32.gmra.mxu0 %v5241
        %v5370 = vpop.f32.mrf.mxu0
        %v5371 = vadd.f32 0.0, %v5370
        %v5372 = vpop.f32.mrf.mxu0
        %5373 = vmatprep.mubr.f32.mxu0 0.0
        %5374 = vmatmul.mubr.f32.gmra.mxu0 %v5244
        %v5375 = vpop.f32.mrf.mxu0
        %v5376 = vadd.f32 0.0, %v5375
        %v5377 = vpop.f32.mrf.mxu0
        %5378 = vmatprep.mubr.f32.mxu0 0.0
        %5379 = vmatmul.mubr.f32.gmra.mxu0 %v5247
        %v5380 = vpop.f32.mrf.mxu0
        %v5381 = vadd.f32 0.0, %v5380
        %v5382 = vpop.f32.mrf.mxu0
        %5383 = vmatprep.mubr.f32.mxu0 0.0
        %5384 = vmatmul.mubr.f32.gmra.mxu0 %v5250
        %v5385 = vpop.f32.mrf.mxu0
        %v5386 = vadd.f32 0.0, %v5385
        %v5387 = vpop.f32.mrf.mxu0
        %5388 = vmatprep.mubr.f32.mxu0 0.0
        %5389 = vmatmul.mubr.f32.gmra.mxu0 %v5253
        %v5390 = vpop.f32.mrf.mxu0
        %v5391 = vadd.f32 0.0, %v5390
        %v5392 = vpop.f32.mrf.mxu0
        %5393 = vmatprep.mubr.f32.mxu0 0.0
        %5394 = vmatmul.mubr.f32.gmra.mxu0 %v5256
        %v5395 = vpop.f32.mrf.mxu0
        %v5396 = vadd.f32 0.0, %v5395
        %v5397 = vpop.f32.mrf.mxu0
        %5398 = vmatprep.mubr.f32.mxu0 0.0
        %5399 = vmatmul.mubr.f32.gmra.mxu0 %v5259
        %v5400 = vpop.f32.mrf.mxu0
        %v5401 = vadd.f32 0.0, %v5400
        %v5402 = vpop.f32.mrf.mxu0
        %5403 = vmatprep.mubr.f32.mxu0 0.0
        %5404 = vmatmul.mubr.f32.gmra.mxu0 %v5262
        %v5405 = vpop.f32.mrf.mxu0
        %v5406 = vadd.f32 0.0, %v5405
        %v5407 = vpop.f32.mrf.mxu0
        %5408 = vdwg.mxu0
        %5409 = vxpose.xlu0.b32.start [1/16] %v2923, 128
        %5410 = vxpose.xlu0.b32.cont [2/16] %v2924, 128
        %5411 = vxpose.xlu0.b32.cont [3/16] 0.0, 128
        %5412 = vxpose.xlu0.b32.cont [4/16] 0.0, 128
        %5413 = vxpose.xlu0.b32.cont [5/16] 0.0, 128
        %5414 = vxpose.xlu0.b32.cont [6/16] 0.0, 128
        %5415 = vxpose.xlu0.b32.cont [7/16] 0.0, 128
        %5416 = vxpose.xlu0.b32.cont [8/16] 0.0, 128
        %5417 = vxpose.xlu0.b32.cont [9/16] 0.0, 128
        %5418 = vxpose.xlu0.b32.cont [10/16] 0.0, 128
        %5419 = vxpose.xlu0.b32.cont [11/16] 0.0, 128
        %5420 = vxpose.xlu0.b32.cont [12/16] 0.0, 128
        %5421 = vxpose.xlu0.b32.cont [13/16] 0.0, 128
        %5422 = vxpose.xlu0.b32.cont [14/16] 0.0, 128
        %5423 = vxpose.xlu0.b32.cont [15/16] 0.0, 128
        %5424 = vxpose.xlu0.b32.end [16/16] 0.0, 128
        %v5425 = vpop.trf.xlu0
        %v5426 = vpop.trf.xlu0
        %v5427 = vpop.trf.xlu0
        %v5428 = vpop.trf.xlu0
        %v5429 = vpop.trf.xlu0
        %v5430 = vpop.trf.xlu0
        %v5431 = vpop.trf.xlu0
        %v5432 = vpop.trf.xlu0
        %v5433 = vpop.trf.xlu0
        %v5434 = vpop.trf.xlu0
        %v5435 = vpop.trf.xlu0
        %v5436 = vpop.trf.xlu0
        %v5437 = vpop.trf.xlu0
        %v5438 = vpop.trf.xlu0
        %v5439 = vpop.trf.xlu0
        %v5440 = vpop.trf.xlu0
        %v5442 = vsel %vm2965, %v5425, 0
        %v5445 = vsel %vm2965, %v5426, 0
        %v5448 = vsel %vm2965, %v5427, 0
        %v5451 = vsel %vm2965, %v5428, 0
        %v5454 = vsel %vm2965, %v5429, 0
        %v5457 = vsel %vm2965, %v5430, 0
        %v5460 = vsel %vm2965, %v5431, 0
        %v5463 = vsel %vm2965, %v5432, 0
        %v5466 = vsel %vm2965, %v5433, 0
        %v5469 = vsel %vm2965, %v5434, 0
        %v5472 = vsel %vm2965, %v5435, 0
        %v5475 = vsel %vm2965, %v5436, 0
        %v5478 = vsel %vm2965, %v5437, 0
        %v5481 = vsel %vm2965, %v5438, 0
        %v5484 = vsel %vm2965, %v5439, 0
        %v5487 = vsel %vm2965, %v5440, 0
        %5489 = vmatprep.subr.mxu0 0.0
        %5490 = vmatpush1.msra.mxu0 0.0
        %5491 = vmatprep.subr.mxu0 0.0
        %5492 = vmatpush1.msra.mxu0 0.0
        %5493 = vmatprep.subr.mxu0 0.0
        %5494 = vmatpush1.msra.mxu0 0.0
        %5495 = vmatprep.subr.mxu0 0.0
        %5496 = vmatpush1.msra.mxu0 0.0
        %5497 = vmatprep.subr.mxu0 0.0
        %5498 = vmatpush1.msra.mxu0 0.0
        %5499 = vmatprep.subr.mxu0 0.0
        %5500 = vmatpush1.msra.mxu0 0.0
        %5501 = vmatprep.subr.mxu0 0.0
        %5502 = vmatpush1.msra.mxu0 0.0
        %5503 = vmatprep.subr.mxu0 0.0
        %5504 = vmatpush1.msra.mxu0 0.0
        %5505 = vmatprep.subr.mxu0 0.0
        %5506 = vmatpush1.msra.mxu0 0.0
        %5507 = vmatprep.subr.mxu0 0.0
        %5508 = vmatpush1.msra.mxu0 0.0
        %5509 = vmatprep.subr.mxu0 0.0
        %5510 = vmatpush1.msra.mxu0 0.0
        %5511 = vmatprep.subr.mxu0 0.0
        %5512 = vmatpush1.msra.mxu0 0.0
        %5513 = vmatprep.subr.mxu0 0.0
        %5514 = vmatpush1.msra.mxu0 0.0
        %5515 = vmatprep.subr.mxu0 0.0
        %5516 = vmatpush1.msra.mxu0 0.0
        %5517 = vmatprep.subr.mxu0 0.0
        %5518 = vmatpush1.msra.mxu0 %v630
        %5519 = vmatprep.subr.mxu0 0.0
        %5520 = vmatpush1.msra.mxu0 %v629
        %5521 = vmatprep.subr.mxu0 0.0
        %5522 = vmatpush2.msra.mxu0 0.0
        %5523 = vmatprep.subr.mxu0 0.0
        %5524 = vmatpush2.msra.mxu0 0.0
        %5525 = vmatprep.subr.mxu0 0.0
        %5526 = vmatpush2.msra.mxu0 0.0
        %5527 = vmatprep.subr.mxu0 0.0
        %5528 = vmatpush2.msra.mxu0 0.0
        %5529 = vmatprep.subr.mxu0 0.0
        %5530 = vmatpush2.msra.mxu0 0.0
        %5531 = vmatprep.subr.mxu0 0.0
        %5532 = vmatpush2.msra.mxu0 0.0
        %5533 = vmatprep.subr.mxu0 0.0
        %5534 = vmatpush2.msra.mxu0 0.0
        %5535 = vmatprep.subr.mxu0 0.0
        %5536 = vmatpush2.msra.mxu0 0.0
        %5537 = vmatprep.subr.mxu0 0.0
        %5538 = vmatpush2.msra.mxu0 0.0
        %5539 = vmatprep.subr.mxu0 0.0
        %5540 = vmatpush2.msra.mxu0 0.0
        %5541 = vmatprep.subr.mxu0 0.0
        %5542 = vmatpush2.msra.mxu0 0.0
        %5543 = vmatprep.subr.mxu0 0.0
        %5544 = vmatpush2.msra.mxu0 0.0
        %5545 = vmatprep.subr.mxu0 0.0
        %5546 = vmatpush2.msra.mxu0 0.0
        %5547 = vmatprep.subr.mxu0 0.0
        %5548 = vmatpush2.msra.mxu0 0.0
        %5549 = vmatprep.subr.mxu0 0.0
        %5550 = vmatpush2.msra.mxu0 0.0
        %5551 = vmatprep.subr.mxu0 0.0
        %5552 = vmatpush2.msra.mxu0 0.0
        %5553 = vmatprep.mubr.f32.mxu0 0.0
        %5554 = vmatmul.mubr.f32.gmra.mxu0 %v5442
        %v5555 = vpop.f32.mrf.mxu0
        %v5556 = vadd.f32 0.0, %v5555
        %v5557 = vpop.f32.mrf.mxu0
        %5558 = vmatprep.mubr.f32.mxu0 0.0
        %5559 = vmatmul.mubr.f32.gmra.mxu0 %v5445
        %v5560 = vpop.f32.mrf.mxu0
        %v5561 = vadd.f32 0.0, %v5560
        %v5562 = vpop.f32.mrf.mxu0
        %5563 = vmatprep.mubr.f32.mxu0 0.0
        %5564 = vmatmul.mubr.f32.gmra.mxu0 %v5448
        %v5565 = vpop.f32.mrf.mxu0
        %v5566 = vadd.f32 0.0, %v5565
        %v5567 = vpop.f32.mrf.mxu0
        %5568 = vmatprep.mubr.f32.mxu0 0.0
        %5569 = vmatmul.mubr.f32.gmra.mxu0 %v5451
        %v5570 = vpop.f32.mrf.mxu0
        %v5571 = vadd.f32 0.0, %v5570
        %v5572 = vpop.f32.mrf.mxu0
        %5573 = vmatprep.mubr.f32.mxu0 0.0
        %5574 = vmatmul.mubr.f32.gmra.mxu0 %v5454
        %v5575 = vpop.f32.mrf.mxu0
        %v5576 = vadd.f32 0.0, %v5575
        %v5577 = vpop.f32.mrf.mxu0
        %5578 = vmatprep.mubr.f32.mxu0 0.0
        %5579 = vmatmul.mubr.f32.gmra.mxu0 %v5457
        %v5580 = vpop.f32.mrf.mxu0
        %v5581 = vadd.f32 0.0, %v5580
        %v5582 = vpop.f32.mrf.mxu0
        %5583 = vmatprep.mubr.f32.mxu0 0.0
        %5584 = vmatmul.mubr.f32.gmra.mxu0 %v5460
        %v5585 = vpop.f32.mrf.mxu0
        %v5586 = vadd.f32 0.0, %v5585
        %v5587 = vpop.f32.mrf.mxu0
        %5588 = vmatprep.mubr.f32.mxu0 0.0
        %5589 = vmatmul.mubr.f32.gmra.mxu0 %v5463
        %v5590 = vpop.f32.mrf.mxu0
        %v5591 = vadd.f32 0.0, %v5590
        %v5592 = vpop.f32.mrf.mxu0
        %5593 = vmatprep.mubr.f32.mxu0 0.0
        %5594 = vmatmul.mubr.f32.gmra.mxu0 %v5466
        %v5595 = vpop.f32.mrf.mxu0
        %v5596 = vadd.f32 0.0, %v5595
        %v5597 = vpop.f32.mrf.mxu0
        %5598 = vmatprep.mubr.f32.mxu0 0.0
        %5599 = vmatmul.mubr.f32.gmra.mxu0 %v5469
        %v5600 = vpop.f32.mrf.mxu0
        %v5601 = vadd.f32 0.0, %v5600
        %v5602 = vpop.f32.mrf.mxu0
        %5603 = vmatprep.mubr.f32.mxu0 0.0
        %5604 = vmatmul.mubr.f32.gmra.mxu0 %v5472
        %v5605 = vpop.f32.mrf.mxu0
        %v5606 = vadd.f32 0.0, %v5605
        %v5607 = vpop.f32.mrf.mxu0
        %5608 = vmatprep.mubr.f32.mxu0 0.0
        %5609 = vmatmul.mubr.f32.gmra.mxu0 %v5475
        %v5610 = vpop.f32.mrf.mxu0
        %v5611 = vadd.f32 0.0, %v5610
        %v5612 = vpop.f32.mrf.mxu0
        %5613 = vmatprep.mubr.f32.mxu0 0.0
        %5614 = vmatmul.mubr.f32.gmra.mxu0 %v5478
        %v5615 = vpop.f32.mrf.mxu0
        %v5616 = vadd.f32 0.0, %v5615
        %v5617 = vpop.f32.mrf.mxu0
        %5618 = vmatprep.mubr.f32.mxu0 0.0
        %5619 = vmatmul.mubr.f32.gmra.mxu0 %v5481
        %v5620 = vpop.f32.mrf.mxu0
        %v5621 = vadd.f32 0.0, %v5620
        %v5622 = vpop.f32.mrf.mxu0
        %5623 = vmatprep.mubr.f32.mxu0 0.0
        %5624 = vmatmul.mubr.f32.gmra.mxu0 %v5484
        %v5625 = vpop.f32.mrf.mxu0
        %v5626 = vadd.f32 0.0, %v5625
        %v5627 = vpop.f32.mrf.mxu0
        %5628 = vmatprep.mubr.f32.mxu0 0.0
        %5629 = vmatmul.mubr.f32.gmra.mxu0 %v5487
        %v5630 = vpop.f32.mrf.mxu0
        %v5631 = vadd.f32 0.0, %v5630
        %v5632 = vpop.f32.mrf.mxu0
        %5633 = vdwg.mxu0
        %5634 = vxpose.xlu0.b32.start [1/16] %v2925, 128
        %5635 = vxpose.xlu0.b32.cont [2/16] %v2926, 128
        %5636 = vxpose.xlu0.b32.cont [3/16] 0.0, 128
        %5637 = vxpose.xlu0.b32.cont [4/16] 0.0, 128
        %5638 = vxpose.xlu0.b32.cont [5/16] 0.0, 128
        %5639 = vxpose.xlu0.b32.cont [6/16] 0.0, 128
        %5640 = vxpose.xlu0.b32.cont [7/16] 0.0, 128
        %5641 = vxpose.xlu0.b32.cont [8/16] 0.0, 128
        %5642 = vxpose.xlu0.b32.cont [9/16] 0.0, 128
        %5643 = vxpose.xlu0.b32.cont [10/16] 0.0, 128
        %5644 = vxpose.xlu0.b32.cont [11/16] 0.0, 128
        %5645 = vxpose.xlu0.b32.cont [12/16] 0.0, 128
        %5646 = vxpose.xlu0.b32.cont [13/16] 0.0, 128
        %5647 = vxpose.xlu0.b32.cont [14/16] 0.0, 128
        %5648 = vxpose.xlu0.b32.cont [15/16] 0.0, 128
        %5649 = vxpose.xlu0.b32.end [16/16] 0.0, 128
        %v5650 = vpop.trf.xlu0
        %v5651 = vpop.trf.xlu0
        %v5652 = vpop.trf.xlu0
        %v5653 = vpop.trf.xlu0
        %v5654 = vpop.trf.xlu0
        %v5655 = vpop.trf.xlu0
        %v5656 = vpop.trf.xlu0
        %v5657 = vpop.trf.xlu0
        %v5658 = vpop.trf.xlu0
        %v5659 = vpop.trf.xlu0
        %v5660 = vpop.trf.xlu0
        %v5661 = vpop.trf.xlu0
        %v5662 = vpop.trf.xlu0
        %v5663 = vpop.trf.xlu0
        %v5664 = vpop.trf.xlu0
        %v5665 = vpop.trf.xlu0
        %v5667 = vsel %vm2965, %v5650, 0
        %v5670 = vsel %vm2965, %v5651, 0
        %v5673 = vsel %vm2965, %v5652, 0
        %v5676 = vsel %vm2965, %v5653, 0
        %v5679 = vsel %vm2965, %v5654, 0
        %v5682 = vsel %vm2965, %v5655, 0
        %v5685 = vsel %vm2965, %v5656, 0
        %v5688 = vsel %vm2965, %v5657, 0
        %v5691 = vsel %vm2965, %v5658, 0
        %v5694 = vsel %vm2965, %v5659, 0
        %v5697 = vsel %vm2965, %v5660, 0
        %v5700 = vsel %vm2965, %v5661, 0
        %v5703 = vsel %vm2965, %v5662, 0
        %v5706 = vsel %vm2965, %v5663, 0
        %v5709 = vsel %vm2965, %v5664, 0
        %v5712 = vsel %vm2965, %v5665, 0
        %5714 = vmatprep.subr.mxu0 0.0
        %5715 = vmatpush1.msra.mxu0 0.0
        %5716 = vmatprep.subr.mxu0 0.0
        %5717 = vmatpush1.msra.mxu0 0.0
        %5718 = vmatprep.subr.mxu0 0.0
        %5719 = vmatpush1.msra.mxu0 0.0
        %5720 = vmatprep.subr.mxu0 0.0
        %5721 = vmatpush1.msra.mxu0 0.0
        %5722 = vmatprep.subr.mxu0 0.0
        %5723 = vmatpush1.msra.mxu0 0.0
        %5724 = vmatprep.subr.mxu0 0.0
        %5725 = vmatpush1.msra.mxu0 0.0
        %5726 = vmatprep.subr.mxu0 0.0
        %5727 = vmatpush1.msra.mxu0 0.0
        %5728 = vmatprep.subr.mxu0 0.0
        %5729 = vmatpush1.msra.mxu0 0.0
        %5730 = vmatprep.subr.mxu0 0.0
        %5731 = vmatpush1.msra.mxu0 0.0
        %5732 = vmatprep.subr.mxu0 0.0
        %5733 = vmatpush1.msra.mxu0 0.0
        %5734 = vmatprep.subr.mxu0 0.0
        %5735 = vmatpush1.msra.mxu0 0.0
        %5736 = vmatprep.subr.mxu0 0.0
        %5737 = vmatpush1.msra.mxu0 0.0
        %5738 = vmatprep.subr.mxu0 0.0
        %5739 = vmatpush1.msra.mxu0 0.0
        %5740 = vmatprep.subr.mxu0 0.0
        %5741 = vmatpush1.msra.mxu0 0.0
        %5742 = vmatprep.subr.mxu0 0.0
        %5743 = vmatpush1.msra.mxu0 %v632
        %5744 = vmatprep.subr.mxu0 0.0
        %5745 = vmatpush1.msra.mxu0 %v631
        %5746 = vmatprep.subr.mxu0 0.0
        %5747 = vmatpush2.msra.mxu0 0.0
        %5748 = vmatprep.subr.mxu0 0.0
        %5749 = vmatpush2.msra.mxu0 0.0
        %5750 = vmatprep.subr.mxu0 0.0
        %5751 = vmatpush2.msra.mxu0 0.0
        %5752 = vmatprep.subr.mxu0 0.0
        %5753 = vmatpush2.msra.mxu0 0.0
        %5754 = vmatprep.subr.mxu0 0.0
        %5755 = vmatpush2.msra.mxu0 0.0
        %5756 = vmatprep.subr.mxu0 0.0
        %5757 = vmatpush2.msra.mxu0 0.0
        %5758 = vmatprep.subr.mxu0 0.0
        %5759 = vmatpush2.msra.mxu0 0.0
        %5760 = vmatprep.subr.mxu0 0.0
        %5761 = vmatpush2.msra.mxu0 0.0
        %5762 = vmatprep.subr.mxu0 0.0
        %5763 = vmatpush2.msra.mxu0 0.0
        %5764 = vmatprep.subr.mxu0 0.0
        %5765 = vmatpush2.msra.mxu0 0.0
        %5766 = vmatprep.subr.mxu0 0.0
        %5767 = vmatpush2.msra.mxu0 0.0
        %5768 = vmatprep.subr.mxu0 0.0
        %5769 = vmatpush2.msra.mxu0 0.0
        %5770 = vmatprep.subr.mxu0 0.0
        %5771 = vmatpush2.msra.mxu0 0.0
        %5772 = vmatprep.subr.mxu0 0.0
        %5773 = vmatpush2.msra.mxu0 0.0
        %5774 = vmatprep.subr.mxu0 0.0
        %5775 = vmatpush2.msra.mxu0 0.0
        %5776 = vmatprep.subr.mxu0 0.0
        %5777 = vmatpush2.msra.mxu0 0.0
        %5778 = vmatprep.mubr.f32.mxu0 0.0
        %5779 = vmatmul.mubr.f32.gmra.mxu0 %v5667
        %v5780 = vpop.f32.mrf.mxu0
        %v5781 = vadd.f32 0.0, %v5780
        %v5782 = vpop.f32.mrf.mxu0
        %5783 = vmatprep.mubr.f32.mxu0 0.0
        %5784 = vmatmul.mubr.f32.gmra.mxu0 %v5670
        %v5785 = vpop.f32.mrf.mxu0
        %v5786 = vadd.f32 0.0, %v5785
        %v5787 = vpop.f32.mrf.mxu0
        %5788 = vmatprep.mubr.f32.mxu0 0.0
        %5789 = vmatmul.mubr.f32.gmra.mxu0 %v5673
        %v5790 = vpop.f32.mrf.mxu0
        %v5791 = vadd.f32 0.0, %v5790
        %v5792 = vpop.f32.mrf.mxu0
        %5793 = vmatprep.mubr.f32.mxu0 0.0
        %5794 = vmatmul.mubr.f32.gmra.mxu0 %v5676
        %v5795 = vpop.f32.mrf.mxu0
        %v5796 = vadd.f32 0.0, %v5795
        %v5797 = vpop.f32.mrf.mxu0
        %5798 = vmatprep.mubr.f32.mxu0 0.0
        %5799 = vmatmul.mubr.f32.gmra.mxu0 %v5679
        %v5800 = vpop.f32.mrf.mxu0
        %v5801 = vadd.f32 0.0, %v5800
        %v5802 = vpop.f32.mrf.mxu0
        %5803 = vmatprep.mubr.f32.mxu0 0.0
        %5804 = vmatmul.mubr.f32.gmra.mxu0 %v5682
        %v5805 = vpop.f32.mrf.mxu0
        %v5806 = vadd.f32 0.0, %v5805
        %v5807 = vpop.f32.mrf.mxu0
        %5808 = vmatprep.mubr.f32.mxu0 0.0
        %5809 = vmatmul.mubr.f32.gmra.mxu0 %v5685
        %v5810 = vpop.f32.mrf.mxu0
        %v5811 = vadd.f32 0.0, %v5810
        %v5812 = vpop.f32.mrf.mxu0
        %5813 = vmatprep.mubr.f32.mxu0 0.0
        %5814 = vmatmul.mubr.f32.gmra.mxu0 %v5688
        %v5815 = vpop.f32.mrf.mxu0
        %v5816 = vadd.f32 0.0, %v5815
        %v5817 = vpop.f32.mrf.mxu0
        %5818 = vmatprep.mubr.f32.mxu0 0.0
        %5819 = vmatmul.mubr.f32.gmra.mxu0 %v5691
        %v5820 = vpop.f32.mrf.mxu0
        %v5821 = vadd.f32 0.0, %v5820
        %v5822 = vpop.f32.mrf.mxu0
        %5823 = vmatprep.mubr.f32.mxu0 0.0
        %5824 = vmatmul.mubr.f32.gmra.mxu0 %v5694
        %v5825 = vpop.f32.mrf.mxu0
        %v5826 = vadd.f32 0.0, %v5825
        %v5827 = vpop.f32.mrf.mxu0
        %5828 = vmatprep.mubr.f32.mxu0 0.0
        %5829 = vmatmul.mubr.f32.gmra.mxu0 %v5697
        %v5830 = vpop.f32.mrf.mxu0
        %v5831 = vadd.f32 0.0, %v5830
        %v5832 = vpop.f32.mrf.mxu0
        %5833 = vmatprep.mubr.f32.mxu0 0.0
        %5834 = vmatmul.mubr.f32.gmra.mxu0 %v5700
        %v5835 = vpop.f32.mrf.mxu0
        %v5836 = vadd.f32 0.0, %v5835
        %v5837 = vpop.f32.mrf.mxu0
        %5838 = vmatprep.mubr.f32.mxu0 0.0
        %5839 = vmatmul.mubr.f32.gmra.mxu0 %v5703
        %v5840 = vpop.f32.mrf.mxu0
        %v5841 = vadd.f32 0.0, %v5840
        %v5842 = vpop.f32.mrf.mxu0
        %5843 = vmatprep.mubr.f32.mxu0 0.0
        %5844 = vmatmul.mubr.f32.gmra.mxu0 %v5706
        %v5845 = vpop.f32.mrf.mxu0
        %v5846 = vadd.f32 0.0, %v5845
        %v5847 = vpop.f32.mrf.mxu0
        %5848 = vmatprep.mubr.f32.mxu0 0.0
        %5849 = vmatmul.mubr.f32.gmra.mxu0 %v5709
        %v5850 = vpop.f32.mrf.mxu0
        %v5851 = vadd.f32 0.0, %v5850
        %v5852 = vpop.f32.mrf.mxu0
        %5853 = vmatprep.mubr.f32.mxu0 0.0
        %5854 = vmatmul.mubr.f32.gmra.mxu0 %v5712
        %v5855 = vpop.f32.mrf.mxu0
        %v5856 = vadd.f32 0.0, %v5855
        %v5857 = vpop.f32.mrf.mxu0
        %5858 = vdwg.mxu0
        %5859 = vxpose.xlu0.b32.start [1/16] %v2927, 128
        %5860 = vxpose.xlu0.b32.cont [2/16] %v2928, 128
        %5861 = vxpose.xlu0.b32.cont [3/16] 0.0, 128
        %5862 = vxpose.xlu0.b32.cont [4/16] 0.0, 128
        %5863 = vxpose.xlu0.b32.cont [5/16] 0.0, 128
        %5864 = vxpose.xlu0.b32.cont [6/16] 0.0, 128
        %5865 = vxpose.xlu0.b32.cont [7/16] 0.0, 128
        %5866 = vxpose.xlu0.b32.cont [8/16] 0.0, 128
        %5867 = vxpose.xlu0.b32.cont [9/16] 0.0, 128
        %5868 = vxpose.xlu0.b32.cont [10/16] 0.0, 128
        %5869 = vxpose.xlu0.b32.cont [11/16] 0.0, 128
        %5870 = vxpose.xlu0.b32.cont [12/16] 0.0, 128
        %5871 = vxpose.xlu0.b32.cont [13/16] 0.0, 128
        %5872 = vxpose.xlu0.b32.cont [14/16] 0.0, 128
        %5873 = vxpose.xlu0.b32.cont [15/16] 0.0, 128
        %5874 = vxpose.xlu0.b32.end [16/16] 0.0, 128
        %v5875 = vpop.trf.xlu0
        %v5876 = vpop.trf.xlu0
        %v5877 = vpop.trf.xlu0
        %v5878 = vpop.trf.xlu0
        %v5879 = vpop.trf.xlu0
        %v5880 = vpop.trf.xlu0
        %v5881 = vpop.trf.xlu0
        %v5882 = vpop.trf.xlu0
        %v5883 = vpop.trf.xlu0
        %v5884 = vpop.trf.xlu0
        %v5885 = vpop.trf.xlu0
        %v5886 = vpop.trf.xlu0
        %v5887 = vpop.trf.xlu0
        %v5888 = vpop.trf.xlu0
        %v5889 = vpop.trf.xlu0
        %v5890 = vpop.trf.xlu0
        %v5892 = vsel %vm2965, %v5875, 0
        %v5895 = vsel %vm2965, %v5876, 0
        %v5898 = vsel %vm2965, %v5877, 0
        %v5901 = vsel %vm2965, %v5878, 0
        %v5904 = vsel %vm2965, %v5879, 0
        %v5907 = vsel %vm2965, %v5880, 0
        %v5910 = vsel %vm2965, %v5881, 0
        %v5913 = vsel %vm2965, %v5882, 0
        %v5916 = vsel %vm2965, %v5883, 0
        %v5919 = vsel %vm2965, %v5884, 0
        %v5922 = vsel %vm2965, %v5885, 0
        %v5925 = vsel %vm2965, %v5886, 0
        %v5928 = vsel %vm2965, %v5887, 0
        %v5931 = vsel %vm2965, %v5888, 0
        %v5934 = vsel %vm2965, %v5889, 0
        %v5937 = vsel %vm2965, %v5890, 0
        %5939 = vmatprep.subr.mxu0 0.0
        %5940 = vmatpush1.msra.mxu0 0.0
        %5941 = vmatprep.subr.mxu0 0.0
        %5942 = vmatpush1.msra.mxu0 0.0
        %5943 = vmatprep.subr.mxu0 0.0
        %5944 = vmatpush1.msra.mxu0 0.0
        %5945 = vmatprep.subr.mxu0 0.0
        %5946 = vmatpush1.msra.mxu0 0.0
        %5947 = vmatprep.subr.mxu0 0.0
        %5948 = vmatpush1.msra.mxu0 0.0
        %5949 = vmatprep.subr.mxu0 0.0
        %5950 = vmatpush1.msra.mxu0 0.0
        %5951 = vmatprep.subr.mxu0 0.0
        %5952 = vmatpush1.msra.mxu0 0.0
        %5953 = vmatprep.subr.mxu0 0.0
        %5954 = vmatpush1.msra.mxu0 0.0
        %5955 = vmatprep.subr.mxu0 0.0
        %5956 = vmatpush1.msra.mxu0 0.0
        %5957 = vmatprep.subr.mxu0 0.0
        %5958 = vmatpush1.msra.mxu0 0.0
        %5959 = vmatprep.subr.mxu0 0.0
        %5960 = vmatpush1.msra.mxu0 0.0
        %5961 = vmatprep.subr.mxu0 0.0
        %5962 = vmatpush1.msra.mxu0 0.0
        %5963 = vmatprep.subr.mxu0 0.0
        %5964 = vmatpush1.msra.mxu0 0.0
        %5965 = vmatprep.subr.mxu0 0.0
        %5966 = vmatpush1.msra.mxu0 0.0
        %5967 = vmatprep.subr.mxu0 0.0
        %5968 = vmatpush1.msra.mxu0 %v634
        %5969 = vmatprep.subr.mxu0 0.0
        %5970 = vmatpush1.msra.mxu0 %v633
        %5971 = vmatprep.subr.mxu0 0.0
        %5972 = vmatpush2.msra.mxu0 0.0
        %5973 = vmatprep.subr.mxu0 0.0
        %5974 = vmatpush2.msra.mxu0 0.0
        %5975 = vmatprep.subr.mxu0 0.0
        %5976 = vmatpush2.msra.mxu0 0.0
        %5977 = vmatprep.subr.mxu0 0.0
        %5978 = vmatpush2.msra.mxu0 0.0
        %5979 = vmatprep.subr.mxu0 0.0
        %5980 = vmatpush2.msra.mxu0 0.0
        %5981 = vmatprep.subr.mxu0 0.0
        %5982 = vmatpush2.msra.mxu0 0.0
        %5983 = vmatprep.subr.mxu0 0.0
        %5984 = vmatpush2.msra.mxu0 0.0
        %5985 = vmatprep.subr.mxu0 0.0
        %5986 = vmatpush2.msra.mxu0 0.0
        %5987 = vmatprep.subr.mxu0 0.0
        %5988 = vmatpush2.msra.mxu0 0.0
        %5989 = vmatprep.subr.mxu0 0.0
        %5990 = vmatpush2.msra.mxu0 0.0
        %5991 = vmatprep.subr.mxu0 0.0
        %5992 = vmatpush2.msra.mxu0 0.0
        %5993 = vmatprep.subr.mxu0 0.0
        %5994 = vmatpush2.msra.mxu0 0.0
        %5995 = vmatprep.subr.mxu0 0.0
        %5996 = vmatpush2.msra.mxu0 0.0
        %5997 = vmatprep.subr.mxu0 0.0
        %5998 = vmatpush2.msra.mxu0 0.0
        %5999 = vmatprep.subr.mxu0 0.0
        %6000 = vmatpush2.msra.mxu0 0.0
        %6001 = vmatprep.subr.mxu0 0.0
        %6002 = vmatpush2.msra.mxu0 0.0
        %6003 = vmatprep.mubr.f32.mxu0 0.0
        %6004 = vmatmul.mubr.f32.gmra.mxu0 %v5892
        %v6005 = vpop.f32.mrf.mxu0
        %v6006 = vadd.f32 0.0, %v6005
        %v6007 = vpop.f32.mrf.mxu0
        %6008 = vmatprep.mubr.f32.mxu0 0.0
        %6009 = vmatmul.mubr.f32.gmra.mxu0 %v5895
        %v6010 = vpop.f32.mrf.mxu0
        %v6011 = vadd.f32 0.0, %v6010
        %v6012 = vpop.f32.mrf.mxu0
        %6013 = vmatprep.mubr.f32.mxu0 0.0
        %6014 = vmatmul.mubr.f32.gmra.mxu0 %v5898
        %v6015 = vpop.f32.mrf.mxu0
        %v6016 = vadd.f32 0.0, %v6015
        %v6017 = vpop.f32.mrf.mxu0
        %6018 = vmatprep.mubr.f32.mxu0 0.0
        %6019 = vmatmul.mubr.f32.gmra.mxu0 %v5901
        %v6020 = vpop.f32.mrf.mxu0
        %v6021 = vadd.f32 0.0, %v6020
        %v6022 = vpop.f32.mrf.mxu0
        %6023 = vmatprep.mubr.f32.mxu0 0.0
        %6024 = vmatmul.mubr.f32.gmra.mxu0 %v5904
        %v6025 = vpop.f32.mrf.mxu0
        %v6026 = vadd.f32 0.0, %v6025
        %v6027 = vpop.f32.mrf.mxu0
        %6028 = vmatprep.mubr.f32.mxu0 0.0
        %6029 = vmatmul.mubr.f32.gmra.mxu0 %v5907
        %v6030 = vpop.f32.mrf.mxu0
        %v6031 = vadd.f32 0.0, %v6030
        %v6032 = vpop.f32.mrf.mxu0
        %6033 = vmatprep.mubr.f32.mxu0 0.0
        %6034 = vmatmul.mubr.f32.gmra.mxu0 %v5910
        %v6035 = vpop.f32.mrf.mxu0
        %v6036 = vadd.f32 0.0, %v6035
        %v6037 = vpop.f32.mrf.mxu0
        %6038 = vmatprep.mubr.f32.mxu0 0.0
        %6039 = vmatmul.mubr.f32.gmra.mxu0 %v5913
        %v6040 = vpop.f32.mrf.mxu0
        %v6041 = vadd.f32 0.0, %v6040
        %v6042 = vpop.f32.mrf.mxu0
        %6043 = vmatprep.mubr.f32.mxu0 0.0
        %6044 = vmatmul.mubr.f32.gmra.mxu0 %v5916
        %v6045 = vpop.f32.mrf.mxu0
        %v6046 = vadd.f32 0.0, %v6045
        %v6047 = vpop.f32.mrf.mxu0
        %6048 = vmatprep.mubr.f32.mxu0 0.0
        %6049 = vmatmul.mubr.f32.gmra.mxu0 %v5919
        %v6050 = vpop.f32.mrf.mxu0
        %v6051 = vadd.f32 0.0, %v6050
        %v6052 = vpop.f32.mrf.mxu0
        %6053 = vmatprep.mubr.f32.mxu0 0.0
        %6054 = vmatmul.mubr.f32.gmra.mxu0 %v5922
        %v6055 = vpop.f32.mrf.mxu0
        %v6056 = vadd.f32 0.0, %v6055
        %v6057 = vpop.f32.mrf.mxu0
        %6058 = vmatprep.mubr.f32.mxu0 0.0
        %6059 = vmatmul.mubr.f32.gmra.mxu0 %v5925
        %v6060 = vpop.f32.mrf.mxu0
        %v6061 = vadd.f32 0.0, %v6060
        %v6062 = vpop.f32.mrf.mxu0
        %6063 = vmatprep.mubr.f32.mxu0 0.0
        %6064 = vmatmul.mubr.f32.gmra.mxu0 %v5928
        %v6065 = vpop.f32.mrf.mxu0
        %v6066 = vadd.f32 0.0, %v6065
        %v6067 = vpop.f32.mrf.mxu0
        %6068 = vmatprep.mubr.f32.mxu0 0.0
        %6069 = vmatmul.mubr.f32.gmra.mxu0 %v5931
        %v6070 = vpop.f32.mrf.mxu0
        %v6071 = vadd.f32 0.0, %v6070
        %v6072 = vpop.f32.mrf.mxu0
        %6073 = vmatprep.mubr.f32.mxu0 0.0
        %6074 = vmatmul.mubr.f32.gmra.mxu0 %v5934
        %v6075 = vpop.f32.mrf.mxu0
        %v6076 = vadd.f32 0.0, %v6075
        %v6077 = vpop.f32.mrf.mxu0
        %6078 = vmatprep.mubr.f32.mxu0 0.0
        %6079 = vmatmul.mubr.f32.gmra.mxu0 %v5937
        %v6080 = vpop.f32.mrf.mxu0
        %v6081 = vadd.f32 0.0, %v6080
        %v6082 = vpop.f32.mrf.mxu0
        %6083 = vdwg.mxu0
        %6084 = vxpose.xlu0.b32.start [1/16] %v2929, 128
        %6085 = vxpose.xlu0.b32.cont [2/16] %v2930, 128
        %6086 = vxpose.xlu0.b32.cont [3/16] 0.0, 128
        %6087 = vxpose.xlu0.b32.cont [4/16] 0.0, 128
        %6088 = vxpose.xlu0.b32.cont [5/16] 0.0, 128
        %6089 = vxpose.xlu0.b32.cont [6/16] 0.0, 128
        %6090 = vxpose.xlu0.b32.cont [7/16] 0.0, 128
        %6091 = vxpose.xlu0.b32.cont [8/16] 0.0, 128
        %6092 = vxpose.xlu0.b32.cont [9/16] 0.0, 128
        %6093 = vxpose.xlu0.b32.cont [10/16] 0.0, 128
        %6094 = vxpose.xlu0.b32.cont [11/16] 0.0, 128
        %6095 = vxpose.xlu0.b32.cont [12/16] 0.0, 128
        %6096 = vxpose.xlu0.b32.cont [13/16] 0.0, 128
        %6097 = vxpose.xlu0.b32.cont [14/16] 0.0, 128
        %6098 = vxpose.xlu0.b32.cont [15/16] 0.0, 128
        %6099 = vxpose.xlu0.b32.end [16/16] 0.0, 128
        %v6100 = vpop.trf.xlu0
        %v6101 = vpop.trf.xlu0
        %v6102 = vpop.trf.xlu0
        %v6103 = vpop.trf.xlu0
        %v6104 = vpop.trf.xlu0
        %v6105 = vpop.trf.xlu0
        %v6106 = vpop.trf.xlu0
        %v6107 = vpop.trf.xlu0
        %v6108 = vpop.trf.xlu0
        %v6109 = vpop.trf.xlu0
        %v6110 = vpop.trf.xlu0
        %v6111 = vpop.trf.xlu0
        %v6112 = vpop.trf.xlu0
        %v6113 = vpop.trf.xlu0
        %v6114 = vpop.trf.xlu0
        %v6115 = vpop.trf.xlu0
        %v6117 = vsel %vm2965, %v6100, 0
        %v6120 = vsel %vm2965, %v6101, 0
        %v6123 = vsel %vm2965, %v6102, 0
        %v6126 = vsel %vm2965, %v6103, 0
        %v6129 = vsel %vm2965, %v6104, 0
        %v6132 = vsel %vm2965, %v6105, 0
        %v6135 = vsel %vm2965, %v6106, 0
        %v6138 = vsel %vm2965, %v6107, 0
        %v6141 = vsel %vm2965, %v6108, 0
        %v6144 = vsel %vm2965, %v6109, 0
        %v6147 = vsel %vm2965, %v6110, 0
        %v6150 = vsel %vm2965, %v6111, 0
        %v6153 = vsel %vm2965, %v6112, 0
        %v6156 = vsel %vm2965, %v6113, 0
        %v6159 = vsel %vm2965, %v6114, 0
        %v6162 = vsel %vm2965, %v6115, 0
        %6164 = vmatprep.subr.mxu0 0.0
        %6165 = vmatpush1.msra.mxu0 0.0
        %6166 = vmatprep.subr.mxu0 0.0
        %6167 = vmatpush1.msra.mxu0 0.0
        %6168 = vmatprep.subr.mxu0 0.0
        %6169 = vmatpush1.msra.mxu0 0.0
        %6170 = vmatprep.subr.mxu0 0.0
        %6171 = vmatpush1.msra.mxu0 0.0
        %6172 = vmatprep.subr.mxu0 0.0
        %6173 = vmatpush1.msra.mxu0 0.0
        %6174 = vmatprep.subr.mxu0 0.0
        %6175 = vmatpush1.msra.mxu0 0.0
        %6176 = vmatprep.subr.mxu0 0.0
        %6177 = vmatpush1.msra.mxu0 0.0
        %6178 = vmatprep.subr.mxu0 0.0
        %6179 = vmatpush1.msra.mxu0 0.0
        %6180 = vmatprep.subr.mxu0 0.0
        %6181 = vmatpush1.msra.mxu0 0.0
        %6182 = vmatprep.subr.mxu0 0.0
        %6183 = vmatpush1.msra.mxu0 0.0
        %6184 = vmatprep.subr.mxu0 0.0
        %6185 = vmatpush1.msra.mxu0 0.0
        %6186 = vmatprep.subr.mxu0 0.0
        %6187 = vmatpush1.msra.mxu0 0.0
        %6188 = vmatprep.subr.mxu0 0.0
        %6189 = vmatpush1.msra.mxu0 0.0
        %6190 = vmatprep.subr.mxu0 0.0
        %6191 = vmatpush1.msra.mxu0 0.0
        %6192 = vmatprep.subr.mxu0 0.0
        %6193 = vmatpush1.msra.mxu0 %v636
        %6194 = vmatprep.subr.mxu0 0.0
        %6195 = vmatpush1.msra.mxu0 %v635
        %6196 = vmatprep.subr.mxu0 0.0
        %6197 = vmatpush2.msra.mxu0 0.0
        %6198 = vmatprep.subr.mxu0 0.0
        %6199 = vmatpush2.msra.mxu0 0.0
        %6200 = vmatprep.subr.mxu0 0.0
        %6201 = vmatpush2.msra.mxu0 0.0
        %6202 = vmatprep.subr.mxu0 0.0
        %6203 = vmatpush2.msra.mxu0 0.0
        %6204 = vmatprep.subr.mxu0 0.0
        %6205 = vmatpush2.msra.mxu0 0.0
        %6206 = vmatprep.subr.mxu0 0.0
        %6207 = vmatpush2.msra.mxu0 0.0
        %6208 = vmatprep.subr.mxu0 0.0
        %6209 = vmatpush2.msra.mxu0 0.0
        %6210 = vmatprep.subr.mxu0 0.0
        %6211 = vmatpush2.msra.mxu0 0.0
        %6212 = vmatprep.subr.mxu0 0.0
        %6213 = vmatpush2.msra.mxu0 0.0
        %6214 = vmatprep.subr.mxu0 0.0
        %6215 = vmatpush2.msra.mxu0 0.0
        %6216 = vmatprep.subr.mxu0 0.0
        %6217 = vmatpush2.msra.mxu0 0.0
        %6218 = vmatprep.subr.mxu0 0.0
        %6219 = vmatpush2.msra.mxu0 0.0
        %6220 = vmatprep.subr.mxu0 0.0
        %6221 = vmatpush2.msra.mxu0 0.0
        %6222 = vmatprep.subr.mxu0 0.0
        %6223 = vmatpush2.msra.mxu0 0.0
        %6224 = vmatprep.subr.mxu0 0.0
        %6225 = vmatpush2.msra.mxu0 0.0
        %6226 = vmatprep.subr.mxu0 0.0
        %6227 = vmatpush2.msra.mxu0 0.0
        %6228 = vmatprep.mubr.f32.mxu0 0.0
        %6229 = vmatmul.mubr.f32.gmra.mxu0 %v6117
        %v6230 = vpop.f32.mrf.mxu0
        %v6231 = vadd.f32 0.0, %v6230
        %v6232 = vpop.f32.mrf.mxu0
        %6233 = vmatprep.mubr.f32.mxu0 0.0
        %6234 = vmatmul.mubr.f32.gmra.mxu0 %v6120
        %v6235 = vpop.f32.mrf.mxu0
        %v6236 = vadd.f32 0.0, %v6235
        %v6237 = vpop.f32.mrf.mxu0
        %6238 = vmatprep.mubr.f32.mxu0 0.0
        %6239 = vmatmul.mubr.f32.gmra.mxu0 %v6123
        %v6240 = vpop.f32.mrf.mxu0
        %v6241 = vadd.f32 0.0, %v6240
        %v6242 = vpop.f32.mrf.mxu0
        %6243 = vmatprep.mubr.f32.mxu0 0.0
        %6244 = vmatmul.mubr.f32.gmra.mxu0 %v6126
        %v6245 = vpop.f32.mrf.mxu0
        %v6246 = vadd.f32 0.0, %v6245
        %v6247 = vpop.f32.mrf.mxu0
        %6248 = vmatprep.mubr.f32.mxu0 0.0
        %6249 = vmatmul.mubr.f32.gmra.mxu0 %v6129
        %v6250 = vpop.f32.mrf.mxu0
        %v6251 = vadd.f32 0.0, %v6250
        %v6252 = vpop.f32.mrf.mxu0
        %6253 = vmatprep.mubr.f32.mxu0 0.0
        %6254 = vmatmul.mubr.f32.gmra.mxu0 %v6132
        %v6255 = vpop.f32.mrf.mxu0
        %v6256 = vadd.f32 0.0, %v6255
        %v6257 = vpop.f32.mrf.mxu0
        %6258 = vmatprep.mubr.f32.mxu0 0.0
        %6259 = vmatmul.mubr.f32.gmra.mxu0 %v6135
        %v6260 = vpop.f32.mrf.mxu0
        %v6261 = vadd.f32 0.0, %v6260
        %v6262 = vpop.f32.mrf.mxu0
        %6263 = vmatprep.mubr.f32.mxu0 0.0
        %6264 = vmatmul.mubr.f32.gmra.mxu0 %v6138
        %v6265 = vpop.f32.mrf.mxu0
        %v6266 = vadd.f32 0.0, %v6265
        %v6267 = vpop.f32.mrf.mxu0
        %6268 = vmatprep.mubr.f32.mxu0 0.0
        %6269 = vmatmul.mubr.f32.gmra.mxu0 %v6141
        %v6270 = vpop.f32.mrf.mxu0
        %v6271 = vadd.f32 0.0, %v6270
        %v6272 = vpop.f32.mrf.mxu0
        %6273 = vmatprep.mubr.f32.mxu0 0.0
        %6274 = vmatmul.mubr.f32.gmra.mxu0 %v6144
        %v6275 = vpop.f32.mrf.mxu0
        %v6276 = vadd.f32 0.0, %v6275
        %v6277 = vpop.f32.mrf.mxu0
        %6278 = vmatprep.mubr.f32.mxu0 0.0
        %6279 = vmatmul.mubr.f32.gmra.mxu0 %v6147
        %v6280 = vpop.f32.mrf.mxu0
        %v6281 = vadd.f32 0.0, %v6280
        %v6282 = vpop.f32.mrf.mxu0
        %6283 = vmatprep.mubr.f32.mxu0 0.0
        %6284 = vmatmul.mubr.f32.gmra.mxu0 %v6150
        %v6285 = vpop.f32.mrf.mxu0
        %v6286 = vadd.f32 0.0, %v6285
        %v6287 = vpop.f32.mrf.mxu0
        %6288 = vmatprep.mubr.f32.mxu0 0.0
        %6289 = vmatmul.mubr.f32.gmra.mxu0 %v6153
        %v6290 = vpop.f32.mrf.mxu0
        %v6291 = vadd.f32 0.0, %v6290
        %v6292 = vpop.f32.mrf.mxu0
        %6293 = vmatprep.mubr.f32.mxu0 0.0
        %6294 = vmatmul.mubr.f32.gmra.mxu0 %v6156
        %v6295 = vpop.f32.mrf.mxu0
        %v6296 = vadd.f32 0.0, %v6295
        %v6297 = vpop.f32.mrf.mxu0
        %6298 = vmatprep.mubr.f32.mxu0 0.0
        %6299 = vmatmul.mubr.f32.gmra.mxu0 %v6159
        %v6300 = vpop.f32.mrf.mxu0
        %v6301 = vadd.f32 0.0, %v6300
        %v6302 = vpop.f32.mrf.mxu0
        %6303 = vmatprep.mubr.f32.mxu0 0.0
        %6304 = vmatmul.mubr.f32.gmra.mxu0 %v6162
        %v6305 = vpop.f32.mrf.mxu0
        %v6306 = vadd.f32 0.0, %v6305
        %v6307 = vpop.f32.mrf.mxu0
        %6308 = vdwg.mxu0
        %6309 = vxpose.xlu0.b32.start [1/16] %v2931, 128
        %6310 = vxpose.xlu0.b32.cont [2/16] %v2932, 128
        %6311 = vxpose.xlu0.b32.cont [3/16] 0.0, 128
        %6312 = vxpose.xlu0.b32.cont [4/16] 0.0, 128
        %6313 = vxpose.xlu0.b32.cont [5/16] 0.0, 128
        %6314 = vxpose.xlu0.b32.cont [6/16] 0.0, 128
        %6315 = vxpose.xlu0.b32.cont [7/16] 0.0, 128
        %6316 = vxpose.xlu0.b32.cont [8/16] 0.0, 128
        %6317 = vxpose.xlu0.b32.cont [9/16] 0.0, 128
        %6318 = vxpose.xlu0.b32.cont [10/16] 0.0, 128
        %6319 = vxpose.xlu0.b32.cont [11/16] 0.0, 128
        %6320 = vxpose.xlu0.b32.cont [12/16] 0.0, 128
        %6321 = vxpose.xlu0.b32.cont [13/16] 0.0, 128
        %6322 = vxpose.xlu0.b32.cont [14/16] 0.0, 128
        %6323 = vxpose.xlu0.b32.cont [15/16] 0.0, 128
        %6324 = vxpose.xlu0.b32.end [16/16] 0.0, 128
        %v6325 = vpop.trf.xlu0
        %v6326 = vpop.trf.xlu0
        %v6327 = vpop.trf.xlu0
        %v6328 = vpop.trf.xlu0
        %v6329 = vpop.trf.xlu0
        %v6330 = vpop.trf.xlu0
        %v6331 = vpop.trf.xlu0
        %v6332 = vpop.trf.xlu0
        %v6333 = vpop.trf.xlu0
        %v6334 = vpop.trf.xlu0
        %v6335 = vpop.trf.xlu0
        %v6336 = vpop.trf.xlu0
        %v6337 = vpop.trf.xlu0
        %v6338 = vpop.trf.xlu0
        %v6339 = vpop.trf.xlu0
        %v6340 = vpop.trf.xlu0
        %v6342 = vsel %vm2965, %v6325, 0
        %v6345 = vsel %vm2965, %v6326, 0
        %v6348 = vsel %vm2965, %v6327, 0
        %v6351 = vsel %vm2965, %v6328, 0
        %v6354 = vsel %vm2965, %v6329, 0
        %v6357 = vsel %vm2965, %v6330, 0
        %v6360 = vsel %vm2965, %v6331, 0
        %v6363 = vsel %vm2965, %v6332, 0
        %v6366 = vsel %vm2965, %v6333, 0
        %v6369 = vsel %vm2965, %v6334, 0
        %v6372 = vsel %vm2965, %v6335, 0
        %v6375 = vsel %vm2965, %v6336, 0
        %v6378 = vsel %vm2965, %v6337, 0
        %v6381 = vsel %vm2965, %v6338, 0
        %v6384 = vsel %vm2965, %v6339, 0
        %v6387 = vsel %vm2965, %v6340, 0
        %6389 = vmatprep.subr.mxu0 0.0
        %6390 = vmatpush1.msra.mxu0 0.0
        %6391 = vmatprep.subr.mxu0 0.0
        %6392 = vmatpush1.msra.mxu0 0.0
        %6393 = vmatprep.subr.mxu0 0.0
        %6394 = vmatpush1.msra.mxu0 0.0
        %6395 = vmatprep.subr.mxu0 0.0
        %6396 = vmatpush1.msra.mxu0 0.0
        %6397 = vmatprep.subr.mxu0 0.0
        %6398 = vmatpush1.msra.mxu0 0.0
        %6399 = vmatprep.subr.mxu0 0.0
        %6400 = vmatpush1.msra.mxu0 0.0
        %6401 = vmatprep.subr.mxu0 0.0
        %6402 = vmatpush1.msra.mxu0 0.0
        %6403 = vmatprep.subr.mxu0 0.0
        %6404 = vmatpush1.msra.mxu0 0.0
        %6405 = vmatprep.subr.mxu0 0.0
        %6406 = vmatpush1.msra.mxu0 0.0
        %6407 = vmatprep.subr.mxu0 0.0
        %6408 = vmatpush1.msra.mxu0 0.0
        %6409 = vmatprep.subr.mxu0 0.0
        %6410 = vmatpush1.msra.mxu0 0.0
        %6411 = vmatprep.subr.mxu0 0.0
        %6412 = vmatpush1.msra.mxu0 0.0
        %6413 = vmatprep.subr.mxu0 0.0
        %6414 = vmatpush1.msra.mxu0 0.0
        %6415 = vmatprep.subr.mxu0 0.0
        %6416 = vmatpush1.msra.mxu0 0.0
        %6417 = vmatprep.subr.mxu0 0.0
        %6418 = vmatpush1.msra.mxu0 %v638
        %6419 = vmatprep.subr.mxu0 0.0
        %6420 = vmatpush1.msra.mxu0 %v637
        %6421 = vmatprep.subr.mxu0 0.0
        %6422 = vmatpush2.msra.mxu0 0.0
        %6423 = vmatprep.subr.mxu0 0.0
        %6424 = vmatpush2.msra.mxu0 0.0
        %6425 = vmatprep.subr.mxu0 0.0
        %6426 = vmatpush2.msra.mxu0 0.0
        %6427 = vmatprep.subr.mxu0 0.0
        %6428 = vmatpush2.msra.mxu0 0.0
        %6429 = vmatprep.subr.mxu0 0.0
        %6430 = vmatpush2.msra.mxu0 0.0
        %6431 = vmatprep.subr.mxu0 0.0
        %6432 = vmatpush2.msra.mxu0 0.0
        %6433 = vmatprep.subr.mxu0 0.0
        %6434 = vmatpush2.msra.mxu0 0.0
        %6435 = vmatprep.subr.mxu0 0.0
        %6436 = vmatpush2.msra.mxu0 0.0
        %6437 = vmatprep.subr.mxu0 0.0
        %6438 = vmatpush2.msra.mxu0 0.0
        %6439 = vmatprep.subr.mxu0 0.0
        %6440 = vmatpush2.msra.mxu0 0.0
        %6441 = vmatprep.subr.mxu0 0.0
        %6442 = vmatpush2.msra.mxu0 0.0
        %6443 = vmatprep.subr.mxu0 0.0
        %6444 = vmatpush2.msra.mxu0 0.0
        %6445 = vmatprep.subr.mxu0 0.0
        %6446 = vmatpush2.msra.mxu0 0.0
        %6447 = vmatprep.subr.mxu0 0.0
        %6448 = vmatpush2.msra.mxu0 0.0
        %6449 = vmatprep.subr.mxu0 0.0
        %6450 = vmatpush2.msra.mxu0 0.0
        %6451 = vmatprep.subr.mxu0 0.0
        %6452 = vmatpush2.msra.mxu0 0.0
        %6453 = vmatprep.mubr.f32.mxu0 0.0
        %6454 = vmatmul.mubr.f32.gmra.mxu0 %v6342
        %v6455 = vpop.f32.mrf.mxu0
        %v6456 = vadd.f32 0.0, %v6455
        %v6457 = vpop.f32.mrf.mxu0
        %6458 = vmatprep.mubr.f32.mxu0 0.0
        %6459 = vmatmul.mubr.f32.gmra.mxu0 %v6345
        %v6460 = vpop.f32.mrf.mxu0
        %v6461 = vadd.f32 0.0, %v6460
        %v6462 = vpop.f32.mrf.mxu0
        %6463 = vmatprep.mubr.f32.mxu0 0.0
        %6464 = vmatmul.mubr.f32.gmra.mxu0 %v6348
        %v6465 = vpop.f32.mrf.mxu0
        %v6466 = vadd.f32 0.0, %v6465
        %v6467 = vpop.f32.mrf.mxu0
        %6468 = vmatprep.mubr.f32.mxu0 0.0
        %6469 = vmatmul.mubr.f32.gmra.mxu0 %v6351
        %v6470 = vpop.f32.mrf.mxu0
        %v6471 = vadd.f32 0.0, %v6470
        %v6472 = vpop.f32.mrf.mxu0
        %6473 = vmatprep.mubr.f32.mxu0 0.0
        %6474 = vmatmul.mubr.f32.gmra.mxu0 %v6354
        %v6475 = vpop.f32.mrf.mxu0
        %v6476 = vadd.f32 0.0, %v6475
        %v6477 = vpop.f32.mrf.mxu0
        %6478 = vmatprep.mubr.f32.mxu0 0.0
        %6479 = vmatmul.mubr.f32.gmra.mxu0 %v6357
        %v6480 = vpop.f32.mrf.mxu0
        %v6481 = vadd.f32 0.0, %v6480
        %v6482 = vpop.f32.mrf.mxu0
        %6483 = vmatprep.mubr.f32.mxu0 0.0
        %6484 = vmatmul.mubr.f32.gmra.mxu0 %v6360
        %v6485 = vpop.f32.mrf.mxu0
        %v6486 = vadd.f32 0.0, %v6485
        %v6487 = vpop.f32.mrf.mxu0
        %6488 = vmatprep.mubr.f32.mxu0 0.0
        %6489 = vmatmul.mubr.f32.gmra.mxu0 %v6363
        %v6490 = vpop.f32.mrf.mxu0
        %v6491 = vadd.f32 0.0, %v6490
        %v6492 = vpop.f32.mrf.mxu0
        %6493 = vmatprep.mubr.f32.mxu0 0.0
        %6494 = vmatmul.mubr.f32.gmra.mxu0 %v6366
        %v6495 = vpop.f32.mrf.mxu0
        %v6496 = vadd.f32 0.0, %v6495
        %v6497 = vpop.f32.mrf.mxu0
        %6498 = vmatprep.mubr.f32.mxu0 0.0
        %6499 = vmatmul.mubr.f32.gmra.mxu0 %v6369
        %v6500 = vpop.f32.mrf.mxu0
        %v6501 = vadd.f32 0.0, %v6500
        %v6502 = vpop.f32.mrf.mxu0
        %6503 = vmatprep.mubr.f32.mxu0 0.0
        %6504 = vmatmul.mubr.f32.gmra.mxu0 %v6372
        %v6505 = vpop.f32.mrf.mxu0
        %v6506 = vadd.f32 0.0, %v6505
        %v6507 = vpop.f32.mrf.mxu0
        %6508 = vmatprep.mubr.f32.mxu0 0.0
        %6509 = vmatmul.mubr.f32.gmra.mxu0 %v6375
        %v6510 = vpop.f32.mrf.mxu0
        %v6511 = vadd.f32 0.0, %v6510
        %v6512 = vpop.f32.mrf.mxu0
        %6513 = vmatprep.mubr.f32.mxu0 0.0
        %6514 = vmatmul.mubr.f32.gmra.mxu0 %v6378
        %v6515 = vpop.f32.mrf.mxu0
        %v6516 = vadd.f32 0.0, %v6515
        %v6517 = vpop.f32.mrf.mxu0
        %6518 = vmatprep.mubr.f32.mxu0 0.0
        %6519 = vmatmul.mubr.f32.gmra.mxu0 %v6381
        %v6520 = vpop.f32.mrf.mxu0
        %v6521 = vadd.f32 0.0, %v6520
        %v6522 = vpop.f32.mrf.mxu0
        %6523 = vmatprep.mubr.f32.mxu0 0.0
        %6524 = vmatmul.mubr.f32.gmra.mxu0 %v6384
        %v6525 = vpop.f32.mrf.mxu0
        %v6526 = vadd.f32 0.0, %v6525
        %v6527 = vpop.f32.mrf.mxu0
        %6528 = vmatprep.mubr.f32.mxu0 0.0
        %6529 = vmatmul.mubr.f32.gmra.mxu0 %v6387
        %v6530 = vpop.f32.mrf.mxu0
        %v6531 = vadd.f32 0.0, %v6530
        %v6532 = vpop.f32.mrf.mxu0
        %6533 = vdwg.mxu0
        %vm6534 = vcmask 31744
        %v6536 = vsel %vm6534, %v3081, 0
        %v6539 = vsel %vm6534, %v3086, 0
        %v6542 = vsel %vm6534, %v3091, 0
        %v6545 = vsel %vm6534, %v3096, 0
        %v6548 = vsel %vm6534, %v3101, 0
        %v6551 = vsel %vm6534, %v3106, 0
        %v6554 = vsel %vm6534, %v3111, 0
        %v6557 = vsel %vm6534, %v3116, 0
        %v6560 = vsel %vm6534, %v3121, 0
        %v6563 = vsel %vm6534, %v3126, 0
        %v6566 = vsel %vm6534, %v3131, 0
        %v6569 = vsel %vm6534, %v3136, 0
        %v6572 = vsel %vm6534, %v3141, 0
        %v6575 = vsel %vm6534, %v3146, 0
        %v6578 = vsel %vm6534, %v3151, 0
        %v6581 = vsel %vm6534, %v3156, 0
        %6583 = vmatprep.subr.mxu0 0.0
        %6584 = vmatpush1.xpose.msra.mxu0 %v6581
        %6585 = vmatprep.subr.mxu0 0.0
        %6586 = vmatpush1.xpose.msra.mxu0 %v6578
        %6587 = vmatprep.subr.mxu0 0.0
        %6588 = vmatpush1.xpose.msra.mxu0 %v6575
        %6589 = vmatprep.subr.mxu0 0.0
        %6590 = vmatpush1.xpose.msra.mxu0 %v6572
        %6591 = vmatprep.subr.mxu0 0.0
        %6592 = vmatpush1.xpose.msra.mxu0 %v6569
        %6593 = vmatprep.subr.mxu0 0.0
        %6594 = vmatpush1.xpose.msra.mxu0 %v6566
        %6595 = vmatprep.subr.mxu0 0.0
        %6596 = vmatpush1.xpose.msra.mxu0 %v6563
        %6597 = vmatprep.subr.mxu0 0.0
        %6598 = vmatpush1.xpose.msra.mxu0 %v6560
        %6599 = vmatprep.subr.mxu0 0.0
        %6600 = vmatpush1.xpose.msra.mxu0 %v6557
        %6601 = vmatprep.subr.mxu0 0.0
        %6602 = vmatpush1.xpose.msra.mxu0 %v6554
        %6603 = vmatprep.subr.mxu0 0.0
        %6604 = vmatpush1.xpose.msra.mxu0 %v6551
        %6605 = vmatprep.subr.mxu0 0.0
        %6606 = vmatpush1.xpose.msra.mxu0 %v6548
        %6607 = vmatprep.subr.mxu0 0.0
        %6608 = vmatpush1.xpose.msra.mxu0 %v6545
        %6609 = vmatprep.subr.mxu0 0.0
        %6610 = vmatpush1.xpose.msra.mxu0 %v6542
        %6611 = vmatprep.subr.mxu0 0.0
        %6612 = vmatpush1.xpose.msra.mxu0 %v6539
        %6613 = vmatprep.subr.mxu0 0.0
        %6614 = vmatpush1.xpose.msra.mxu0 %v6536
        %6615 = vmatprep.subr.mxu0 0.0
        %6616 = vmatpush2.xpose.msra.mxu0 0.0
        %6617 = vmatprep.subr.mxu0 0.0
        %6618 = vmatpush2.xpose.msra.mxu0 0.0
        %6619 = vmatprep.subr.mxu0 0.0
        %6620 = vmatpush2.xpose.msra.mxu0 0.0
        %6621 = vmatprep.subr.mxu0 0.0
        %6622 = vmatpush2.xpose.msra.mxu0 0.0
        %6623 = vmatprep.subr.mxu0 0.0
        %6624 = vmatpush2.xpose.msra.mxu0 0.0
        %6625 = vmatprep.subr.mxu0 0.0
        %6626 = vmatpush2.xpose.msra.mxu0 0.0
        %6627 = vmatprep.subr.mxu0 0.0
        %6628 = vmatpush2.xpose.msra.mxu0 0.0
        %6629 = vmatprep.subr.mxu0 0.0
        %6630 = vmatpush2.xpose.msra.mxu0 0.0
        %6631 = vmatprep.subr.mxu0 0.0
        %6632 = vmatpush2.xpose.msra.mxu0 0.0
        %6633 = vmatprep.subr.mxu0 0.0
        %6634 = vmatpush2.xpose.msra.mxu0 0.0
        %6635 = vmatprep.subr.mxu0 0.0
        %6636 = vmatpush2.xpose.msra.mxu0 0.0
        %6637 = vmatprep.subr.mxu0 0.0
        %6638 = vmatpush2.xpose.msra.mxu0 0.0
        %6639 = vmatprep.subr.mxu0 0.0
        %6640 = vmatpush2.xpose.msra.mxu0 0.0
        %6641 = vmatprep.subr.mxu0 0.0
        %6642 = vmatpush2.xpose.msra.mxu0 0.0
        %6643 = vmatprep.subr.mxu0 0.0
        %6644 = vmatpush2.xpose.msra.mxu0 0.0
        %6645 = vmatprep.subr.mxu0 0.0
        %6646 = vmatpush2.xpose.msra.mxu0 0.0
        %6647 = vmatprep.mubr.f32.mxu0 0.0
        %6648 = vmatmul.mubr.f32.gmra.mxu0 %v6536
        %v6649 = vpop.f32.mrf.mxu0
        %v6650 = vadd.f32 0.0, %v6649
        %v6651 = vpop.f32.mrf.mxu0
        %6652 = vmatprep.mubr.f32.mxu0 0.0
        %6653 = vmatmul.mubr.f32.gmra.mxu0 %v6539
        %v6654 = vpop.f32.mrf.mxu0
        %v6655 = vadd.f32 0.0, %v6654
        %v6656 = vpop.f32.mrf.mxu0
        %6657 = vdwg.mxu0
        %v6659 = vsel %vm6534, %v3306, 0
        %v6662 = vsel %vm6534, %v3311, 0
        %v6665 = vsel %vm6534, %v3316, 0
        %v6668 = vsel %vm6534, %v3321, 0
        %v6671 = vsel %vm6534, %v3326, 0
        %v6674 = vsel %vm6534, %v3331, 0
        %v6677 = vsel %vm6534, %v3336, 0
        %v6680 = vsel %vm6534, %v3341, 0
        %v6683 = vsel %vm6534, %v3346, 0
        %v6686 = vsel %vm6534, %v3351, 0
        %v6689 = vsel %vm6534, %v3356, 0
        %v6692 = vsel %vm6534, %v3361, 0
        %v6695 = vsel %vm6534, %v3366, 0
        %v6698 = vsel %vm6534, %v3371, 0
        %v6701 = vsel %vm6534, %v3376, 0
        %v6704 = vsel %vm6534, %v3381, 0
        %6706 = vmatprep.subr.mxu0 0.0
        %6707 = vmatpush1.xpose.msra.mxu0 %v6704
        %6708 = vmatprep.subr.mxu0 0.0
        %6709 = vmatpush1.xpose.msra.mxu0 %v6701
        %6710 = vmatprep.subr.mxu0 0.0
        %6711 = vmatpush1.xpose.msra.mxu0 %v6698
        %6712 = vmatprep.subr.mxu0 0.0
        %6713 = vmatpush1.xpose.msra.mxu0 %v6695
        %6714 = vmatprep.subr.mxu0 0.0
        %6715 = vmatpush1.xpose.msra.mxu0 %v6692
        %6716 = vmatprep.subr.mxu0 0.0
        %6717 = vmatpush1.xpose.msra.mxu0 %v6689
        %6718 = vmatprep.subr.mxu0 0.0
        %6719 = vmatpush1.xpose.msra.mxu0 %v6686
        %6720 = vmatprep.subr.mxu0 0.0
        %6721 = vmatpush1.xpose.msra.mxu0 %v6683
        %6722 = vmatprep.subr.mxu0 0.0
        %6723 = vmatpush1.xpose.msra.mxu0 %v6680
        %6724 = vmatprep.subr.mxu0 0.0
        %6725 = vmatpush1.xpose.msra.mxu0 %v6677
        %6726 = vmatprep.subr.mxu0 0.0
        %6727 = vmatpush1.xpose.msra.mxu0 %v6674
        %6728 = vmatprep.subr.mxu0 0.0
        %6729 = vmatpush1.xpose.msra.mxu0 %v6671
        %6730 = vmatprep.subr.mxu0 0.0
        %6731 = vmatpush1.xpose.msra.mxu0 %v6668
        %6732 = vmatprep.subr.mxu0 0.0
        %6733 = vmatpush1.xpose.msra.mxu0 %v6665
        %6734 = vmatprep.subr.mxu0 0.0
        %6735 = vmatpush1.xpose.msra.mxu0 %v6662
        %6736 = vmatprep.subr.mxu0 0.0
        %6737 = vmatpush1.xpose.msra.mxu0 %v6659
        %6738 = vmatprep.subr.mxu0 0.0
        %6739 = vmatpush2.xpose.msra.mxu0 0.0
        %6740 = vmatprep.subr.mxu0 0.0
        %6741 = vmatpush2.xpose.msra.mxu0 0.0
        %6742 = vmatprep.subr.mxu0 0.0
        %6743 = vmatpush2.xpose.msra.mxu0 0.0
        %6744 = vmatprep.subr.mxu0 0.0
        %6745 = vmatpush2.xpose.msra.mxu0 0.0
        %6746 = vmatprep.subr.mxu0 0.0
        %6747 = vmatpush2.xpose.msra.mxu0 0.0
        %6748 = vmatprep.subr.mxu0 0.0
        %6749 = vmatpush2.xpose.msra.mxu0 0.0
        %6750 = vmatprep.subr.mxu0 0.0
        %6751 = vmatpush2.xpose.msra.mxu0 0.0
        %6752 = vmatprep.subr.mxu0 0.0
        %6753 = vmatpush2.xpose.msra.mxu0 0.0
        %6754 = vmatprep.subr.mxu0 0.0
        %6755 = vmatpush2.xpose.msra.mxu0 0.0
        %6756 = vmatprep.subr.mxu0 0.0
        %6757 = vmatpush2.xpose.msra.mxu0 0.0
        %6758 = vmatprep.subr.mxu0 0.0
        %6759 = vmatpush2.xpose.msra.mxu0 0.0
        %6760 = vmatprep.subr.mxu0 0.0
        %6761 = vmatpush2.xpose.msra.mxu0 0.0
        %6762 = vmatprep.subr.mxu0 0.0
        %6763 = vmatpush2.xpose.msra.mxu0 0.0
        %6764 = vmatprep.subr.mxu0 0.0
        %6765 = vmatpush2.xpose.msra.mxu0 0.0
        %6766 = vmatprep.subr.mxu0 0.0
        %6767 = vmatpush2.xpose.msra.mxu0 0.0
        %6768 = vmatprep.subr.mxu0 0.0
        %6769 = vmatpush2.xpose.msra.mxu0 0.0
        %6770 = vmatprep.mubr.f32.mxu0 0.0
        %6771 = vmatmul.mubr.f32.gmra.mxu0 %v6659
        %v6772 = vpop.f32.mrf.mxu0
        %v6773 = vadd.f32 0.0, %v6772
        %v6774 = vpop.f32.mrf.mxu0
        %6775 = vmatprep.mubr.f32.mxu0 0.0
        %6776 = vmatmul.mubr.f32.gmra.mxu0 %v6662
        %v6777 = vpop.f32.mrf.mxu0
        %v6778 = vadd.f32 0.0, %v6777
        %v6779 = vpop.f32.mrf.mxu0
        %6780 = vdwg.mxu0
        %v6782 = vsel %vm6534, %v3531, 0
        %v6785 = vsel %vm6534, %v3536, 0
        %v6788 = vsel %vm6534, %v3541, 0
        %v6791 = vsel %vm6534, %v3546, 0
        %v6794 = vsel %vm6534, %v3551, 0
        %v6797 = vsel %vm6534, %v3556, 0
        %v6800 = vsel %vm6534, %v3561, 0
        %v6803 = vsel %vm6534, %v3566, 0
        %v6806 = vsel %vm6534, %v3571, 0
        %v6809 = vsel %vm6534, %v3576, 0
        %v6812 = vsel %vm6534, %v3581, 0
        %v6815 = vsel %vm6534, %v3586, 0
        %v6818 = vsel %vm6534, %v3591, 0
        %v6821 = vsel %vm6534, %v3596, 0
        %v6824 = vsel %vm6534, %v3601, 0
        %v6827 = vsel %vm6534, %v3606, 0
        %6829 = vmatprep.subr.mxu0 0.0
        %6830 = vmatpush1.xpose.msra.mxu0 %v6827
        %6831 = vmatprep.subr.mxu0 0.0
        %6832 = vmatpush1.xpose.msra.mxu0 %v6824
        %6833 = vmatprep.subr.mxu0 0.0
        %6834 = vmatpush1.xpose.msra.mxu0 %v6821
        %6835 = vmatprep.subr.mxu0 0.0
        %6836 = vmatpush1.xpose.msra.mxu0 %v6818
        %6837 = vmatprep.subr.mxu0 0.0
        %6838 = vmatpush1.xpose.msra.mxu0 %v6815
        %6839 = vmatprep.subr.mxu0 0.0
        %6840 = vmatpush1.xpose.msra.mxu0 %v6812
        %6841 = vmatprep.subr.mxu0 0.0
        %6842 = vmatpush1.xpose.msra.mxu0 %v6809
        %6843 = vmatprep.subr.mxu0 0.0
        %6844 = vmatpush1.xpose.msra.mxu0 %v6806
        %6845 = vmatprep.subr.mxu0 0.0
        %6846 = vmatpush1.xpose.msra.mxu0 %v6803
        %6847 = vmatprep.subr.mxu0 0.0
        %6848 = vmatpush1.xpose.msra.mxu0 %v6800
        %6849 = vmatprep.subr.mxu0 0.0
        %6850 = vmatpush1.xpose.msra.mxu0 %v6797
        %6851 = vmatprep.subr.mxu0 0.0
        %6852 = vmatpush1.xpose.msra.mxu0 %v6794
        %6853 = vmatprep.subr.mxu0 0.0
        %6854 = vmatpush1.xpose.msra.mxu0 %v6791
        %6855 = vmatprep.subr.mxu0 0.0
        %6856 = vmatpush1.xpose.msra.mxu0 %v6788
        %6857 = vmatprep.subr.mxu0 0.0
        %6858 = vmatpush1.xpose.msra.mxu0 %v6785
        %6859 = vmatprep.subr.mxu0 0.0
        %6860 = vmatpush1.xpose.msra.mxu0 %v6782
        %6861 = vmatprep.subr.mxu0 0.0
        %6862 = vmatpush2.xpose.msra.mxu0 0.0
        %6863 = vmatprep.subr.mxu0 0.0
        %6864 = vmatpush2.xpose.msra.mxu0 0.0
        %6865 = vmatprep.subr.mxu0 0.0
        %6866 = vmatpush2.xpose.msra.mxu0 0.0
        %6867 = vmatprep.subr.mxu0 0.0
        %6868 = vmatpush2.xpose.msra.mxu0 0.0
        %6869 = vmatprep.subr.mxu0 0.0
        %6870 = vmatpush2.xpose.msra.mxu0 0.0
        %6871 = vmatprep.subr.mxu0 0.0
        %6872 = vmatpush2.xpose.msra.mxu0 0.0
        %6873 = vmatprep.subr.mxu0 0.0
        %6874 = vmatpush2.xpose.msra.mxu0 0.0
        %6875 = vmatprep.subr.mxu0 0.0
        %6876 = vmatpush2.xpose.msra.mxu0 0.0
        %6877 = vmatprep.subr.mxu0 0.0
        %6878 = vmatpush2.xpose.msra.mxu0 0.0
        %6879 = vmatprep.subr.mxu0 0.0
        %6880 = vmatpush2.xpose.msra.mxu0 0.0
        %6881 = vmatprep.subr.mxu0 0.0
        %6882 = vmatpush2.xpose.msra.mxu0 0.0
        %6883 = vmatprep.subr.mxu0 0.0
        %6884 = vmatpush2.xpose.msra.mxu0 0.0
        %6885 = vmatprep.subr.mxu0 0.0
        %6886 = vmatpush2.xpose.msra.mxu0 0.0
        %6887 = vmatprep.subr.mxu0 0.0
        %6888 = vmatpush2.xpose.msra.mxu0 0.0
        %6889 = vmatprep.subr.mxu0 0.0
        %6890 = vmatpush2.xpose.msra.mxu0 0.0
        %6891 = vmatprep.subr.mxu0 0.0
        %6892 = vmatpush2.xpose.msra.mxu0 0.0
        %6893 = vmatprep.mubr.f32.mxu0 0.0
        %6894 = vmatmul.mubr.f32.gmra.mxu0 %v6782
        %v6895 = vpop.f32.mrf.mxu0
        %v6896 = vadd.f32 0.0, %v6895
        %v6897 = vpop.f32.mrf.mxu0
        %6898 = vmatprep.mubr.f32.mxu0 0.0
        %6899 = vmatmul.mubr.f32.gmra.mxu0 %v6785
        %v6900 = vpop.f32.mrf.mxu0
        %v6901 = vadd.f32 0.0, %v6900
        %v6902 = vpop.f32.mrf.mxu0
        %6903 = vdwg.mxu0
        %v6905 = vsel %vm6534, %v3756, 0
        %v6908 = vsel %vm6534, %v3761, 0
        %v6911 = vsel %vm6534, %v3766, 0
        %v6914 = vsel %vm6534, %v3771, 0
        %v6917 = vsel %vm6534, %v3776, 0
        %v6920 = vsel %vm6534, %v3781, 0
        %v6923 = vsel %vm6534, %v3786, 0
        %v6926 = vsel %vm6534, %v3791, 0
        %v6929 = vsel %vm6534, %v3796, 0
        %v6932 = vsel %vm6534, %v3801, 0
        %v6935 = vsel %vm6534, %v3806, 0
        %v6938 = vsel %vm6534, %v3811, 0
        %v6941 = vsel %vm6534, %v3816, 0
        %v6944 = vsel %vm6534, %v3821, 0
        %v6947 = vsel %vm6534, %v3826, 0
        %v6950 = vsel %vm6534, %v3831, 0
        %6952 = vmatprep.subr.mxu0 0.0
        %6953 = vmatpush1.xpose.msra.mxu0 %v6950
        %6954 = vmatprep.subr.mxu0 0.0
        %6955 = vmatpush1.xpose.msra.mxu0 %v6947
        %6956 = vmatprep.subr.mxu0 0.0
        %6957 = vmatpush1.xpose.msra.mxu0 %v6944
        %6958 = vmatprep.subr.mxu0 0.0
        %6959 = vmatpush1.xpose.msra.mxu0 %v6941
        %6960 = vmatprep.subr.mxu0 0.0
        %6961 = vmatpush1.xpose.msra.mxu0 %v6938
        %6962 = vmatprep.subr.mxu0 0.0
        %6963 = vmatpush1.xpose.msra.mxu0 %v6935
        %6964 = vmatprep.subr.mxu0 0.0
        %6965 = vmatpush1.xpose.msra.mxu0 %v6932
        %6966 = vmatprep.subr.mxu0 0.0
        %6967 = vmatpush1.xpose.msra.mxu0 %v6929
        %6968 = vmatprep.subr.mxu0 0.0
        %6969 = vmatpush1.xpose.msra.mxu0 %v6926
        %6970 = vmatprep.subr.mxu0 0.0
        %6971 = vmatpush1.xpose.msra.mxu0 %v6923
        %6972 = vmatprep.subr.mxu0 0.0
        %6973 = vmatpush1.xpose.msra.mxu0 %v6920
        %6974 = vmatprep.subr.mxu0 0.0
        %6975 = vmatpush1.xpose.msra.mxu0 %v6917
        %6976 = vmatprep.subr.mxu0 0.0
        %6977 = vmatpush1.xpose.msra.mxu0 %v6914
        %6978 = vmatprep.subr.mxu0 0.0
        %6979 = vmatpush1.xpose.msra.mxu0 %v6911
        %6980 = vmatprep.subr.mxu0 0.0
        %6981 = vmatpush1.xpose.msra.mxu0 %v6908
        %6982 = vmatprep.subr.mxu0 0.0
        %6983 = vmatpush1.xpose.msra.mxu0 %v6905
        %6984 = vmatprep.subr.mxu0 0.0
        %6985 = vmatpush2.xpose.msra.mxu0 0.0
        %6986 = vmatprep.subr.mxu0 0.0
        %6987 = vmatpush2.xpose.msra.mxu0 0.0
        %6988 = vmatprep.subr.mxu0 0.0
        %6989 = vmatpush2.xpose.msra.mxu0 0.0
        %6990 = vmatprep.subr.mxu0 0.0
        %6991 = vmatpush2.xpose.msra.mxu0 0.0
        %6992 = vmatprep.subr.mxu0 0.0
        %6993 = vmatpush2.xpose.msra.mxu0 0.0
        %6994 = vmatprep.subr.mxu0 0.0
        %6995 = vmatpush2.xpose.msra.mxu0 0.0
        %6996 = vmatprep.subr.mxu0 0.0
        %6997 = vmatpush2.xpose.msra.mxu0 0.0
        %6998 = vmatprep.subr.mxu0 0.0
        %6999 = vmatpush2.xpose.msra.mxu0 0.0
        %7000 = vmatprep.subr.mxu0 0.0
        %7001 = vmatpush2.xpose.msra.mxu0 0.0
        %7002 = vmatprep.subr.mxu0 0.0
        %7003 = vmatpush2.xpose.msra.mxu0 0.0
        %7004 = vmatprep.subr.mxu0 0.0
        %7005 = vmatpush2.xpose.msra.mxu0 0.0
        %7006 = vmatprep.subr.mxu0 0.0
        %7007 = vmatpush2.xpose.msra.mxu0 0.0
        %7008 = vmatprep.subr.mxu0 0.0
        %7009 = vmatpush2.xpose.msra.mxu0 0.0
        %7010 = vmatprep.subr.mxu0 0.0
        %7011 = vmatpush2.xpose.msra.mxu0 0.0
        %7012 = vmatprep.subr.mxu0 0.0
        %7013 = vmatpush2.xpose.msra.mxu0 0.0
        %7014 = vmatprep.subr.mxu0 0.0
        %7015 = vmatpush2.xpose.msra.mxu0 0.0
        %7016 = vmatprep.mubr.f32.mxu0 0.0
        %7017 = vmatmul.mubr.f32.gmra.mxu0 %v6905
        %v7018 = vpop.f32.mrf.mxu0
        %v7019 = vadd.f32 0.0, %v7018
        %v7020 = vpop.f32.mrf.mxu0
        %7021 = vmatprep.mubr.f32.mxu0 0.0
        %7022 = vmatmul.mubr.f32.gmra.mxu0 %v6908
        %v7023 = vpop.f32.mrf.mxu0
        %v7024 = vadd.f32 0.0, %v7023
        %v7025 = vpop.f32.mrf.mxu0
        %7026 = vdwg.mxu0
        %v7028 = vsel %vm6534, %v3981, 0
        %v7031 = vsel %vm6534, %v3986, 0
        %v7034 = vsel %vm6534, %v3991, 0
        %v7037 = vsel %vm6534, %v3996, 0
        %v7040 = vsel %vm6534, %v4001, 0
        %v7043 = vsel %vm6534, %v4006, 0
        %v7046 = vsel %vm6534, %v4011, 0
        %v7049 = vsel %vm6534, %v4016, 0
        %v7052 = vsel %vm6534, %v4021, 0
        %v7055 = vsel %vm6534, %v4026, 0
        %v7058 = vsel %vm6534, %v4031, 0
        %v7061 = vsel %vm6534, %v4036, 0
        %v7064 = vsel %vm6534, %v4041, 0
        %v7067 = vsel %vm6534, %v4046, 0
        %v7070 = vsel %vm6534, %v4051, 0
        %v7073 = vsel %vm6534, %v4056, 0
        %7075 = vmatprep.subr.mxu0 0.0
        %7076 = vmatpush1.xpose.msra.mxu0 %v7073
        %7077 = vmatprep.subr.mxu0 0.0
        %7078 = vmatpush1.xpose.msra.mxu0 %v7070
        %7079 = vmatprep.subr.mxu0 0.0
        %7080 = vmatpush1.xpose.msra.mxu0 %v7067
        %7081 = vmatprep.subr.mxu0 0.0
        %7082 = vmatpush1.xpose.msra.mxu0 %v7064
        %7083 = vmatprep.subr.mxu0 0.0
        %7084 = vmatpush1.xpose.msra.mxu0 %v7061
        %7085 = vmatprep.subr.mxu0 0.0
        %7086 = vmatpush1.xpose.msra.mxu0 %v7058
        %7087 = vmatprep.subr.mxu0 0.0
        %7088 = vmatpush1.xpose.msra.mxu0 %v7055
        %7089 = vmatprep.subr.mxu0 0.0
        %7090 = vmatpush1.xpose.msra.mxu0 %v7052
        %7091 = vmatprep.subr.mxu0 0.0
        %7092 = vmatpush1.xpose.msra.mxu0 %v7049
        %7093 = vmatprep.subr.mxu0 0.0
        %7094 = vmatpush1.xpose.msra.mxu0 %v7046
        %7095 = vmatprep.subr.mxu0 0.0
        %7096 = vmatpush1.xpose.msra.mxu0 %v7043
        %7097 = vmatprep.subr.mxu0 0.0
        %7098 = vmatpush1.xpose.msra.mxu0 %v7040
        %7099 = vmatprep.subr.mxu0 0.0
        %7100 = vmatpush1.xpose.msra.mxu0 %v7037
        %7101 = vmatprep.subr.mxu0 0.0
        %7102 = vmatpush1.xpose.msra.mxu0 %v7034
        %7103 = vmatprep.subr.mxu0 0.0
        %7104 = vmatpush1.xpose.msra.mxu0 %v7031
        %7105 = vmatprep.subr.mxu0 0.0
        %7106 = vmatpush1.xpose.msra.mxu0 %v7028
        %7107 = vmatprep.subr.mxu0 0.0
        %7108 = vmatpush2.xpose.msra.mxu0 0.0
        %7109 = vmatprep.subr.mxu0 0.0
        %7110 = vmatpush2.xpose.msra.mxu0 0.0
        %7111 = vmatprep.subr.mxu0 0.0
        %7112 = vmatpush2.xpose.msra.mxu0 0.0
        %7113 = vmatprep.subr.mxu0 0.0
        %7114 = vmatpush2.xpose.msra.mxu0 0.0
        %7115 = vmatprep.subr.mxu0 0.0
        %7116 = vmatpush2.xpose.msra.mxu0 0.0
        %7117 = vmatprep.subr.mxu0 0.0
        %7118 = vmatpush2.xpose.msra.mxu0 0.0
        %7119 = vmatprep.subr.mxu0 0.0
        %7120 = vmatpush2.xpose.msra.mxu0 0.0
        %7121 = vmatprep.subr.mxu0 0.0
        %7122 = vmatpush2.xpose.msra.mxu0 0.0
        %7123 = vmatprep.subr.mxu0 0.0
        %7124 = vmatpush2.xpose.msra.mxu0 0.0
        %7125 = vmatprep.subr.mxu0 0.0
        %7126 = vmatpush2.xpose.msra.mxu0 0.0
        %7127 = vmatprep.subr.mxu0 0.0
        %7128 = vmatpush2.xpose.msra.mxu0 0.0
        %7129 = vmatprep.subr.mxu0 0.0
        %7130 = vmatpush2.xpose.msra.mxu0 0.0
        %7131 = vmatprep.subr.mxu0 0.0
        %7132 = vmatpush2.xpose.msra.mxu0 0.0
        %7133 = vmatprep.subr.mxu0 0.0
        %7134 = vmatpush2.xpose.msra.mxu0 0.0
        %7135 = vmatprep.subr.mxu0 0.0
        %7136 = vmatpush2.xpose.msra.mxu0 0.0
        %7137 = vmatprep.subr.mxu0 0.0
        %7138 = vmatpush2.xpose.msra.mxu0 0.0
        %7139 = vmatprep.mubr.f32.mxu0 0.0
        %7140 = vmatmul.mubr.f32.gmra.mxu0 %v7028
        %v7141 = vpop.f32.mrf.mxu0
        %v7142 = vadd.f32 0.0, %v7141
        %v7143 = vpop.f32.mrf.mxu0
        %7144 = vmatprep.mubr.f32.mxu0 0.0
        %7145 = vmatmul.mubr.f32.gmra.mxu0 %v7031
        %v7146 = vpop.f32.mrf.mxu0
        %v7147 = vadd.f32 0.0, %v7146
        %v7148 = vpop.f32.mrf.mxu0
        %7149 = vdwg.mxu0
        %v7151 = vsel %vm6534, %v4206, 0
        %v7154 = vsel %vm6534, %v4211, 0
        %v7157 = vsel %vm6534, %v4216, 0
        %v7160 = vsel %vm6534, %v4221, 0
        %v7163 = vsel %vm6534, %v4226, 0
        %v7166 = vsel %vm6534, %v4231, 0
        %v7169 = vsel %vm6534, %v4236, 0
        %v7172 = vsel %vm6534, %v4241, 0
        %v7175 = vsel %vm6534, %v4246, 0
        %v7178 = vsel %vm6534, %v4251, 0
        %v7181 = vsel %vm6534, %v4256, 0
        %v7184 = vsel %vm6534, %v4261, 0
        %v7187 = vsel %vm6534, %v4266, 0
        %v7190 = vsel %vm6534, %v4271, 0
        %v7193 = vsel %vm6534, %v4276, 0
        %v7196 = vsel %vm6534, %v4281, 0
        %7198 = vmatprep.subr.mxu0 0.0
        %7199 = vmatpush1.xpose.msra.mxu0 %v7196
        %7200 = vmatprep.subr.mxu0 0.0
        %7201 = vmatpush1.xpose.msra.mxu0 %v7193
        %7202 = vmatprep.subr.mxu0 0.0
        %7203 = vmatpush1.xpose.msra.mxu0 %v7190
        %7204 = vmatprep.subr.mxu0 0.0
        %7205 = vmatpush1.xpose.msra.mxu0 %v7187
        %7206 = vmatprep.subr.mxu0 0.0
        %7207 = vmatpush1.xpose.msra.mxu0 %v7184
        %7208 = vmatprep.subr.mxu0 0.0
        %7209 = vmatpush1.xpose.msra.mxu0 %v7181
        %7210 = vmatprep.subr.mxu0 0.0
        %7211 = vmatpush1.xpose.msra.mxu0 %v7178
        %7212 = vmatprep.subr.mxu0 0.0
        %7213 = vmatpush1.xpose.msra.mxu0 %v7175
        %7214 = vmatprep.subr.mxu0 0.0
        %7215 = vmatpush1.xpose.msra.mxu0 %v7172
        %7216 = vmatprep.subr.mxu0 0.0
        %7217 = vmatpush1.xpose.msra.mxu0 %v7169
        %7218 = vmatprep.subr.mxu0 0.0
        %7219 = vmatpush1.xpose.msra.mxu0 %v7166
        %7220 = vmatprep.subr.mxu0 0.0
        %7221 = vmatpush1.xpose.msra.mxu0 %v7163
        %7222 = vmatprep.subr.mxu0 0.0
        %7223 = vmatpush1.xpose.msra.mxu0 %v7160
        %7224 = vmatprep.subr.mxu0 0.0
        %7225 = vmatpush1.xpose.msra.mxu0 %v7157
        %7226 = vmatprep.subr.mxu0 0.0
        %7227 = vmatpush1.xpose.msra.mxu0 %v7154
        %7228 = vmatprep.subr.mxu0 0.0
        %7229 = vmatpush1.xpose.msra.mxu0 %v7151
        %7230 = vmatprep.subr.mxu0 0.0
        %7231 = vmatpush2.xpose.msra.mxu0 0.0
        %7232 = vmatprep.subr.mxu0 0.0
        %7233 = vmatpush2.xpose.msra.mxu0 0.0
        %7234 = vmatprep.subr.mxu0 0.0
        %7235 = vmatpush2.xpose.msra.mxu0 0.0
        %7236 = vmatprep.subr.mxu0 0.0
        %7237 = vmatpush2.xpose.msra.mxu0 0.0
        %7238 = vmatprep.subr.mxu0 0.0
        %7239 = vmatpush2.xpose.msra.mxu0 0.0
        %7240 = vmatprep.subr.mxu0 0.0
        %7241 = vmatpush2.xpose.msra.mxu0 0.0
        %7242 = vmatprep.subr.mxu0 0.0
        %7243 = vmatpush2.xpose.msra.mxu0 0.0
        %7244 = vmatprep.subr.mxu0 0.0
        %7245 = vmatpush2.xpose.msra.mxu0 0.0
        %7246 = vmatprep.subr.mxu0 0.0
        %7247 = vmatpush2.xpose.msra.mxu0 0.0
        %7248 = vmatprep.subr.mxu0 0.0
        %7249 = vmatpush2.xpose.msra.mxu0 0.0
        %7250 = vmatprep.subr.mxu0 0.0
        %7251 = vmatpush2.xpose.msra.mxu0 0.0
        %7252 = vmatprep.subr.mxu0 0.0
        %7253 = vmatpush2.xpose.msra.mxu0 0.0
        %7254 = vmatprep.subr.mxu0 0.0
        %7255 = vmatpush2.xpose.msra.mxu0 0.0
        %7256 = vmatprep.subr.mxu0 0.0
        %7257 = vmatpush2.xpose.msra.mxu0 0.0
        %7258 = vmatprep.subr.mxu0 0.0
        %7259 = vmatpush2.xpose.msra.mxu0 0.0
        %7260 = vmatprep.subr.mxu0 0.0
        %7261 = vmatpush2.xpose.msra.mxu0 0.0
        %7262 = vmatprep.mubr.f32.mxu0 0.0
        %7263 = vmatmul.mubr.f32.gmra.mxu0 %v7151
        %v7264 = vpop.f32.mrf.mxu0
        %v7265 = vadd.f32 0.0, %v7264
        %v7266 = vpop.f32.mrf.mxu0
        %7267 = vmatprep.mubr.f32.mxu0 0.0
        %7268 = vmatmul.mubr.f32.gmra.mxu0 %v7154
        %v7269 = vpop.f32.mrf.mxu0
        %v7270 = vadd.f32 0.0, %v7269
        %v7271 = vpop.f32.mrf.mxu0
        %7272 = vdwg.mxu0
        %v7274 = vsel %vm6534, %v4431, 0
        %v7277 = vsel %vm6534, %v4436, 0
        %v7280 = vsel %vm6534, %v4441, 0
        %v7283 = vsel %vm6534, %v4446, 0
        %v7286 = vsel %vm6534, %v4451, 0
        %v7289 = vsel %vm6534, %v4456, 0
        %v7292 = vsel %vm6534, %v4461, 0
        %v7295 = vsel %vm6534, %v4466, 0
        %v7298 = vsel %vm6534, %v4471, 0
        %v7301 = vsel %vm6534, %v4476, 0
        %v7304 = vsel %vm6534, %v4481, 0
        %v7307 = vsel %vm6534, %v4486, 0
        %v7310 = vsel %vm6534, %v4491, 0
        %v7313 = vsel %vm6534, %v4496, 0
        %v7316 = vsel %vm6534, %v4501, 0
        %v7319 = vsel %vm6534, %v4506, 0
        %7321 = vmatprep.subr.mxu0 0.0
        %7322 = vmatpush1.xpose.msra.mxu0 %v7319
        %7323 = vmatprep.subr.mxu0 0.0
        %7324 = vmatpush1.xpose.msra.mxu0 %v7316
        %7325 = vmatprep.subr.mxu0 0.0
        %7326 = vmatpush1.xpose.msra.mxu0 %v7313
        %7327 = vmatprep.subr.mxu0 0.0
        %7328 = vmatpush1.xpose.msra.mxu0 %v7310
        %7329 = vmatprep.subr.mxu0 0.0
        %7330 = vmatpush1.xpose.msra.mxu0 %v7307
        %7331 = vmatprep.subr.mxu0 0.0
        %7332 = vmatpush1.xpose.msra.mxu0 %v7304
        %7333 = vmatprep.subr.mxu0 0.0
        %7334 = vmatpush1.xpose.msra.mxu0 %v7301
        %7335 = vmatprep.subr.mxu0 0.0
        %7336 = vmatpush1.xpose.msra.mxu0 %v7298
        %7337 = vmatprep.subr.mxu0 0.0
        %7338 = vmatpush1.xpose.msra.mxu0 %v7295
        %7339 = vmatprep.subr.mxu0 0.0
        %7340 = vmatpush1.xpose.msra.mxu0 %v7292
        %7341 = vmatprep.subr.mxu0 0.0
        %7342 = vmatpush1.xpose.msra.mxu0 %v7289
        %7343 = vmatprep.subr.mxu0 0.0
        %7344 = vmatpush1.xpose.msra.mxu0 %v7286
        %7345 = vmatprep.subr.mxu0 0.0
        %7346 = vmatpush1.xpose.msra.mxu0 %v7283
        %7347 = vmatprep.subr.mxu0 0.0
        %7348 = vmatpush1.xpose.msra.mxu0 %v7280
        %7349 = vmatprep.subr.mxu0 0.0
        %7350 = vmatpush1.xpose.msra.mxu0 %v7277
        %7351 = vmatprep.subr.mxu0 0.0
        %7352 = vmatpush1.xpose.msra.mxu0 %v7274
        %7353 = vmatprep.subr.mxu0 0.0
        %7354 = vmatpush2.xpose.msra.mxu0 0.0
        %7355 = vmatprep.subr.mxu0 0.0
        %7356 = vmatpush2.xpose.msra.mxu0 0.0
        %7357 = vmatprep.subr.mxu0 0.0
        %7358 = vmatpush2.xpose.msra.mxu0 0.0
        %7359 = vmatprep.subr.mxu0 0.0
        %7360 = vmatpush2.xpose.msra.mxu0 0.0
        %7361 = vmatprep.subr.mxu0 0.0
        %7362 = vmatpush2.xpose.msra.mxu0 0.0
        %7363 = vmatprep.subr.mxu0 0.0
        %7364 = vmatpush2.xpose.msra.mxu0 0.0
        %7365 = vmatprep.subr.mxu0 0.0
        %7366 = vmatpush2.xpose.msra.mxu0 0.0
        %7367 = vmatprep.subr.mxu0 0.0
        %7368 = vmatpush2.xpose.msra.mxu0 0.0
        %7369 = vmatprep.subr.mxu0 0.0
        %7370 = vmatpush2.xpose.msra.mxu0 0.0
        %7371 = vmatprep.subr.mxu0 0.0
        %7372 = vmatpush2.xpose.msra.mxu0 0.0
        %7373 = vmatprep.subr.mxu0 0.0
        %7374 = vmatpush2.xpose.msra.mxu0 0.0
        %7375 = vmatprep.subr.mxu0 0.0
        %7376 = vmatpush2.xpose.msra.mxu0 0.0
        %7377 = vmatprep.subr.mxu0 0.0
        %7378 = vmatpush2.xpose.msra.mxu0 0.0
        %7379 = vmatprep.subr.mxu0 0.0
        %7380 = vmatpush2.xpose.msra.mxu0 0.0
        %7381 = vmatprep.subr.mxu0 0.0
        %7382 = vmatpush2.xpose.msra.mxu0 0.0
        %7383 = vmatprep.subr.mxu0 0.0
        %7384 = vmatpush2.xpose.msra.mxu0 0.0
        %7385 = vmatprep.mubr.f32.mxu0 0.0
        %7386 = vmatmul.mubr.f32.gmra.mxu0 %v7274
        %v7387 = vpop.f32.mrf.mxu0
        %v7388 = vadd.f32 0.0, %v7387
        %v7389 = vpop.f32.mrf.mxu0
        %7390 = vmatprep.mubr.f32.mxu0 0.0
        %7391 = vmatmul.mubr.f32.gmra.mxu0 %v7277
        %v7392 = vpop.f32.mrf.mxu0
        %v7393 = vadd.f32 0.0, %v7392
        %v7394 = vpop.f32.mrf.mxu0
        %7395 = vdwg.mxu0
        %v7397 = vsel %vm6534, %v4656, 0
        %v7400 = vsel %vm6534, %v4661, 0
        %v7403 = vsel %vm6534, %v4666, 0
        %v7406 = vsel %vm6534, %v4671, 0
        %v7409 = vsel %vm6534, %v4676, 0
        %v7412 = vsel %vm6534, %v4681, 0
        %v7415 = vsel %vm6534, %v4686, 0
        %v7418 = vsel %vm6534, %v4691, 0
        %v7421 = vsel %vm6534, %v4696, 0
        %v7424 = vsel %vm6534, %v4701, 0
        %v7427 = vsel %vm6534, %v4706, 0
        %v7430 = vsel %vm6534, %v4711, 0
        %v7433 = vsel %vm6534, %v4716, 0
        %v7436 = vsel %vm6534, %v4721, 0
        %v7439 = vsel %vm6534, %v4726, 0
        %v7442 = vsel %vm6534, %v4731, 0
        %7444 = vmatprep.subr.mxu0 0.0
        %7445 = vmatpush1.xpose.msra.mxu0 %v7442
        %7446 = vmatprep.subr.mxu0 0.0
        %7447 = vmatpush1.xpose.msra.mxu0 %v7439
        %7448 = vmatprep.subr.mxu0 0.0
        %7449 = vmatpush1.xpose.msra.mxu0 %v7436
        %7450 = vmatprep.subr.mxu0 0.0
        %7451 = vmatpush1.xpose.msra.mxu0 %v7433
        %7452 = vmatprep.subr.mxu0 0.0
        %7453 = vmatpush1.xpose.msra.mxu0 %v7430
        %7454 = vmatprep.subr.mxu0 0.0
        %7455 = vmatpush1.xpose.msra.mxu0 %v7427
        %7456 = vmatprep.subr.mxu0 0.0
        %7457 = vmatpush1.xpose.msra.mxu0 %v7424
        %7458 = vmatprep.subr.mxu0 0.0
        %7459 = vmatpush1.xpose.msra.mxu0 %v7421
        %7460 = vmatprep.subr.mxu0 0.0
        %7461 = vmatpush1.xpose.msra.mxu0 %v7418
        %7462 = vmatprep.subr.mxu0 0.0
        %7463 = vmatpush1.xpose.msra.mxu0 %v7415
        %7464 = vmatprep.subr.mxu0 0.0
        %7465 = vmatpush1.xpose.msra.mxu0 %v7412
        %7466 = vmatprep.subr.mxu0 0.0
        %7467 = vmatpush1.xpose.msra.mxu0 %v7409
        %7468 = vmatprep.subr.mxu0 0.0
        %7469 = vmatpush1.xpose.msra.mxu0 %v7406
        %7470 = vmatprep.subr.mxu0 0.0
        %7471 = vmatpush1.xpose.msra.mxu0 %v7403
        %7472 = vmatprep.subr.mxu0 0.0
        %7473 = vmatpush1.xpose.msra.mxu0 %v7400
        %7474 = vmatprep.subr.mxu0 0.0
        %7475 = vmatpush1.xpose.msra.mxu0 %v7397
        %7476 = vmatprep.subr.mxu0 0.0
        %7477 = vmatpush2.xpose.msra.mxu0 0.0
        %7478 = vmatprep.subr.mxu0 0.0
        %7479 = vmatpush2.xpose.msra.mxu0 0.0
        %7480 = vmatprep.subr.mxu0 0.0
        %7481 = vmatpush2.xpose.msra.mxu0 0.0
        %7482 = vmatprep.subr.mxu0 0.0
        %7483 = vmatpush2.xpose.msra.mxu0 0.0
        %7484 = vmatprep.subr.mxu0 0.0
        %7485 = vmatpush2.xpose.msra.mxu0 0.0
        %7486 = vmatprep.subr.mxu0 0.0
        %7487 = vmatpush2.xpose.msra.mxu0 0.0
        %7488 = vmatprep.subr.mxu0 0.0
        %7489 = vmatpush2.xpose.msra.mxu0 0.0
        %7490 = vmatprep.subr.mxu0 0.0
        %7491 = vmatpush2.xpose.msra.mxu0 0.0
        %7492 = vmatprep.subr.mxu0 0.0
        %7493 = vmatpush2.xpose.msra.mxu0 0.0
        %7494 = vmatprep.subr.mxu0 0.0
        %7495 = vmatpush2.xpose.msra.mxu0 0.0
        %7496 = vmatprep.subr.mxu0 0.0
        %7497 = vmatpush2.xpose.msra.mxu0 0.0
        %7498 = vmatprep.subr.mxu0 0.0
        %7499 = vmatpush2.xpose.msra.mxu0 0.0
        %7500 = vmatprep.subr.mxu0 0.0
        %7501 = vmatpush2.xpose.msra.mxu0 0.0
        %7502 = vmatprep.subr.mxu0 0.0
        %7503 = vmatpush2.xpose.msra.mxu0 0.0
        %7504 = vmatprep.subr.mxu0 0.0
        %7505 = vmatpush2.xpose.msra.mxu0 0.0
        %7506 = vmatprep.subr.mxu0 0.0
        %7507 = vmatpush2.xpose.msra.mxu0 0.0
        %7508 = vmatprep.mubr.f32.mxu0 0.0
        %7509 = vmatmul.mubr.f32.gmra.mxu0 %v7397
        %v7510 = vpop.f32.mrf.mxu0
        %v7511 = vadd.f32 0.0, %v7510
        %v7512 = vpop.f32.mrf.mxu0
        %7513 = vmatprep.mubr.f32.mxu0 0.0
        %7514 = vmatmul.mubr.f32.gmra.mxu0 %v7400
        %v7515 = vpop.f32.mrf.mxu0
        %v7516 = vadd.f32 0.0, %v7515
        %v7517 = vpop.f32.mrf.mxu0
        %7518 = vdwg.mxu0
        %v7520 = vsel %vm6534, %v4881, 0
        %v7523 = vsel %vm6534, %v4886, 0
        %v7526 = vsel %vm6534, %v4891, 0
        %v7529 = vsel %vm6534, %v4896, 0
        %v7532 = vsel %vm6534, %v4901, 0
        %v7535 = vsel %vm6534, %v4906, 0
        %v7538 = vsel %vm6534, %v4911, 0
        %v7541 = vsel %vm6534, %v4916, 0
        %v7544 = vsel %vm6534, %v4921, 0
        %v7547 = vsel %vm6534, %v4926, 0
        %v7550 = vsel %vm6534, %v4931, 0
        %v7553 = vsel %vm6534, %v4936, 0
        %v7556 = vsel %vm6534, %v4941, 0
        %v7559 = vsel %vm6534, %v4946, 0
        %v7562 = vsel %vm6534, %v4951, 0
        %v7565 = vsel %vm6534, %v4956, 0
        %7567 = vmatprep.subr.mxu0 0.0
        %7568 = vmatpush1.xpose.msra.mxu0 %v7565
        %7569 = vmatprep.subr.mxu0 0.0
        %7570 = vmatpush1.xpose.msra.mxu0 %v7562
        %7571 = vmatprep.subr.mxu0 0.0
        %7572 = vmatpush1.xpose.msra.mxu0 %v7559
        %7573 = vmatprep.subr.mxu0 0.0
        %7574 = vmatpush1.xpose.msra.mxu0 %v7556
        %7575 = vmatprep.subr.mxu0 0.0
        %7576 = vmatpush1.xpose.msra.mxu0 %v7553
        %7577 = vmatprep.subr.mxu0 0.0
        %7578 = vmatpush1.xpose.msra.mxu0 %v7550
        %7579 = vmatprep.subr.mxu0 0.0
        %7580 = vmatpush1.xpose.msra.mxu0 %v7547
        %7581 = vmatprep.subr.mxu0 0.0
        %7582 = vmatpush1.xpose.msra.mxu0 %v7544
        %7583 = vmatprep.subr.mxu0 0.0
        %7584 = vmatpush1.xpose.msra.mxu0 %v7541
        %7585 = vmatprep.subr.mxu0 0.0
        %7586 = vmatpush1.xpose.msra.mxu0 %v7538
        %7587 = vmatprep.subr.mxu0 0.0
        %7588 = vmatpush1.xpose.msra.mxu0 %v7535
        %7589 = vmatprep.subr.mxu0 0.0
        %7590 = vmatpush1.xpose.msra.mxu0 %v7532
        %7591 = vmatprep.subr.mxu0 0.0
        %7592 = vmatpush1.xpose.msra.mxu0 %v7529
        %7593 = vmatprep.subr.mxu0 0.0
        %7594 = vmatpush1.xpose.msra.mxu0 %v7526
        %7595 = vmatprep.subr.mxu0 0.0
        %7596 = vmatpush1.xpose.msra.mxu0 %v7523
        %7597 = vmatprep.subr.mxu0 0.0
        %7598 = vmatpush1.xpose.msra.mxu0 %v7520
        %7599 = vmatprep.subr.mxu0 0.0
        %7600 = vmatpush2.xpose.msra.mxu0 0.0
        %7601 = vmatprep.subr.mxu0 0.0
        %7602 = vmatpush2.xpose.msra.mxu0 0.0
        %7603 = vmatprep.subr.mxu0 0.0
        %7604 = vmatpush2.xpose.msra.mxu0 0.0
        %7605 = vmatprep.subr.mxu0 0.0
        %7606 = vmatpush2.xpose.msra.mxu0 0.0
        %7607 = vmatprep.subr.mxu0 0.0
        %7608 = vmatpush2.xpose.msra.mxu0 0.0
        %7609 = vmatprep.subr.mxu0 0.0
        %7610 = vmatpush2.xpose.msra.mxu0 0.0
        %7611 = vmatprep.subr.mxu0 0.0
        %7612 = vmatpush2.xpose.msra.mxu0 0.0
        %7613 = vmatprep.subr.mxu0 0.0
        %7614 = vmatpush2.xpose.msra.mxu0 0.0
        %7615 = vmatprep.subr.mxu0 0.0
        %7616 = vmatpush2.xpose.msra.mxu0 0.0
        %7617 = vmatprep.subr.mxu0 0.0
        %7618 = vmatpush2.xpose.msra.mxu0 0.0
        %7619 = vmatprep.subr.mxu0 0.0
        %7620 = vmatpush2.xpose.msra.mxu0 0.0
        %7621 = vmatprep.subr.mxu0 0.0
        %7622 = vmatpush2.xpose.msra.mxu0 0.0
        %7623 = vmatprep.subr.mxu0 0.0
        %7624 = vmatpush2.xpose.msra.mxu0 0.0
        %7625 = vmatprep.subr.mxu0 0.0
        %7626 = vmatpush2.xpose.msra.mxu0 0.0
        %7627 = vmatprep.subr.mxu0 0.0
        %7628 = vmatpush2.xpose.msra.mxu0 0.0
        %7629 = vmatprep.subr.mxu0 0.0
        %7630 = vmatpush2.xpose.msra.mxu0 0.0
        %7631 = vmatprep.mubr.f32.mxu0 0.0
        %7632 = vmatmul.mubr.f32.gmra.mxu0 %v7520
        %v7633 = vpop.f32.mrf.mxu0
        %v7634 = vadd.f32 0.0, %v7633
        %v7635 = vpop.f32.mrf.mxu0
        %7636 = vmatprep.mubr.f32.mxu0 0.0
        %7637 = vmatmul.mubr.f32.gmra.mxu0 %v7523
        %v7638 = vpop.f32.mrf.mxu0
        %v7639 = vadd.f32 0.0, %v7638
        %v7640 = vpop.f32.mrf.mxu0
        %7641 = vdwg.mxu0
        %v7643 = vsel %vm6534, %v5106, 0
        %v7646 = vsel %vm6534, %v5111, 0
        %v7649 = vsel %vm6534, %v5116, 0
        %v7652 = vsel %vm6534, %v5121, 0
        %v7655 = vsel %vm6534, %v5126, 0
        %v7658 = vsel %vm6534, %v5131, 0
        %v7661 = vsel %vm6534, %v5136, 0
        %v7664 = vsel %vm6534, %v5141, 0
        %v7667 = vsel %vm6534, %v5146, 0
        %v7670 = vsel %vm6534, %v5151, 0
        %v7673 = vsel %vm6534, %v5156, 0
        %v7676 = vsel %vm6534, %v5161, 0
        %v7679 = vsel %vm6534, %v5166, 0
        %v7682 = vsel %vm6534, %v5171, 0
        %v7685 = vsel %vm6534, %v5176, 0
        %v7688 = vsel %vm6534, %v5181, 0
        %7690 = vmatprep.subr.mxu0 0.0
        %7691 = vmatpush1.xpose.msra.mxu0 %v7688
        %7692 = vmatprep.subr.mxu0 0.0
        %7693 = vmatpush1.xpose.msra.mxu0 %v7685
        %7694 = vmatprep.subr.mxu0 0.0
        %7695 = vmatpush1.xpose.msra.mxu0 %v7682
        %7696 = vmatprep.subr.mxu0 0.0
        %7697 = vmatpush1.xpose.msra.mxu0 %v7679
        %7698 = vmatprep.subr.mxu0 0.0
        %7699 = vmatpush1.xpose.msra.mxu0 %v7676
        %7700 = vmatprep.subr.mxu0 0.0
        %7701 = vmatpush1.xpose.msra.mxu0 %v7673
        %7702 = vmatprep.subr.mxu0 0.0
        %7703 = vmatpush1.xpose.msra.mxu0 %v7670
        %7704 = vmatprep.subr.mxu0 0.0
        %7705 = vmatpush1.xpose.msra.mxu0 %v7667
        %7706 = vmatprep.subr.mxu0 0.0
        %7707 = vmatpush1.xpose.msra.mxu0 %v7664
        %7708 = vmatprep.subr.mxu0 0.0
        %7709 = vmatpush1.xpose.msra.mxu0 %v7661
        %7710 = vmatprep.subr.mxu0 0.0
        %7711 = vmatpush1.xpose.msra.mxu0 %v7658
        %7712 = vmatprep.subr.mxu0 0.0
        %7713 = vmatpush1.xpose.msra.mxu0 %v7655
        %7714 = vmatprep.subr.mxu0 0.0
        %7715 = vmatpush1.xpose.msra.mxu0 %v7652
        %7716 = vmatprep.subr.mxu0 0.0
        %7717 = vmatpush1.xpose.msra.mxu0 %v7649
        %7718 = vmatprep.subr.mxu0 0.0
        %7719 = vmatpush1.xpose.msra.mxu0 %v7646
        %7720 = vmatprep.subr.mxu0 0.0
        %7721 = vmatpush1.xpose.msra.mxu0 %v7643
        %7722 = vmatprep.subr.mxu0 0.0
        %7723 = vmatpush2.xpose.msra.mxu0 0.0
        %7724 = vmatprep.subr.mxu0 0.0
        %7725 = vmatpush2.xpose.msra.mxu0 0.0
        %7726 = vmatprep.subr.mxu0 0.0
        %7727 = vmatpush2.xpose.msra.mxu0 0.0
        %7728 = vmatprep.subr.mxu0 0.0
        %7729 = vmatpush2.xpose.msra.mxu0 0.0
        %7730 = vmatprep.subr.mxu0 0.0
        %7731 = vmatpush2.xpose.msra.mxu0 0.0
        %7732 = vmatprep.subr.mxu0 0.0
        %7733 = vmatpush2.xpose.msra.mxu0 0.0
        %7734 = vmatprep.subr.mxu0 0.0
        %7735 = vmatpush2.xpose.msra.mxu0 0.0
        %7736 = vmatprep.subr.mxu0 0.0
        %7737 = vmatpush2.xpose.msra.mxu0 0.0
        %7738 = vmatprep.subr.mxu0 0.0
        %7739 = vmatpush2.xpose.msra.mxu0 0.0
        %7740 = vmatprep.subr.mxu0 0.0
        %7741 = vmatpush2.xpose.msra.mxu0 0.0
        %7742 = vmatprep.subr.mxu0 0.0
        %7743 = vmatpush2.xpose.msra.mxu0 0.0
        %7744 = vmatprep.subr.mxu0 0.0
        %7745 = vmatpush2.xpose.msra.mxu0 0.0
        %7746 = vmatprep.subr.mxu0 0.0
        %7747 = vmatpush2.xpose.msra.mxu0 0.0
        %7748 = vmatprep.subr.mxu0 0.0
        %7749 = vmatpush2.xpose.msra.mxu0 0.0
        %7750 = vmatprep.subr.mxu0 0.0
        %7751 = vmatpush2.xpose.msra.mxu0 0.0
        %7752 = vmatprep.subr.mxu0 0.0
        %7753 = vmatpush2.xpose.msra.mxu0 0.0
        %7754 = vmatprep.mubr.f32.mxu0 0.0
        %7755 = vmatmul.mubr.f32.gmra.mxu0 %v7643
        %v7756 = vpop.f32.mrf.mxu0
        %v7757 = vadd.f32 0.0, %v7756
        %v7758 = vpop.f32.mrf.mxu0
        %7759 = vmatprep.mubr.f32.mxu0 0.0
        %7760 = vmatmul.mubr.f32.gmra.mxu0 %v7646
        %v7761 = vpop.f32.mrf.mxu0
        %v7762 = vadd.f32 0.0, %v7761
        %v7763 = vpop.f32.mrf.mxu0
        %7764 = vdwg.mxu0
        %v7766 = vsel %vm6534, %v5331, 0
        %v7769 = vsel %vm6534, %v5336, 0
        %v7772 = vsel %vm6534, %v5341, 0
        %v7775 = vsel %vm6534, %v5346, 0
        %v7778 = vsel %vm6534, %v5351, 0
        %v7781 = vsel %vm6534, %v5356, 0
        %v7784 = vsel %vm6534, %v5361, 0
        %v7787 = vsel %vm6534, %v5366, 0
        %v7790 = vsel %vm6534, %v5371, 0
        %v7793 = vsel %vm6534, %v5376, 0
        %v7796 = vsel %vm6534, %v5381, 0
        %v7799 = vsel %vm6534, %v5386, 0
        %v7802 = vsel %vm6534, %v5391, 0
        %v7805 = vsel %vm6534, %v5396, 0
        %v7808 = vsel %vm6534, %v5401, 0
        %v7811 = vsel %vm6534, %v5406, 0
        %7813 = vmatprep.subr.mxu0 0.0
        %7814 = vmatpush1.xpose.msra.mxu0 %v7811
        %7815 = vmatprep.subr.mxu0 0.0
        %7816 = vmatpush1.xpose.msra.mxu0 %v7808
        %7817 = vmatprep.subr.mxu0 0.0
        %7818 = vmatpush1.xpose.msra.mxu0 %v7805
        %7819 = vmatprep.subr.mxu0 0.0
        %7820 = vmatpush1.xpose.msra.mxu0 %v7802
        %7821 = vmatprep.subr.mxu0 0.0
        %7822 = vmatpush1.xpose.msra.mxu0 %v7799
        %7823 = vmatprep.subr.mxu0 0.0
        %7824 = vmatpush1.xpose.msra.mxu0 %v7796
        %7825 = vmatprep.subr.mxu0 0.0
        %7826 = vmatpush1.xpose.msra.mxu0 %v7793
        %7827 = vmatprep.subr.mxu0 0.0
        %7828 = vmatpush1.xpose.msra.mxu0 %v7790
        %7829 = vmatprep.subr.mxu0 0.0
        %7830 = vmatpush1.xpose.msra.mxu0 %v7787
        %7831 = vmatprep.subr.mxu0 0.0
        %7832 = vmatpush1.xpose.msra.mxu0 %v7784
        %7833 = vmatprep.subr.mxu0 0.0
        %7834 = vmatpush1.xpose.msra.mxu0 %v7781
        %7835 = vmatprep.subr.mxu0 0.0
        %7836 = vmatpush1.xpose.msra.mxu0 %v7778
        %7837 = vmatprep.subr.mxu0 0.0
        %7838 = vmatpush1.xpose.msra.mxu0 %v7775
        %7839 = vmatprep.subr.mxu0 0.0
        %7840 = vmatpush1.xpose.msra.mxu0 %v7772
        %7841 = vmatprep.subr.mxu0 0.0
        %7842 = vmatpush1.xpose.msra.mxu0 %v7769
        %7843 = vmatprep.subr.mxu0 0.0
        %7844 = vmatpush1.xpose.msra.mxu0 %v7766
        %7845 = vmatprep.subr.mxu0 0.0
        %7846 = vmatpush2.xpose.msra.mxu0 0.0
        %7847 = vmatprep.subr.mxu0 0.0
        %7848 = vmatpush2.xpose.msra.mxu0 0.0
        %7849 = vmatprep.subr.mxu0 0.0
        %7850 = vmatpush2.xpose.msra.mxu0 0.0
        %7851 = vmatprep.subr.mxu0 0.0
        %7852 = vmatpush2.xpose.msra.mxu0 0.0
        %7853 = vmatprep.subr.mxu0 0.0
        %7854 = vmatpush2.xpose.msra.mxu0 0.0
        %7855 = vmatprep.subr.mxu0 0.0
        %7856 = vmatpush2.xpose.msra.mxu0 0.0
        %7857 = vmatprep.subr.mxu0 0.0
        %7858 = vmatpush2.xpose.msra.mxu0 0.0
        %7859 = vmatprep.subr.mxu0 0.0
        %7860 = vmatpush2.xpose.msra.mxu0 0.0
        %7861 = vmatprep.subr.mxu0 0.0
        %7862 = vmatpush2.xpose.msra.mxu0 0.0
        %7863 = vmatprep.subr.mxu0 0.0
        %7864 = vmatpush2.xpose.msra.mxu0 0.0
        %7865 = vmatprep.subr.mxu0 0.0
        %7866 = vmatpush2.xpose.msra.mxu0 0.0
        %7867 = vmatprep.subr.mxu0 0.0
        %7868 = vmatpush2.xpose.msra.mxu0 0.0
        %7869 = vmatprep.subr.mxu0 0.0
        %7870 = vmatpush2.xpose.msra.mxu0 0.0
        %7871 = vmatprep.subr.mxu0 0.0
        %7872 = vmatpush2.xpose.msra.mxu0 0.0
        %7873 = vmatprep.subr.mxu0 0.0
        %7874 = vmatpush2.xpose.msra.mxu0 0.0
        %7875 = vmatprep.subr.mxu0 0.0
        %7876 = vmatpush2.xpose.msra.mxu0 0.0
        %7877 = vmatprep.mubr.f32.mxu0 0.0
        %7878 = vmatmul.mubr.f32.gmra.mxu0 %v7766
        %v7879 = vpop.f32.mrf.mxu0
        %v7880 = vadd.f32 0.0, %v7879
        %v7881 = vpop.f32.mrf.mxu0
        %7882 = vmatprep.mubr.f32.mxu0 0.0
        %7883 = vmatmul.mubr.f32.gmra.mxu0 %v7769
        %v7884 = vpop.f32.mrf.mxu0
        %v7885 = vadd.f32 0.0, %v7884
        %v7886 = vpop.f32.mrf.mxu0
        %7887 = vdwg.mxu0
        %v7889 = vsel %vm6534, %v5556, 0
        %v7892 = vsel %vm6534, %v5561, 0
        %v7895 = vsel %vm6534, %v5566, 0
        %v7898 = vsel %vm6534, %v5571, 0
        %v7901 = vsel %vm6534, %v5576, 0
        %v7904 = vsel %vm6534, %v5581, 0
        %v7907 = vsel %vm6534, %v5586, 0
        %v7910 = vsel %vm6534, %v5591, 0
        %v7913 = vsel %vm6534, %v5596, 0
        %v7916 = vsel %vm6534, %v5601, 0
        %v7919 = vsel %vm6534, %v5606, 0
        %v7922 = vsel %vm6534, %v5611, 0
        %v7925 = vsel %vm6534, %v5616, 0
        %v7928 = vsel %vm6534, %v5621, 0
        %v7931 = vsel %vm6534, %v5626, 0
        %v7934 = vsel %vm6534, %v5631, 0
        %7936 = vmatprep.subr.mxu0 0.0
        %7937 = vmatpush1.xpose.msra.mxu0 %v7934
        %7938 = vmatprep.subr.mxu0 0.0
        %7939 = vmatpush1.xpose.msra.mxu0 %v7931
        %7940 = vmatprep.subr.mxu0 0.0
        %7941 = vmatpush1.xpose.msra.mxu0 %v7928
        %7942 = vmatprep.subr.mxu0 0.0
        %7943 = vmatpush1.xpose.msra.mxu0 %v7925
        %7944 = vmatprep.subr.mxu0 0.0
        %7945 = vmatpush1.xpose.msra.mxu0 %v7922
        %7946 = vmatprep.subr.mxu0 0.0
        %7947 = vmatpush1.xpose.msra.mxu0 %v7919
        %7948 = vmatprep.subr.mxu0 0.0
        %7949 = vmatpush1.xpose.msra.mxu0 %v7916
        %7950 = vmatprep.subr.mxu0 0.0
        %7951 = vmatpush1.xpose.msra.mxu0 %v7913
        %7952 = vmatprep.subr.mxu0 0.0
        %7953 = vmatpush1.xpose.msra.mxu0 %v7910
        %7954 = vmatprep.subr.mxu0 0.0
        %7955 = vmatpush1.xpose.msra.mxu0 %v7907
        %7956 = vmatprep.subr.mxu0 0.0
        %7957 = vmatpush1.xpose.msra.mxu0 %v7904
        %7958 = vmatprep.subr.mxu0 0.0
        %7959 = vmatpush1.xpose.msra.mxu0 %v7901
        %7960 = vmatprep.subr.mxu0 0.0
        %7961 = vmatpush1.xpose.msra.mxu0 %v7898
        %7962 = vmatprep.subr.mxu0 0.0
        %7963 = vmatpush1.xpose.msra.mxu0 %v7895
        %7964 = vmatprep.subr.mxu0 0.0
        %7965 = vmatpush1.xpose.msra.mxu0 %v7892
        %7966 = vmatprep.subr.mxu0 0.0
        %7967 = vmatpush1.xpose.msra.mxu0 %v7889
        %7968 = vmatprep.subr.mxu0 0.0
        %7969 = vmatpush2.xpose.msra.mxu0 0.0
        %7970 = vmatprep.subr.mxu0 0.0
        %7971 = vmatpush2.xpose.msra.mxu0 0.0
        %7972 = vmatprep.subr.mxu0 0.0
        %7973 = vmatpush2.xpose.msra.mxu0 0.0
        %7974 = vmatprep.subr.mxu0 0.0
        %7975 = vmatpush2.xpose.msra.mxu0 0.0
        %7976 = vmatprep.subr.mxu0 0.0
        %7977 = vmatpush2.xpose.msra.mxu0 0.0
        %7978 = vmatprep.subr.mxu0 0.0
        %7979 = vmatpush2.xpose.msra.mxu0 0.0
        %7980 = vmatprep.subr.mxu0 0.0
        %7981 = vmatpush2.xpose.msra.mxu0 0.0
        %7982 = vmatprep.subr.mxu0 0.0
        %7983 = vmatpush2.xpose.msra.mxu0 0.0
        %7984 = vmatprep.subr.mxu0 0.0
        %7985 = vmatpush2.xpose.msra.mxu0 0.0
        %7986 = vmatprep.subr.mxu0 0.0
        %7987 = vmatpush2.xpose.msra.mxu0 0.0
        %7988 = vmatprep.subr.mxu0 0.0
        %7989 = vmatpush2.xpose.msra.mxu0 0.0
        %7990 = vmatprep.subr.mxu0 0.0
        %7991 = vmatpush2.xpose.msra.mxu0 0.0
        %7992 = vmatprep.subr.mxu0 0.0
        %7993 = vmatpush2.xpose.msra.mxu0 0.0
        %7994 = vmatprep.subr.mxu0 0.0
        %7995 = vmatpush2.xpose.msra.mxu0 0.0
        %7996 = vmatprep.subr.mxu0 0.0
        %7997 = vmatpush2.xpose.msra.mxu0 0.0
        %7998 = vmatprep.subr.mxu0 0.0
        %7999 = vmatpush2.xpose.msra.mxu0 0.0
        %8000 = vmatprep.mubr.f32.mxu0 0.0
        %8001 = vmatmul.mubr.f32.gmra.mxu0 %v7889
        %v8002 = vpop.f32.mrf.mxu0
        %v8003 = vadd.f32 0.0, %v8002
        %v8004 = vpop.f32.mrf.mxu0
        %8005 = vmatprep.mubr.f32.mxu0 0.0
        %8006 = vmatmul.mubr.f32.gmra.mxu0 %v7892
        %v8007 = vpop.f32.mrf.mxu0
        %v8008 = vadd.f32 0.0, %v8007
        %v8009 = vpop.f32.mrf.mxu0
        %8010 = vdwg.mxu0
        %v8012 = vsel %vm6534, %v5781, 0
        %v8015 = vsel %vm6534, %v5786, 0
        %v8018 = vsel %vm6534, %v5791, 0
        %v8021 = vsel %vm6534, %v5796, 0
        %v8024 = vsel %vm6534, %v5801, 0
        %v8027 = vsel %vm6534, %v5806, 0
        %v8030 = vsel %vm6534, %v5811, 0
        %v8033 = vsel %vm6534, %v5816, 0
        %v8036 = vsel %vm6534, %v5821, 0
        %v8039 = vsel %vm6534, %v5826, 0
        %v8042 = vsel %vm6534, %v5831, 0
        %v8045 = vsel %vm6534, %v5836, 0
        %v8048 = vsel %vm6534, %v5841, 0
        %v8051 = vsel %vm6534, %v5846, 0
        %v8054 = vsel %vm6534, %v5851, 0
        %v8057 = vsel %vm6534, %v5856, 0
        %8059 = vmatprep.subr.mxu0 0.0
        %8060 = vmatpush1.xpose.msra.mxu0 %v8057
        %8061 = vmatprep.subr.mxu0 0.0
        %8062 = vmatpush1.xpose.msra.mxu0 %v8054
        %8063 = vmatprep.subr.mxu0 0.0
        %8064 = vmatpush1.xpose.msra.mxu0 %v8051
        %8065 = vmatprep.subr.mxu0 0.0
        %8066 = vmatpush1.xpose.msra.mxu0 %v8048
        %8067 = vmatprep.subr.mxu0 0.0
        %8068 = vmatpush1.xpose.msra.mxu0 %v8045
        %8069 = vmatprep.subr.mxu0 0.0
        %8070 = vmatpush1.xpose.msra.mxu0 %v8042
        %8071 = vmatprep.subr.mxu0 0.0
        %8072 = vmatpush1.xpose.msra.mxu0 %v8039
        %8073 = vmatprep.subr.mxu0 0.0
        %8074 = vmatpush1.xpose.msra.mxu0 %v8036
        %8075 = vmatprep.subr.mxu0 0.0
        %8076 = vmatpush1.xpose.msra.mxu0 %v8033
        %8077 = vmatprep.subr.mxu0 0.0
        %8078 = vmatpush1.xpose.msra.mxu0 %v8030
        %8079 = vmatprep.subr.mxu0 0.0
        %8080 = vmatpush1.xpose.msra.mxu0 %v8027
        %8081 = vmatprep.subr.mxu0 0.0
        %8082 = vmatpush1.xpose.msra.mxu0 %v8024
        %8083 = vmatprep.subr.mxu0 0.0
        %8084 = vmatpush1.xpose.msra.mxu0 %v8021
        %8085 = vmatprep.subr.mxu0 0.0
        %8086 = vmatpush1.xpose.msra.mxu0 %v8018
        %8087 = vmatprep.subr.mxu0 0.0
        %8088 = vmatpush1.xpose.msra.mxu0 %v8015
        %8089 = vmatprep.subr.mxu0 0.0
        %8090 = vmatpush1.xpose.msra.mxu0 %v8012
        %8091 = vmatprep.subr.mxu0 0.0
        %8092 = vmatpush2.xpose.msra.mxu0 0.0
        %8093 = vmatprep.subr.mxu0 0.0
        %8094 = vmatpush2.xpose.msra.mxu0 0.0
        %8095 = vmatprep.subr.mxu0 0.0
        %8096 = vmatpush2.xpose.msra.mxu0 0.0
        %8097 = vmatprep.subr.mxu0 0.0
        %8098 = vmatpush2.xpose.msra.mxu0 0.0
        %8099 = vmatprep.subr.mxu0 0.0
        %8100 = vmatpush2.xpose.msra.mxu0 0.0
        %8101 = vmatprep.subr.mxu0 0.0
        %8102 = vmatpush2.xpose.msra.mxu0 0.0
        %8103 = vmatprep.subr.mxu0 0.0
        %8104 = vmatpush2.xpose.msra.mxu0 0.0
        %8105 = vmatprep.subr.mxu0 0.0
        %8106 = vmatpush2.xpose.msra.mxu0 0.0
        %8107 = vmatprep.subr.mxu0 0.0
        %8108 = vmatpush2.xpose.msra.mxu0 0.0
        %8109 = vmatprep.subr.mxu0 0.0
        %8110 = vmatpush2.xpose.msra.mxu0 0.0
        %8111 = vmatprep.subr.mxu0 0.0
        %8112 = vmatpush2.xpose.msra.mxu0 0.0
        %8113 = vmatprep.subr.mxu0 0.0
        %8114 = vmatpush2.xpose.msra.mxu0 0.0
        %8115 = vmatprep.subr.mxu0 0.0
        %8116 = vmatpush2.xpose.msra.mxu0 0.0
        %8117 = vmatprep.subr.mxu0 0.0
        %8118 = vmatpush2.xpose.msra.mxu0 0.0
        %8119 = vmatprep.subr.mxu0 0.0
        %8120 = vmatpush2.xpose.msra.mxu0 0.0
        %8121 = vmatprep.subr.mxu0 0.0
        %8122 = vmatpush2.xpose.msra.mxu0 0.0
        %8123 = vmatprep.mubr.f32.mxu0 0.0
        %8124 = vmatmul.mubr.f32.gmra.mxu0 %v8012
        %v8125 = vpop.f32.mrf.mxu0
        %v8126 = vadd.f32 0.0, %v8125
        %v8127 = vpop.f32.mrf.mxu0
        %8128 = vmatprep.mubr.f32.mxu0 0.0
        %8129 = vmatmul.mubr.f32.gmra.mxu0 %v8015
        %v8130 = vpop.f32.mrf.mxu0
        %v8131 = vadd.f32 0.0, %v8130
        %v8132 = vpop.f32.mrf.mxu0
        %8133 = vdwg.mxu0
        %v8135 = vsel %vm6534, %v6006, 0
        %v8138 = vsel %vm6534, %v6011, 0
        %v8141 = vsel %vm6534, %v6016, 0
        %v8144 = vsel %vm6534, %v6021, 0
        %v8147 = vsel %vm6534, %v6026, 0
        %v8150 = vsel %vm6534, %v6031, 0
        %v8153 = vsel %vm6534, %v6036, 0
        %v8156 = vsel %vm6534, %v6041, 0
        %v8159 = vsel %vm6534, %v6046, 0
        %v8162 = vsel %vm6534, %v6051, 0
        %v8165 = vsel %vm6534, %v6056, 0
        %v8168 = vsel %vm6534, %v6061, 0
        %v8171 = vsel %vm6534, %v6066, 0
        %v8174 = vsel %vm6534, %v6071, 0
        %v8177 = vsel %vm6534, %v6076, 0
        %v8180 = vsel %vm6534, %v6081, 0
        %8182 = vmatprep.subr.mxu0 0.0
        %8183 = vmatpush1.xpose.msra.mxu0 %v8180
        %8184 = vmatprep.subr.mxu0 0.0
        %8185 = vmatpush1.xpose.msra.mxu0 %v8177
        %8186 = vmatprep.subr.mxu0 0.0
        %8187 = vmatpush1.xpose.msra.mxu0 %v8174
        %8188 = vmatprep.subr.mxu0 0.0
        %8189 = vmatpush1.xpose.msra.mxu0 %v8171
        %8190 = vmatprep.subr.mxu0 0.0
        %8191 = vmatpush1.xpose.msra.mxu0 %v8168
        %8192 = vmatprep.subr.mxu0 0.0
        %8193 = vmatpush1.xpose.msra.mxu0 %v8165
        %8194 = vmatprep.subr.mxu0 0.0
        %8195 = vmatpush1.xpose.msra.mxu0 %v8162
        %8196 = vmatprep.subr.mxu0 0.0
        %8197 = vmatpush1.xpose.msra.mxu0 %v8159
        %8198 = vmatprep.subr.mxu0 0.0
        %8199 = vmatpush1.xpose.msra.mxu0 %v8156
        %8200 = vmatprep.subr.mxu0 0.0
        %8201 = vmatpush1.xpose.msra.mxu0 %v8153
        %8202 = vmatprep.subr.mxu0 0.0
        %8203 = vmatpush1.xpose.msra.mxu0 %v8150
        %8204 = vmatprep.subr.mxu0 0.0
        %8205 = vmatpush1.xpose.msra.mxu0 %v8147
        %8206 = vmatprep.subr.mxu0 0.0
        %8207 = vmatpush1.xpose.msra.mxu0 %v8144
        %8208 = vmatprep.subr.mxu0 0.0
        %8209 = vmatpush1.xpose.msra.mxu0 %v8141
        %8210 = vmatprep.subr.mxu0 0.0
        %8211 = vmatpush1.xpose.msra.mxu0 %v8138
        %8212 = vmatprep.subr.mxu0 0.0
        %8213 = vmatpush1.xpose.msra.mxu0 %v8135
        %8214 = vmatprep.subr.mxu0 0.0
        %8215 = vmatpush2.xpose.msra.mxu0 0.0
        %8216 = vmatprep.subr.mxu0 0.0
        %8217 = vmatpush2.xpose.msra.mxu0 0.0
        %8218 = vmatprep.subr.mxu0 0.0
        %8219 = vmatpush2.xpose.msra.mxu0 0.0
        %8220 = vmatprep.subr.mxu0 0.0
        %8221 = vmatpush2.xpose.msra.mxu0 0.0
        %8222 = vmatprep.subr.mxu0 0.0
        %8223 = vmatpush2.xpose.msra.mxu0 0.0
        %8224 = vmatprep.subr.mxu0 0.0
        %8225 = vmatpush2.xpose.msra.mxu0 0.0
        %8226 = vmatprep.subr.mxu0 0.0
        %8227 = vmatpush2.xpose.msra.mxu0 0.0
        %8228 = vmatprep.subr.mxu0 0.0
        %8229 = vmatpush2.xpose.msra.mxu0 0.0
        %8230 = vmatprep.subr.mxu0 0.0
        %8231 = vmatpush2.xpose.msra.mxu0 0.0
        %8232 = vmatprep.subr.mxu0 0.0
        %8233 = vmatpush2.xpose.msra.mxu0 0.0
        %8234 = vmatprep.subr.mxu0 0.0
        %8235 = vmatpush2.xpose.msra.mxu0 0.0
        %8236 = vmatprep.subr.mxu0 0.0
        %8237 = vmatpush2.xpose.msra.mxu0 0.0
        %8238 = vmatprep.subr.mxu0 0.0
        %8239 = vmatpush2.xpose.msra.mxu0 0.0
        %8240 = vmatprep.subr.mxu0 0.0
        %8241 = vmatpush2.xpose.msra.mxu0 0.0
        %8242 = vmatprep.subr.mxu0 0.0
        %8243 = vmatpush2.xpose.msra.mxu0 0.0
        %8244 = vmatprep.subr.mxu0 0.0
        %8245 = vmatpush2.xpose.msra.mxu0 0.0
        %8246 = vmatprep.mubr.f32.mxu0 0.0
        %8247 = vmatmul.mubr.f32.gmra.mxu0 %v8135
        %v8248 = vpop.f32.mrf.mxu0
        %v8249 = vadd.f32 0.0, %v8248
        %v8250 = vpop.f32.mrf.mxu0
        %8251 = vmatprep.mubr.f32.mxu0 0.0
        %8252 = vmatmul.mubr.f32.gmra.mxu0 %v8138
        %v8253 = vpop.f32.mrf.mxu0
        %v8254 = vadd.f32 0.0, %v8253
        %v8255 = vpop.f32.mrf.mxu0
        %8256 = vdwg.mxu0
        %v8258 = vsel %vm6534, %v6231, 0
        %v8261 = vsel %vm6534, %v6236, 0
        %v8264 = vsel %vm6534, %v6241, 0
        %v8267 = vsel %vm6534, %v6246, 0
        %v8270 = vsel %vm6534, %v6251, 0
        %v8273 = vsel %vm6534, %v6256, 0
        %v8276 = vsel %vm6534, %v6261, 0
        %v8279 = vsel %vm6534, %v6266, 0
        %v8282 = vsel %vm6534, %v6271, 0
        %v8285 = vsel %vm6534, %v6276, 0
        %v8288 = vsel %vm6534, %v6281, 0
        %v8291 = vsel %vm6534, %v6286, 0
        %v8294 = vsel %vm6534, %v6291, 0
        %v8297 = vsel %vm6534, %v6296, 0
        %v8300 = vsel %vm6534, %v6301, 0
        %v8303 = vsel %vm6534, %v6306, 0
        %8305 = vmatprep.subr.mxu0 0.0
        %8306 = vmatpush1.xpose.msra.mxu0 %v8303
        %8307 = vmatprep.subr.mxu0 0.0
        %8308 = vmatpush1.xpose.msra.mxu0 %v8300
        %8309 = vmatprep.subr.mxu0 0.0
        %8310 = vmatpush1.xpose.msra.mxu0 %v8297
        %8311 = vmatprep.subr.mxu0 0.0
        %8312 = vmatpush1.xpose.msra.mxu0 %v8294
        %8313 = vmatprep.subr.mxu0 0.0
        %8314 = vmatpush1.xpose.msra.mxu0 %v8291
        %8315 = vmatprep.subr.mxu0 0.0
        %8316 = vmatpush1.xpose.msra.mxu0 %v8288
        %8317 = vmatprep.subr.mxu0 0.0
        %8318 = vmatpush1.xpose.msra.mxu0 %v8285
        %8319 = vmatprep.subr.mxu0 0.0
        %8320 = vmatpush1.xpose.msra.mxu0 %v8282
        %8321 = vmatprep.subr.mxu0 0.0
        %8322 = vmatpush1.xpose.msra.mxu0 %v8279
        %8323 = vmatprep.subr.mxu0 0.0
        %8324 = vmatpush1.xpose.msra.mxu0 %v8276
        %8325 = vmatprep.subr.mxu0 0.0
        %8326 = vmatpush1.xpose.msra.mxu0 %v8273
        %8327 = vmatprep.subr.mxu0 0.0
        %8328 = vmatpush1.xpose.msra.mxu0 %v8270
        %8329 = vmatprep.subr.mxu0 0.0
        %8330 = vmatpush1.xpose.msra.mxu0 %v8267
        %8331 = vmatprep.subr.mxu0 0.0
        %8332 = vmatpush1.xpose.msra.mxu0 %v8264
        %8333 = vmatprep.subr.mxu0 0.0
        %8334 = vmatpush1.xpose.msra.mxu0 %v8261
        %8335 = vmatprep.subr.mxu0 0.0
        %8336 = vmatpush1.xpose.msra.mxu0 %v8258
        %8337 = vmatprep.subr.mxu0 0.0
        %8338 = vmatpush2.xpose.msra.mxu0 0.0
        %8339 = vmatprep.subr.mxu0 0.0
        %8340 = vmatpush2.xpose.msra.mxu0 0.0
        %8341 = vmatprep.subr.mxu0 0.0
        %8342 = vmatpush2.xpose.msra.mxu0 0.0
        %8343 = vmatprep.subr.mxu0 0.0
        %8344 = vmatpush2.xpose.msra.mxu0 0.0
        %8345 = vmatprep.subr.mxu0 0.0
        %8346 = vmatpush2.xpose.msra.mxu0 0.0
        %8347 = vmatprep.subr.mxu0 0.0
        %8348 = vmatpush2.xpose.msra.mxu0 0.0
        %8349 = vmatprep.subr.mxu0 0.0
        %8350 = vmatpush2.xpose.msra.mxu0 0.0
        %8351 = vmatprep.subr.mxu0 0.0
        %8352 = vmatpush2.xpose.msra.mxu0 0.0
        %8353 = vmatprep.subr.mxu0 0.0
        %8354 = vmatpush2.xpose.msra.mxu0 0.0
        %8355 = vmatprep.subr.mxu0 0.0
        %8356 = vmatpush2.xpose.msra.mxu0 0.0
        %8357 = vmatprep.subr.mxu0 0.0
        %8358 = vmatpush2.xpose.msra.mxu0 0.0
        %8359 = vmatprep.subr.mxu0 0.0
        %8360 = vmatpush2.xpose.msra.mxu0 0.0
        %8361 = vmatprep.subr.mxu0 0.0
        %8362 = vmatpush2.xpose.msra.mxu0 0.0
        %8363 = vmatprep.subr.mxu0 0.0
        %8364 = vmatpush2.xpose.msra.mxu0 0.0
        %8365 = vmatprep.subr.mxu0 0.0
        %8366 = vmatpush2.xpose.msra.mxu0 0.0
        %8367 = vmatprep.subr.mxu0 0.0
        %8368 = vmatpush2.xpose.msra.mxu0 0.0
        %8369 = vmatprep.mubr.f32.mxu0 0.0
        %8370 = vmatmul.mubr.f32.gmra.mxu0 %v8258
        %v8371 = vpop.f32.mrf.mxu0
        %v8372 = vadd.f32 0.0, %v8371
        %v8373 = vpop.f32.mrf.mxu0
        %8374 = vmatprep.mubr.f32.mxu0 0.0
        %8375 = vmatmul.mubr.f32.gmra.mxu0 %v8261
        %v8376 = vpop.f32.mrf.mxu0
        %v8377 = vadd.f32 0.0, %v8376
        %v8378 = vpop.f32.mrf.mxu0
        %8379 = vdwg.mxu0
        %v8381 = vsel %vm6534, %v6456, 0
        %v8384 = vsel %vm6534, %v6461, 0
        %v8387 = vsel %vm6534, %v6466, 0
        %v8390 = vsel %vm6534, %v6471, 0
        %v8393 = vsel %vm6534, %v6476, 0
        %v8396 = vsel %vm6534, %v6481, 0
        %v8399 = vsel %vm6534, %v6486, 0
        %v8402 = vsel %vm6534, %v6491, 0
        %v8405 = vsel %vm6534, %v6496, 0
        %v8408 = vsel %vm6534, %v6501, 0
        %v8411 = vsel %vm6534, %v6506, 0
        %v8414 = vsel %vm6534, %v6511, 0
        %v8417 = vsel %vm6534, %v6516, 0
        %v8420 = vsel %vm6534, %v6521, 0
        %v8423 = vsel %vm6534, %v6526, 0
        %v8426 = vsel %vm6534, %v6531, 0
        %8428 = vmatprep.subr.mxu0 0.0
        %8429 = vmatpush1.xpose.msra.mxu0 %v8426
        %8430 = vmatprep.subr.mxu0 0.0
        %8431 = vmatpush1.xpose.msra.mxu0 %v8423
        %8432 = vmatprep.subr.mxu0 0.0
        %8433 = vmatpush1.xpose.msra.mxu0 %v8420
        %8434 = vmatprep.subr.mxu0 0.0
        %8435 = vmatpush1.xpose.msra.mxu0 %v8417
        %8436 = vmatprep.subr.mxu0 0.0
        %8437 = vmatpush1.xpose.msra.mxu0 %v8414
        %8438 = vmatprep.subr.mxu0 0.0
        %8439 = vmatpush1.xpose.msra.mxu0 %v8411
        %8440 = vmatprep.subr.mxu0 0.0
        %8441 = vmatpush1.xpose.msra.mxu0 %v8408
        %8442 = vmatprep.subr.mxu0 0.0
        %8443 = vmatpush1.xpose.msra.mxu0 %v8405
        %8444 = vmatprep.subr.mxu0 0.0
        %8445 = vmatpush1.xpose.msra.mxu0 %v8402
        %8446 = vmatprep.subr.mxu0 0.0
        %8447 = vmatpush1.xpose.msra.mxu0 %v8399
        %8448 = vmatprep.subr.mxu0 0.0
        %8449 = vmatpush1.xpose.msra.mxu0 %v8396
        %8450 = vmatprep.subr.mxu0 0.0
        %8451 = vmatpush1.xpose.msra.mxu0 %v8393
        %8452 = vmatprep.subr.mxu0 0.0
        %8453 = vmatpush1.xpose.msra.mxu0 %v8390
        %8454 = vmatprep.subr.mxu0 0.0
        %8455 = vmatpush1.xpose.msra.mxu0 %v8387
        %8456 = vmatprep.subr.mxu0 0.0
        %8457 = vmatpush1.xpose.msra.mxu0 %v8384
        %8458 = vmatprep.subr.mxu0 0.0
        %8459 = vmatpush1.xpose.msra.mxu0 %v8381
        %8460 = vmatprep.subr.mxu0 0.0
        %8461 = vmatpush2.xpose.msra.mxu0 0.0
        %8462 = vmatprep.subr.mxu0 0.0
        %8463 = vmatpush2.xpose.msra.mxu0 0.0
        %8464 = vmatprep.subr.mxu0 0.0
        %8465 = vmatpush2.xpose.msra.mxu0 0.0
        %8466 = vmatprep.subr.mxu0 0.0
        %8467 = vmatpush2.xpose.msra.mxu0 0.0
        %8468 = vmatprep.subr.mxu0 0.0
        %8469 = vmatpush2.xpose.msra.mxu0 0.0
        %8470 = vmatprep.subr.mxu0 0.0
        %8471 = vmatpush2.xpose.msra.mxu0 0.0
        %8472 = vmatprep.subr.mxu0 0.0
        %8473 = vmatpush2.xpose.msra.mxu0 0.0
        %8474 = vmatprep.subr.mxu0 0.0
        %8475 = vmatpush2.xpose.msra.mxu0 0.0
        %8476 = vmatprep.subr.mxu0 0.0
        %8477 = vmatpush2.xpose.msra.mxu0 0.0
        %8478 = vmatprep.subr.mxu0 0.0
        %8479 = vmatpush2.xpose.msra.mxu0 0.0
        %8480 = vmatprep.subr.mxu0 0.0
        %8481 = vmatpush2.xpose.msra.mxu0 0.0
        %8482 = vmatprep.subr.mxu0 0.0
        %8483 = vmatpush2.xpose.msra.mxu0 0.0
        %8484 = vmatprep.subr.mxu0 0.0
        %8485 = vmatpush2.xpose.msra.mxu0 0.0
        %8486 = vmatprep.subr.mxu0 0.0
        %8487 = vmatpush2.xpose.msra.mxu0 0.0
        %8488 = vmatprep.subr.mxu0 0.0
        %8489 = vmatpush2.xpose.msra.mxu0 0.0
        %8490 = vmatprep.subr.mxu0 0.0
        %8491 = vmatpush2.xpose.msra.mxu0 0.0
        %8492 = vmatprep.mubr.f32.mxu0 0.0
        %8493 = vmatmul.mubr.f32.gmra.mxu0 %v8381
        %v8494 = vpop.f32.mrf.mxu0
        %v8495 = vadd.f32 0.0, %v8494
        %v8496 = vpop.f32.mrf.mxu0
        %8497 = vmatprep.mubr.f32.mxu0 0.0
        %8498 = vmatmul.mubr.f32.gmra.mxu0 %v8384
        %v8499 = vpop.f32.mrf.mxu0
        %v8500 = vadd.f32 0.0, %v8499
        %v8501 = vpop.f32.mrf.mxu0
        %8502 = vdwg.mxu0
        %8503 = vst [vmem:[%s522] sm:$0xff] %v6650
        %8504 = vst [vmem:[%s522 + $0x8] sm:$0xff] %v6655
        %8505 = vst [vmem:[%s522 + $0x10] sm:$0xff] %v6773
        %8506 = vst [vmem:[%s522 + $0x18] sm:$0xff] %v6778
        %8507 = vst [vmem:[%s522 + $0x20] sm:$0xff] %v6896
        %8508 = vst [vmem:[%s522 + $0x28] sm:$0xff] %v6901
        %8509 = vst [vmem:[%s522 + $0x30] sm:$0xff] %v7019
        %8510 = vst [vmem:[%s522 + $0x38] sm:$0xff] %v7024
        %8511 = vst [vmem:[%s522 + $0x40] sm:$0xff] %v7142
        %8512 = vst [vmem:[%s522 + $0x48] sm:$0xff] %v7147
        %8513 = vst [vmem:[%s522 + $0x50] sm:$0xff] %v7265
        %8514 = vst [vmem:[%s522 + $0x58] sm:$0xff] %v7270
        %8515 = vst [vmem:[%s522 + $0x60] sm:$0xff] %v7388
        %8516 = vst [vmem:[%s522 + $0x68] sm:$0xff] %v7393
        %8517 = vst [vmem:[%s522 + $0x70] sm:$0xff] %v7511
        %8518 = vst [vmem:[%s522 + $0x78] sm:$0xff] %v7516
        %8519 = vst [vmem:[%s522 + $0x80] sm:$0xff] %v7634
        %8520 = vst [vmem:[%s522 + $0x88] sm:$0xff] %v7639
        %8521 = vst [vmem:[%s522 + $0x90] sm:$0xff] %v7757
        %8522 = vst [vmem:[%s522 + $0x98] sm:$0xff] %v7762
        %8523 = vst [vmem:[%s522 + $0xa0] sm:$0xff] %v7880
        %8524 = vst [vmem:[%s522 + $0xa8] sm:$0xff] %v7885
        %8525 = vst [vmem:[%s522 + $0xb0] sm:$0xff] %v8003
        %8526 = vst [vmem:[%s522 + $0xb8] sm:$0xff] %v8008
        %8527 = vst [vmem:[%s522 + $0xc0] sm:$0xff] %v8126
        %8528 = vst [vmem:[%s522 + $0xc8] sm:$0xff] %v8131
        %8529 = vst [vmem:[%s522 + $0xd0] sm:$0xff] %v8249
        %8530 = vst [vmem:[%s522 + $0xd8] sm:$0xff] %v8254
        %8531 = vst [vmem:[%s522 + $0xe0] sm:$0xff] %v8372
        %8532 = vst [vmem:[%s522 + $0xe8] sm:$0xff] %v8377
        %8533 = vst [vmem:[%s522 + $0xf0] sm:$0xff] %v8495
        %8534 = vst [vmem:[%s522 + $0xf8] sm:$0xff] %v8500
        %s8535 = sand.u32 %s367, 1
        %s8536 = scalar_lea.sflag [#allocation3], %s8535
        %s8537 = sand.u32 %s367, 1
        %s8538 = smul.addr %s8537, 256
        %s8539 = scalar_lea.vmem [#allocation2], %s8538
        // Predicated region
        $region81: #{tpu_custom_call.1} parent=79 // pred_check
          %p8540 = pneg %p377
        $region82: #{tpu_custom_call.1} parent=79 // pred_check_branch
          %8542 = sbr.rel (%p8540) target = $region84
        $region83: #{tpu_custom_call.1} parent=79 // pred_region
          %s8543 = smul.u32 16, %s29
          %s8545 = ssub.s32 4096, 4096
          %8546 = vsyncadd %s8536, %s8545
          %s8547 = smul.addr %s8543, 2
          %s8548 = smul.addr %s8547, 128
          %s8549 = scalar_lea.hbm %s15, %s8548
          %s8550 = sshll.u32 %s8539, 4
          %s8551 = int_to_ptr.vmem [resolvable:$true] %s8550
          %8556 = dma.vmem_to_hbm [thread:$0]  %s8551, 4096, %s8549, %s8536, 128, 128, 8
        $region84: #{tpu_custom_call.1} parent=79 // pred_fallthru
          _
      $region80: #{tpu_custom_call.1} parent=5 // pred_fallthru
        _
      %p8557 = scmp.le.s32.totalorder 2, %s24
      // Predicated region
      $region85: #{tpu_custom_call.1} parent=5 // pred_check
        %p8558 = pneg %p8557
      $region86: #{tpu_custom_call.1} parent=5 // pred_check_branch
        %8560 = sbr.rel (%p8558) target = $region88
      $region87: #{tpu_custom_call.1} parent=5 // pred_region
        %s8561 = ssub.s32 %s24, 2
        // Predicated region
        $region89: #{tpu_custom_call.1} parent=87 // pred_check
          %p8562 = pneg %p383
        $region90: #{tpu_custom_call.1} parent=87 // pred_check_branch
          %8564 = sbr.rel (%p8562) target = $region92
        $region91: #{tpu_custom_call.1} parent=87 // pred_region
          %s8565 = sand.u32 %s368, 1
          %s8566 = scalar_lea.sflag [#allocation3], %s8565
          %s8567 = sand.u32 %s368, 1
          %s8568 = smul.addr %s8567, 256
          %s8569 = scalar_lea.vmem [#allocation2], %s8568
          %8570 = dma.done %s8566, 4096
        $region92: #{tpu_custom_call.1} parent=87 // pred_fallthru
          _
      $region88: #{tpu_custom_call.1} parent=5 // pred_fallthru
        _
    $region6: #{tpu_custom_call.1} parent=1 // loop_footer
      %s28 = sadd.s32 1, %s24
    $region7: #{tpu_custom_call.1} parent=1 // loop_footer_branch
      %23 = sbr.rel target = $region3
    $region8: #{tpu_custom_call.1} parent=1 // loop_exit
      _
    %8571 = vsyncpa [#allocation3], 1
    %s8572 = scalar_lea.sflag [#allocation3], 1
    %8573 = vsyncpa %s8572, 1

// kernel: tpu_custom_call.1
$region0: #{tpu_custom_call.1}
  #allocation0 [shape = 'u32[]', space=smem, size = 0x4, offset = 0x4, fixed_abs, tag = 'smem constant byte address 0x4 - core index']
  #allocation1 [shape = 'u32[144,128]{1,0:T(1,128)}', space=vmem, size = 0x12000, scoped, tag = 'internal scratch']
  %s0 = inlined_call_operand.vmem [shape: f32[512,1], index: 0, kind: input, shape index: {}]
  %s1 = inlined_call_operand.vmem [shape: s32[512,1], index: 1, kind: input, shape index: {}]
  %s2 = inlined_call_operand.vmem [shape: f32[1,32], index: 2, kind: input, shape index: {}]
  %s3 = inlined_call_operand.vmem [shape: f32[1,32], index: 3, kind: input, shape index: {}]
  %s4 = inlined_call_operand.vmem [shape: f32[32,64], index: 4, kind: input, shape index: {}]
  %s5 = inlined_call_operand.vmem [shape: f32[1,64], index: 5, kind: input, shape index: {}]
  %s6 = inlined_call_operand.vmem [shape: f32[64,128], index: 6, kind: input, shape index: {}]
  %s7 = inlined_call_operand.vmem [shape: f32[1,128], index: 7, kind: input, shape index: {}]
  %s8 = inlined_call_operand.vmem [shape: f32[1,32], index: 8, kind: input, shape index: {}]
  %s9 = inlined_call_operand.vmem [shape: f32[1,32], index: 9, kind: input, shape index: {}]
  %s10 = inlined_call_operand.vmem [shape: f32[32,64], index: 10, kind: input, shape index: {}]
  %s11 = inlined_call_operand.vmem [shape: f32[1,64], index: 11, kind: input, shape index: {}]
  %s12 = inlined_call_operand.vmem [shape: f32[64,128], index: 12, kind: input, shape index: {}]
  %s13 = inlined_call_operand.vmem [shape: f32[1,128], index: 13, kind: input, shape index: {}]
  %s14 = inlined_call_operand.hbm [shape: f32[512,128], index: 14, kind: output, shape index: {}]
  %s15 = sld [smem:[#allocation0]]
  $region66: #{tpu_custom_call.1} parent=0
    _
  %s17 = ssub.s32 1, %s15
  %s18 = scalar_select 0, %s17, %s15
  $region1: #{tpu_custom_call.1} parent=0
    #allocation2 [shape = 'u8[262144]{0}', space=vmem, size = 0x40000, scoped, tag = 'output window, operand 0, single buffered']
    #allocation3 [shape = 's32[1]{0}', space=sflag, size = 0x4, scoped, tag = 'scoped memory for tpu_custom_call.1']
    %19 = vsyncpa [#allocation3], 0
    // Predicated region
    $region2: #{tpu_custom_call.1} parent=1 // pred_check
      _
    $region3: #{tpu_custom_call.1} parent=1 // pred_check_branch
      %21 = sbr.rel (0) target = $region5
    $region4: #{tpu_custom_call.1} parent=1 // pred_region
      _
    $region5: #{tpu_custom_call.1} parent=1 // pred_fallthru
      _
    // Predicated region
    $region6: #{tpu_custom_call.1} parent=1 // pred_check
      _
    $region7: #{tpu_custom_call.1} parent=1 // pred_check_branch
      %23 = sbr.rel (0) target = $region9
    $region8: #{tpu_custom_call.1} parent=1 // pred_region
      _
    $region9: #{tpu_custom_call.1} parent=1 // pred_fallthru
      _
    // Predicated region
    $region10: #{tpu_custom_call.1} parent=1 // pred_check
      _
    $region11: #{tpu_custom_call.1} parent=1 // pred_check_branch
      %25 = sbr.rel (0) target = $region13
    $region12: #{tpu_custom_call.1} parent=1 // pred_region
      _
    $region13: #{tpu_custom_call.1} parent=1 // pred_fallthru
      _
    // Predicated region
    $region14: #{tpu_custom_call.1} parent=1 // pred_check
      _
    $region15: #{tpu_custom_call.1} parent=1 // pred_check_branch
      %27 = sbr.rel (0) target = $region17
    $region16: #{tpu_custom_call.1} parent=1 // pred_region
      _
    $region17: #{tpu_custom_call.1} parent=1 // pred_fallthru
      _
    // Predicated region
    $region18: #{tpu_custom_call.1} parent=1 // pred_check
      _
    $region19: #{tpu_custom_call.1} parent=1 // pred_check_branch
      %29 = sbr.rel (0) target = $region21
    $region20: #{tpu_custom_call.1} parent=1 // pred_region
      _
    $region21: #{tpu_custom_call.1} parent=1 // pred_fallthru
      _
    // Predicated region
    $region22: #{tpu_custom_call.1} parent=1 // pred_check
      _
    $region23: #{tpu_custom_call.1} parent=1 // pred_check_branch
      %31 = sbr.rel (0) target = $region25
    $region24: #{tpu_custom_call.1} parent=1 // pred_region
      _
    $region25: #{tpu_custom_call.1} parent=1 // pred_fallthru
      _
    // Predicated region
    $region26: #{tpu_custom_call.1} parent=1 // pred_check
      _
    $region27: #{tpu_custom_call.1} parent=1 // pred_check_branch
      %33 = sbr.rel (0) target = $region29
    $region28: #{tpu_custom_call.1} parent=1 // pred_region
      _
    $region29: #{tpu_custom_call.1} parent=1 // pred_fallthru
      _
    // Predicated region
    $region30: #{tpu_custom_call.1} parent=1 // pred_check
      _
    $region31: #{tpu_custom_call.1} parent=1 // pred_check_branch
      %35 = sbr.rel (0) target = $region33
    $region32: #{tpu_custom_call.1} parent=1 // pred_region
      _
    $region33: #{tpu_custom_call.1} parent=1 // pred_fallthru
      _
    // Predicated region
    $region34: #{tpu_custom_call.1} parent=1 // pred_check
      _
    $region35: #{tpu_custom_call.1} parent=1 // pred_check_branch
      %37 = sbr.rel (0) target = $region37
    $region36: #{tpu_custom_call.1} parent=1 // pred_region
      _
    $region37: #{tpu_custom_call.1} parent=1 // pred_fallthru
      _
    // Predicated region
    $region38: #{tpu_custom_call.1} parent=1 // pred_check
      _
    $region39: #{tpu_custom_call.1} parent=1 // pred_check_branch
      %39 = sbr.rel (0) target = $region41
    $region40: #{tpu_custom_call.1} parent=1 // pred_region
      _
    $region41: #{tpu_custom_call.1} parent=1 // pred_fallthru
      _
    // Predicated region
    $region42: #{tpu_custom_call.1} parent=1 // pred_check
      _
    $region43: #{tpu_custom_call.1} parent=1 // pred_check_branch
      %41 = sbr.rel (0) target = $region45
    $region44: #{tpu_custom_call.1} parent=1 // pred_region
      _
    $region45: #{tpu_custom_call.1} parent=1 // pred_fallthru
      _
    // Predicated region
    $region46: #{tpu_custom_call.1} parent=1 // pred_check
      _
    $region47: #{tpu_custom_call.1} parent=1 // pred_check_branch
      %43 = sbr.rel (0) target = $region49
    $region48: #{tpu_custom_call.1} parent=1 // pred_region
      _
    $region49: #{tpu_custom_call.1} parent=1 // pred_fallthru
      _
    // Predicated region
    $region50: #{tpu_custom_call.1} parent=1 // pred_check
      _
    $region51: #{tpu_custom_call.1} parent=1 // pred_check_branch
      %45 = sbr.rel (0) target = $region53
    $region52: #{tpu_custom_call.1} parent=1 // pred_region
      _
    $region53: #{tpu_custom_call.1} parent=1 // pred_fallthru
      _
    // Predicated region
    $region54: #{tpu_custom_call.1} parent=1 // pred_check
      _
    $region55: #{tpu_custom_call.1} parent=1 // pred_check_branch
      %47 = sbr.rel (0) target = $region57
    $region56: #{tpu_custom_call.1} parent=1 // pred_region
      _
    $region57: #{tpu_custom_call.1} parent=1 // pred_fallthru
      _
    %v48 = vld [vmem:[%s0] sm:$0xff]
    %v49 = vld [vmem:[%s0 + $0x8] sm:$0xff]
    %v50 = vld [vmem:[%s0 + $0x10] sm:$0xff]
    %v51 = vld [vmem:[%s0 + $0x18] sm:$0xff]
    %v52 = vld [vmem:[%s0 + $0x20] sm:$0xff]
    %v53 = vld [vmem:[%s0 + $0x28] sm:$0xff]
    %v54 = vld [vmem:[%s0 + $0x30] sm:$0xff]
    %v55 = vld [vmem:[%s0 + $0x38] sm:$0xff]
    %v56 = vld [vmem:[%s0 + $0x40] sm:$0xff]
    %v57 = vld [vmem:[%s0 + $0x48] sm:$0xff]
    %v58 = vld [vmem:[%s0 + $0x50] sm:$0xff]
    %v59 = vld [vmem:[%s0 + $0x58] sm:$0xff]
    %v60 = vld [vmem:[%s0 + $0x60] sm:$0xff]
    %v61 = vld [vmem:[%s0 + $0x68] sm:$0xff]
    %v62 = vld [vmem:[%s0 + $0x70] sm:$0xff]
    %v63 = vld [vmem:[%s0 + $0x78] sm:$0xff]
    %v64 = vld [vmem:[%s0 + $0x80] sm:$0xff]
    %v65 = vld [vmem:[%s0 + $0x88] sm:$0xff]
    %v66 = vld [vmem:[%s0 + $0x90] sm:$0xff]
    %v67 = vld [vmem:[%s0 + $0x98] sm:$0xff]
    %v68 = vld [vmem:[%s0 + $0xa0] sm:$0xff]
    %v69 = vld [vmem:[%s0 + $0xa8] sm:$0xff]
    %v70 = vld [vmem:[%s0 + $0xb0] sm:$0xff]
    %v71 = vld [vmem:[%s0 + $0xb8] sm:$0xff]
    %v72 = vld [vmem:[%s0 + $0xc0] sm:$0xff]
    %v73 = vld [vmem:[%s0 + $0xc8] sm:$0xff]
    %v74 = vld [vmem:[%s0 + $0xd0] sm:$0xff]
    %v75 = vld [vmem:[%s0 + $0xd8] sm:$0xff]
    %v76 = vld [vmem:[%s0 + $0xe0] sm:$0xff]
    %v77 = vld [vmem:[%s0 + $0xe8] sm:$0xff]
    %v78 = vld [vmem:[%s0 + $0xf0] sm:$0xff]
    %v79 = vld [vmem:[%s0 + $0xf8] sm:$0xff]
    %v80 = vld [vmem:[%s0 + $0x100] sm:$0xff]
    %v81 = vld [vmem:[%s0 + $0x108] sm:$0xff]
    %v82 = vld [vmem:[%s0 + $0x110] sm:$0xff]
    %v83 = vld [vmem:[%s0 + $0x118] sm:$0xff]
    %v84 = vld [vmem:[%s0 + $0x120] sm:$0xff]
    %v85 = vld [vmem:[%s0 + $0x128] sm:$0xff]
    %v86 = vld [vmem:[%s0 + $0x130] sm:$0xff]
    %v87 = vld [vmem:[%s0 + $0x138] sm:$0xff]
    %v88 = vld [vmem:[%s0 + $0x140] sm:$0xff]
    %v89 = vld [vmem:[%s0 + $0x148] sm:$0xff]
    %v90 = vld [vmem:[%s0 + $0x150] sm:$0xff]
    %v91 = vld [vmem:[%s0 + $0x158] sm:$0xff]
    %v92 = vld [vmem:[%s0 + $0x160] sm:$0xff]
    %v93 = vld [vmem:[%s0 + $0x168] sm:$0xff]
    %v94 = vld [vmem:[%s0 + $0x170] sm:$0xff]
    %v95 = vld [vmem:[%s0 + $0x178] sm:$0xff]
    %v96 = vld [vmem:[%s0 + $0x180] sm:$0xff]
    %v97 = vld [vmem:[%s0 + $0x188] sm:$0xff]
    %v98 = vld [vmem:[%s0 + $0x190] sm:$0xff]
    %v99 = vld [vmem:[%s0 + $0x198] sm:$0xff]
    %v100 = vld [vmem:[%s0 + $0x1a0] sm:$0xff]
    %v101 = vld [vmem:[%s0 + $0x1a8] sm:$0xff]
    %v102 = vld [vmem:[%s0 + $0x1b0] sm:$0xff]
    %v103 = vld [vmem:[%s0 + $0x1b8] sm:$0xff]
    %v104 = vld [vmem:[%s0 + $0x1c0] sm:$0xff]
    %v105 = vld [vmem:[%s0 + $0x1c8] sm:$0xff]
    %v106 = vld [vmem:[%s0 + $0x1d0] sm:$0xff]
    %v107 = vld [vmem:[%s0 + $0x1d8] sm:$0xff]
    %v108 = vld [vmem:[%s0 + $0x1e0] sm:$0xff]
    %v109 = vld [vmem:[%s0 + $0x1e8] sm:$0xff]
    %v110 = vld [vmem:[%s0 + $0x1f0] sm:$0xff]
    %v111 = vld [vmem:[%s0 + $0x1f8] sm:$0xff]
    %v112 = vld [vmem:[%s1] sm:$0xff]
    %v113 = vld [vmem:[%s1 + $0x8] sm:$0xff]
    %v114 = vld [vmem:[%s1 + $0x10] sm:$0xff]
    %v115 = vld [vmem:[%s1 + $0x18] sm:$0xff]
    %v116 = vld [vmem:[%s1 + $0x20] sm:$0xff]
    %v117 = vld [vmem:[%s1 + $0x28] sm:$0xff]
    %v118 = vld [vmem:[%s1 + $0x30] sm:$0xff]
    %v119 = vld [vmem:[%s1 + $0x38] sm:$0xff]
    %v120 = vld [vmem:[%s1 + $0x40] sm:$0xff]
    %v121 = vld [vmem:[%s1 + $0x48] sm:$0xff]
    %v122 = vld [vmem:[%s1 + $0x50] sm:$0xff]
    %v123 = vld [vmem:[%s1 + $0x58] sm:$0xff]
    %v124 = vld [vmem:[%s1 + $0x60] sm:$0xff]
    %v125 = vld [vmem:[%s1 + $0x68] sm:$0xff]
    %v126 = vld [vmem:[%s1 + $0x70] sm:$0xff]
    %v127 = vld [vmem:[%s1 + $0x78] sm:$0xff]
    %v128 = vld [vmem:[%s1 + $0x80] sm:$0xff]
    %v129 = vld [vmem:[%s1 + $0x88] sm:$0xff]
    %v130 = vld [vmem:[%s1 + $0x90] sm:$0xff]
    %v131 = vld [vmem:[%s1 + $0x98] sm:$0xff]
    %v132 = vld [vmem:[%s1 + $0xa0] sm:$0xff]
    %v133 = vld [vmem:[%s1 + $0xa8] sm:$0xff]
    %v134 = vld [vmem:[%s1 + $0xb0] sm:$0xff]
    %v135 = vld [vmem:[%s1 + $0xb8] sm:$0xff]
    %v136 = vld [vmem:[%s1 + $0xc0] sm:$0xff]
    %v137 = vld [vmem:[%s1 + $0xc8] sm:$0xff]
    %v138 = vld [vmem:[%s1 + $0xd0] sm:$0xff]
    %v139 = vld [vmem:[%s1 + $0xd8] sm:$0xff]
    %v140 = vld [vmem:[%s1 + $0xe0] sm:$0xff]
    %v141 = vld [vmem:[%s1 + $0xe8] sm:$0xff]
    %v142 = vld [vmem:[%s1 + $0xf0] sm:$0xff]
    %v143 = vld [vmem:[%s1 + $0xf8] sm:$0xff]
    %v144 = vld [vmem:[%s1 + $0x100] sm:$0xff]
    %v145 = vld [vmem:[%s1 + $0x108] sm:$0xff]
    %v146 = vld [vmem:[%s1 + $0x110] sm:$0xff]
    %v147 = vld [vmem:[%s1 + $0x118] sm:$0xff]
    %v148 = vld [vmem:[%s1 + $0x120] sm:$0xff]
    %v149 = vld [vmem:[%s1 + $0x128] sm:$0xff]
    %v150 = vld [vmem:[%s1 + $0x130] sm:$0xff]
    %v151 = vld [vmem:[%s1 + $0x138] sm:$0xff]
    %v152 = vld [vmem:[%s1 + $0x140] sm:$0xff]
    %v153 = vld [vmem:[%s1 + $0x148] sm:$0xff]
    %v154 = vld [vmem:[%s1 + $0x150] sm:$0xff]
    %v155 = vld [vmem:[%s1 + $0x158] sm:$0xff]
    %v156 = vld [vmem:[%s1 + $0x160] sm:$0xff]
    %v157 = vld [vmem:[%s1 + $0x168] sm:$0xff]
    %v158 = vld [vmem:[%s1 + $0x170] sm:$0xff]
    %v159 = vld [vmem:[%s1 + $0x178] sm:$0xff]
    %v160 = vld [vmem:[%s1 + $0x180] sm:$0xff]
    %v161 = vld [vmem:[%s1 + $0x188] sm:$0xff]
    %v162 = vld [vmem:[%s1 + $0x190] sm:$0xff]
    %v163 = vld [vmem:[%s1 + $0x198] sm:$0xff]
    %v164 = vld [vmem:[%s1 + $0x1a0] sm:$0xff]
    %v165 = vld [vmem:[%s1 + $0x1a8] sm:$0xff]
    %v166 = vld [vmem:[%s1 + $0x1b0] sm:$0xff]
    %v167 = vld [vmem:[%s1 + $0x1b8] sm:$0xff]
    %v168 = vld [vmem:[%s1 + $0x1c0] sm:$0xff]
    %v169 = vld [vmem:[%s1 + $0x1c8] sm:$0xff]
    %v170 = vld [vmem:[%s1 + $0x1d0] sm:$0xff]
    %v171 = vld [vmem:[%s1 + $0x1d8] sm:$0xff]
    %v172 = vld [vmem:[%s1 + $0x1e0] sm:$0xff]
    %v173 = vld [vmem:[%s1 + $0x1e8] sm:$0xff]
    %v174 = vld [vmem:[%s1 + $0x1f0] sm:$0xff]
    %v175 = vld [vmem:[%s1 + $0x1f8] sm:$0xff]
    %v176 = vld [vmem:[%s2] sm:$0x1]
    %v177 = vld [vmem:[%s3] sm:$0x1]
    %179 = vset.pattern.permute.xlu0 0
    %180 = vperm.xlu0 %179, %v48
    %v181 = vpop.permute.xlu0 %180
    %184 = vset.pattern.permute.xlu0 0
    %185 = vperm.xlu0 %184, %v49
    %v186 = vpop.permute.xlu0 %185
    %189 = vset.pattern.permute.xlu0 0
    %190 = vperm.xlu0 %189, %v50
    %v191 = vpop.permute.xlu0 %190
    %194 = vset.pattern.permute.xlu0 0
    %195 = vperm.xlu0 %194, %v51
    %v196 = vpop.permute.xlu0 %195
    %199 = vset.pattern.permute.xlu0 0
    %200 = vperm.xlu0 %199, %v52
    %v201 = vpop.permute.xlu0 %200
    %204 = vset.pattern.permute.xlu0 0
    %205 = vperm.xlu0 %204, %v53
    %v206 = vpop.permute.xlu0 %205
    %209 = vset.pattern.permute.xlu0 0
    %210 = vperm.xlu0 %209, %v54
    %v211 = vpop.permute.xlu0 %210
    %214 = vset.pattern.permute.xlu0 0
    %215 = vperm.xlu0 %214, %v55
    %v216 = vpop.permute.xlu0 %215
    %219 = vset.pattern.permute.xlu0 0
    %220 = vperm.xlu0 %219, %v56
    %v221 = vpop.permute.xlu0 %220
    %224 = vset.pattern.permute.xlu0 0
    %225 = vperm.xlu0 %224, %v57
    %v226 = vpop.permute.xlu0 %225
    %229 = vset.pattern.permute.xlu0 0
    %230 = vperm.xlu0 %229, %v58
    %v231 = vpop.permute.xlu0 %230
    %234 = vset.pattern.permute.xlu0 0
    %235 = vperm.xlu0 %234, %v59
    %v236 = vpop.permute.xlu0 %235
    %239 = vset.pattern.permute.xlu0 0
    %240 = vperm.xlu0 %239, %v60
    %v241 = vpop.permute.xlu0 %240
    %244 = vset.pattern.permute.xlu0 0
    %245 = vperm.xlu0 %244, %v61
    %v246 = vpop.permute.xlu0 %245
    %249 = vset.pattern.permute.xlu0 0
    %250 = vperm.xlu0 %249, %v62
    %v251 = vpop.permute.xlu0 %250
    %254 = vset.pattern.permute.xlu0 0
    %255 = vperm.xlu0 %254, %v63
    %v256 = vpop.permute.xlu0 %255
    %259 = vset.pattern.permute.xlu0 0
    %260 = vperm.xlu0 %259, %v64
    %v261 = vpop.permute.xlu0 %260
    %264 = vset.pattern.permute.xlu0 0
    %265 = vperm.xlu0 %264, %v65
    %v266 = vpop.permute.xlu0 %265
    %269 = vset.pattern.permute.xlu0 0
    %270 = vperm.xlu0 %269, %v66
    %v271 = vpop.permute.xlu0 %270
    %274 = vset.pattern.permute.xlu0 0
    %275 = vperm.xlu0 %274, %v67
    %v276 = vpop.permute.xlu0 %275
    %279 = vset.pattern.permute.xlu0 0
    %280 = vperm.xlu0 %279, %v68
    %v281 = vpop.permute.xlu0 %280
    %284 = vset.pattern.permute.xlu0 0
    %285 = vperm.xlu0 %284, %v69
    %v286 = vpop.permute.xlu0 %285
    %289 = vset.pattern.permute.xlu0 0
    %290 = vperm.xlu0 %289, %v70
    %v291 = vpop.permute.xlu0 %290
    %294 = vset.pattern.permute.xlu0 0
    %295 = vperm.xlu0 %294, %v71
    %v296 = vpop.permute.xlu0 %295
    %299 = vset.pattern.permute.xlu0 0
    %300 = vperm.xlu0 %299, %v72
    %v301 = vpop.permute.xlu0 %300
    %304 = vset.pattern.permute.xlu0 0
    %305 = vperm.xlu0 %304, %v73
    %v306 = vpop.permute.xlu0 %305
    %309 = vset.pattern.permute.xlu0 0
    %310 = vperm.xlu0 %309, %v74
    %v311 = vpop.permute.xlu0 %310
    %314 = vset.pattern.permute.xlu0 0
    %315 = vperm.xlu0 %314, %v75
    %v316 = vpop.permute.xlu0 %315
    %319 = vset.pattern.permute.xlu0 0
    %320 = vperm.xlu0 %319, %v76
    %v321 = vpop.permute.xlu0 %320
    %324 = vset.pattern.permute.xlu0 0
    %325 = vperm.xlu0 %324, %v77
    %v326 = vpop.permute.xlu0 %325
    %329 = vset.pattern.permute.xlu0 0
    %330 = vperm.xlu0 %329, %v78
    %v331 = vpop.permute.xlu0 %330
    %334 = vset.pattern.permute.xlu0 0
    %335 = vperm.xlu0 %334, %v79
    %v336 = vpop.permute.xlu0 %335
    %339 = vset.pattern.permute.xlu0 0
    %340 = vperm.xlu0 %339, %v80
    %v341 = vpop.permute.xlu0 %340
    %344 = vset.pattern.permute.xlu0 0
    %345 = vperm.xlu0 %344, %v81
    %v346 = vpop.permute.xlu0 %345
    %349 = vset.pattern.permute.xlu0 0
    %350 = vperm.xlu0 %349, %v82
    %v351 = vpop.permute.xlu0 %350
    %354 = vset.pattern.permute.xlu0 0
    %355 = vperm.xlu0 %354, %v83
    %v356 = vpop.permute.xlu0 %355
    %359 = vset.pattern.permute.xlu0 0
    %360 = vperm.xlu0 %359, %v84
    %v361 = vpop.permute.xlu0 %360
    %364 = vset.pattern.permute.xlu0 0
    %365 = vperm.xlu0 %364, %v85
    %v366 = vpop.permute.xlu0 %365
    %369 = vset.pattern.permute.xlu0 0
    %370 = vperm.xlu0 %369, %v86
    %v371 = vpop.permute.xlu0 %370
    %374 = vset.pattern.permute.xlu0 0
    %375 = vperm.xlu0 %374, %v87
    %v376 = vpop.permute.xlu0 %375
    %379 = vset.pattern.permute.xlu0 0
    %380 = vperm.xlu0 %379, %v88
    %v381 = vpop.permute.xlu0 %380
    %384 = vset.pattern.permute.xlu0 0
    %385 = vperm.xlu0 %384, %v89
    %v386 = vpop.permute.xlu0 %385
    %389 = vset.pattern.permute.xlu0 0
    %390 = vperm.xlu0 %389, %v90
    %v391 = vpop.permute.xlu0 %390
    %394 = vset.pattern.permute.xlu0 0
    %395 = vperm.xlu0 %394, %v91
    %v396 = vpop.permute.xlu0 %395
    %399 = vset.pattern.permute.xlu0 0
    %400 = vperm.xlu0 %399, %v92
    %v401 = vpop.permute.xlu0 %400
    %404 = vset.pattern.permute.xlu0 0
    %405 = vperm.xlu0 %404, %v93
    %v406 = vpop.permute.xlu0 %405
    %409 = vset.pattern.permute.xlu0 0
    %410 = vperm.xlu0 %409, %v94
    %v411 = vpop.permute.xlu0 %410
    %414 = vset.pattern.permute.xlu0 0
    %415 = vperm.xlu0 %414, %v95
    %v416 = vpop.permute.xlu0 %415
    %419 = vset.pattern.permute.xlu0 0
    %420 = vperm.xlu0 %419, %v96
    %v421 = vpop.permute.xlu0 %420
    %424 = vset.pattern.permute.xlu0 0
    %425 = vperm.xlu0 %424, %v97
    %v426 = vpop.permute.xlu0 %425
    %429 = vset.pattern.permute.xlu0 0
    %430 = vperm.xlu0 %429, %v98
    %v431 = vpop.permute.xlu0 %430
    %434 = vset.pattern.permute.xlu0 0
    %435 = vperm.xlu0 %434, %v99
    %v436 = vpop.permute.xlu0 %435
    %439 = vset.pattern.permute.xlu0 0
    %440 = vperm.xlu0 %439, %v100
    %v441 = vpop.permute.xlu0 %440
    %444 = vset.pattern.permute.xlu0 0
    %445 = vperm.xlu0 %444, %v101
    %v446 = vpop.permute.xlu0 %445
    %449 = vset.pattern.permute.xlu0 0
    %450 = vperm.xlu0 %449, %v102
    %v451 = vpop.permute.xlu0 %450
    %454 = vset.pattern.permute.xlu0 0
    %455 = vperm.xlu0 %454, %v103
    %v456 = vpop.permute.xlu0 %455
    %459 = vset.pattern.permute.xlu0 0
    %460 = vperm.xlu0 %459, %v104
    %v461 = vpop.permute.xlu0 %460
    %464 = vset.pattern.permute.xlu0 0
    %465 = vperm.xlu0 %464, %v105
    %v466 = vpop.permute.xlu0 %465
    %469 = vset.pattern.permute.xlu0 0
    %470 = vperm.xlu0 %469, %v106
    %v471 = vpop.permute.xlu0 %470
    %474 = vset.pattern.permute.xlu0 0
    %475 = vperm.xlu0 %474, %v107
    %v476 = vpop.permute.xlu0 %475
    %479 = vset.pattern.permute.xlu0 0
    %480 = vperm.xlu0 %479, %v108
    %v481 = vpop.permute.xlu0 %480
    %484 = vset.pattern.permute.xlu0 0
    %485 = vperm.xlu0 %484, %v109
    %v486 = vpop.permute.xlu0 %485
    %489 = vset.pattern.permute.xlu0 0
    %490 = vperm.xlu0 %489, %v110
    %v491 = vpop.permute.xlu0 %490
    %494 = vset.pattern.permute.xlu0 0
    %495 = vperm.xlu0 %494, %v111
    %v496 = vpop.permute.xlu0 %495
    %v499 = vlaneseq
    %v500 = vshrl.u32 %v499, 7
    %v501 = vsub.s32 0, %v500
    %v502 = vrot.slane %v176, %v501
    %v504 = vmul.f32 %v181, %v502
    %v505 = vmul.f32 %v186, %v502
    %v506 = vmul.f32 %v191, %v502
    %v507 = vmul.f32 %v196, %v502
    %v508 = vmul.f32 %v201, %v502
    %v509 = vmul.f32 %v206, %v502
    %v510 = vmul.f32 %v211, %v502
    %v511 = vmul.f32 %v216, %v502
    %v512 = vmul.f32 %v221, %v502
    %v513 = vmul.f32 %v226, %v502
    %v514 = vmul.f32 %v231, %v502
    %v515 = vmul.f32 %v236, %v502
    %v516 = vmul.f32 %v241, %v502
    %v517 = vmul.f32 %v246, %v502
    %v518 = vmul.f32 %v251, %v502
    %v519 = vmul.f32 %v256, %v502
    %v520 = vmul.f32 %v261, %v502
    %v521 = vmul.f32 %v266, %v502
    %v522 = vmul.f32 %v271, %v502
    %v523 = vmul.f32 %v276, %v502
    %v524 = vmul.f32 %v281, %v502
    %v525 = vmul.f32 %v286, %v502
    %v526 = vmul.f32 %v291, %v502
    %v527 = vmul.f32 %v296, %v502
    %v528 = vmul.f32 %v301, %v502
    %v529 = vmul.f32 %v306, %v502
    %v530 = vmul.f32 %v311, %v502
    %v531 = vmul.f32 %v316, %v502
    %v532 = vmul.f32 %v321, %v502
    %v533 = vmul.f32 %v326, %v502
    %v534 = vmul.f32 %v331, %v502
    %v535 = vmul.f32 %v336, %v502
    %v536 = vmul.f32 %v341, %v502
    %v537 = vmul.f32 %v346, %v502
    %v538 = vmul.f32 %v351, %v502
    %v539 = vmul.f32 %v356, %v502
    %v540 = vmul.f32 %v361, %v502
    %v541 = vmul.f32 %v366, %v502
    %v542 = vmul.f32 %v371, %v502
    %v543 = vmul.f32 %v376, %v502
    %v544 = vmul.f32 %v381, %v502
    %v545 = vmul.f32 %v386, %v502
    %v546 = vmul.f32 %v391, %v502
    %v547 = vmul.f32 %v396, %v502
    %v548 = vmul.f32 %v401, %v502
    %v549 = vmul.f32 %v406, %v502
    %v550 = vmul.f32 %v411, %v502
    %v551 = vmul.f32 %v416, %v502
    %v552 = vmul.f32 %v421, %v502
    %v553 = vmul.f32 %v426, %v502
    %v554 = vmul.f32 %v431, %v502
    %v555 = vmul.f32 %v436, %v502
    %v556 = vmul.f32 %v441, %v502
    %v557 = vmul.f32 %v446, %v502
    %v558 = vmul.f32 %v451, %v502
    %v559 = vmul.f32 %v456, %v502
    %v560 = vmul.f32 %v461, %v502
    %v561 = vmul.f32 %v466, %v502
    %v562 = vmul.f32 %v471, %v502
    %v563 = vmul.f32 %v476, %v502
    %v564 = vmul.f32 %v481, %v502
    %v565 = vmul.f32 %v486, %v502
    %v566 = vmul.f32 %v491, %v502
    %v567 = vmul.f32 %v496, %v502
    %v569 = vlaneseq
    %v570 = vshrl.u32 %v569, 7
    %v571 = vsub.s32 0, %v570
    %v572 = vrot.slane %v177, %v571
    %v574 = vadd.f32 %v504, %v572
    %v575 = vadd.f32 %v505, %v572
    %v576 = vadd.f32 %v506, %v572
    %v577 = vadd.f32 %v507, %v572
    %v578 = vadd.f32 %v508, %v572
    %v579 = vadd.f32 %v509, %v572
    %v580 = vadd.f32 %v510, %v572
    %v581 = vadd.f32 %v511, %v572
    %v582 = vadd.f32 %v512, %v572
    %v583 = vadd.f32 %v513, %v572
    %v584 = vadd.f32 %v514, %v572
    %v585 = vadd.f32 %v515, %v572
    %v586 = vadd.f32 %v516, %v572
    %v587 = vadd.f32 %v517, %v572
    %v588 = vadd.f32 %v518, %v572
    %v589 = vadd.f32 %v519, %v572
    %v590 = vadd.f32 %v520, %v572
    %v591 = vadd.f32 %v521, %v572
    %v592 = vadd.f32 %v522, %v572
    %v593 = vadd.f32 %v523, %v572
    %v594 = vadd.f32 %v524, %v572
    %v595 = vadd.f32 %v525, %v572
    %v596 = vadd.f32 %v526, %v572
    %v597 = vadd.f32 %v527, %v572
    %v598 = vadd.f32 %v528, %v572
    %v599 = vadd.f32 %v529, %v572
    %v600 = vadd.f32 %v530, %v572
    %v601 = vadd.f32 %v531, %v572
    %v602 = vadd.f32 %v532, %v572
    %v603 = vadd.f32 %v533, %v572
    %v604 = vadd.f32 %v534, %v572
    %v605 = vadd.f32 %v535, %v572
    %v606 = vadd.f32 %v536, %v572
    %v607 = vadd.f32 %v537, %v572
    %v608 = vadd.f32 %v538, %v572
    %v609 = vadd.f32 %v539, %v572
    %v610 = vadd.f32 %v540, %v572
    %v611 = vadd.f32 %v541, %v572
    %v612 = vadd.f32 %v542, %v572
    %v613 = vadd.f32 %v543, %v572
    %v614 = vadd.f32 %v544, %v572
    %v615 = vadd.f32 %v545, %v572
    %v616 = vadd.f32 %v546, %v572
    %v617 = vadd.f32 %v547, %v572
    %v618 = vadd.f32 %v548, %v572
    %v619 = vadd.f32 %v549, %v572
    %v620 = vadd.f32 %v550, %v572
    %v621 = vadd.f32 %v551, %v572
    %v622 = vadd.f32 %v552, %v572
    %v623 = vadd.f32 %v553, %v572
    %v624 = vadd.f32 %v554, %v572
    %v625 = vadd.f32 %v555, %v572
    %v626 = vadd.f32 %v556, %v572
    %v627 = vadd.f32 %v557, %v572
    %v628 = vadd.f32 %v558, %v572
    %v629 = vadd.f32 %v559, %v572
    %v630 = vadd.f32 %v560, %v572
    %v631 = vadd.f32 %v561, %v572
    %v632 = vadd.f32 %v562, %v572
    %v633 = vadd.f32 %v563, %v572
    %v634 = vadd.f32 %v564, %v572
    %v635 = vadd.f32 %v565, %v572
    %v636 = vadd.f32 %v566, %v572
    %v637 = vadd.f32 %v567, %v572
    %v638 = vmax.f32 %v574, 0.0
    %v639 = vmax.f32 %v575, 0.0
    %v640 = vmax.f32 %v576, 0.0
    %v641 = vmax.f32 %v577, 0.0
    %v642 = vmax.f32 %v578, 0.0
    %v643 = vmax.f32 %v579, 0.0
    %v644 = vmax.f32 %v580, 0.0
    %v645 = vmax.f32 %v581, 0.0
    %v646 = vmax.f32 %v582, 0.0
    %v647 = vmax.f32 %v583, 0.0
    %v648 = vmax.f32 %v584, 0.0
    %v649 = vmax.f32 %v585, 0.0
    %v650 = vmax.f32 %v586, 0.0
    %v651 = vmax.f32 %v587, 0.0
    %v652 = vmax.f32 %v588, 0.0
    %v653 = vmax.f32 %v589, 0.0
    %v654 = vmax.f32 %v590, 0.0
    %v655 = vmax.f32 %v591, 0.0
    %v656 = vmax.f32 %v592, 0.0
    %v657 = vmax.f32 %v593, 0.0
    %v658 = vmax.f32 %v594, 0.0
    %v659 = vmax.f32 %v595, 0.0
    %v660 = vmax.f32 %v596, 0.0
    %v661 = vmax.f32 %v597, 0.0
    %v662 = vmax.f32 %v598, 0.0
    %v663 = vmax.f32 %v599, 0.0
    %v664 = vmax.f32 %v600, 0.0
    %v665 = vmax.f32 %v601, 0.0
    %v666 = vmax.f32 %v602, 0.0
    %v667 = vmax.f32 %v603, 0.0
    %v668 = vmax.f32 %v604, 0.0
    %v669 = vmax.f32 %v605, 0.0
    %v670 = vmax.f32 %v606, 0.0
    %v671 = vmax.f32 %v607, 0.0
    %v672 = vmax.f32 %v608, 0.0
    %v673 = vmax.f32 %v609, 0.0
    %v674 = vmax.f32 %v610, 0.0
    %v675 = vmax.f32 %v611, 0.0
    %v676 = vmax.f32 %v612, 0.0
    %v677 = vmax.f32 %v613, 0.0
    %v678 = vmax.f32 %v614, 0.0
    %v679 = vmax.f32 %v615, 0.0
    %v680 = vmax.f32 %v616, 0.0
    %v681 = vmax.f32 %v617, 0.0
    %v682 = vmax.f32 %v618, 0.0
    %v683 = vmax.f32 %v619, 0.0
    %v684 = vmax.f32 %v620, 0.0
    %v685 = vmax.f32 %v621, 0.0
    %v686 = vmax.f32 %v622, 0.0
    %v687 = vmax.f32 %v623, 0.0
    %v688 = vmax.f32 %v624, 0.0
    %v689 = vmax.f32 %v625, 0.0
    %v690 = vmax.f32 %v626, 0.0
    %v691 = vmax.f32 %v627, 0.0
    %v692 = vmax.f32 %v628, 0.0
    %v693 = vmax.f32 %v629, 0.0
    %v694 = vmax.f32 %v630, 0.0
    %v695 = vmax.f32 %v631, 0.0
    %v696 = vmax.f32 %v632, 0.0
    %v697 = vmax.f32 %v633, 0.0
    %v698 = vmax.f32 %v634, 0.0
    %v699 = vmax.f32 %v635, 0.0
    %v700 = vmax.f32 %v636, 0.0
    %v701 = vmax.f32 %v637, 0.0
    %v702 = vld [vmem:[%s4] sm:$0xff]
    %v703 = vld [vmem:[%s4 + $0x8] sm:$0xff]
    %v704 = vld [vmem:[%s4 + $0x10] sm:$0xff]
    %v705 = vld [vmem:[%s4 + $0x18] sm:$0xff]
    %v706 = vld [vmem:[%s5] sm:$0x1]
    %v708 = vlaneseq
    %v709 = vshrl.u32 %v708, 7
    %v710 = vsub.s32 0, %v709
    %v711 = vrot.slane %v706, %v710
    %vm713 = vcmask 261120
    %v715 = vsel %vm713, %v638, 0
    %v718 = vsel %vm713, %v639, 0
    %v721 = vsel %vm713, %v640, 0
    %v724 = vsel %vm713, %v641, 0
    %v727 = vsel %vm713, %v642, 0
    %v730 = vsel %vm713, %v643, 0
    %v733 = vsel %vm713, %v644, 0
    %v736 = vsel %vm713, %v645, 0
    %v739 = vsel %vm713, %v646, 0
    %v742 = vsel %vm713, %v647, 0
    %v745 = vsel %vm713, %v648, 0
    %v748 = vsel %vm713, %v649, 0
    %v751 = vsel %vm713, %v650, 0
    %v754 = vsel %vm713, %v651, 0
    %v757 = vsel %vm713, %v652, 0
    %v760 = vsel %vm713, %v653, 0
    %v763 = vsel %vm713, %v654, 0
    %v766 = vsel %vm713, %v655, 0
    %v769 = vsel %vm713, %v656, 0
    %v772 = vsel %vm713, %v657, 0
    %v775 = vsel %vm713, %v658, 0
    %v778 = vsel %vm713, %v659, 0
    %v781 = vsel %vm713, %v660, 0
    %v784 = vsel %vm713, %v661, 0
    %v787 = vsel %vm713, %v662, 0
    %v790 = vsel %vm713, %v663, 0
    %v793 = vsel %vm713, %v664, 0
    %v796 = vsel %vm713, %v665, 0
    %v799 = vsel %vm713, %v666, 0
    %v802 = vsel %vm713, %v667, 0
    %v805 = vsel %vm713, %v668, 0
    %v808 = vsel %vm713, %v669, 0
    %v811 = vsel %vm713, %v670, 0
    %v814 = vsel %vm713, %v671, 0
    %v817 = vsel %vm713, %v672, 0
    %v820 = vsel %vm713, %v673, 0
    %v823 = vsel %vm713, %v674, 0
    %v826 = vsel %vm713, %v675, 0
    %v829 = vsel %vm713, %v676, 0
    %v832 = vsel %vm713, %v677, 0
    %v835 = vsel %vm713, %v678, 0
    %v838 = vsel %vm713, %v679, 0
    %v841 = vsel %vm713, %v680, 0
    %v844 = vsel %vm713, %v681, 0
    %v847 = vsel %vm713, %v682, 0
    %v850 = vsel %vm713, %v683, 0
    %v853 = vsel %vm713, %v684, 0
    %v856 = vsel %vm713, %v685, 0
    %v859 = vsel %vm713, %v686, 0
    %v862 = vsel %vm713, %v687, 0
    %v865 = vsel %vm713, %v688, 0
    %v868 = vsel %vm713, %v689, 0
    %v871 = vsel %vm713, %v690, 0
    %v874 = vsel %vm713, %v691, 0
    %v877 = vsel %vm713, %v692, 0
    %v880 = vsel %vm713, %v693, 0
    %v883 = vsel %vm713, %v694, 0
    %v886 = vsel %vm713, %v695, 0
    %v889 = vsel %vm713, %v696, 0
    %v892 = vsel %vm713, %v697, 0
    %v895 = vsel %vm713, %v698, 0
    %v898 = vsel %vm713, %v699, 0
    %v901 = vsel %vm713, %v700, 0
    %v904 = vsel %vm713, %v701, 0
    %906 = vmatprep.subr.mxu0 0.0
    %907 = vmatpush1.msra.mxu0 0.0
    %908 = vmatprep.subr.mxu0 0.0
    %909 = vmatpush1.msra.mxu0 0.0
    %910 = vmatprep.subr.mxu0 0.0
    %911 = vmatpush1.msra.mxu0 0.0
    %912 = vmatprep.subr.mxu0 0.0
    %913 = vmatpush1.msra.mxu0 0.0
    %914 = vmatprep.subr.mxu0 0.0
    %915 = vmatpush1.msra.mxu0 0.0
    %916 = vmatprep.subr.mxu0 0.0
    %917 = vmatpush1.msra.mxu0 0.0
    %918 = vmatprep.subr.mxu0 0.0
    %919 = vmatpush1.msra.mxu0 0.0
    %920 = vmatprep.subr.mxu0 0.0
    %921 = vmatpush1.msra.mxu0 0.0
    %922 = vmatprep.subr.mxu0 0.0
    %923 = vmatpush1.msra.mxu0 0.0
    %924 = vmatprep.subr.mxu0 0.0
    %925 = vmatpush1.msra.mxu0 0.0
    %926 = vmatprep.subr.mxu0 0.0
    %927 = vmatpush1.msra.mxu0 0.0
    %928 = vmatprep.subr.mxu0 0.0
    %929 = vmatpush1.msra.mxu0 0.0
    %930 = vmatprep.subr.mxu0 0.0
    %931 = vmatpush1.msra.mxu0 %v705
    %932 = vmatprep.subr.mxu0 0.0
    %933 = vmatpush1.msra.mxu0 %v704
    %934 = vmatprep.subr.mxu0 0.0
    %935 = vmatpush1.msra.mxu0 %v703
    %936 = vmatprep.subr.mxu0 0.0
    %937 = vmatpush1.msra.mxu0 %v702
    %938 = vmatprep.subr.mxu0 0.0
    %939 = vmatpush2.msra.mxu0 0.0
    %940 = vmatprep.subr.mxu0 0.0
    %941 = vmatpush2.msra.mxu0 0.0
    %942 = vmatprep.subr.mxu0 0.0
    %943 = vmatpush2.msra.mxu0 0.0
    %944 = vmatprep.subr.mxu0 0.0
    %945 = vmatpush2.msra.mxu0 0.0
    %946 = vmatprep.subr.mxu0 0.0
    %947 = vmatpush2.msra.mxu0 0.0
    %948 = vmatprep.subr.mxu0 0.0
    %949 = vmatpush2.msra.mxu0 0.0
    %950 = vmatprep.subr.mxu0 0.0
    %951 = vmatpush2.msra.mxu0 0.0
    %952 = vmatprep.subr.mxu0 0.0
    %953 = vmatpush2.msra.mxu0 0.0
    %954 = vmatprep.subr.mxu0 0.0
    %955 = vmatpush2.msra.mxu0 0.0
    %956 = vmatprep.subr.mxu0 0.0
    %957 = vmatpush2.msra.mxu0 0.0
    %958 = vmatprep.subr.mxu0 0.0
    %959 = vmatpush2.msra.mxu0 0.0
    %960 = vmatprep.subr.mxu0 0.0
    %961 = vmatpush2.msra.mxu0 0.0
    %962 = vmatprep.subr.mxu0 0.0
    %963 = vmatpush2.msra.mxu0 0.0
    %964 = vmatprep.subr.mxu0 0.0
    %965 = vmatpush2.msra.mxu0 0.0
    %966 = vmatprep.subr.mxu0 0.0
    %967 = vmatpush2.msra.mxu0 0.0
    %968 = vmatprep.subr.mxu0 0.0
    %969 = vmatpush2.msra.mxu0 0.0
    %970 = vmatprep.mubr.f32.mxu0 0.0
    %971 = vmatmul.mubr.f32.gmra.mxu0 %v715
    %v972 = vpop.f32.mrf.mxu0
    %v973 = vadd.f32 %v711, %v972
    %v974 = vpop.f32.mrf.mxu0
    %975 = vmatprep.mubr.f32.mxu0 0.0
    %976 = vmatmul.mubr.f32.gmra.mxu0 %v718
    %v977 = vpop.f32.mrf.mxu0
    %v978 = vadd.f32 %v711, %v977
    %v979 = vpop.f32.mrf.mxu0
    %980 = vmatprep.mubr.f32.mxu0 0.0
    %981 = vmatmul.mubr.f32.gmra.mxu0 %v721
    %v982 = vpop.f32.mrf.mxu0
    %v983 = vadd.f32 %v711, %v982
    %v984 = vpop.f32.mrf.mxu0
    %985 = vmatprep.mubr.f32.mxu0 0.0
    %986 = vmatmul.mubr.f32.gmra.mxu0 %v724
    %v987 = vpop.f32.mrf.mxu0
    %v988 = vadd.f32 %v711, %v987
    %v989 = vpop.f32.mrf.mxu0
    %990 = vmatprep.mubr.f32.mxu0 0.0
    %991 = vmatmul.mubr.f32.gmra.mxu0 %v727
    %v992 = vpop.f32.mrf.mxu0
    %v993 = vadd.f32 %v711, %v992
    %v994 = vpop.f32.mrf.mxu0
    %995 = vmatprep.mubr.f32.mxu0 0.0
    %996 = vmatmul.mubr.f32.gmra.mxu0 %v730
    %v997 = vpop.f32.mrf.mxu0
    %v998 = vadd.f32 %v711, %v997
    %v999 = vpop.f32.mrf.mxu0
    %1000 = vmatprep.mubr.f32.mxu0 0.0
    %1001 = vmatmul.mubr.f32.gmra.mxu0 %v733
    %v1002 = vpop.f32.mrf.mxu0
    %v1003 = vadd.f32 %v711, %v1002
    %v1004 = vpop.f32.mrf.mxu0
    %1005 = vmatprep.mubr.f32.mxu0 0.0
    %1006 = vmatmul.mubr.f32.gmra.mxu0 %v736
    %v1007 = vpop.f32.mrf.mxu0
    %v1008 = vadd.f32 %v711, %v1007
    %v1009 = vpop.f32.mrf.mxu0
    %1010 = vmatprep.mubr.f32.mxu0 0.0
    %1011 = vmatmul.mubr.f32.gmra.mxu0 %v739
    %v1012 = vpop.f32.mrf.mxu0
    %v1013 = vadd.f32 %v711, %v1012
    %v1014 = vpop.f32.mrf.mxu0
    %1015 = vmatprep.mubr.f32.mxu0 0.0
    %1016 = vmatmul.mubr.f32.gmra.mxu0 %v742
    %v1017 = vpop.f32.mrf.mxu0
    %v1018 = vadd.f32 %v711, %v1017
    %v1019 = vpop.f32.mrf.mxu0
    %1020 = vmatprep.mubr.f32.mxu0 0.0
    %1021 = vmatmul.mubr.f32.gmra.mxu0 %v745
    %v1022 = vpop.f32.mrf.mxu0
    %v1023 = vadd.f32 %v711, %v1022
    %v1024 = vpop.f32.mrf.mxu0
    %1025 = vmatprep.mubr.f32.mxu0 0.0
    %1026 = vmatmul.mubr.f32.gmra.mxu0 %v748
    %v1027 = vpop.f32.mrf.mxu0
    %v1028 = vadd.f32 %v711, %v1027
    %v1029 = vpop.f32.mrf.mxu0
    %1030 = vmatprep.mubr.f32.mxu0 0.0
    %1031 = vmatmul.mubr.f32.gmra.mxu0 %v751
    %v1032 = vpop.f32.mrf.mxu0
    %v1033 = vadd.f32 %v711, %v1032
    %v1034 = vpop.f32.mrf.mxu0
    %1035 = vmatprep.mubr.f32.mxu0 0.0
    %1036 = vmatmul.mubr.f32.gmra.mxu0 %v754
    %v1037 = vpop.f32.mrf.mxu0
    %v1038 = vadd.f32 %v711, %v1037
    %v1039 = vpop.f32.mrf.mxu0
    %1040 = vmatprep.mubr.f32.mxu0 0.0
    %1041 = vmatmul.mubr.f32.gmra.mxu0 %v757
    %v1042 = vpop.f32.mrf.mxu0
    %v1043 = vadd.f32 %v711, %v1042
    %v1044 = vpop.f32.mrf.mxu0
    %1045 = vmatprep.mubr.f32.mxu0 0.0
    %1046 = vmatmul.mubr.f32.gmra.mxu0 %v760
    %v1047 = vpop.f32.mrf.mxu0
    %v1048 = vadd.f32 %v711, %v1047
    %v1049 = vpop.f32.mrf.mxu0
    %1050 = vmatprep.mubr.f32.mxu0 0.0
    %1051 = vmatmul.mubr.f32.gmra.mxu0 %v763
    %v1052 = vpop.f32.mrf.mxu0
    %v1053 = vadd.f32 %v711, %v1052
    %v1054 = vpop.f32.mrf.mxu0
    %1055 = vmatprep.mubr.f32.mxu0 0.0
    %1056 = vmatmul.mubr.f32.gmra.mxu0 %v766
    %v1057 = vpop.f32.mrf.mxu0
    %v1058 = vadd.f32 %v711, %v1057
    %v1059 = vpop.f32.mrf.mxu0
    %1060 = vmatprep.mubr.f32.mxu0 0.0
    %1061 = vmatmul.mubr.f32.gmra.mxu0 %v769
    %v1062 = vpop.f32.mrf.mxu0
    %v1063 = vadd.f32 %v711, %v1062
    %v1064 = vpop.f32.mrf.mxu0
    %1065 = vmatprep.mubr.f32.mxu0 0.0
    %1066 = vmatmul.mubr.f32.gmra.mxu0 %v772
    %v1067 = vpop.f32.mrf.mxu0
    %v1068 = vadd.f32 %v711, %v1067
    %v1069 = vpop.f32.mrf.mxu0
    %1070 = vmatprep.mubr.f32.mxu0 0.0
    %1071 = vmatmul.mubr.f32.gmra.mxu0 %v775
    %v1072 = vpop.f32.mrf.mxu0
    %v1073 = vadd.f32 %v711, %v1072
    %v1074 = vpop.f32.mrf.mxu0
    %1075 = vmatprep.mubr.f32.mxu0 0.0
    %1076 = vmatmul.mubr.f32.gmra.mxu0 %v778
    %v1077 = vpop.f32.mrf.mxu0
    %v1078 = vadd.f32 %v711, %v1077
    %v1079 = vpop.f32.mrf.mxu0
    %1080 = vmatprep.mubr.f32.mxu0 0.0
    %1081 = vmatmul.mubr.f32.gmra.mxu0 %v781
    %v1082 = vpop.f32.mrf.mxu0
    %v1083 = vadd.f32 %v711, %v1082
    %v1084 = vpop.f32.mrf.mxu0
    %1085 = vmatprep.mubr.f32.mxu0 0.0
    %1086 = vmatmul.mubr.f32.gmra.mxu0 %v784
    %v1087 = vpop.f32.mrf.mxu0
    %v1088 = vadd.f32 %v711, %v1087
    %v1089 = vpop.f32.mrf.mxu0
    %1090 = vmatprep.mubr.f32.mxu0 0.0
    %1091 = vmatmul.mubr.f32.gmra.mxu0 %v787
    %v1092 = vpop.f32.mrf.mxu0
    %v1093 = vadd.f32 %v711, %v1092
    %v1094 = vpop.f32.mrf.mxu0
    %1095 = vmatprep.mubr.f32.mxu0 0.0
    %1096 = vmatmul.mubr.f32.gmra.mxu0 %v790
    %v1097 = vpop.f32.mrf.mxu0
    %v1098 = vadd.f32 %v711, %v1097
    %v1099 = vpop.f32.mrf.mxu0
    %1100 = vmatprep.mubr.f32.mxu0 0.0
    %1101 = vmatmul.mubr.f32.gmra.mxu0 %v793
    %v1102 = vpop.f32.mrf.mxu0
    %v1103 = vadd.f32 %v711, %v1102
    %v1104 = vpop.f32.mrf.mxu0
    %1105 = vmatprep.mubr.f32.mxu0 0.0
    %1106 = vmatmul.mubr.f32.gmra.mxu0 %v796
    %v1107 = vpop.f32.mrf.mxu0
    %v1108 = vadd.f32 %v711, %v1107
    %v1109 = vpop.f32.mrf.mxu0
    %1110 = vmatprep.mubr.f32.mxu0 0.0
    %1111 = vmatmul.mubr.f32.gmra.mxu0 %v799
    %v1112 = vpop.f32.mrf.mxu0
    %v1113 = vadd.f32 %v711, %v1112
    %v1114 = vpop.f32.mrf.mxu0
    %1115 = vmatprep.mubr.f32.mxu0 0.0
    %1116 = vmatmul.mubr.f32.gmra.mxu0 %v802
    %v1117 = vpop.f32.mrf.mxu0
    %v1118 = vadd.f32 %v711, %v1117
    %v1119 = vpop.f32.mrf.mxu0
    %1120 = vmatprep.mubr.f32.mxu0 0.0
    %1121 = vmatmul.mubr.f32.gmra.mxu0 %v805
    %v1122 = vpop.f32.mrf.mxu0
    %v1123 = vadd.f32 %v711, %v1122
    %v1124 = vpop.f32.mrf.mxu0
    %1125 = vmatprep.mubr.f32.mxu0 0.0
    %1126 = vmatmul.mubr.f32.gmra.mxu0 %v808
    %v1127 = vpop.f32.mrf.mxu0
    %v1128 = vadd.f32 %v711, %v1127
    %v1129 = vpop.f32.mrf.mxu0
    %1130 = vmatprep.mubr.f32.mxu0 0.0
    %1131 = vmatmul.mubr.f32.gmra.mxu0 %v811
    %v1132 = vpop.f32.mrf.mxu0
    %v1133 = vadd.f32 %v711, %v1132
    %v1134 = vpop.f32.mrf.mxu0
    %1135 = vmatprep.mubr.f32.mxu0 0.0
    %1136 = vmatmul.mubr.f32.gmra.mxu0 %v814
    %v1137 = vpop.f32.mrf.mxu0
    %v1138 = vadd.f32 %v711, %v1137
    %v1139 = vpop.f32.mrf.mxu0
    %1140 = vmatprep.mubr.f32.mxu0 0.0
    %1141 = vmatmul.mubr.f32.gmra.mxu0 %v817
    %v1142 = vpop.f32.mrf.mxu0
    %v1143 = vadd.f32 %v711, %v1142
    %v1144 = vpop.f32.mrf.mxu0
    %1145 = vmatprep.mubr.f32.mxu0 0.0
    %1146 = vmatmul.mubr.f32.gmra.mxu0 %v820
    %v1147 = vpop.f32.mrf.mxu0
    %v1148 = vadd.f32 %v711, %v1147
    %v1149 = vpop.f32.mrf.mxu0
    %1150 = vmatprep.mubr.f32.mxu0 0.0
    %1151 = vmatmul.mubr.f32.gmra.mxu0 %v823
    %v1152 = vpop.f32.mrf.mxu0
    %v1153 = vadd.f32 %v711, %v1152
    %v1154 = vpop.f32.mrf.mxu0
    %1155 = vmatprep.mubr.f32.mxu0 0.0
    %1156 = vmatmul.mubr.f32.gmra.mxu0 %v826
    %v1157 = vpop.f32.mrf.mxu0
    %v1158 = vadd.f32 %v711, %v1157
    %v1159 = vpop.f32.mrf.mxu0
    %1160 = vmatprep.mubr.f32.mxu0 0.0
    %1161 = vmatmul.mubr.f32.gmra.mxu0 %v829
    %v1162 = vpop.f32.mrf.mxu0
    %v1163 = vadd.f32 %v711, %v1162
    %v1164 = vpop.f32.mrf.mxu0
    %1165 = vmatprep.mubr.f32.mxu0 0.0
    %1166 = vmatmul.mubr.f32.gmra.mxu0 %v832
    %v1167 = vpop.f32.mrf.mxu0
    %v1168 = vadd.f32 %v711, %v1167
    %v1169 = vpop.f32.mrf.mxu0
    %1170 = vmatprep.mubr.f32.mxu0 0.0
    %1171 = vmatmul.mubr.f32.gmra.mxu0 %v835
    %v1172 = vpop.f32.mrf.mxu0
    %v1173 = vadd.f32 %v711, %v1172
    %v1174 = vpop.f32.mrf.mxu0
    %1175 = vmatprep.mubr.f32.mxu0 0.0
    %1176 = vmatmul.mubr.f32.gmra.mxu0 %v838
    %v1177 = vpop.f32.mrf.mxu0
    %v1178 = vadd.f32 %v711, %v1177
    %v1179 = vpop.f32.mrf.mxu0
    %1180 = vmatprep.mubr.f32.mxu0 0.0
    %1181 = vmatmul.mubr.f32.gmra.mxu0 %v841
    %v1182 = vpop.f32.mrf.mxu0
    %v1183 = vadd.f32 %v711, %v1182
    %v1184 = vpop.f32.mrf.mxu0
    %1185 = vmatprep.mubr.f32.mxu0 0.0
    %1186 = vmatmul.mubr.f32.gmra.mxu0 %v844
    %v1187 = vpop.f32.mrf.mxu0
    %v1188 = vadd.f32 %v711, %v1187
    %v1189 = vpop.f32.mrf.mxu0
    %1190 = vmatprep.mubr.f32.mxu0 0.0
    %1191 = vmatmul.mubr.f32.gmra.mxu0 %v847
    %v1192 = vpop.f32.mrf.mxu0
    %v1193 = vadd.f32 %v711, %v1192
    %v1194 = vpop.f32.mrf.mxu0
    %1195 = vmatprep.mubr.f32.mxu0 0.0
    %1196 = vmatmul.mubr.f32.gmra.mxu0 %v850
    %v1197 = vpop.f32.mrf.mxu0
    %v1198 = vadd.f32 %v711, %v1197
    %v1199 = vpop.f32.mrf.mxu0
    %1200 = vmatprep.mubr.f32.mxu0 0.0
    %1201 = vmatmul.mubr.f32.gmra.mxu0 %v853
    %v1202 = vpop.f32.mrf.mxu0
    %v1203 = vadd.f32 %v711, %v1202
    %v1204 = vpop.f32.mrf.mxu0
    %1205 = vmatprep.mubr.f32.mxu0 0.0
    %1206 = vmatmul.mubr.f32.gmra.mxu0 %v856
    %v1207 = vpop.f32.mrf.mxu0
    %v1208 = vadd.f32 %v711, %v1207
    %v1209 = vpop.f32.mrf.mxu0
    %1210 = vmatprep.mubr.f32.mxu0 0.0
    %1211 = vmatmul.mubr.f32.gmra.mxu0 %v859
    %v1212 = vpop.f32.mrf.mxu0
    %v1213 = vadd.f32 %v711, %v1212
    %v1214 = vpop.f32.mrf.mxu0
    %1215 = vmatprep.mubr.f32.mxu0 0.0
    %1216 = vmatmul.mubr.f32.gmra.mxu0 %v862
    %v1217 = vpop.f32.mrf.mxu0
    %v1218 = vadd.f32 %v711, %v1217
    %v1219 = vpop.f32.mrf.mxu0
    %1220 = vmatprep.mubr.f32.mxu0 0.0
    %1221 = vmatmul.mubr.f32.gmra.mxu0 %v865
    %v1222 = vpop.f32.mrf.mxu0
    %v1223 = vadd.f32 %v711, %v1222
    %v1224 = vpop.f32.mrf.mxu0
    %1225 = vmatprep.mubr.f32.mxu0 0.0
    %1226 = vmatmul.mubr.f32.gmra.mxu0 %v868
    %v1227 = vpop.f32.mrf.mxu0
    %v1228 = vadd.f32 %v711, %v1227
    %v1229 = vpop.f32.mrf.mxu0
    %1230 = vmatprep.mubr.f32.mxu0 0.0
    %1231 = vmatmul.mubr.f32.gmra.mxu0 %v871
    %v1232 = vpop.f32.mrf.mxu0
    %v1233 = vadd.f32 %v711, %v1232
    %v1234 = vpop.f32.mrf.mxu0
    %1235 = vmatprep.mubr.f32.mxu0 0.0
    %1236 = vmatmul.mubr.f32.gmra.mxu0 %v874
    %v1237 = vpop.f32.mrf.mxu0
    %v1238 = vadd.f32 %v711, %v1237
    %v1239 = vpop.f32.mrf.mxu0
    %1240 = vmatprep.mubr.f32.mxu0 0.0
    %1241 = vmatmul.mubr.f32.gmra.mxu0 %v877
    %v1242 = vpop.f32.mrf.mxu0
    %v1243 = vadd.f32 %v711, %v1242
    %v1244 = vpop.f32.mrf.mxu0
    %1245 = vmatprep.mubr.f32.mxu0 0.0
    %1246 = vmatmul.mubr.f32.gmra.mxu0 %v880
    %v1247 = vpop.f32.mrf.mxu0
    %v1248 = vadd.f32 %v711, %v1247
    %v1249 = vpop.f32.mrf.mxu0
    %1250 = vmatprep.mubr.f32.mxu0 0.0
    %1251 = vmatmul.mubr.f32.gmra.mxu0 %v883
    %v1252 = vpop.f32.mrf.mxu0
    %v1253 = vadd.f32 %v711, %v1252
    %v1254 = vpop.f32.mrf.mxu0
    %1255 = vmatprep.mubr.f32.mxu0 0.0
    %1256 = vmatmul.mubr.f32.gmra.mxu0 %v886
    %v1257 = vpop.f32.mrf.mxu0
    %v1258 = vadd.f32 %v711, %v1257
    %v1259 = vpop.f32.mrf.mxu0
    %1260 = vmatprep.mubr.f32.mxu0 0.0
    %1261 = vmatmul.mubr.f32.gmra.mxu0 %v889
    %v1262 = vpop.f32.mrf.mxu0
    %v1263 = vadd.f32 %v711, %v1262
    %v1264 = vpop.f32.mrf.mxu0
    %1265 = vmatprep.mubr.f32.mxu0 0.0
    %1266 = vmatmul.mubr.f32.gmra.mxu0 %v892
    %v1267 = vpop.f32.mrf.mxu0
    %v1268 = vadd.f32 %v711, %v1267
    %v1269 = vpop.f32.mrf.mxu0
    %1270 = vmatprep.mubr.f32.mxu0 0.0
    %1271 = vmatmul.mubr.f32.gmra.mxu0 %v895
    %v1272 = vpop.f32.mrf.mxu0
    %v1273 = vadd.f32 %v711, %v1272
    %v1274 = vpop.f32.mrf.mxu0
    %1275 = vmatprep.mubr.f32.mxu0 0.0
    %1276 = vmatmul.mubr.f32.gmra.mxu0 %v898
    %v1277 = vpop.f32.mrf.mxu0
    %v1278 = vadd.f32 %v711, %v1277
    %v1279 = vpop.f32.mrf.mxu0
    %1280 = vmatprep.mubr.f32.mxu0 0.0
    %1281 = vmatmul.mubr.f32.gmra.mxu0 %v901
    %v1282 = vpop.f32.mrf.mxu0
    %v1283 = vadd.f32 %v711, %v1282
    %v1284 = vpop.f32.mrf.mxu0
    %1285 = vmatprep.mubr.f32.mxu0 0.0
    %1286 = vmatmul.mubr.f32.gmra.mxu0 %v904
    %v1287 = vpop.f32.mrf.mxu0
    %v1288 = vadd.f32 %v711, %v1287
    %v1289 = vpop.f32.mrf.mxu0
    %1290 = vdwg.mxu0
    %v1291 = vmax.f32 %v973, 0.0
    %v1292 = vmax.f32 %v978, 0.0
    %v1293 = vmax.f32 %v983, 0.0
    %v1294 = vmax.f32 %v988, 0.0
    %v1295 = vmax.f32 %v993, 0.0
    %v1296 = vmax.f32 %v998, 0.0
    %v1297 = vmax.f32 %v1003, 0.0
    %v1298 = vmax.f32 %v1008, 0.0
    %v1299 = vmax.f32 %v1013, 0.0
    %v1300 = vmax.f32 %v1018, 0.0
    %v1301 = vmax.f32 %v1023, 0.0
    %v1302 = vmax.f32 %v1028, 0.0
    %v1303 = vmax.f32 %v1033, 0.0
    %v1304 = vmax.f32 %v1038, 0.0
    %v1305 = vmax.f32 %v1043, 0.0
    %v1306 = vmax.f32 %v1048, 0.0
    %v1307 = vmax.f32 %v1053, 0.0
    %v1308 = vmax.f32 %v1058, 0.0
    %v1309 = vmax.f32 %v1063, 0.0
    %v1310 = vmax.f32 %v1068, 0.0
    %v1311 = vmax.f32 %v1073, 0.0
    %v1312 = vmax.f32 %v1078, 0.0
    %v1313 = vmax.f32 %v1083, 0.0
    %v1314 = vmax.f32 %v1088, 0.0
    %v1315 = vmax.f32 %v1093, 0.0
    %v1316 = vmax.f32 %v1098, 0.0
    %v1317 = vmax.f32 %v1103, 0.0
    %v1318 = vmax.f32 %v1108, 0.0
    %v1319 = vmax.f32 %v1113, 0.0
    %v1320 = vmax.f32 %v1118, 0.0
    %v1321 = vmax.f32 %v1123, 0.0
    %v1322 = vmax.f32 %v1128, 0.0
    %v1323 = vmax.f32 %v1133, 0.0
    %v1324 = vmax.f32 %v1138, 0.0
    %v1325 = vmax.f32 %v1143, 0.0
    %v1326 = vmax.f32 %v1148, 0.0
    %v1327 = vmax.f32 %v1153, 0.0
    %v1328 = vmax.f32 %v1158, 0.0
    %v1329 = vmax.f32 %v1163, 0.0
    %v1330 = vmax.f32 %v1168, 0.0
    %v1331 = vmax.f32 %v1173, 0.0
    %v1332 = vmax.f32 %v1178, 0.0
    %v1333 = vmax.f32 %v1183, 0.0
    %v1334 = vmax.f32 %v1188, 0.0
    %v1335 = vmax.f32 %v1193, 0.0
    %v1336 = vmax.f32 %v1198, 0.0
    %v1337 = vmax.f32 %v1203, 0.0
    %v1338 = vmax.f32 %v1208, 0.0
    %v1339 = vmax.f32 %v1213, 0.0
    %v1340 = vmax.f32 %v1218, 0.0
    %v1341 = vmax.f32 %v1223, 0.0
    %v1342 = vmax.f32 %v1228, 0.0
    %v1343 = vmax.f32 %v1233, 0.0
    %v1344 = vmax.f32 %v1238, 0.0
    %v1345 = vmax.f32 %v1243, 0.0
    %v1346 = vmax.f32 %v1248, 0.0
    %v1347 = vmax.f32 %v1253, 0.0
    %v1348 = vmax.f32 %v1258, 0.0
    %v1349 = vmax.f32 %v1263, 0.0
    %v1350 = vmax.f32 %v1268, 0.0
    %v1351 = vmax.f32 %v1273, 0.0
    %v1352 = vmax.f32 %v1278, 0.0
    %v1353 = vmax.f32 %v1283, 0.0
    %v1354 = vmax.f32 %v1288, 0.0
    %v1355 = vld [vmem:[%s6] sm:$0xff]
    %v1356 = vld [vmem:[%s6 + $0x8] sm:$0xff]
    %v1357 = vld [vmem:[%s6 + $0x10] sm:$0xff]
    %v1358 = vld [vmem:[%s6 + $0x18] sm:$0xff]
    %v1359 = vld [vmem:[%s6 + $0x20] sm:$0xff]
    %v1360 = vld [vmem:[%s6 + $0x28] sm:$0xff]
    %v1361 = vld [vmem:[%s6 + $0x30] sm:$0xff]
    %v1362 = vld [vmem:[%s6 + $0x38] sm:$0xff]
    %v1363 = vld [vmem:[%s7] sm:$0x1]
    %v1365 = vlaneseq
    %v1366 = vshrl.u32 %v1365, 7
    %v1367 = vsub.s32 0, %v1366
    %v1368 = vrot.slane %v1363, %v1367
    %vm1370 = vcmask 523264
    %v1372 = vsel %vm1370, %v1291, 0
    %v1375 = vsel %vm1370, %v1292, 0
    %v1378 = vsel %vm1370, %v1293, 0
    %v1381 = vsel %vm1370, %v1294, 0
    %v1384 = vsel %vm1370, %v1295, 0
    %v1387 = vsel %vm1370, %v1296, 0
    %v1390 = vsel %vm1370, %v1297, 0
    %v1393 = vsel %vm1370, %v1298, 0
    %v1396 = vsel %vm1370, %v1299, 0
    %v1399 = vsel %vm1370, %v1300, 0
    %v1402 = vsel %vm1370, %v1301, 0
    %v1405 = vsel %vm1370, %v1302, 0
    %v1408 = vsel %vm1370, %v1303, 0
    %v1411 = vsel %vm1370, %v1304, 0
    %v1414 = vsel %vm1370, %v1305, 0
    %v1417 = vsel %vm1370, %v1306, 0
    %v1420 = vsel %vm1370, %v1307, 0
    %v1423 = vsel %vm1370, %v1308, 0
    %v1426 = vsel %vm1370, %v1309, 0
    %v1429 = vsel %vm1370, %v1310, 0
    %v1432 = vsel %vm1370, %v1311, 0
    %v1435 = vsel %vm1370, %v1312, 0
    %v1438 = vsel %vm1370, %v1313, 0
    %v1441 = vsel %vm1370, %v1314, 0
    %v1444 = vsel %vm1370, %v1315, 0
    %v1447 = vsel %vm1370, %v1316, 0
    %v1450 = vsel %vm1370, %v1317, 0
    %v1453 = vsel %vm1370, %v1318, 0
    %v1456 = vsel %vm1370, %v1319, 0
    %v1459 = vsel %vm1370, %v1320, 0
    %v1462 = vsel %vm1370, %v1321, 0
    %v1465 = vsel %vm1370, %v1322, 0
    %v1468 = vsel %vm1370, %v1323, 0
    %v1471 = vsel %vm1370, %v1324, 0
    %v1474 = vsel %vm1370, %v1325, 0
    %v1477 = vsel %vm1370, %v1326, 0
    %v1480 = vsel %vm1370, %v1327, 0
    %v1483 = vsel %vm1370, %v1328, 0
    %v1486 = vsel %vm1370, %v1329, 0
    %v1489 = vsel %vm1370, %v1330, 0
    %v1492 = vsel %vm1370, %v1331, 0
    %v1495 = vsel %vm1370, %v1332, 0
    %v1498 = vsel %vm1370, %v1333, 0
    %v1501 = vsel %vm1370, %v1334, 0
    %v1504 = vsel %vm1370, %v1335, 0
    %v1507 = vsel %vm1370, %v1336, 0
    %v1510 = vsel %vm1370, %v1337, 0
    %v1513 = vsel %vm1370, %v1338, 0
    %v1516 = vsel %vm1370, %v1339, 0
    %v1519 = vsel %vm1370, %v1340, 0
    %v1522 = vsel %vm1370, %v1341, 0
    %v1525 = vsel %vm1370, %v1342, 0
    %v1528 = vsel %vm1370, %v1343, 0
    %v1531 = vsel %vm1370, %v1344, 0
    %v1534 = vsel %vm1370, %v1345, 0
    %v1537 = vsel %vm1370, %v1346, 0
    %v1540 = vsel %vm1370, %v1347, 0
    %v1543 = vsel %vm1370, %v1348, 0
    %v1546 = vsel %vm1370, %v1349, 0
    %v1549 = vsel %vm1370, %v1350, 0
    %v1552 = vsel %vm1370, %v1351, 0
    %v1555 = vsel %vm1370, %v1352, 0
    %v1558 = vsel %vm1370, %v1353, 0
    %v1561 = vsel %vm1370, %v1354, 0
    %1563 = vmatprep.subr.mxu0 0.0
    %1564 = vmatpush1.msra.mxu0 0.0
    %1565 = vmatprep.subr.mxu0 0.0
    %1566 = vmatpush1.msra.mxu0 0.0
    %1567 = vmatprep.subr.mxu0 0.0
    %1568 = vmatpush1.msra.mxu0 0.0
    %1569 = vmatprep.subr.mxu0 0.0
    %1570 = vmatpush1.msra.mxu0 0.0
    %1571 = vmatprep.subr.mxu0 0.0
    %1572 = vmatpush1.msra.mxu0 0.0
    %1573 = vmatprep.subr.mxu0 0.0
    %1574 = vmatpush1.msra.mxu0 0.0
    %1575 = vmatprep.subr.mxu0 0.0
    %1576 = vmatpush1.msra.mxu0 0.0
    %1577 = vmatprep.subr.mxu0 0.0
    %1578 = vmatpush1.msra.mxu0 0.0
    %1579 = vmatprep.subr.mxu0 0.0
    %1580 = vmatpush1.msra.mxu0 %v1362
    %1581 = vmatprep.subr.mxu0 0.0
    %1582 = vmatpush1.msra.mxu0 %v1361
    %1583 = vmatprep.subr.mxu0 0.0
    %1584 = vmatpush1.msra.mxu0 %v1360
    %1585 = vmatprep.subr.mxu0 0.0
    %1586 = vmatpush1.msra.mxu0 %v1359
    %1587 = vmatprep.subr.mxu0 0.0
    %1588 = vmatpush1.msra.mxu0 %v1358
    %1589 = vmatprep.subr.mxu0 0.0
    %1590 = vmatpush1.msra.mxu0 %v1357
    %1591 = vmatprep.subr.mxu0 0.0
    %1592 = vmatpush1.msra.mxu0 %v1356
    %1593 = vmatprep.subr.mxu0 0.0
    %1594 = vmatpush1.msra.mxu0 %v1355
    %1595 = vmatprep.subr.mxu0 0.0
    %1596 = vmatpush2.msra.mxu0 0.0
    %1597 = vmatprep.subr.mxu0 0.0
    %1598 = vmatpush2.msra.mxu0 0.0
    %1599 = vmatprep.subr.mxu0 0.0
    %1600 = vmatpush2.msra.mxu0 0.0
    %1601 = vmatprep.subr.mxu0 0.0
    %1602 = vmatpush2.msra.mxu0 0.0
    %1603 = vmatprep.subr.mxu0 0.0
    %1604 = vmatpush2.msra.mxu0 0.0
    %1605 = vmatprep.subr.mxu0 0.0
    %1606 = vmatpush2.msra.mxu0 0.0
    %1607 = vmatprep.subr.mxu0 0.0
    %1608 = vmatpush2.msra.mxu0 0.0
    %1609 = vmatprep.subr.mxu0 0.0
    %1610 = vmatpush2.msra.mxu0 0.0
    %1611 = vmatprep.subr.mxu0 0.0
    %1612 = vmatpush2.msra.mxu0 0.0
    %1613 = vmatprep.subr.mxu0 0.0
    %1614 = vmatpush2.msra.mxu0 0.0
    %1615 = vmatprep.subr.mxu0 0.0
    %1616 = vmatpush2.msra.mxu0 0.0
    %1617 = vmatprep.subr.mxu0 0.0
    %1618 = vmatpush2.msra.mxu0 0.0
    %1619 = vmatprep.subr.mxu0 0.0
    %1620 = vmatpush2.msra.mxu0 0.0
    %1621 = vmatprep.subr.mxu0 0.0
    %1622 = vmatpush2.msra.mxu0 0.0
    %1623 = vmatprep.subr.mxu0 0.0
    %1624 = vmatpush2.msra.mxu0 0.0
    %1625 = vmatprep.subr.mxu0 0.0
    %1626 = vmatpush2.msra.mxu0 0.0
    %1627 = vmatprep.mubr.f32.mxu0 0.0
    %1628 = vmatmul.mubr.f32.gmra.mxu0 %v1372
    %v1629 = vpop.f32.mrf.mxu0
    %v1630 = vadd.f32 %v1368, %v1629
    %v1631 = vpop.f32.mrf.mxu0
    %1632 = vmatprep.mubr.f32.mxu0 0.0
    %1633 = vmatmul.mubr.f32.gmra.mxu0 %v1375
    %v1634 = vpop.f32.mrf.mxu0
    %v1635 = vadd.f32 %v1368, %v1634
    %v1636 = vpop.f32.mrf.mxu0
    %1637 = vmatprep.mubr.f32.mxu0 0.0
    %1638 = vmatmul.mubr.f32.gmra.mxu0 %v1378
    %v1639 = vpop.f32.mrf.mxu0
    %v1640 = vadd.f32 %v1368, %v1639
    %v1641 = vpop.f32.mrf.mxu0
    %1642 = vmatprep.mubr.f32.mxu0 0.0
    %1643 = vmatmul.mubr.f32.gmra.mxu0 %v1381
    %v1644 = vpop.f32.mrf.mxu0
    %v1645 = vadd.f32 %v1368, %v1644
    %v1646 = vpop.f32.mrf.mxu0
    %1647 = vmatprep.mubr.f32.mxu0 0.0
    %1648 = vmatmul.mubr.f32.gmra.mxu0 %v1384
    %v1649 = vpop.f32.mrf.mxu0
    %v1650 = vadd.f32 %v1368, %v1649
    %v1651 = vpop.f32.mrf.mxu0
    %1652 = vmatprep.mubr.f32.mxu0 0.0
    %1653 = vmatmul.mubr.f32.gmra.mxu0 %v1387
    %v1654 = vpop.f32.mrf.mxu0
    %v1655 = vadd.f32 %v1368, %v1654
    %v1656 = vpop.f32.mrf.mxu0
    %1657 = vmatprep.mubr.f32.mxu0 0.0
    %1658 = vmatmul.mubr.f32.gmra.mxu0 %v1390
    %v1659 = vpop.f32.mrf.mxu0
    %v1660 = vadd.f32 %v1368, %v1659
    %v1661 = vpop.f32.mrf.mxu0
    %1662 = vmatprep.mubr.f32.mxu0 0.0
    %1663 = vmatmul.mubr.f32.gmra.mxu0 %v1393
    %v1664 = vpop.f32.mrf.mxu0
    %v1665 = vadd.f32 %v1368, %v1664
    %v1666 = vpop.f32.mrf.mxu0
    %1667 = vmatprep.mubr.f32.mxu0 0.0
    %1668 = vmatmul.mubr.f32.gmra.mxu0 %v1396
    %v1669 = vpop.f32.mrf.mxu0
    %v1670 = vadd.f32 %v1368, %v1669
    %v1671 = vpop.f32.mrf.mxu0
    %1672 = vmatprep.mubr.f32.mxu0 0.0
    %1673 = vmatmul.mubr.f32.gmra.mxu0 %v1399
    %v1674 = vpop.f32.mrf.mxu0
    %v1675 = vadd.f32 %v1368, %v1674
    %v1676 = vpop.f32.mrf.mxu0
    %1677 = vmatprep.mubr.f32.mxu0 0.0
    %1678 = vmatmul.mubr.f32.gmra.mxu0 %v1402
    %v1679 = vpop.f32.mrf.mxu0
    %v1680 = vadd.f32 %v1368, %v1679
    %v1681 = vpop.f32.mrf.mxu0
    %1682 = vmatprep.mubr.f32.mxu0 0.0
    %1683 = vmatmul.mubr.f32.gmra.mxu0 %v1405
    %v1684 = vpop.f32.mrf.mxu0
    %v1685 = vadd.f32 %v1368, %v1684
    %v1686 = vpop.f32.mrf.mxu0
    %1687 = vmatprep.mubr.f32.mxu0 0.0
    %1688 = vmatmul.mubr.f32.gmra.mxu0 %v1408
    %v1689 = vpop.f32.mrf.mxu0
    %v1690 = vadd.f32 %v1368, %v1689
    %v1691 = vpop.f32.mrf.mxu0
    %1692 = vmatprep.mubr.f32.mxu0 0.0
    %1693 = vmatmul.mubr.f32.gmra.mxu0 %v1411
    %v1694 = vpop.f32.mrf.mxu0
    %v1695 = vadd.f32 %v1368, %v1694
    %v1696 = vpop.f32.mrf.mxu0
    %1697 = vmatprep.mubr.f32.mxu0 0.0
    %1698 = vmatmul.mubr.f32.gmra.mxu0 %v1414
    %v1699 = vpop.f32.mrf.mxu0
    %v1700 = vadd.f32 %v1368, %v1699
    %v1701 = vpop.f32.mrf.mxu0
    %1702 = vmatprep.mubr.f32.mxu0 0.0
    %1703 = vmatmul.mubr.f32.gmra.mxu0 %v1417
    %v1704 = vpop.f32.mrf.mxu0
    %v1705 = vadd.f32 %v1368, %v1704
    %v1706 = vpop.f32.mrf.mxu0
    %1707 = vmatprep.mubr.f32.mxu0 0.0
    %1708 = vmatmul.mubr.f32.gmra.mxu0 %v1420
    %v1709 = vpop.f32.mrf.mxu0
    %v1710 = vadd.f32 %v1368, %v1709
    %v1711 = vpop.f32.mrf.mxu0
    %1712 = vmatprep.mubr.f32.mxu0 0.0
    %1713 = vmatmul.mubr.f32.gmra.mxu0 %v1423
    %v1714 = vpop.f32.mrf.mxu0
    %v1715 = vadd.f32 %v1368, %v1714
    %v1716 = vpop.f32.mrf.mxu0
    %1717 = vmatprep.mubr.f32.mxu0 0.0
    %1718 = vmatmul.mubr.f32.gmra.mxu0 %v1426
    %v1719 = vpop.f32.mrf.mxu0
    %v1720 = vadd.f32 %v1368, %v1719
    %v1721 = vpop.f32.mrf.mxu0
    %1722 = vmatprep.mubr.f32.mxu0 0.0
    %1723 = vmatmul.mubr.f32.gmra.mxu0 %v1429
    %v1724 = vpop.f32.mrf.mxu0
    %v1725 = vadd.f32 %v1368, %v1724
    %v1726 = vpop.f32.mrf.mxu0
    %1727 = vmatprep.mubr.f32.mxu0 0.0
    %1728 = vmatmul.mubr.f32.gmra.mxu0 %v1432
    %v1729 = vpop.f32.mrf.mxu0
    %v1730 = vadd.f32 %v1368, %v1729
    %v1731 = vpop.f32.mrf.mxu0
    %1732 = vmatprep.mubr.f32.mxu0 0.0
    %1733 = vmatmul.mubr.f32.gmra.mxu0 %v1435
    %v1734 = vpop.f32.mrf.mxu0
    %v1735 = vadd.f32 %v1368, %v1734
    %v1736 = vpop.f32.mrf.mxu0
    %1737 = vmatprep.mubr.f32.mxu0 0.0
    %1738 = vmatmul.mubr.f32.gmra.mxu0 %v1438
    %v1739 = vpop.f32.mrf.mxu0
    %v1740 = vadd.f32 %v1368, %v1739
    %v1741 = vpop.f32.mrf.mxu0
    %1742 = vmatprep.mubr.f32.mxu0 0.0
    %1743 = vmatmul.mubr.f32.gmra.mxu0 %v1441
    %v1744 = vpop.f32.mrf.mxu0
    %v1745 = vadd.f32 %v1368, %v1744
    %v1746 = vpop.f32.mrf.mxu0
    %1747 = vmatprep.mubr.f32.mxu0 0.0
    %1748 = vmatmul.mubr.f32.gmra.mxu0 %v1444
    %v1749 = vpop.f32.mrf.mxu0
    %v1750 = vadd.f32 %v1368, %v1749
    %v1751 = vpop.f32.mrf.mxu0
    %1752 = vmatprep.mubr.f32.mxu0 0.0
    %1753 = vmatmul.mubr.f32.gmra.mxu0 %v1447
    %v1754 = vpop.f32.mrf.mxu0
    %v1755 = vadd.f32 %v1368, %v1754
    %v1756 = vpop.f32.mrf.mxu0
    %1757 = vmatprep.mubr.f32.mxu0 0.0
    %1758 = vmatmul.mubr.f32.gmra.mxu0 %v1450
    %v1759 = vpop.f32.mrf.mxu0
    %v1760 = vadd.f32 %v1368, %v1759
    %v1761 = vpop.f32.mrf.mxu0
    %1762 = vmatprep.mubr.f32.mxu0 0.0
    %1763 = vmatmul.mubr.f32.gmra.mxu0 %v1453
    %v1764 = vpop.f32.mrf.mxu0
    %v1765 = vadd.f32 %v1368, %v1764
    %v1766 = vpop.f32.mrf.mxu0
    %1767 = vmatprep.mubr.f32.mxu0 0.0
    %1768 = vmatmul.mubr.f32.gmra.mxu0 %v1456
    %v1769 = vpop.f32.mrf.mxu0
    %v1770 = vadd.f32 %v1368, %v1769
    %v1771 = vpop.f32.mrf.mxu0
    %1772 = vmatprep.mubr.f32.mxu0 0.0
    %1773 = vmatmul.mubr.f32.gmra.mxu0 %v1459
    %v1774 = vpop.f32.mrf.mxu0
    %v1775 = vadd.f32 %v1368, %v1774
    %v1776 = vpop.f32.mrf.mxu0
    %1777 = vmatprep.mubr.f32.mxu0 0.0
    %1778 = vmatmul.mubr.f32.gmra.mxu0 %v1462
    %v1779 = vpop.f32.mrf.mxu0
    %v1780 = vadd.f32 %v1368, %v1779
    %v1781 = vpop.f32.mrf.mxu0
    %1782 = vmatprep.mubr.f32.mxu0 0.0
    %1783 = vmatmul.mubr.f32.gmra.mxu0 %v1465
    %v1784 = vpop.f32.mrf.mxu0
    %v1785 = vadd.f32 %v1368, %v1784
    %v1786 = vpop.f32.mrf.mxu0
    %1787 = vmatprep.mubr.f32.mxu0 0.0
    %1788 = vmatmul.mubr.f32.gmra.mxu0 %v1468
    %v1789 = vpop.f32.mrf.mxu0
    %v1790 = vadd.f32 %v1368, %v1789
    %v1791 = vpop.f32.mrf.mxu0
    %1792 = vmatprep.mubr.f32.mxu0 0.0
    %1793 = vmatmul.mubr.f32.gmra.mxu0 %v1471
    %v1794 = vpop.f32.mrf.mxu0
    %v1795 = vadd.f32 %v1368, %v1794
    %v1796 = vpop.f32.mrf.mxu0
    %1797 = vmatprep.mubr.f32.mxu0 0.0
    %1798 = vmatmul.mubr.f32.gmra.mxu0 %v1474
    %v1799 = vpop.f32.mrf.mxu0
    %v1800 = vadd.f32 %v1368, %v1799
    %v1801 = vpop.f32.mrf.mxu0
    %1802 = vmatprep.mubr.f32.mxu0 0.0
    %1803 = vmatmul.mubr.f32.gmra.mxu0 %v1477
    %v1804 = vpop.f32.mrf.mxu0
    %v1805 = vadd.f32 %v1368, %v1804
    %v1806 = vpop.f32.mrf.mxu0
    %1807 = vmatprep.mubr.f32.mxu0 0.0
    %1808 = vmatmul.mubr.f32.gmra.mxu0 %v1480
    %v1809 = vpop.f32.mrf.mxu0
    %v1810 = vadd.f32 %v1368, %v1809
    %v1811 = vpop.f32.mrf.mxu0
    %1812 = vmatprep.mubr.f32.mxu0 0.0
    %1813 = vmatmul.mubr.f32.gmra.mxu0 %v1483
    %v1814 = vpop.f32.mrf.mxu0
    %v1815 = vadd.f32 %v1368, %v1814
    %v1816 = vpop.f32.mrf.mxu0
    %1817 = vmatprep.mubr.f32.mxu0 0.0
    %1818 = vmatmul.mubr.f32.gmra.mxu0 %v1486
    %v1819 = vpop.f32.mrf.mxu0
    %v1820 = vadd.f32 %v1368, %v1819
    %v1821 = vpop.f32.mrf.mxu0
    %1822 = vmatprep.mubr.f32.mxu0 0.0
    %1823 = vmatmul.mubr.f32.gmra.mxu0 %v1489
    %v1824 = vpop.f32.mrf.mxu0
    %v1825 = vadd.f32 %v1368, %v1824
    %v1826 = vpop.f32.mrf.mxu0
    %1827 = vmatprep.mubr.f32.mxu0 0.0
    %1828 = vmatmul.mubr.f32.gmra.mxu0 %v1492
    %v1829 = vpop.f32.mrf.mxu0
    %v1830 = vadd.f32 %v1368, %v1829
    %v1831 = vpop.f32.mrf.mxu0
    %1832 = vmatprep.mubr.f32.mxu0 0.0
    %1833 = vmatmul.mubr.f32.gmra.mxu0 %v1495
    %v1834 = vpop.f32.mrf.mxu0
    %v1835 = vadd.f32 %v1368, %v1834
    %v1836 = vpop.f32.mrf.mxu0
    %1837 = vmatprep.mubr.f32.mxu0 0.0
    %1838 = vmatmul.mubr.f32.gmra.mxu0 %v1498
    %v1839 = vpop.f32.mrf.mxu0
    %v1840 = vadd.f32 %v1368, %v1839
    %v1841 = vpop.f32.mrf.mxu0
    %1842 = vmatprep.mubr.f32.mxu0 0.0
    %1843 = vmatmul.mubr.f32.gmra.mxu0 %v1501
    %v1844 = vpop.f32.mrf.mxu0
    %v1845 = vadd.f32 %v1368, %v1844
    %v1846 = vpop.f32.mrf.mxu0
    %1847 = vmatprep.mubr.f32.mxu0 0.0
    %1848 = vmatmul.mubr.f32.gmra.mxu0 %v1504
    %v1849 = vpop.f32.mrf.mxu0
    %v1850 = vadd.f32 %v1368, %v1849
    %v1851 = vpop.f32.mrf.mxu0
    %1852 = vmatprep.mubr.f32.mxu0 0.0
    %1853 = vmatmul.mubr.f32.gmra.mxu0 %v1507
    %v1854 = vpop.f32.mrf.mxu0
    %v1855 = vadd.f32 %v1368, %v1854
    %v1856 = vpop.f32.mrf.mxu0
    %1857 = vmatprep.mubr.f32.mxu0 0.0
    %1858 = vmatmul.mubr.f32.gmra.mxu0 %v1510
    %v1859 = vpop.f32.mrf.mxu0
    %v1860 = vadd.f32 %v1368, %v1859
    %v1861 = vpop.f32.mrf.mxu0
    %1862 = vmatprep.mubr.f32.mxu0 0.0
    %1863 = vmatmul.mubr.f32.gmra.mxu0 %v1513
    %v1864 = vpop.f32.mrf.mxu0
    %v1865 = vadd.f32 %v1368, %v1864
    %v1866 = vpop.f32.mrf.mxu0
    %1867 = vmatprep.mubr.f32.mxu0 0.0
    %1868 = vmatmul.mubr.f32.gmra.mxu0 %v1516
    %v1869 = vpop.f32.mrf.mxu0
    %v1870 = vadd.f32 %v1368, %v1869
    %v1871 = vpop.f32.mrf.mxu0
    %1872 = vmatprep.mubr.f32.mxu0 0.0
    %1873 = vmatmul.mubr.f32.gmra.mxu0 %v1519
    %v1874 = vpop.f32.mrf.mxu0
    %v1875 = vadd.f32 %v1368, %v1874
    %v1876 = vpop.f32.mrf.mxu0
    %1877 = vmatprep.mubr.f32.mxu0 0.0
    %1878 = vmatmul.mubr.f32.gmra.mxu0 %v1522
    %v1879 = vpop.f32.mrf.mxu0
    %v1880 = vadd.f32 %v1368, %v1879
    %v1881 = vpop.f32.mrf.mxu0
    %1882 = vmatprep.mubr.f32.mxu0 0.0
    %1883 = vmatmul.mubr.f32.gmra.mxu0 %v1525
    %v1884 = vpop.f32.mrf.mxu0
    %v1885 = vadd.f32 %v1368, %v1884
    %v1886 = vpop.f32.mrf.mxu0
    %1887 = vmatprep.mubr.f32.mxu0 0.0
    %1888 = vmatmul.mubr.f32.gmra.mxu0 %v1528
    %v1889 = vpop.f32.mrf.mxu0
    %v1890 = vadd.f32 %v1368, %v1889
    %v1891 = vpop.f32.mrf.mxu0
    %1892 = vmatprep.mubr.f32.mxu0 0.0
    %1893 = vmatmul.mubr.f32.gmra.mxu0 %v1531
    %v1894 = vpop.f32.mrf.mxu0
    %v1895 = vadd.f32 %v1368, %v1894
    %v1896 = vpop.f32.mrf.mxu0
    %1897 = vmatprep.mubr.f32.mxu0 0.0
    %1898 = vmatmul.mubr.f32.gmra.mxu0 %v1534
    %v1899 = vpop.f32.mrf.mxu0
    %v1900 = vadd.f32 %v1368, %v1899
    %v1901 = vpop.f32.mrf.mxu0
    %1902 = vmatprep.mubr.f32.mxu0 0.0
    %1903 = vmatmul.mubr.f32.gmra.mxu0 %v1537
    %v1904 = vpop.f32.mrf.mxu0
    %v1905 = vadd.f32 %v1368, %v1904
    %v1906 = vpop.f32.mrf.mxu0
    %1907 = vmatprep.mubr.f32.mxu0 0.0
    %1908 = vmatmul.mubr.f32.gmra.mxu0 %v1540
    %v1909 = vpop.f32.mrf.mxu0
    %v1910 = vadd.f32 %v1368, %v1909
    %v1911 = vpop.f32.mrf.mxu0
    %1912 = vmatprep.mubr.f32.mxu0 0.0
    %1913 = vmatmul.mubr.f32.gmra.mxu0 %v1543
    %v1914 = vpop.f32.mrf.mxu0
    %v1915 = vadd.f32 %v1368, %v1914
    %v1916 = vpop.f32.mrf.mxu0
    %1917 = vmatprep.mubr.f32.mxu0 0.0
    %1918 = vmatmul.mubr.f32.gmra.mxu0 %v1546
    %v1919 = vpop.f32.mrf.mxu0
    %v1920 = vadd.f32 %v1368, %v1919
    %v1921 = vpop.f32.mrf.mxu0
    %1922 = vmatprep.mubr.f32.mxu0 0.0
    %1923 = vmatmul.mubr.f32.gmra.mxu0 %v1549
    %v1924 = vpop.f32.mrf.mxu0
    %v1925 = vadd.f32 %v1368, %v1924
    %v1926 = vpop.f32.mrf.mxu0
    %1927 = vmatprep.mubr.f32.mxu0 0.0
    %1928 = vmatmul.mubr.f32.gmra.mxu0 %v1552
    %v1929 = vpop.f32.mrf.mxu0
    %v1930 = vadd.f32 %v1368, %v1929
    %v1931 = vpop.f32.mrf.mxu0
    %1932 = vmatprep.mubr.f32.mxu0 0.0
    %1933 = vmatmul.mubr.f32.gmra.mxu0 %v1555
    %v1934 = vpop.f32.mrf.mxu0
    %v1935 = vadd.f32 %v1368, %v1934
    %v1936 = vpop.f32.mrf.mxu0
    %1937 = vmatprep.mubr.f32.mxu0 0.0
    %1938 = vmatmul.mubr.f32.gmra.mxu0 %v1558
    %v1939 = vpop.f32.mrf.mxu0
    %v1940 = vadd.f32 %v1368, %v1939
    %v1941 = vpop.f32.mrf.mxu0
    %1942 = vmatprep.mubr.f32.mxu0 0.0
    %1943 = vmatmul.mubr.f32.gmra.mxu0 %v1561
    %v1944 = vpop.f32.mrf.mxu0
    %v1945 = vadd.f32 %v1368, %v1944
    %v1946 = vpop.f32.mrf.mxu0
    %1947 = vdwg.mxu0
    %vm1948 = vcmp.eq.s32.totalorder %v112, 0
    %vm1949 = vcmp.eq.s32.totalorder %v113, 0
    %vm1950 = vcmp.eq.s32.totalorder %v114, 0
    %vm1951 = vcmp.eq.s32.totalorder %v115, 0
    %vm1952 = vcmp.eq.s32.totalorder %v116, 0
    %vm1953 = vcmp.eq.s32.totalorder %v117, 0
    %vm1954 = vcmp.eq.s32.totalorder %v118, 0
    %vm1955 = vcmp.eq.s32.totalorder %v119, 0
    %vm1956 = vcmp.eq.s32.totalorder %v120, 0
    %vm1957 = vcmp.eq.s32.totalorder %v121, 0
    %vm1958 = vcmp.eq.s32.totalorder %v122, 0
    %vm1959 = vcmp.eq.s32.totalorder %v123, 0
    %vm1960 = vcmp.eq.s32.totalorder %v124, 0
    %vm1961 = vcmp.eq.s32.totalorder %v125, 0
    %vm1962 = vcmp.eq.s32.totalorder %v126, 0
    %vm1963 = vcmp.eq.s32.totalorder %v127, 0
    %vm1964 = vcmp.eq.s32.totalorder %v128, 0
    %vm1965 = vcmp.eq.s32.totalorder %v129, 0
    %vm1966 = vcmp.eq.s32.totalorder %v130, 0
    %vm1967 = vcmp.eq.s32.totalorder %v131, 0
    %vm1968 = vcmp.eq.s32.totalorder %v132, 0
    %vm1969 = vcmp.eq.s32.totalorder %v133, 0
    %vm1970 = vcmp.eq.s32.totalorder %v134, 0
    %vm1971 = vcmp.eq.s32.totalorder %v135, 0
    %vm1972 = vcmp.eq.s32.totalorder %v136, 0
    %vm1973 = vcmp.eq.s32.totalorder %v137, 0
    %vm1974 = vcmp.eq.s32.totalorder %v138, 0
    %vm1975 = vcmp.eq.s32.totalorder %v139, 0
    %vm1976 = vcmp.eq.s32.totalorder %v140, 0
    %vm1977 = vcmp.eq.s32.totalorder %v141, 0
    %vm1978 = vcmp.eq.s32.totalorder %v142, 0
    %vm1979 = vcmp.eq.s32.totalorder %v143, 0
    %vm1980 = vcmp.eq.s32.totalorder %v144, 0
    %vm1981 = vcmp.eq.s32.totalorder %v145, 0
    %vm1982 = vcmp.eq.s32.totalorder %v146, 0
    %vm1983 = vcmp.eq.s32.totalorder %v147, 0
    %vm1984 = vcmp.eq.s32.totalorder %v148, 0
    %vm1985 = vcmp.eq.s32.totalorder %v149, 0
    %vm1986 = vcmp.eq.s32.totalorder %v150, 0
    %vm1987 = vcmp.eq.s32.totalorder %v151, 0
    %vm1988 = vcmp.eq.s32.totalorder %v152, 0
    %vm1989 = vcmp.eq.s32.totalorder %v153, 0
    %vm1990 = vcmp.eq.s32.totalorder %v154, 0
    %vm1991 = vcmp.eq.s32.totalorder %v155, 0
    %vm1992 = vcmp.eq.s32.totalorder %v156, 0
    %vm1993 = vcmp.eq.s32.totalorder %v157, 0
    %vm1994 = vcmp.eq.s32.totalorder %v158, 0
    %vm1995 = vcmp.eq.s32.totalorder %v159, 0
    %vm1996 = vcmp.eq.s32.totalorder %v160, 0
    %vm1997 = vcmp.eq.s32.totalorder %v161, 0
    %vm1998 = vcmp.eq.s32.totalorder %v162, 0
    %vm1999 = vcmp.eq.s32.totalorder %v163, 0
    %vm2000 = vcmp.eq.s32.totalorder %v164, 0
    %vm2001 = vcmp.eq.s32.totalorder %v165, 0
    %vm2002 = vcmp.eq.s32.totalorder %v166, 0
    %vm2003 = vcmp.eq.s32.totalorder %v167, 0
    %vm2004 = vcmp.eq.s32.totalorder %v168, 0
    %vm2005 = vcmp.eq.s32.totalorder %v169, 0
    %vm2006 = vcmp.eq.s32.totalorder %v170, 0
    %vm2007 = vcmp.eq.s32.totalorder %v171, 0
    %vm2008 = vcmp.eq.s32.totalorder %v172, 0
    %vm2009 = vcmp.eq.s32.totalorder %v173, 0
    %vm2010 = vcmp.eq.s32.totalorder %v174, 0
    %vm2011 = vcmp.eq.s32.totalorder %v175, 0
    %v2012 = vsel %vm1948, 1, 0
    %v2013 = vsel %vm1949, 1, 0
    %v2014 = vsel %vm1950, 1, 0
    %v2015 = vsel %vm1951, 1, 0
    %v2016 = vsel %vm1952, 1, 0
    %v2017 = vsel %vm1953, 1, 0
    %v2018 = vsel %vm1954, 1, 0
    %v2019 = vsel %vm1955, 1, 0
    %v2020 = vsel %vm1956, 1, 0
    %v2021 = vsel %vm1957, 1, 0
    %v2022 = vsel %vm1958, 1, 0
    %v2023 = vsel %vm1959, 1, 0
    %v2024 = vsel %vm1960, 1, 0
    %v2025 = vsel %vm1961, 1, 0
    %v2026 = vsel %vm1962, 1, 0
    %v2027 = vsel %vm1963, 1, 0
    %v2028 = vsel %vm1964, 1, 0
    %v2029 = vsel %vm1965, 1, 0
    %v2030 = vsel %vm1966, 1, 0
    %v2031 = vsel %vm1967, 1, 0
    %v2032 = vsel %vm1968, 1, 0
    %v2033 = vsel %vm1969, 1, 0
    %v2034 = vsel %vm1970, 1, 0
    %v2035 = vsel %vm1971, 1, 0
    %v2036 = vsel %vm1972, 1, 0
    %v2037 = vsel %vm1973, 1, 0
    %v2038 = vsel %vm1974, 1, 0
    %v2039 = vsel %vm1975, 1, 0
    %v2040 = vsel %vm1976, 1, 0
    %v2041 = vsel %vm1977, 1, 0
    %v2042 = vsel %vm1978, 1, 0
    %v2043 = vsel %vm1979, 1, 0
    %v2044 = vsel %vm1980, 1, 0
    %v2045 = vsel %vm1981, 1, 0
    %v2046 = vsel %vm1982, 1, 0
    %v2047 = vsel %vm1983, 1, 0
    %v2048 = vsel %vm1984, 1, 0
    %v2049 = vsel %vm1985, 1, 0
    %v2050 = vsel %vm1986, 1, 0
    %v2051 = vsel %vm1987, 1, 0
    %v2052 = vsel %vm1988, 1, 0
    %v2053 = vsel %vm1989, 1, 0
    %v2054 = vsel %vm1990, 1, 0
    %v2055 = vsel %vm1991, 1, 0
    %v2056 = vsel %vm1992, 1, 0
    %v2057 = vsel %vm1993, 1, 0
    %v2058 = vsel %vm1994, 1, 0
    %v2059 = vsel %vm1995, 1, 0
    %v2060 = vsel %vm1996, 1, 0
    %v2061 = vsel %vm1997, 1, 0
    %v2062 = vsel %vm1998, 1, 0
    %v2063 = vsel %vm1999, 1, 0
    %v2064 = vsel %vm2000, 1, 0
    %v2065 = vsel %vm2001, 1, 0
    %v2066 = vsel %vm2002, 1, 0
    %v2067 = vsel %vm2003, 1, 0
    %v2068 = vsel %vm2004, 1, 0
    %v2069 = vsel %vm2005, 1, 0
    %v2070 = vsel %vm2006, 1, 0
    %v2071 = vsel %vm2007, 1, 0
    %v2072 = vsel %vm2008, 1, 0
    %v2073 = vsel %vm2009, 1, 0
    %v2074 = vsel %vm2010, 1, 0
    %v2075 = vsel %vm2011, 1, 0
    %2076 = vset.pattern.permute.xlu0 0
    %2077 = vperm.xlu0 %2076, %v2012
    %v2078 = vpop.permute.xlu0 %2077
    %2079 = vset.pattern.permute.xlu0 0
    %2080 = vperm.xlu0 %2079, %v2013
    %v2081 = vpop.permute.xlu0 %2080
    %2082 = vset.pattern.permute.xlu0 0
    %2083 = vperm.xlu0 %2082, %v2014
    %v2084 = vpop.permute.xlu0 %2083
    %2085 = vset.pattern.permute.xlu0 0
    %2086 = vperm.xlu0 %2085, %v2015
    %v2087 = vpop.permute.xlu0 %2086
    %2088 = vset.pattern.permute.xlu0 0
    %2089 = vperm.xlu0 %2088, %v2016
    %v2090 = vpop.permute.xlu0 %2089
    %2091 = vset.pattern.permute.xlu0 0
    %2092 = vperm.xlu0 %2091, %v2017
    %v2093 = vpop.permute.xlu0 %2092
    %2094 = vset.pattern.permute.xlu0 0
    %2095 = vperm.xlu0 %2094, %v2018
    %v2096 = vpop.permute.xlu0 %2095
    %2097 = vset.pattern.permute.xlu0 0
    %2098 = vperm.xlu0 %2097, %v2019
    %v2099 = vpop.permute.xlu0 %2098
    %2100 = vset.pattern.permute.xlu0 0
    %2101 = vperm.xlu0 %2100, %v2020
    %v2102 = vpop.permute.xlu0 %2101
    %2103 = vset.pattern.permute.xlu0 0
    %2104 = vperm.xlu0 %2103, %v2021
    %v2105 = vpop.permute.xlu0 %2104
    %2106 = vset.pattern.permute.xlu0 0
    %2107 = vperm.xlu0 %2106, %v2022
    %v2108 = vpop.permute.xlu0 %2107
    %2109 = vset.pattern.permute.xlu0 0
    %2110 = vperm.xlu0 %2109, %v2023
    %v2111 = vpop.permute.xlu0 %2110
    %2112 = vset.pattern.permute.xlu0 0
    %2113 = vperm.xlu0 %2112, %v2024
    %v2114 = vpop.permute.xlu0 %2113
    %2115 = vset.pattern.permute.xlu0 0
    %2116 = vperm.xlu0 %2115, %v2025
    %v2117 = vpop.permute.xlu0 %2116
    %2118 = vset.pattern.permute.xlu0 0
    %2119 = vperm.xlu0 %2118, %v2026
    %v2120 = vpop.permute.xlu0 %2119
    %2121 = vset.pattern.permute.xlu0 0
    %2122 = vperm.xlu0 %2121, %v2027
    %v2123 = vpop.permute.xlu0 %2122
    %2124 = vset.pattern.permute.xlu0 0
    %2125 = vperm.xlu0 %2124, %v2028
    %v2126 = vpop.permute.xlu0 %2125
    %2127 = vset.pattern.permute.xlu0 0
    %2128 = vperm.xlu0 %2127, %v2029
    %v2129 = vpop.permute.xlu0 %2128
    %2130 = vset.pattern.permute.xlu0 0
    %2131 = vperm.xlu0 %2130, %v2030
    %v2132 = vpop.permute.xlu0 %2131
    %2133 = vset.pattern.permute.xlu0 0
    %2134 = vperm.xlu0 %2133, %v2031
    %v2135 = vpop.permute.xlu0 %2134
    %2136 = vset.pattern.permute.xlu0 0
    %2137 = vperm.xlu0 %2136, %v2032
    %v2138 = vpop.permute.xlu0 %2137
    %2139 = vset.pattern.permute.xlu0 0
    %2140 = vperm.xlu0 %2139, %v2033
    %v2141 = vpop.permute.xlu0 %2140
    %2142 = vset.pattern.permute.xlu0 0
    %2143 = vperm.xlu0 %2142, %v2034
    %v2144 = vpop.permute.xlu0 %2143
    %2145 = vset.pattern.permute.xlu0 0
    %2146 = vperm.xlu0 %2145, %v2035
    %v2147 = vpop.permute.xlu0 %2146
    %2148 = vset.pattern.permute.xlu0 0
    %2149 = vperm.xlu0 %2148, %v2036
    %v2150 = vpop.permute.xlu0 %2149
    %2151 = vset.pattern.permute.xlu0 0
    %2152 = vperm.xlu0 %2151, %v2037
    %v2153 = vpop.permute.xlu0 %2152
    %2154 = vset.pattern.permute.xlu0 0
    %2155 = vperm.xlu0 %2154, %v2038
    %v2156 = vpop.permute.xlu0 %2155
    %2157 = vset.pattern.permute.xlu0 0
    %2158 = vperm.xlu0 %2157, %v2039
    %v2159 = vpop.permute.xlu0 %2158
    %2160 = vset.pattern.permute.xlu0 0
    %2161 = vperm.xlu0 %2160, %v2040
    %v2162 = vpop.permute.xlu0 %2161
    %2163 = vset.pattern.permute.xlu0 0
    %2164 = vperm.xlu0 %2163, %v2041
    %v2165 = vpop.permute.xlu0 %2164
    %2166 = vset.pattern.permute.xlu0 0
    %2167 = vperm.xlu0 %2166, %v2042
    %v2168 = vpop.permute.xlu0 %2167
    %2169 = vset.pattern.permute.xlu0 0
    %2170 = vperm.xlu0 %2169, %v2043
    %v2171 = vpop.permute.xlu0 %2170
    %2172 = vset.pattern.permute.xlu0 0
    %2173 = vperm.xlu0 %2172, %v2044
    %v2174 = vpop.permute.xlu0 %2173
    %2175 = vset.pattern.permute.xlu0 0
    %2176 = vperm.xlu0 %2175, %v2045
    %v2177 = vpop.permute.xlu0 %2176
    %2178 = vset.pattern.permute.xlu0 0
    %2179 = vperm.xlu0 %2178, %v2046
    %v2180 = vpop.permute.xlu0 %2179
    %2181 = vset.pattern.permute.xlu0 0
    %2182 = vperm.xlu0 %2181, %v2047
    %v2183 = vpop.permute.xlu0 %2182
    %2184 = vset.pattern.permute.xlu0 0
    %2185 = vperm.xlu0 %2184, %v2048
    %v2186 = vpop.permute.xlu0 %2185
    %2187 = vset.pattern.permute.xlu0 0
    %2188 = vperm.xlu0 %2187, %v2049
    %v2189 = vpop.permute.xlu0 %2188
    %2190 = vset.pattern.permute.xlu0 0
    %2191 = vperm.xlu0 %2190, %v2050
    %v2192 = vpop.permute.xlu0 %2191
    %2193 = vset.pattern.permute.xlu0 0
    %2194 = vperm.xlu0 %2193, %v2051
    %v2195 = vpop.permute.xlu0 %2194
    %2196 = vset.pattern.permute.xlu0 0
    %2197 = vperm.xlu0 %2196, %v2052
    %v2198 = vpop.permute.xlu0 %2197
    %2199 = vset.pattern.permute.xlu0 0
    %2200 = vperm.xlu0 %2199, %v2053
    %v2201 = vpop.permute.xlu0 %2200
    %2202 = vset.pattern.permute.xlu0 0
    %2203 = vperm.xlu0 %2202, %v2054
    %v2204 = vpop.permute.xlu0 %2203
    %2205 = vset.pattern.permute.xlu0 0
    %2206 = vperm.xlu0 %2205, %v2055
    %v2207 = vpop.permute.xlu0 %2206
    %2208 = vset.pattern.permute.xlu0 0
    %2209 = vperm.xlu0 %2208, %v2056
    %v2210 = vpop.permute.xlu0 %2209
    %2211 = vset.pattern.permute.xlu0 0
    %2212 = vperm.xlu0 %2211, %v2057
    %v2213 = vpop.permute.xlu0 %2212
    %2214 = vset.pattern.permute.xlu0 0
    %2215 = vperm.xlu0 %2214, %v2058
    %v2216 = vpop.permute.xlu0 %2215
    %2217 = vset.pattern.permute.xlu0 0
    %2218 = vperm.xlu0 %2217, %v2059
    %v2219 = vpop.permute.xlu0 %2218
    %2220 = vset.pattern.permute.xlu0 0
    %2221 = vperm.xlu0 %2220, %v2060
    %v2222 = vpop.permute.xlu0 %2221
    %2223 = vset.pattern.permute.xlu0 0
    %2224 = vperm.xlu0 %2223, %v2061
    %v2225 = vpop.permute.xlu0 %2224
    %2226 = vset.pattern.permute.xlu0 0
    %2227 = vperm.xlu0 %2226, %v2062
    %v2228 = vpop.permute.xlu0 %2227
    %2229 = vset.pattern.permute.xlu0 0
    %2230 = vperm.xlu0 %2229, %v2063
    %v2231 = vpop.permute.xlu0 %2230
    %2232 = vset.pattern.permute.xlu0 0
    %2233 = vperm.xlu0 %2232, %v2064
    %v2234 = vpop.permute.xlu0 %2233
    %2235 = vset.pattern.permute.xlu0 0
    %2236 = vperm.xlu0 %2235, %v2065
    %v2237 = vpop.permute.xlu0 %2236
    %2238 = vset.pattern.permute.xlu0 0
    %2239 = vperm.xlu0 %2238, %v2066
    %v2240 = vpop.permute.xlu0 %2239
    %2241 = vset.pattern.permute.xlu0 0
    %2242 = vperm.xlu0 %2241, %v2067
    %v2243 = vpop.permute.xlu0 %2242
    %2244 = vset.pattern.permute.xlu0 0
    %2245 = vperm.xlu0 %2244, %v2068
    %v2246 = vpop.permute.xlu0 %2245
    %2247 = vset.pattern.permute.xlu0 0
    %2248 = vperm.xlu0 %2247, %v2069
    %v2249 = vpop.permute.xlu0 %2248
    %2250 = vset.pattern.permute.xlu0 0
    %2251 = vperm.xlu0 %2250, %v2070
    %v2252 = vpop.permute.xlu0 %2251
    %2253 = vset.pattern.permute.xlu0 0
    %2254 = vperm.xlu0 %2253, %v2071
    %v2255 = vpop.permute.xlu0 %2254
    %2256 = vset.pattern.permute.xlu0 0
    %2257 = vperm.xlu0 %2256, %v2072
    %v2258 = vpop.permute.xlu0 %2257
    %2259 = vset.pattern.permute.xlu0 0
    %2260 = vperm.xlu0 %2259, %v2073
    %v2261 = vpop.permute.xlu0 %2260
    %2262 = vset.pattern.permute.xlu0 0
    %2263 = vperm.xlu0 %2262, %v2074
    %v2264 = vpop.permute.xlu0 %2263
    %2265 = vset.pattern.permute.xlu0 0
    %2266 = vperm.xlu0 %2265, %v2075
    %v2267 = vpop.permute.xlu0 %2266
    %vm2268 = vcmp.eq.s32.totalorder %v2078, 1
    %vm2269 = vcmp.eq.s32.totalorder %v2081, 1
    %vm2270 = vcmp.eq.s32.totalorder %v2084, 1
    %vm2271 = vcmp.eq.s32.totalorder %v2087, 1
    %vm2272 = vcmp.eq.s32.totalorder %v2090, 1
    %vm2273 = vcmp.eq.s32.totalorder %v2093, 1
    %vm2274 = vcmp.eq.s32.totalorder %v2096, 1
    %vm2275 = vcmp.eq.s32.totalorder %v2099, 1
    %vm2276 = vcmp.eq.s32.totalorder %v2102, 1
    %vm2277 = vcmp.eq.s32.totalorder %v2105, 1
    %vm2278 = vcmp.eq.s32.totalorder %v2108, 1
    %vm2279 = vcmp.eq.s32.totalorder %v2111, 1
    %vm2280 = vcmp.eq.s32.totalorder %v2114, 1
    %vm2281 = vcmp.eq.s32.totalorder %v2117, 1
    %vm2282 = vcmp.eq.s32.totalorder %v2120, 1
    %vm2283 = vcmp.eq.s32.totalorder %v2123, 1
    %vm2284 = vcmp.eq.s32.totalorder %v2126, 1
    %vm2285 = vcmp.eq.s32.totalorder %v2129, 1
    %vm2286 = vcmp.eq.s32.totalorder %v2132, 1
    %vm2287 = vcmp.eq.s32.totalorder %v2135, 1
    %vm2288 = vcmp.eq.s32.totalorder %v2138, 1
    %vm2289 = vcmp.eq.s32.totalorder %v2141, 1
    %vm2290 = vcmp.eq.s32.totalorder %v2144, 1
    %vm2291 = vcmp.eq.s32.totalorder %v2147, 1
    %vm2292 = vcmp.eq.s32.totalorder %v2150, 1
    %vm2293 = vcmp.eq.s32.totalorder %v2153, 1
    %vm2294 = vcmp.eq.s32.totalorder %v2156, 1
    %vm2295 = vcmp.eq.s32.totalorder %v2159, 1
    %vm2296 = vcmp.eq.s32.totalorder %v2162, 1
    %vm2297 = vcmp.eq.s32.totalorder %v2165, 1
    %vm2298 = vcmp.eq.s32.totalorder %v2168, 1
    %vm2299 = vcmp.eq.s32.totalorder %v2171, 1
    %vm2300 = vcmp.eq.s32.totalorder %v2174, 1
    %vm2301 = vcmp.eq.s32.totalorder %v2177, 1
    %vm2302 = vcmp.eq.s32.totalorder %v2180, 1
    %vm2303 = vcmp.eq.s32.totalorder %v2183, 1
    %vm2304 = vcmp.eq.s32.totalorder %v2186, 1
    %vm2305 = vcmp.eq.s32.totalorder %v2189, 1
    %vm2306 = vcmp.eq.s32.totalorder %v2192, 1
    %vm2307 = vcmp.eq.s32.totalorder %v2195, 1
    %vm2308 = vcmp.eq.s32.totalorder %v2198, 1
    %vm2309 = vcmp.eq.s32.totalorder %v2201, 1
    %vm2310 = vcmp.eq.s32.totalorder %v2204, 1
    %vm2311 = vcmp.eq.s32.totalorder %v2207, 1
    %vm2312 = vcmp.eq.s32.totalorder %v2210, 1
    %vm2313 = vcmp.eq.s32.totalorder %v2213, 1
    %vm2314 = vcmp.eq.s32.totalorder %v2216, 1
    %vm2315 = vcmp.eq.s32.totalorder %v2219, 1
    %vm2316 = vcmp.eq.s32.totalorder %v2222, 1
    %vm2317 = vcmp.eq.s32.totalorder %v2225, 1
    %vm2318 = vcmp.eq.s32.totalorder %v2228, 1
    %vm2319 = vcmp.eq.s32.totalorder %v2231, 1
    %vm2320 = vcmp.eq.s32.totalorder %v2234, 1
    %vm2321 = vcmp.eq.s32.totalorder %v2237, 1
    %vm2322 = vcmp.eq.s32.totalorder %v2240, 1
    %vm2323 = vcmp.eq.s32.totalorder %v2243, 1
    %vm2324 = vcmp.eq.s32.totalorder %v2246, 1
    %vm2325 = vcmp.eq.s32.totalorder %v2249, 1
    %vm2326 = vcmp.eq.s32.totalorder %v2252, 1
    %vm2327 = vcmp.eq.s32.totalorder %v2255, 1
    %vm2328 = vcmp.eq.s32.totalorder %v2258, 1
    %vm2329 = vcmp.eq.s32.totalorder %v2261, 1
    %vm2330 = vcmp.eq.s32.totalorder %v2264, 1
    %vm2331 = vcmp.eq.s32.totalorder %v2267, 1
    %v2332 = vsel %vm2268, %v1630, 0.0
    %v2333 = vsel %vm2269, %v1635, 0.0
    %v2334 = vsel %vm2270, %v1640, 0.0
    %v2335 = vsel %vm2271, %v1645, 0.0
    %v2336 = vsel %vm2272, %v1650, 0.0
    %v2337 = vsel %vm2273, %v1655, 0.0
    %v2338 = vsel %vm2274, %v1660, 0.0
    %v2339 = vsel %vm2275, %v1665, 0.0
    %v2340 = vsel %vm2276, %v1670, 0.0
    %v2341 = vsel %vm2277, %v1675, 0.0
    %v2342 = vsel %vm2278, %v1680, 0.0
    %v2343 = vsel %vm2279, %v1685, 0.0
    %v2344 = vsel %vm2280, %v1690, 0.0
    %v2345 = vsel %vm2281, %v1695, 0.0
    %v2346 = vsel %vm2282, %v1700, 0.0
    %v2347 = vsel %vm2283, %v1705, 0.0
    %v2348 = vsel %vm2284, %v1710, 0.0
    %v2349 = vsel %vm2285, %v1715, 0.0
    %v2350 = vsel %vm2286, %v1720, 0.0
    %v2351 = vsel %vm2287, %v1725, 0.0
    %v2352 = vsel %vm2288, %v1730, 0.0
    %v2353 = vsel %vm2289, %v1735, 0.0
    %v2354 = vsel %vm2290, %v1740, 0.0
    %v2355 = vsel %vm2291, %v1745, 0.0
    %v2356 = vsel %vm2292, %v1750, 0.0
    %v2357 = vsel %vm2293, %v1755, 0.0
    %v2358 = vsel %vm2294, %v1760, 0.0
    %v2359 = vsel %vm2295, %v1765, 0.0
    %v2360 = vsel %vm2296, %v1770, 0.0
    %v2361 = vsel %vm2297, %v1775, 0.0
    %v2362 = vsel %vm2298, %v1780, 0.0
    %v2363 = vsel %vm2299, %v1785, 0.0
    %v2364 = vsel %vm2300, %v1790, 0.0
    %v2365 = vsel %vm2301, %v1795, 0.0
    %v2366 = vsel %vm2302, %v1800, 0.0
    %v2367 = vsel %vm2303, %v1805, 0.0
    %v2368 = vsel %vm2304, %v1810, 0.0
    %v2369 = vsel %vm2305, %v1815, 0.0
    %v2370 = vsel %vm2306, %v1820, 0.0
    %v2371 = vsel %vm2307, %v1825, 0.0
    %v2372 = vsel %vm2308, %v1830, 0.0
    %v2373 = vsel %vm2309, %v1835, 0.0
    %v2374 = vsel %vm2310, %v1840, 0.0
    %v2375 = vsel %vm2311, %v1845, 0.0
    %v2376 = vsel %vm2312, %v1850, 0.0
    %v2377 = vsel %vm2313, %v1855, 0.0
    %v2378 = vsel %vm2314, %v1860, 0.0
    %v2379 = vsel %vm2315, %v1865, 0.0
    %v2380 = vsel %vm2316, %v1870, 0.0
    %v2381 = vsel %vm2317, %v1875, 0.0
    %v2382 = vsel %vm2318, %v1880, 0.0
    %v2383 = vsel %vm2319, %v1885, 0.0
    %v2384 = vsel %vm2320, %v1890, 0.0
    %v2385 = vsel %vm2321, %v1895, 0.0
    %v2386 = vsel %vm2322, %v1900, 0.0
    %v2387 = vsel %vm2323, %v1905, 0.0
    %v2388 = vsel %vm2324, %v1910, 0.0
    %v2389 = vsel %vm2325, %v1915, 0.0
    %v2390 = vsel %vm2326, %v1920, 0.0
    %v2391 = vsel %vm2327, %v1925, 0.0
    %v2392 = vsel %vm2328, %v1930, 0.0
    %v2393 = vsel %vm2329, %v1935, 0.0
    %v2394 = vsel %vm2330, %v1940, 0.0
    %v2395 = vsel %vm2331, %v1945, 0.0
    %v2396 = vadd.f32 %v2332, 0.0
    %v2397 = vadd.f32 %v2333, 0.0
    %v2398 = vadd.f32 %v2334, 0.0
    %v2399 = vadd.f32 %v2335, 0.0
    %v2400 = vadd.f32 %v2336, 0.0
    %v2401 = vadd.f32 %v2337, 0.0
    %v2402 = vadd.f32 %v2338, 0.0
    %v2403 = vadd.f32 %v2339, 0.0
    %v2404 = vadd.f32 %v2340, 0.0
    %v2405 = vadd.f32 %v2341, 0.0
    %v2406 = vadd.f32 %v2342, 0.0
    %v2407 = vadd.f32 %v2343, 0.0
    %v2408 = vadd.f32 %v2344, 0.0
    %v2409 = vadd.f32 %v2345, 0.0
    %v2410 = vadd.f32 %v2346, 0.0
    %v2411 = vadd.f32 %v2347, 0.0
    %v2412 = vadd.f32 %v2348, 0.0
    %v2413 = vadd.f32 %v2349, 0.0
    %v2414 = vadd.f32 %v2350, 0.0
    %v2415 = vadd.f32 %v2351, 0.0
    %v2416 = vadd.f32 %v2352, 0.0
    %v2417 = vadd.f32 %v2353, 0.0
    %v2418 = vadd.f32 %v2354, 0.0
    %v2419 = vadd.f32 %v2355, 0.0
    %v2420 = vadd.f32 %v2356, 0.0
    %v2421 = vadd.f32 %v2357, 0.0
    %v2422 = vadd.f32 %v2358, 0.0
    %v2423 = vadd.f32 %v2359, 0.0
    %v2424 = vadd.f32 %v2360, 0.0
    %v2425 = vadd.f32 %v2361, 0.0
    %v2426 = vadd.f32 %v2362, 0.0
    %v2427 = vadd.f32 %v2363, 0.0
    %v2428 = vadd.f32 %v2364, 0.0
    %v2429 = vadd.f32 %v2365, 0.0
    %v2430 = vadd.f32 %v2366, 0.0
    %v2431 = vadd.f32 %v2367, 0.0
    %v2432 = vadd.f32 %v2368, 0.0
    %v2433 = vadd.f32 %v2369, 0.0
    %v2434 = vadd.f32 %v2370, 0.0
    %v2435 = vadd.f32 %v2371, 0.0
    %v2436 = vadd.f32 %v2372, 0.0
    %v2437 = vadd.f32 %v2373, 0.0
    %v2438 = vadd.f32 %v2374, 0.0
    %v2439 = vadd.f32 %v2375, 0.0
    %v2440 = vadd.f32 %v2376, 0.0
    %v2441 = vadd.f32 %v2377, 0.0
    %v2442 = vadd.f32 %v2378, 0.0
    %v2443 = vadd.f32 %v2379, 0.0
    %v2444 = vadd.f32 %v2380, 0.0
    %v2445 = vadd.f32 %v2381, 0.0
    %v2446 = vadd.f32 %v2382, 0.0
    %v2447 = vadd.f32 %v2383, 0.0
    %v2448 = vadd.f32 %v2384, 0.0
    %v2449 = vadd.f32 %v2385, 0.0
    %v2450 = vadd.f32 %v2386, 0.0
    %v2451 = vadd.f32 %v2387, 0.0
    %v2452 = vadd.f32 %v2388, 0.0
    %v2453 = vadd.f32 %v2389, 0.0
    %v2454 = vadd.f32 %v2390, 0.0
    %v2455 = vadd.f32 %v2391, 0.0
    %v2456 = vadd.f32 %v2392, 0.0
    %v2457 = vadd.f32 %v2393, 0.0
    %v2458 = vadd.f32 %v2394, 0.0
    %v2459 = vadd.f32 %v2395, 0.0
    %v2460 = vld [vmem:[%s8] sm:$0x1]
    %v2461 = vld [vmem:[%s9] sm:$0x1]
    %v2463 = vlaneseq
    %v2464 = vshrl.u32 %v2463, 7
    %v2465 = vsub.s32 0, %v2464
    %v2466 = vrot.slane %v2460, %v2465
    %v2468 = vmul.f32 %v181, %v2466
    %v2469 = vmul.f32 %v186, %v2466
    %v2470 = vmul.f32 %v191, %v2466
    %v2471 = vmul.f32 %v196, %v2466
    %v2472 = vmul.f32 %v201, %v2466
    %v2473 = vmul.f32 %v206, %v2466
    %v2474 = vmul.f32 %v211, %v2466
    %v2475 = vmul.f32 %v216, %v2466
    %v2476 = vmul.f32 %v221, %v2466
    %v2477 = vmul.f32 %v226, %v2466
    %v2478 = vmul.f32 %v231, %v2466
    %v2479 = vmul.f32 %v236, %v2466
    %v2480 = vmul.f32 %v241, %v2466
    %v2481 = vmul.f32 %v246, %v2466
    %v2482 = vmul.f32 %v251, %v2466
    %v2483 = vmul.f32 %v256, %v2466
    %v2484 = vmul.f32 %v261, %v2466
    %v2485 = vmul.f32 %v266, %v2466
    %v2486 = vmul.f32 %v271, %v2466
    %v2487 = vmul.f32 %v276, %v2466
    %v2488 = vmul.f32 %v281, %v2466
    %v2489 = vmul.f32 %v286, %v2466
    %v2490 = vmul.f32 %v291, %v2466
    %v2491 = vmul.f32 %v296, %v2466
    %v2492 = vmul.f32 %v301, %v2466
    %v2493 = vmul.f32 %v306, %v2466
    %v2494 = vmul.f32 %v311, %v2466
    %v2495 = vmul.f32 %v316, %v2466
    %v2496 = vmul.f32 %v321, %v2466
    %v2497 = vmul.f32 %v326, %v2466
    %v2498 = vmul.f32 %v331, %v2466
    %v2499 = vmul.f32 %v336, %v2466
    %v2500 = vmul.f32 %v341, %v2466
    %v2501 = vmul.f32 %v346, %v2466
    %v2502 = vmul.f32 %v351, %v2466
    %v2503 = vmul.f32 %v356, %v2466
    %v2504 = vmul.f32 %v361, %v2466
    %v2505 = vmul.f32 %v366, %v2466
    %v2506 = vmul.f32 %v371, %v2466
    %v2507 = vmul.f32 %v376, %v2466
    %v2508 = vmul.f32 %v381, %v2466
    %v2509 = vmul.f32 %v386, %v2466
    %v2510 = vmul.f32 %v391, %v2466
    %v2511 = vmul.f32 %v396, %v2466
    %v2512 = vmul.f32 %v401, %v2466
    %v2513 = vmul.f32 %v406, %v2466
    %v2514 = vmul.f32 %v411, %v2466
    %v2515 = vmul.f32 %v416, %v2466
    %v2516 = vmul.f32 %v421, %v2466
    %v2517 = vmul.f32 %v426, %v2466
    %v2518 = vmul.f32 %v431, %v2466
    %v2519 = vmul.f32 %v436, %v2466
    %v2520 = vmul.f32 %v441, %v2466
    %v2521 = vmul.f32 %v446, %v2466
    %v2522 = vmul.f32 %v451, %v2466
    %v2523 = vmul.f32 %v456, %v2466
    %v2524 = vmul.f32 %v461, %v2466
    %v2525 = vmul.f32 %v466, %v2466
    %v2526 = vmul.f32 %v471, %v2466
    %v2527 = vmul.f32 %v476, %v2466
    %v2528 = vmul.f32 %v481, %v2466
    %v2529 = vmul.f32 %v486, %v2466
    %v2530 = vmul.f32 %v491, %v2466
    %v2531 = vmul.f32 %v496, %v2466
    %v2533 = vlaneseq
    %v2534 = vshrl.u32 %v2533, 7
    %v2535 = vsub.s32 0, %v2534
    %v2536 = vrot.slane %v2461, %v2535
    %v2538 = vadd.f32 %v2468, %v2536
    %v2539 = vadd.f32 %v2469, %v2536
    %v2540 = vadd.f32 %v2470, %v2536
    %v2541 = vadd.f32 %v2471, %v2536
    %v2542 = vadd.f32 %v2472, %v2536
    %v2543 = vadd.f32 %v2473, %v2536
    %v2544 = vadd.f32 %v2474, %v2536
    %v2545 = vadd.f32 %v2475, %v2536
    %v2546 = vadd.f32 %v2476, %v2536
    %v2547 = vadd.f32 %v2477, %v2536
    %v2548 = vadd.f32 %v2478, %v2536
    %v2549 = vadd.f32 %v2479, %v2536
    %v2550 = vadd.f32 %v2480, %v2536
    %v2551 = vadd.f32 %v2481, %v2536
    %v2552 = vadd.f32 %v2482, %v2536
    %v2553 = vadd.f32 %v2483, %v2536
    %v2554 = vadd.f32 %v2484, %v2536
    %v2555 = vadd.f32 %v2485, %v2536
    %v2556 = vadd.f32 %v2486, %v2536
    %v2557 = vadd.f32 %v2487, %v2536
    %v2558 = vadd.f32 %v2488, %v2536
    %v2559 = vadd.f32 %v2489, %v2536
    %v2560 = vadd.f32 %v2490, %v2536
    %v2561 = vadd.f32 %v2491, %v2536
    %v2562 = vadd.f32 %v2492, %v2536
    %v2563 = vadd.f32 %v2493, %v2536
    %v2564 = vadd.f32 %v2494, %v2536
    %v2565 = vadd.f32 %v2495, %v2536
    %v2566 = vadd.f32 %v2496, %v2536
    %v2567 = vadd.f32 %v2497, %v2536
    %v2568 = vadd.f32 %v2498, %v2536
    %v2569 = vadd.f32 %v2499, %v2536
    %v2570 = vadd.f32 %v2500, %v2536
    %v2571 = vadd.f32 %v2501, %v2536
    %v2572 = vadd.f32 %v2502, %v2536
    %v2573 = vadd.f32 %v2503, %v2536
    %v2574 = vadd.f32 %v2504, %v2536
    %v2575 = vadd.f32 %v2505, %v2536
    %v2576 = vadd.f32 %v2506, %v2536
    %v2577 = vadd.f32 %v2507, %v2536
    %v2578 = vadd.f32 %v2508, %v2536
    %v2579 = vadd.f32 %v2509, %v2536
    %v2580 = vadd.f32 %v2510, %v2536
    %v2581 = vadd.f32 %v2511, %v2536
    %v2582 = vadd.f32 %v2512, %v2536
    %v2583 = vadd.f32 %v2513, %v2536
    %v2584 = vadd.f32 %v2514, %v2536
    %v2585 = vadd.f32 %v2515, %v2536
    %v2586 = vadd.f32 %v2516, %v2536
    %v2587 = vadd.f32 %v2517, %v2536
    %v2588 = vadd.f32 %v2518, %v2536
    %v2589 = vadd.f32 %v2519, %v2536
    %v2590 = vadd.f32 %v2520, %v2536
    %v2591 = vadd.f32 %v2521, %v2536
    %v2592 = vadd.f32 %v2522, %v2536
    %v2593 = vadd.f32 %v2523, %v2536
    %v2594 = vadd.f32 %v2524, %v2536
    %v2595 = vadd.f32 %v2525, %v2536
    %v2596 = vadd.f32 %v2526, %v2536
    %v2597 = vadd.f32 %v2527, %v2536
    %v2598 = vadd.f32 %v2528, %v2536
    %v2599 = vadd.f32 %v2529, %v2536
    %v2600 = vadd.f32 %v2530, %v2536
    %v2601 = vadd.f32 %v2531, %v2536
    %v2602 = vmax.f32 %v2538, 0.0
    %v2603 = vmax.f32 %v2539, 0.0
    %v2604 = vmax.f32 %v2540, 0.0
    %v2605 = vmax.f32 %v2541, 0.0
    %v2606 = vmax.f32 %v2542, 0.0
    %v2607 = vmax.f32 %v2543, 0.0
    %v2608 = vmax.f32 %v2544, 0.0
    %v2609 = vmax.f32 %v2545, 0.0
    %v2610 = vmax.f32 %v2546, 0.0
    %v2611 = vmax.f32 %v2547, 0.0
    %v2612 = vmax.f32 %v2548, 0.0
    %v2613 = vmax.f32 %v2549, 0.0
    %v2614 = vmax.f32 %v2550, 0.0
    %v2615 = vmax.f32 %v2551, 0.0
    %v2616 = vmax.f32 %v2552, 0.0
    %v2617 = vmax.f32 %v2553, 0.0
    %v2618 = vmax.f32 %v2554, 0.0
    %v2619 = vmax.f32 %v2555, 0.0
    %v2620 = vmax.f32 %v2556, 0.0
    %v2621 = vmax.f32 %v2557, 0.0
    %v2622 = vmax.f32 %v2558, 0.0
    %v2623 = vmax.f32 %v2559, 0.0
    %v2624 = vmax.f32 %v2560, 0.0
    %v2625 = vmax.f32 %v2561, 0.0
    %v2626 = vmax.f32 %v2562, 0.0
    %v2627 = vmax.f32 %v2563, 0.0
    %v2628 = vmax.f32 %v2564, 0.0
    %v2629 = vmax.f32 %v2565, 0.0
    %v2630 = vmax.f32 %v2566, 0.0
    %v2631 = vmax.f32 %v2567, 0.0
    %v2632 = vmax.f32 %v2568, 0.0
    %v2633 = vmax.f32 %v2569, 0.0
    %v2634 = vmax.f32 %v2570, 0.0
    %v2635 = vmax.f32 %v2571, 0.0
    %v2636 = vmax.f32 %v2572, 0.0
    %v2637 = vmax.f32 %v2573, 0.0
    %v2638 = vmax.f32 %v2574, 0.0
    %v2639 = vmax.f32 %v2575, 0.0
    %v2640 = vmax.f32 %v2576, 0.0
    %v2641 = vmax.f32 %v2577, 0.0
    %v2642 = vmax.f32 %v2578, 0.0
    %v2643 = vmax.f32 %v2579, 0.0
    %v2644 = vmax.f32 %v2580, 0.0
    %v2645 = vmax.f32 %v2581, 0.0
    %v2646 = vmax.f32 %v2582, 0.0
    %v2647 = vmax.f32 %v2583, 0.0
    %v2648 = vmax.f32 %v2584, 0.0
    %v2649 = vmax.f32 %v2585, 0.0
    %v2650 = vmax.f32 %v2586, 0.0
    %v2651 = vmax.f32 %v2587, 0.0
    %v2652 = vmax.f32 %v2588, 0.0
    %v2653 = vmax.f32 %v2589, 0.0
    %v2654 = vmax.f32 %v2590, 0.0
    %v2655 = vmax.f32 %v2591, 0.0
    %v2656 = vmax.f32 %v2592, 0.0
    %v2657 = vmax.f32 %v2593, 0.0
    %v2658 = vmax.f32 %v2594, 0.0
    %v2659 = vmax.f32 %v2595, 0.0
    %v2660 = vmax.f32 %v2596, 0.0
    %v2661 = vmax.f32 %v2597, 0.0
    %v2662 = vmax.f32 %v2598, 0.0
    %v2663 = vmax.f32 %v2599, 0.0
    %v2664 = vmax.f32 %v2600, 0.0
    %v2665 = vmax.f32 %v2601, 0.0
    %v2666 = vld [vmem:[%s10] sm:$0xff]
    %v2667 = vld [vmem:[%s10 + $0x8] sm:$0xff]
    %v2668 = vld [vmem:[%s10 + $0x10] sm:$0xff]
    %v2669 = vld [vmem:[%s10 + $0x18] sm:$0xff]
    %v2670 = vld [vmem:[%s11] sm:$0x1]
    %v2672 = vlaneseq
    %v2673 = vshrl.u32 %v2672, 7
    %v2674 = vsub.s32 0, %v2673
    %v2675 = vrot.slane %v2670, %v2674
    %v2678 = vsel %vm713, %v2602, 0
    %v2681 = vsel %vm713, %v2603, 0
    %v2684 = vsel %vm713, %v2604, 0
    %v2687 = vsel %vm713, %v2605, 0
    %v2690 = vsel %vm713, %v2606, 0
    %v2693 = vsel %vm713, %v2607, 0
    %v2696 = vsel %vm713, %v2608, 0
    %v2699 = vsel %vm713, %v2609, 0
    %v2702 = vsel %vm713, %v2610, 0
    %v2705 = vsel %vm713, %v2611, 0
    %v2708 = vsel %vm713, %v2612, 0
    %v2711 = vsel %vm713, %v2613, 0
    %v2714 = vsel %vm713, %v2614, 0
    %v2717 = vsel %vm713, %v2615, 0
    %v2720 = vsel %vm713, %v2616, 0
    %v2723 = vsel %vm713, %v2617, 0
    %v2726 = vsel %vm713, %v2618, 0
    %v2729 = vsel %vm713, %v2619, 0
    %v2732 = vsel %vm713, %v2620, 0
    %v2735 = vsel %vm713, %v2621, 0
    %v2738 = vsel %vm713, %v2622, 0
    %v2741 = vsel %vm713, %v2623, 0
    %v2744 = vsel %vm713, %v2624, 0
    %v2747 = vsel %vm713, %v2625, 0
    %v2750 = vsel %vm713, %v2626, 0
    %v2753 = vsel %vm713, %v2627, 0
    %v2756 = vsel %vm713, %v2628, 0
    %v2759 = vsel %vm713, %v2629, 0
    %v2762 = vsel %vm713, %v2630, 0
    %v2765 = vsel %vm713, %v2631, 0
    %v2768 = vsel %vm713, %v2632, 0
    %v2771 = vsel %vm713, %v2633, 0
    %v2774 = vsel %vm713, %v2634, 0
    %v2777 = vsel %vm713, %v2635, 0
    %v2780 = vsel %vm713, %v2636, 0
    %v2783 = vsel %vm713, %v2637, 0
    %v2786 = vsel %vm713, %v2638, 0
    %v2789 = vsel %vm713, %v2639, 0
    %v2792 = vsel %vm713, %v2640, 0
    %v2795 = vsel %vm713, %v2641, 0
    %v2798 = vsel %vm713, %v2642, 0
    %v2801 = vsel %vm713, %v2643, 0
    %v2804 = vsel %vm713, %v2644, 0
    %v2807 = vsel %vm713, %v2645, 0
    %v2810 = vsel %vm713, %v2646, 0
    %v2813 = vsel %vm713, %v2647, 0
    %v2816 = vsel %vm713, %v2648, 0
    %v2819 = vsel %vm713, %v2649, 0
    %v2822 = vsel %vm713, %v2650, 0
    %v2825 = vsel %vm713, %v2651, 0
    %v2828 = vsel %vm713, %v2652, 0
    %v2831 = vsel %vm713, %v2653, 0
    %v2834 = vsel %vm713, %v2654, 0
    %v2837 = vsel %vm713, %v2655, 0
    %v2840 = vsel %vm713, %v2656, 0
    %v2843 = vsel %vm713, %v2657, 0
    %v2846 = vsel %vm713, %v2658, 0
    %v2849 = vsel %vm713, %v2659, 0
    %v2852 = vsel %vm713, %v2660, 0
    %v2855 = vsel %vm713, %v2661, 0
    %v2858 = vsel %vm713, %v2662, 0
    %v2861 = vsel %vm713, %v2663, 0
    %v2864 = vsel %vm713, %v2664, 0
    %v2867 = vsel %vm713, %v2665, 0
    %2869 = vmatprep.subr.mxu0 0.0
    %2870 = vmatpush1.msra.mxu0 0.0
    %2871 = vmatprep.subr.mxu0 0.0
    %2872 = vmatpush1.msra.mxu0 0.0
    %2873 = vmatprep.subr.mxu0 0.0
    %2874 = vmatpush1.msra.mxu0 0.0
    %2875 = vmatprep.subr.mxu0 0.0
    %2876 = vmatpush1.msra.mxu0 0.0
    %2877 = vmatprep.subr.mxu0 0.0
    %2878 = vmatpush1.msra.mxu0 0.0
    %2879 = vmatprep.subr.mxu0 0.0
    %2880 = vmatpush1.msra.mxu0 0.0
    %2881 = vmatprep.subr.mxu0 0.0
    %2882 = vmatpush1.msra.mxu0 0.0
    %2883 = vmatprep.subr.mxu0 0.0
    %2884 = vmatpush1.msra.mxu0 0.0
    %2885 = vmatprep.subr.mxu0 0.0
    %2886 = vmatpush1.msra.mxu0 0.0
    %2887 = vmatprep.subr.mxu0 0.0
    %2888 = vmatpush1.msra.mxu0 0.0
    %2889 = vmatprep.subr.mxu0 0.0
    %2890 = vmatpush1.msra.mxu0 0.0
    %2891 = vmatprep.subr.mxu0 0.0
    %2892 = vmatpush1.msra.mxu0 0.0
    %2893 = vmatprep.subr.mxu0 0.0
    %2894 = vmatpush1.msra.mxu0 %v2669
    %2895 = vmatprep.subr.mxu0 0.0
    %2896 = vmatpush1.msra.mxu0 %v2668
    %2897 = vmatprep.subr.mxu0 0.0
    %2898 = vmatpush1.msra.mxu0 %v2667
    %2899 = vmatprep.subr.mxu0 0.0
    %2900 = vmatpush1.msra.mxu0 %v2666
    %2901 = vmatprep.subr.mxu0 0.0
    %2902 = vmatpush2.msra.mxu0 0.0
    %2903 = vmatprep.subr.mxu0 0.0
    %2904 = vmatpush2.msra.mxu0 0.0
    %2905 = vmatprep.subr.mxu0 0.0
    %2906 = vmatpush2.msra.mxu0 0.0
    %2907 = vmatprep.subr.mxu0 0.0
    %2908 = vmatpush2.msra.mxu0 0.0
    %2909 = vmatprep.subr.mxu0 0.0
    %2910 = vmatpush2.msra.mxu0 0.0
    %2911 = vmatprep.subr.mxu0 0.0
    %2912 = vmatpush2.msra.mxu0 0.0
    %2913 = vmatprep.subr.mxu0 0.0
    %2914 = vmatpush2.msra.mxu0 0.0
    %2915 = vmatprep.subr.mxu0 0.0
    %2916 = vmatpush2.msra.mxu0 0.0
    %2917 = vmatprep.subr.mxu0 0.0
    %2918 = vmatpush2.msra.mxu0 0.0
    %2919 = vmatprep.subr.mxu0 0.0
    %2920 = vmatpush2.msra.mxu0 0.0
    %2921 = vmatprep.subr.mxu0 0.0
    %2922 = vmatpush2.msra.mxu0 0.0
    %2923 = vmatprep.subr.mxu0 0.0
    %2924 = vmatpush2.msra.mxu0 0.0
    %2925 = vmatprep.subr.mxu0 0.0
    %2926 = vmatpush2.msra.mxu0 0.0
    %2927 = vmatprep.subr.mxu0 0.0
    %2928 = vmatpush2.msra.mxu0 0.0
    %2929 = vmatprep.subr.mxu0 0.0
    %2930 = vmatpush2.msra.mxu0 0.0
    %2931 = vmatprep.subr.mxu0 0.0
    %2932 = vmatpush2.msra.mxu0 0.0
    %2933 = vmatprep.mubr.f32.mxu0 0.0
    %2934 = vmatmul.mubr.f32.gmra.mxu0 %v2678
    %v2935 = vpop.f32.mrf.mxu0
    %v2936 = vadd.f32 %v2675, %v2935
    %v2937 = vpop.f32.mrf.mxu0
    %2938 = vmatprep.mubr.f32.mxu0 0.0
    %2939 = vmatmul.mubr.f32.gmra.mxu0 %v2681
    %v2940 = vpop.f32.mrf.mxu0
    %v2941 = vadd.f32 %v2675, %v2940
    %v2942 = vpop.f32.mrf.mxu0
    %2943 = vmatprep.mubr.f32.mxu0 0.0
    %2944 = vmatmul.mubr.f32.gmra.mxu0 %v2684
    %v2945 = vpop.f32.mrf.mxu0
    %v2946 = vadd.f32 %v2675, %v2945
    %v2947 = vpop.f32.mrf.mxu0
    %2948 = vmatprep.mubr.f32.mxu0 0.0
    %2949 = vmatmul.mubr.f32.gmra.mxu0 %v2687
    %v2950 = vpop.f32.mrf.mxu0
    %v2951 = vadd.f32 %v2675, %v2950
    %v2952 = vpop.f32.mrf.mxu0
    %2953 = vmatprep.mubr.f32.mxu0 0.0
    %2954 = vmatmul.mubr.f32.gmra.mxu0 %v2690
    %v2955 = vpop.f32.mrf.mxu0
    %v2956 = vadd.f32 %v2675, %v2955
    %v2957 = vpop.f32.mrf.mxu0
    %2958 = vmatprep.mubr.f32.mxu0 0.0
    %2959 = vmatmul.mubr.f32.gmra.mxu0 %v2693
    %v2960 = vpop.f32.mrf.mxu0
    %v2961 = vadd.f32 %v2675, %v2960
    %v2962 = vpop.f32.mrf.mxu0
    %2963 = vmatprep.mubr.f32.mxu0 0.0
    %2964 = vmatmul.mubr.f32.gmra.mxu0 %v2696
    %v2965 = vpop.f32.mrf.mxu0
    %v2966 = vadd.f32 %v2675, %v2965
    %v2967 = vpop.f32.mrf.mxu0
    %2968 = vmatprep.mubr.f32.mxu0 0.0
    %2969 = vmatmul.mubr.f32.gmra.mxu0 %v2699
    %v2970 = vpop.f32.mrf.mxu0
    %v2971 = vadd.f32 %v2675, %v2970
    %v2972 = vpop.f32.mrf.mxu0
    %2973 = vmatprep.mubr.f32.mxu0 0.0
    %2974 = vmatmul.mubr.f32.gmra.mxu0 %v2702
    %v2975 = vpop.f32.mrf.mxu0
    %v2976 = vadd.f32 %v2675, %v2975
    %v2977 = vpop.f32.mrf.mxu0
    %2978 = vmatprep.mubr.f32.mxu0 0.0
    %2979 = vmatmul.mubr.f32.gmra.mxu0 %v2705
    %v2980 = vpop.f32.mrf.mxu0
    %v2981 = vadd.f32 %v2675, %v2980
    %v2982 = vpop.f32.mrf.mxu0
    %2983 = vmatprep.mubr.f32.mxu0 0.0
    %2984 = vmatmul.mubr.f32.gmra.mxu0 %v2708
    %v2985 = vpop.f32.mrf.mxu0
    %v2986 = vadd.f32 %v2675, %v2985
    %v2987 = vpop.f32.mrf.mxu0
    %2988 = vmatprep.mubr.f32.mxu0 0.0
    %2989 = vmatmul.mubr.f32.gmra.mxu0 %v2711
    %v2990 = vpop.f32.mrf.mxu0
    %v2991 = vadd.f32 %v2675, %v2990
    %v2992 = vpop.f32.mrf.mxu0
    %2993 = vmatprep.mubr.f32.mxu0 0.0
    %2994 = vmatmul.mubr.f32.gmra.mxu0 %v2714
    %v2995 = vpop.f32.mrf.mxu0
    %v2996 = vadd.f32 %v2675, %v2995
    %v2997 = vpop.f32.mrf.mxu0
    %2998 = vmatprep.mubr.f32.mxu0 0.0
    %2999 = vmatmul.mubr.f32.gmra.mxu0 %v2717
    %v3000 = vpop.f32.mrf.mxu0
    %v3001 = vadd.f32 %v2675, %v3000
    %v3002 = vpop.f32.mrf.mxu0
    %3003 = vmatprep.mubr.f32.mxu0 0.0
    %3004 = vmatmul.mubr.f32.gmra.mxu0 %v2720
    %v3005 = vpop.f32.mrf.mxu0
    %v3006 = vadd.f32 %v2675, %v3005
    %v3007 = vpop.f32.mrf.mxu0
    %3008 = vmatprep.mubr.f32.mxu0 0.0
    %3009 = vmatmul.mubr.f32.gmra.mxu0 %v2723
    %v3010 = vpop.f32.mrf.mxu0
    %v3011 = vadd.f32 %v2675, %v3010
    %v3012 = vpop.f32.mrf.mxu0
    %3013 = vmatprep.mubr.f32.mxu0 0.0
    %3014 = vmatmul.mubr.f32.gmra.mxu0 %v2726
    %v3015 = vpop.f32.mrf.mxu0
    %v3016 = vadd.f32 %v2675, %v3015
    %v3017 = vpop.f32.mrf.mxu0
    %3018 = vmatprep.mubr.f32.mxu0 0.0
    %3019 = vmatmul.mubr.f32.gmra.mxu0 %v2729
    %v3020 = vpop.f32.mrf.mxu0
    %v3021 = vadd.f32 %v2675, %v3020
    %v3022 = vpop.f32.mrf.mxu0
    %3023 = vmatprep.mubr.f32.mxu0 0.0
    %3024 = vmatmul.mubr.f32.gmra.mxu0 %v2732
    %v3025 = vpop.f32.mrf.mxu0
    %v3026 = vadd.f32 %v2675, %v3025
    %v3027 = vpop.f32.mrf.mxu0
    %3028 = vmatprep.mubr.f32.mxu0 0.0
    %3029 = vmatmul.mubr.f32.gmra.mxu0 %v2735
    %v3030 = vpop.f32.mrf.mxu0
    %v3031 = vadd.f32 %v2675, %v3030
    %v3032 = vpop.f32.mrf.mxu0
    %3033 = vmatprep.mubr.f32.mxu0 0.0
    %3034 = vmatmul.mubr.f32.gmra.mxu0 %v2738
    %v3035 = vpop.f32.mrf.mxu0
    %v3036 = vadd.f32 %v2675, %v3035
    %v3037 = vpop.f32.mrf.mxu0
    %3038 = vmatprep.mubr.f32.mxu0 0.0
    %3039 = vmatmul.mubr.f32.gmra.mxu0 %v2741
    %v3040 = vpop.f32.mrf.mxu0
    %v3041 = vadd.f32 %v2675, %v3040
    %v3042 = vpop.f32.mrf.mxu0
    %3043 = vmatprep.mubr.f32.mxu0 0.0
    %3044 = vmatmul.mubr.f32.gmra.mxu0 %v2744
    %v3045 = vpop.f32.mrf.mxu0
    %v3046 = vadd.f32 %v2675, %v3045
    %v3047 = vpop.f32.mrf.mxu0
    %3048 = vmatprep.mubr.f32.mxu0 0.0
    %3049 = vmatmul.mubr.f32.gmra.mxu0 %v2747
    %v3050 = vpop.f32.mrf.mxu0
    %v3051 = vadd.f32 %v2675, %v3050
    %v3052 = vpop.f32.mrf.mxu0
    %3053 = vmatprep.mubr.f32.mxu0 0.0
    %3054 = vmatmul.mubr.f32.gmra.mxu0 %v2750
    %v3055 = vpop.f32.mrf.mxu0
    %v3056 = vadd.f32 %v2675, %v3055
    %v3057 = vpop.f32.mrf.mxu0
    %3058 = vmatprep.mubr.f32.mxu0 0.0
    %3059 = vmatmul.mubr.f32.gmra.mxu0 %v2753
    %v3060 = vpop.f32.mrf.mxu0
    %v3061 = vadd.f32 %v2675, %v3060
    %v3062 = vpop.f32.mrf.mxu0
    %3063 = vmatprep.mubr.f32.mxu0 0.0
    %3064 = vmatmul.mubr.f32.gmra.mxu0 %v2756
    %v3065 = vpop.f32.mrf.mxu0
    %v3066 = vadd.f32 %v2675, %v3065
    %v3067 = vpop.f32.mrf.mxu0
    %3068 = vmatprep.mubr.f32.mxu0 0.0
    %3069 = vmatmul.mubr.f32.gmra.mxu0 %v2759
    %v3070 = vpop.f32.mrf.mxu0
    %v3071 = vadd.f32 %v2675, %v3070
    %v3072 = vpop.f32.mrf.mxu0
    %3073 = vmatprep.mubr.f32.mxu0 0.0
    %3074 = vmatmul.mubr.f32.gmra.mxu0 %v2762
    %v3075 = vpop.f32.mrf.mxu0
    %v3076 = vadd.f32 %v2675, %v3075
    %v3077 = vpop.f32.mrf.mxu0
    %3078 = vmatprep.mubr.f32.mxu0 0.0
    %3079 = vmatmul.mubr.f32.gmra.mxu0 %v2765
    %v3080 = vpop.f32.mrf.mxu0
    %v3081 = vadd.f32 %v2675, %v3080
    %v3082 = vpop.f32.mrf.mxu0
    %3083 = vmatprep.mubr.f32.mxu0 0.0
    %3084 = vmatmul.mubr.f32.gmra.mxu0 %v2768
    %v3085 = vpop.f32.mrf.mxu0
    %v3086 = vadd.f32 %v2675, %v3085
    %v3087 = vpop.f32.mrf.mxu0
    %3088 = vmatprep.mubr.f32.mxu0 0.0
    %3089 = vmatmul.mubr.f32.gmra.mxu0 %v2771
    %v3090 = vpop.f32.mrf.mxu0
    %v3091 = vadd.f32 %v2675, %v3090
    %v3092 = vpop.f32.mrf.mxu0
    %3093 = vmatprep.mubr.f32.mxu0 0.0
    %3094 = vmatmul.mubr.f32.gmra.mxu0 %v2774
    %v3095 = vpop.f32.mrf.mxu0
    %v3096 = vadd.f32 %v2675, %v3095
    %v3097 = vpop.f32.mrf.mxu0
    %3098 = vmatprep.mubr.f32.mxu0 0.0
    %3099 = vmatmul.mubr.f32.gmra.mxu0 %v2777
    %v3100 = vpop.f32.mrf.mxu0
    %v3101 = vadd.f32 %v2675, %v3100
    %v3102 = vpop.f32.mrf.mxu0
    %3103 = vmatprep.mubr.f32.mxu0 0.0
    %3104 = vmatmul.mubr.f32.gmra.mxu0 %v2780
    %v3105 = vpop.f32.mrf.mxu0
    %v3106 = vadd.f32 %v2675, %v3105
    %v3107 = vpop.f32.mrf.mxu0
    %3108 = vmatprep.mubr.f32.mxu0 0.0
    %3109 = vmatmul.mubr.f32.gmra.mxu0 %v2783
    %v3110 = vpop.f32.mrf.mxu0
    %v3111 = vadd.f32 %v2675, %v3110
    %v3112 = vpop.f32.mrf.mxu0
    %3113 = vmatprep.mubr.f32.mxu0 0.0
    %3114 = vmatmul.mubr.f32.gmra.mxu0 %v2786
    %v3115 = vpop.f32.mrf.mxu0
    %v3116 = vadd.f32 %v2675, %v3115
    %v3117 = vpop.f32.mrf.mxu0
    %3118 = vmatprep.mubr.f32.mxu0 0.0
    %3119 = vmatmul.mubr.f32.gmra.mxu0 %v2789
    %v3120 = vpop.f32.mrf.mxu0
    %v3121 = vadd.f32 %v2675, %v3120
    %v3122 = vpop.f32.mrf.mxu0
    %3123 = vmatprep.mubr.f32.mxu0 0.0
    %3124 = vmatmul.mubr.f32.gmra.mxu0 %v2792
    %v3125 = vpop.f32.mrf.mxu0
    %v3126 = vadd.f32 %v2675, %v3125
    %v3127 = vpop.f32.mrf.mxu0
    %3128 = vmatprep.mubr.f32.mxu0 0.0
    %3129 = vmatmul.mubr.f32.gmra.mxu0 %v2795
    %v3130 = vpop.f32.mrf.mxu0
    %v3131 = vadd.f32 %v2675, %v3130
    %v3132 = vpop.f32.mrf.mxu0
    %3133 = vmatprep.mubr.f32.mxu0 0.0
    %3134 = vmatmul.mubr.f32.gmra.mxu0 %v2798
    %v3135 = vpop.f32.mrf.mxu0
    %v3136 = vadd.f32 %v2675, %v3135
    %v3137 = vpop.f32.mrf.mxu0
    %3138 = vmatprep.mubr.f32.mxu0 0.0
    %3139 = vmatmul.mubr.f32.gmra.mxu0 %v2801
    %v3140 = vpop.f32.mrf.mxu0
    %v3141 = vadd.f32 %v2675, %v3140
    %v3142 = vpop.f32.mrf.mxu0
    %3143 = vmatprep.mubr.f32.mxu0 0.0
    %3144 = vmatmul.mubr.f32.gmra.mxu0 %v2804
    %v3145 = vpop.f32.mrf.mxu0
    %v3146 = vadd.f32 %v2675, %v3145
    %v3147 = vpop.f32.mrf.mxu0
    %3148 = vmatprep.mubr.f32.mxu0 0.0
    %3149 = vmatmul.mubr.f32.gmra.mxu0 %v2807
    %v3150 = vpop.f32.mrf.mxu0
    %v3151 = vadd.f32 %v2675, %v3150
    %v3152 = vpop.f32.mrf.mxu0
    %3153 = vmatprep.mubr.f32.mxu0 0.0
    %3154 = vmatmul.mubr.f32.gmra.mxu0 %v2810
    %v3155 = vpop.f32.mrf.mxu0
    %v3156 = vadd.f32 %v2675, %v3155
    %v3157 = vpop.f32.mrf.mxu0
    %3158 = vmatprep.mubr.f32.mxu0 0.0
    %3159 = vmatmul.mubr.f32.gmra.mxu0 %v2813
    %v3160 = vpop.f32.mrf.mxu0
    %v3161 = vadd.f32 %v2675, %v3160
    %v3162 = vpop.f32.mrf.mxu0
    %3163 = vmatprep.mubr.f32.mxu0 0.0
    %3164 = vmatmul.mubr.f32.gmra.mxu0 %v2816
    %v3165 = vpop.f32.mrf.mxu0
    %v3166 = vadd.f32 %v2675, %v3165
    %v3167 = vpop.f32.mrf.mxu0
    %3168 = vmatprep.mubr.f32.mxu0 0.0
    %3169 = vmatmul.mubr.f32.gmra.mxu0 %v2819
    %v3170 = vpop.f32.mrf.mxu0
    %v3171 = vadd.f32 %v2675, %v3170
    %v3172 = vpop.f32.mrf.mxu0
    %3173 = vmatprep.mubr.f32.mxu0 0.0
    %3174 = vmatmul.mubr.f32.gmra.mxu0 %v2822
    %v3175 = vpop.f32.mrf.mxu0
    %v3176 = vadd.f32 %v2675, %v3175
    %v3177 = vpop.f32.mrf.mxu0
    %3178 = vmatprep.mubr.f32.mxu0 0.0
    %3179 = vmatmul.mubr.f32.gmra.mxu0 %v2825
    %v3180 = vpop.f32.mrf.mxu0
    %v3181 = vadd.f32 %v2675, %v3180
    %v3182 = vpop.f32.mrf.mxu0
    %3183 = vmatprep.mubr.f32.mxu0 0.0
    %3184 = vmatmul.mubr.f32.gmra.mxu0 %v2828
    %v3185 = vpop.f32.mrf.mxu0
    %v3186 = vadd.f32 %v2675, %v3185
    %v3187 = vpop.f32.mrf.mxu0
    %3188 = vmatprep.mubr.f32.mxu0 0.0
    %3189 = vmatmul.mubr.f32.gmra.mxu0 %v2831
    %v3190 = vpop.f32.mrf.mxu0
    %v3191 = vadd.f32 %v2675, %v3190
    %v3192 = vpop.f32.mrf.mxu0
    %3193 = vmatprep.mubr.f32.mxu0 0.0
    %3194 = vmatmul.mubr.f32.gmra.mxu0 %v2834
    %v3195 = vpop.f32.mrf.mxu0
    %v3196 = vadd.f32 %v2675, %v3195
    %v3197 = vpop.f32.mrf.mxu0
    %3198 = vmatprep.mubr.f32.mxu0 0.0
    %3199 = vmatmul.mubr.f32.gmra.mxu0 %v2837
    %v3200 = vpop.f32.mrf.mxu0
    %v3201 = vadd.f32 %v2675, %v3200
    %v3202 = vpop.f32.mrf.mxu0
    %3203 = vmatprep.mubr.f32.mxu0 0.0
    %3204 = vmatmul.mubr.f32.gmra.mxu0 %v2840
    %v3205 = vpop.f32.mrf.mxu0
    %v3206 = vadd.f32 %v2675, %v3205
    %v3207 = vpop.f32.mrf.mxu0
    %3208 = vmatprep.mubr.f32.mxu0 0.0
    %3209 = vmatmul.mubr.f32.gmra.mxu0 %v2843
    %v3210 = vpop.f32.mrf.mxu0
    %v3211 = vadd.f32 %v2675, %v3210
    %v3212 = vpop.f32.mrf.mxu0
    %3213 = vmatprep.mubr.f32.mxu0 0.0
    %3214 = vmatmul.mubr.f32.gmra.mxu0 %v2846
    %v3215 = vpop.f32.mrf.mxu0
    %v3216 = vadd.f32 %v2675, %v3215
    %v3217 = vpop.f32.mrf.mxu0
    %3218 = vmatprep.mubr.f32.mxu0 0.0
    %3219 = vmatmul.mubr.f32.gmra.mxu0 %v2849
    %v3220 = vpop.f32.mrf.mxu0
    %v3221 = vadd.f32 %v2675, %v3220
    %v3222 = vpop.f32.mrf.mxu0
    %3223 = vmatprep.mubr.f32.mxu0 0.0
    %3224 = vmatmul.mubr.f32.gmra.mxu0 %v2852
    %v3225 = vpop.f32.mrf.mxu0
    %v3226 = vadd.f32 %v2675, %v3225
    %v3227 = vpop.f32.mrf.mxu0
    %3228 = vmatprep.mubr.f32.mxu0 0.0
    %3229 = vmatmul.mubr.f32.gmra.mxu0 %v2855
    %v3230 = vpop.f32.mrf.mxu0
    %v3231 = vadd.f32 %v2675, %v3230
    %v3232 = vpop.f32.mrf.mxu0
    %3233 = vmatprep.mubr.f32.mxu0 0.0
    %3234 = vmatmul.mubr.f32.gmra.mxu0 %v2858
    %v3235 = vpop.f32.mrf.mxu0
    %v3236 = vadd.f32 %v2675, %v3235
    %v3237 = vpop.f32.mrf.mxu0
    %3238 = vmatprep.mubr.f32.mxu0 0.0
    %3239 = vmatmul.mubr.f32.gmra.mxu0 %v2861
    %v3240 = vpop.f32.mrf.mxu0
    %v3241 = vadd.f32 %v2675, %v3240
    %v3242 = vpop.f32.mrf.mxu0
    %3243 = vmatprep.mubr.f32.mxu0 0.0
    %3244 = vmatmul.mubr.f32.gmra.mxu0 %v2864
    %v3245 = vpop.f32.mrf.mxu0
    %v3246 = vadd.f32 %v2675, %v3245
    %v3247 = vpop.f32.mrf.mxu0
    %3248 = vmatprep.mubr.f32.mxu0 0.0
    %3249 = vmatmul.mubr.f32.gmra.mxu0 %v2867
    %v3250 = vpop.f32.mrf.mxu0
    %v3251 = vadd.f32 %v2675, %v3250
    %v3252 = vpop.f32.mrf.mxu0
    %3253 = vdwg.mxu0
    %v3254 = vmax.f32 %v2936, 0.0
    %v3255 = vmax.f32 %v2941, 0.0
    %v3256 = vmax.f32 %v2946, 0.0
    %v3257 = vmax.f32 %v2951, 0.0
    %v3258 = vmax.f32 %v2956, 0.0
    %v3259 = vmax.f32 %v2961, 0.0
    %v3260 = vmax.f32 %v2966, 0.0
    %v3261 = vmax.f32 %v2971, 0.0
    %v3262 = vmax.f32 %v2976, 0.0
    %v3263 = vmax.f32 %v2981, 0.0
    %v3264 = vmax.f32 %v2986, 0.0
    %v3265 = vmax.f32 %v2991, 0.0
    %v3266 = vmax.f32 %v2996, 0.0
    %v3267 = vmax.f32 %v3001, 0.0
    %v3268 = vmax.f32 %v3006, 0.0
    %v3269 = vmax.f32 %v3011, 0.0
    %v3270 = vmax.f32 %v3016, 0.0
    %v3271 = vmax.f32 %v3021, 0.0
    %v3272 = vmax.f32 %v3026, 0.0
    %v3273 = vmax.f32 %v3031, 0.0
    %v3274 = vmax.f32 %v3036, 0.0
    %v3275 = vmax.f32 %v3041, 0.0
    %v3276 = vmax.f32 %v3046, 0.0
    %v3277 = vmax.f32 %v3051, 0.0
    %v3278 = vmax.f32 %v3056, 0.0
    %v3279 = vmax.f32 %v3061, 0.0
    %v3280 = vmax.f32 %v3066, 0.0
    %v3281 = vmax.f32 %v3071, 0.0
    %v3282 = vmax.f32 %v3076, 0.0
    %v3283 = vmax.f32 %v3081, 0.0
    %v3284 = vmax.f32 %v3086, 0.0
    %v3285 = vmax.f32 %v3091, 0.0
    %v3286 = vmax.f32 %v3096, 0.0
    %v3287 = vmax.f32 %v3101, 0.0
    %v3288 = vmax.f32 %v3106, 0.0
    %v3289 = vmax.f32 %v3111, 0.0
    %v3290 = vmax.f32 %v3116, 0.0
    %v3291 = vmax.f32 %v3121, 0.0
    %v3292 = vmax.f32 %v3126, 0.0
    %v3293 = vmax.f32 %v3131, 0.0
    %v3294 = vmax.f32 %v3136, 0.0
    %v3295 = vmax.f32 %v3141, 0.0
    %v3296 = vmax.f32 %v3146, 0.0
    %v3297 = vmax.f32 %v3151, 0.0
    %v3298 = vmax.f32 %v3156, 0.0
    %v3299 = vmax.f32 %v3161, 0.0
    %v3300 = vmax.f32 %v3166, 0.0
    %v3301 = vmax.f32 %v3171, 0.0
    %v3302 = vmax.f32 %v3176, 0.0
    %v3303 = vmax.f32 %v3181, 0.0
    %v3304 = vmax.f32 %v3186, 0.0
    %v3305 = vmax.f32 %v3191, 0.0
    %v3306 = vmax.f32 %v3196, 0.0
    %v3307 = vmax.f32 %v3201, 0.0
    %v3308 = vmax.f32 %v3206, 0.0
    %v3309 = vmax.f32 %v3211, 0.0
    %v3310 = vmax.f32 %v3216, 0.0
    %v3311 = vmax.f32 %v3221, 0.0
    %v3312 = vmax.f32 %v3226, 0.0
    %v3313 = vmax.f32 %v3231, 0.0
    %v3314 = vmax.f32 %v3236, 0.0
    %v3315 = vmax.f32 %v3241, 0.0
    %v3316 = vmax.f32 %v3246, 0.0
    %v3317 = vmax.f32 %v3251, 0.0
    %v3318 = vld [vmem:[%s12] sm:$0xff]
    %v3319 = vld [vmem:[%s12 + $0x8] sm:$0xff]
    %v3320 = vld [vmem:[%s12 + $0x10] sm:$0xff]
    %v3321 = vld [vmem:[%s12 + $0x18] sm:$0xff]
    %v3322 = vld [vmem:[%s12 + $0x20] sm:$0xff]
    %v3323 = vld [vmem:[%s12 + $0x28] sm:$0xff]
    %v3324 = vld [vmem:[%s12 + $0x30] sm:$0xff]
    %v3325 = vld [vmem:[%s12 + $0x38] sm:$0xff]
    %v3326 = vld [vmem:[%s13] sm:$0x1]
    %v3328 = vlaneseq
    %v3329 = vshrl.u32 %v3328, 7
    %v3330 = vsub.s32 0, %v3329
    %v3331 = vrot.slane %v3326, %v3330
    %v3334 = vsel %vm1370, %v3254, 0
    %v3337 = vsel %vm1370, %v3255, 0
    %v3340 = vsel %vm1370, %v3256, 0
    %v3343 = vsel %vm1370, %v3257, 0
    %v3346 = vsel %vm1370, %v3258, 0
    %v3349 = vsel %vm1370, %v3259, 0
    %v3352 = vsel %vm1370, %v3260, 0
    %v3355 = vsel %vm1370, %v3261, 0
    %v3358 = vsel %vm1370, %v3262, 0
    %v3361 = vsel %vm1370, %v3263, 0
    %v3364 = vsel %vm1370, %v3264, 0
    %v3367 = vsel %vm1370, %v3265, 0
    %v3370 = vsel %vm1370, %v3266, 0
    %v3373 = vsel %vm1370, %v3267, 0
    %v3376 = vsel %vm1370, %v3268, 0
    %v3379 = vsel %vm1370, %v3269, 0
    %v3382 = vsel %vm1370, %v3270, 0
    %v3385 = vsel %vm1370, %v3271, 0
    %v3388 = vsel %vm1370, %v3272, 0
    %v3391 = vsel %vm1370, %v3273, 0
    %v3394 = vsel %vm1370, %v3274, 0
    %v3397 = vsel %vm1370, %v3275, 0
    %v3400 = vsel %vm1370, %v3276, 0
    %v3403 = vsel %vm1370, %v3277, 0
    %v3406 = vsel %vm1370, %v3278, 0
    %v3409 = vsel %vm1370, %v3279, 0
    %v3412 = vsel %vm1370, %v3280, 0
    %v3415 = vsel %vm1370, %v3281, 0
    %v3418 = vsel %vm1370, %v3282, 0
    %v3421 = vsel %vm1370, %v3283, 0
    %v3424 = vsel %vm1370, %v3284, 0
    %v3427 = vsel %vm1370, %v3285, 0
    %v3430 = vsel %vm1370, %v3286, 0
    %v3433 = vsel %vm1370, %v3287, 0
    %v3436 = vsel %vm1370, %v3288, 0
    %v3439 = vsel %vm1370, %v3289, 0
    %v3442 = vsel %vm1370, %v3290, 0
    %v3445 = vsel %vm1370, %v3291, 0
    %v3448 = vsel %vm1370, %v3292, 0
    %v3451 = vsel %vm1370, %v3293, 0
    %v3454 = vsel %vm1370, %v3294, 0
    %v3457 = vsel %vm1370, %v3295, 0
    %v3460 = vsel %vm1370, %v3296, 0
    %v3463 = vsel %vm1370, %v3297, 0
    %v3466 = vsel %vm1370, %v3298, 0
    %v3469 = vsel %vm1370, %v3299, 0
    %v3472 = vsel %vm1370, %v3300, 0
    %v3475 = vsel %vm1370, %v3301, 0
    %v3478 = vsel %vm1370, %v3302, 0
    %v3481 = vsel %vm1370, %v3303, 0
    %v3484 = vsel %vm1370, %v3304, 0
    %v3487 = vsel %vm1370, %v3305, 0
    %v3490 = vsel %vm1370, %v3306, 0
    %v3493 = vsel %vm1370, %v3307, 0
    %v3496 = vsel %vm1370, %v3308, 0
    %v3499 = vsel %vm1370, %v3309, 0
    %v3502 = vsel %vm1370, %v3310, 0
    %v3505 = vsel %vm1370, %v3311, 0
    %v3508 = vsel %vm1370, %v3312, 0
    %v3511 = vsel %vm1370, %v3313, 0
    %v3514 = vsel %vm1370, %v3314, 0
    %v3517 = vsel %vm1370, %v3315, 0
    %v3520 = vsel %vm1370, %v3316, 0
    %v3523 = vsel %vm1370, %v3317, 0
    %3525 = vmatprep.subr.mxu0 0.0
    %3526 = vmatpush1.msra.mxu0 0.0
    %3527 = vmatprep.subr.mxu0 0.0
    %3528 = vmatpush1.msra.mxu0 0.0
    %3529 = vmatprep.subr.mxu0 0.0
    %3530 = vmatpush1.msra.mxu0 0.0
    %3531 = vmatprep.subr.mxu0 0.0
    %3532 = vmatpush1.msra.mxu0 0.0
    %3533 = vmatprep.subr.mxu0 0.0
    %3534 = vmatpush1.msra.mxu0 0.0
    %3535 = vmatprep.subr.mxu0 0.0
    %3536 = vmatpush1.msra.mxu0 0.0
    %3537 = vmatprep.subr.mxu0 0.0
    %3538 = vmatpush1.msra.mxu0 0.0
    %3539 = vmatprep.subr.mxu0 0.0
    %3540 = vmatpush1.msra.mxu0 0.0
    %3541 = vmatprep.subr.mxu0 0.0
    %3542 = vmatpush1.msra.mxu0 %v3325
    %3543 = vmatprep.subr.mxu0 0.0
    %3544 = vmatpush1.msra.mxu0 %v3324
    %3545 = vmatprep.subr.mxu0 0.0
    %3546 = vmatpush1.msra.mxu0 %v3323
    %3547 = vmatprep.subr.mxu0 0.0
    %3548 = vmatpush1.msra.mxu0 %v3322
    %3549 = vmatprep.subr.mxu0 0.0
    %3550 = vmatpush1.msra.mxu0 %v3321
    %3551 = vmatprep.subr.mxu0 0.0
    %3552 = vmatpush1.msra.mxu0 %v3320
    %3553 = vmatprep.subr.mxu0 0.0
    %3554 = vmatpush1.msra.mxu0 %v3319
    %3555 = vmatprep.subr.mxu0 0.0
    %3556 = vmatpush1.msra.mxu0 %v3318
    %3557 = vmatprep.subr.mxu0 0.0
    %3558 = vmatpush2.msra.mxu0 0.0
    %3559 = vmatprep.subr.mxu0 0.0
    %3560 = vmatpush2.msra.mxu0 0.0
    %3561 = vmatprep.subr.mxu0 0.0
    %3562 = vmatpush2.msra.mxu0 0.0
    %3563 = vmatprep.subr.mxu0 0.0
    %3564 = vmatpush2.msra.mxu0 0.0
    %3565 = vmatprep.subr.mxu0 0.0
    %3566 = vmatpush2.msra.mxu0 0.0
    %3567 = vmatprep.subr.mxu0 0.0
    %3568 = vmatpush2.msra.mxu0 0.0
    %3569 = vmatprep.subr.mxu0 0.0
    %3570 = vmatpush2.msra.mxu0 0.0
    %3571 = vmatprep.subr.mxu0 0.0
    %3572 = vmatpush2.msra.mxu0 0.0
    %3573 = vmatprep.subr.mxu0 0.0
    %3574 = vmatpush2.msra.mxu0 0.0
    %3575 = vmatprep.subr.mxu0 0.0
    %3576 = vmatpush2.msra.mxu0 0.0
    %3577 = vmatprep.subr.mxu0 0.0
    %3578 = vmatpush2.msra.mxu0 0.0
    %3579 = vmatprep.subr.mxu0 0.0
    %3580 = vmatpush2.msra.mxu0 0.0
    %3581 = vmatprep.subr.mxu0 0.0
    %3582 = vmatpush2.msra.mxu0 0.0
    %3583 = vmatprep.subr.mxu0 0.0
    %3584 = vmatpush2.msra.mxu0 0.0
    %3585 = vmatprep.subr.mxu0 0.0
    %3586 = vmatpush2.msra.mxu0 0.0
    %3587 = vmatprep.subr.mxu0 0.0
    %3588 = vmatpush2.msra.mxu0 0.0
    %3589 = vmatprep.mubr.f32.mxu0 0.0
    %3590 = vmatmul.mubr.f32.gmra.mxu0 %v3334
    %v3591 = vpop.f32.mrf.mxu0
    %v3592 = vadd.f32 %v3331, %v3591
    %v3593 = vpop.f32.mrf.mxu0
    %3594 = vmatprep.mubr.f32.mxu0 0.0
    %3595 = vmatmul.mubr.f32.gmra.mxu0 %v3337
    %v3596 = vpop.f32.mrf.mxu0
    %v3597 = vadd.f32 %v3331, %v3596
    %v3598 = vpop.f32.mrf.mxu0
    %3599 = vmatprep.mubr.f32.mxu0 0.0
    %3600 = vmatmul.mubr.f32.gmra.mxu0 %v3340
    %v3601 = vpop.f32.mrf.mxu0
    %v3602 = vadd.f32 %v3331, %v3601
    %v3603 = vpop.f32.mrf.mxu0
    %3604 = vmatprep.mubr.f32.mxu0 0.0
    %3605 = vmatmul.mubr.f32.gmra.mxu0 %v3343
    %v3606 = vpop.f32.mrf.mxu0
    %v3607 = vadd.f32 %v3331, %v3606
    %v3608 = vpop.f32.mrf.mxu0
    %3609 = vmatprep.mubr.f32.mxu0 0.0
    %3610 = vmatmul.mubr.f32.gmra.mxu0 %v3346
    %v3611 = vpop.f32.mrf.mxu0
    %v3612 = vadd.f32 %v3331, %v3611
    %v3613 = vpop.f32.mrf.mxu0
    %3614 = vmatprep.mubr.f32.mxu0 0.0
    %3615 = vmatmul.mubr.f32.gmra.mxu0 %v3349
    %v3616 = vpop.f32.mrf.mxu0
    %v3617 = vadd.f32 %v3331, %v3616
    %v3618 = vpop.f32.mrf.mxu0
    %3619 = vmatprep.mubr.f32.mxu0 0.0
    %3620 = vmatmul.mubr.f32.gmra.mxu0 %v3352
    %v3621 = vpop.f32.mrf.mxu0
    %v3622 = vadd.f32 %v3331, %v3621
    %v3623 = vpop.f32.mrf.mxu0
    %3624 = vmatprep.mubr.f32.mxu0 0.0
    %3625 = vmatmul.mubr.f32.gmra.mxu0 %v3355
    %v3626 = vpop.f32.mrf.mxu0
    %v3627 = vadd.f32 %v3331, %v3626
    %v3628 = vpop.f32.mrf.mxu0
    %3629 = vmatprep.mubr.f32.mxu0 0.0
    %3630 = vmatmul.mubr.f32.gmra.mxu0 %v3358
    %v3631 = vpop.f32.mrf.mxu0
    %v3632 = vadd.f32 %v3331, %v3631
    %v3633 = vpop.f32.mrf.mxu0
    %3634 = vmatprep.mubr.f32.mxu0 0.0
    %3635 = vmatmul.mubr.f32.gmra.mxu0 %v3361
    %v3636 = vpop.f32.mrf.mxu0
    %v3637 = vadd.f32 %v3331, %v3636
    %v3638 = vpop.f32.mrf.mxu0
    %3639 = vmatprep.mubr.f32.mxu0 0.0
    %3640 = vmatmul.mubr.f32.gmra.mxu0 %v3364
    %v3641 = vpop.f32.mrf.mxu0
    %v3642 = vadd.f32 %v3331, %v3641
    %v3643 = vpop.f32.mrf.mxu0
    %3644 = vmatprep.mubr.f32.mxu0 0.0
    %3645 = vmatmul.mubr.f32.gmra.mxu0 %v3367
    %v3646 = vpop.f32.mrf.mxu0
    %v3647 = vadd.f32 %v3331, %v3646
    %v3648 = vpop.f32.mrf.mxu0
    %3649 = vmatprep.mubr.f32.mxu0 0.0
    %3650 = vmatmul.mubr.f32.gmra.mxu0 %v3370
    %v3651 = vpop.f32.mrf.mxu0
    %v3652 = vadd.f32 %v3331, %v3651
    %v3653 = vpop.f32.mrf.mxu0
    %3654 = vmatprep.mubr.f32.mxu0 0.0
    %3655 = vmatmul.mubr.f32.gmra.mxu0 %v3373
    %v3656 = vpop.f32.mrf.mxu0
    %v3657 = vadd.f32 %v3331, %v3656
    %v3658 = vpop.f32.mrf.mxu0
    %3659 = vmatprep.mubr.f32.mxu0 0.0
    %3660 = vmatmul.mubr.f32.gmra.mxu0 %v3376
    %v3661 = vpop.f32.mrf.mxu0
    %v3662 = vadd.f32 %v3331, %v3661
    %v3663 = vpop.f32.mrf.mxu0
    %3664 = vmatprep.mubr.f32.mxu0 0.0
    %3665 = vmatmul.mubr.f32.gmra.mxu0 %v3379
    %v3666 = vpop.f32.mrf.mxu0
    %v3667 = vadd.f32 %v3331, %v3666
    %v3668 = vpop.f32.mrf.mxu0
    %3669 = vmatprep.mubr.f32.mxu0 0.0
    %3670 = vmatmul.mubr.f32.gmra.mxu0 %v3382
    %v3671 = vpop.f32.mrf.mxu0
    %v3672 = vadd.f32 %v3331, %v3671
    %v3673 = vpop.f32.mrf.mxu0
    %3674 = vmatprep.mubr.f32.mxu0 0.0
    %3675 = vmatmul.mubr.f32.gmra.mxu0 %v3385
    %v3676 = vpop.f32.mrf.mxu0
    %v3677 = vadd.f32 %v3331, %v3676
    %v3678 = vpop.f32.mrf.mxu0
    %3679 = vmatprep.mubr.f32.mxu0 0.0
    %3680 = vmatmul.mubr.f32.gmra.mxu0 %v3388
    %v3681 = vpop.f32.mrf.mxu0
    %v3682 = vadd.f32 %v3331, %v3681
    %v3683 = vpop.f32.mrf.mxu0
    %3684 = vmatprep.mubr.f32.mxu0 0.0
    %3685 = vmatmul.mubr.f32.gmra.mxu0 %v3391
    %v3686 = vpop.f32.mrf.mxu0
    %v3687 = vadd.f32 %v3331, %v3686
    %v3688 = vpop.f32.mrf.mxu0
    %3689 = vmatprep.mubr.f32.mxu0 0.0
    %3690 = vmatmul.mubr.f32.gmra.mxu0 %v3394
    %v3691 = vpop.f32.mrf.mxu0
    %v3692 = vadd.f32 %v3331, %v3691
    %v3693 = vpop.f32.mrf.mxu0
    %3694 = vmatprep.mubr.f32.mxu0 0.0
    %3695 = vmatmul.mubr.f32.gmra.mxu0 %v3397
    %v3696 = vpop.f32.mrf.mxu0
    %v3697 = vadd.f32 %v3331, %v3696
    %v3698 = vpop.f32.mrf.mxu0
    %3699 = vmatprep.mubr.f32.mxu0 0.0
    %3700 = vmatmul.mubr.f32.gmra.mxu0 %v3400
    %v3701 = vpop.f32.mrf.mxu0
    %v3702 = vadd.f32 %v3331, %v3701
    %v3703 = vpop.f32.mrf.mxu0
    %3704 = vmatprep.mubr.f32.mxu0 0.0
    %3705 = vmatmul.mubr.f32.gmra.mxu0 %v3403
    %v3706 = vpop.f32.mrf.mxu0
    %v3707 = vadd.f32 %v3331, %v3706
    %v3708 = vpop.f32.mrf.mxu0
    %3709 = vmatprep.mubr.f32.mxu0 0.0
    %3710 = vmatmul.mubr.f32.gmra.mxu0 %v3406
    %v3711 = vpop.f32.mrf.mxu0
    %v3712 = vadd.f32 %v3331, %v3711
    %v3713 = vpop.f32.mrf.mxu0
    %3714 = vmatprep.mubr.f32.mxu0 0.0
    %3715 = vmatmul.mubr.f32.gmra.mxu0 %v3409
    %v3716 = vpop.f32.mrf.mxu0
    %v3717 = vadd.f32 %v3331, %v3716
    %v3718 = vpop.f32.mrf.mxu0
    %3719 = vmatprep.mubr.f32.mxu0 0.0
    %3720 = vmatmul.mubr.f32.gmra.mxu0 %v3412
    %v3721 = vpop.f32.mrf.mxu0
    %v3722 = vadd.f32 %v3331, %v3721
    %v3723 = vpop.f32.mrf.mxu0
    %3724 = vmatprep.mubr.f32.mxu0 0.0
    %3725 = vmatmul.mubr.f32.gmra.mxu0 %v3415
    %v3726 = vpop.f32.mrf.mxu0
    %v3727 = vadd.f32 %v3331, %v3726
    %v3728 = vpop.f32.mrf.mxu0
    %3729 = vmatprep.mubr.f32.mxu0 0.0
    %3730 = vmatmul.mubr.f32.gmra.mxu0 %v3418
    %v3731 = vpop.f32.mrf.mxu0
    %v3732 = vadd.f32 %v3331, %v3731
    %v3733 = vpop.f32.mrf.mxu0
    %3734 = vmatprep.mubr.f32.mxu0 0.0
    %3735 = vmatmul.mubr.f32.gmra.mxu0 %v3421
    %v3736 = vpop.f32.mrf.mxu0
    %v3737 = vadd.f32 %v3331, %v3736
    %v3738 = vpop.f32.mrf.mxu0
    %3739 = vmatprep.mubr.f32.mxu0 0.0
    %3740 = vmatmul.mubr.f32.gmra.mxu0 %v3424
    %v3741 = vpop.f32.mrf.mxu0
    %v3742 = vadd.f32 %v3331, %v3741
    %v3743 = vpop.f32.mrf.mxu0
    %3744 = vmatprep.mubr.f32.mxu0 0.0
    %3745 = vmatmul.mubr.f32.gmra.mxu0 %v3427
    %v3746 = vpop.f32.mrf.mxu0
    %v3747 = vadd.f32 %v3331, %v3746
    %v3748 = vpop.f32.mrf.mxu0
    %3749 = vmatprep.mubr.f32.mxu0 0.0
    %3750 = vmatmul.mubr.f32.gmra.mxu0 %v3430
    %v3751 = vpop.f32.mrf.mxu0
    %v3752 = vadd.f32 %v3331, %v3751
    %v3753 = vpop.f32.mrf.mxu0
    %3754 = vmatprep.mubr.f32.mxu0 0.0
    %3755 = vmatmul.mubr.f32.gmra.mxu0 %v3433
    %v3756 = vpop.f32.mrf.mxu0
    %v3757 = vadd.f32 %v3331, %v3756
    %v3758 = vpop.f32.mrf.mxu0
    %3759 = vmatprep.mubr.f32.mxu0 0.0
    %3760 = vmatmul.mubr.f32.gmra.mxu0 %v3436
    %v3761 = vpop.f32.mrf.mxu0
    %v3762 = vadd.f32 %v3331, %v3761
    %v3763 = vpop.f32.mrf.mxu0
    %3764 = vmatprep.mubr.f32.mxu0 0.0
    %3765 = vmatmul.mubr.f32.gmra.mxu0 %v3439
    %v3766 = vpop.f32.mrf.mxu0
    %v3767 = vadd.f32 %v3331, %v3766
    %v3768 = vpop.f32.mrf.mxu0
    %3769 = vmatprep.mubr.f32.mxu0 0.0
    %3770 = vmatmul.mubr.f32.gmra.mxu0 %v3442
    %v3771 = vpop.f32.mrf.mxu0
    %v3772 = vadd.f32 %v3331, %v3771
    %v3773 = vpop.f32.mrf.mxu0
    %3774 = vmatprep.mubr.f32.mxu0 0.0
    %3775 = vmatmul.mubr.f32.gmra.mxu0 %v3445
    %v3776 = vpop.f32.mrf.mxu0
    %v3777 = vadd.f32 %v3331, %v3776
    %v3778 = vpop.f32.mrf.mxu0
    %3779 = vmatprep.mubr.f32.mxu0 0.0
    %3780 = vmatmul.mubr.f32.gmra.mxu0 %v3448
    %v3781 = vpop.f32.mrf.mxu0
    %v3782 = vadd.f32 %v3331, %v3781
    %v3783 = vpop.f32.mrf.mxu0
    %3784 = vmatprep.mubr.f32.mxu0 0.0
    %3785 = vmatmul.mubr.f32.gmra.mxu0 %v3451
    %v3786 = vpop.f32.mrf.mxu0
    %v3787 = vadd.f32 %v3331, %v3786
    %v3788 = vpop.f32.mrf.mxu0
    %3789 = vmatprep.mubr.f32.mxu0 0.0
    %3790 = vmatmul.mubr.f32.gmra.mxu0 %v3454
    %v3791 = vpop.f32.mrf.mxu0
    %v3792 = vadd.f32 %v3331, %v3791
    %v3793 = vpop.f32.mrf.mxu0
    %3794 = vmatprep.mubr.f32.mxu0 0.0
    %3795 = vmatmul.mubr.f32.gmra.mxu0 %v3457
    %v3796 = vpop.f32.mrf.mxu0
    %v3797 = vadd.f32 %v3331, %v3796
    %v3798 = vpop.f32.mrf.mxu0
    %3799 = vmatprep.mubr.f32.mxu0 0.0
    %3800 = vmatmul.mubr.f32.gmra.mxu0 %v3460
    %v3801 = vpop.f32.mrf.mxu0
    %v3802 = vadd.f32 %v3331, %v3801
    %v3803 = vpop.f32.mrf.mxu0
    %3804 = vmatprep.mubr.f32.mxu0 0.0
    %3805 = vmatmul.mubr.f32.gmra.mxu0 %v3463
    %v3806 = vpop.f32.mrf.mxu0
    %v3807 = vadd.f32 %v3331, %v3806
    %v3808 = vpop.f32.mrf.mxu0
    %3809 = vmatprep.mubr.f32.mxu0 0.0
    %3810 = vmatmul.mubr.f32.gmra.mxu0 %v3466
    %v3811 = vpop.f32.mrf.mxu0
    %v3812 = vadd.f32 %v3331, %v3811
    %v3813 = vpop.f32.mrf.mxu0
    %3814 = vmatprep.mubr.f32.mxu0 0.0
    %3815 = vmatmul.mubr.f32.gmra.mxu0 %v3469
    %v3816 = vpop.f32.mrf.mxu0
    %v3817 = vadd.f32 %v3331, %v3816
    %v3818 = vpop.f32.mrf.mxu0
    %3819 = vmatprep.mubr.f32.mxu0 0.0
    %3820 = vmatmul.mubr.f32.gmra.mxu0 %v3472
    %v3821 = vpop.f32.mrf.mxu0
    %v3822 = vadd.f32 %v3331, %v3821
    %v3823 = vpop.f32.mrf.mxu0
    %3824 = vmatprep.mubr.f32.mxu0 0.0
    %3825 = vmatmul.mubr.f32.gmra.mxu0 %v3475
    %v3826 = vpop.f32.mrf.mxu0
    %v3827 = vadd.f32 %v3331, %v3826
    %v3828 = vpop.f32.mrf.mxu0
    %3829 = vmatprep.mubr.f32.mxu0 0.0
    %3830 = vmatmul.mubr.f32.gmra.mxu0 %v3478
    %v3831 = vpop.f32.mrf.mxu0
    %v3832 = vadd.f32 %v3331, %v3831
    %v3833 = vpop.f32.mrf.mxu0
    %3834 = vmatprep.mubr.f32.mxu0 0.0
    %3835 = vmatmul.mubr.f32.gmra.mxu0 %v3481
    %v3836 = vpop.f32.mrf.mxu0
    %v3837 = vadd.f32 %v3331, %v3836
    %v3838 = vpop.f32.mrf.mxu0
    %3839 = vmatprep.mubr.f32.mxu0 0.0
    %3840 = vmatmul.mubr.f32.gmra.mxu0 %v3484
    %v3841 = vpop.f32.mrf.mxu0
    %v3842 = vadd.f32 %v3331, %v3841
    %v3843 = vpop.f32.mrf.mxu0
    %3844 = vmatprep.mubr.f32.mxu0 0.0
    %3845 = vmatmul.mubr.f32.gmra.mxu0 %v3487
    %v3846 = vpop.f32.mrf.mxu0
    %v3847 = vadd.f32 %v3331, %v3846
    %v3848 = vpop.f32.mrf.mxu0
    %3849 = vmatprep.mubr.f32.mxu0 0.0
    %3850 = vmatmul.mubr.f32.gmra.mxu0 %v3490
    %v3851 = vpop.f32.mrf.mxu0
    %v3852 = vadd.f32 %v3331, %v3851
    %v3853 = vpop.f32.mrf.mxu0
    %3854 = vmatprep.mubr.f32.mxu0 0.0
    %3855 = vmatmul.mubr.f32.gmra.mxu0 %v3493
    %v3856 = vpop.f32.mrf.mxu0
    %v3857 = vadd.f32 %v3331, %v3856
    %v3858 = vpop.f32.mrf.mxu0
    %3859 = vmatprep.mubr.f32.mxu0 0.0
    %3860 = vmatmul.mubr.f32.gmra.mxu0 %v3496
    %v3861 = vpop.f32.mrf.mxu0
    %v3862 = vadd.f32 %v3331, %v3861
    %v3863 = vpop.f32.mrf.mxu0
    %3864 = vmatprep.mubr.f32.mxu0 0.0
    %3865 = vmatmul.mubr.f32.gmra.mxu0 %v3499
    %v3866 = vpop.f32.mrf.mxu0
    %v3867 = vadd.f32 %v3331, %v3866
    %v3868 = vpop.f32.mrf.mxu0
    %3869 = vmatprep.mubr.f32.mxu0 0.0
    %3870 = vmatmul.mubr.f32.gmra.mxu0 %v3502
    %v3871 = vpop.f32.mrf.mxu0
    %v3872 = vadd.f32 %v3331, %v3871
    %v3873 = vpop.f32.mrf.mxu0
    %3874 = vmatprep.mubr.f32.mxu0 0.0
    %3875 = vmatmul.mubr.f32.gmra.mxu0 %v3505
    %v3876 = vpop.f32.mrf.mxu0
    %v3877 = vadd.f32 %v3331, %v3876
    %v3878 = vpop.f32.mrf.mxu0
    %3879 = vmatprep.mubr.f32.mxu0 0.0
    %3880 = vmatmul.mubr.f32.gmra.mxu0 %v3508
    %v3881 = vpop.f32.mrf.mxu0
    %v3882 = vadd.f32 %v3331, %v3881
    %v3883 = vpop.f32.mrf.mxu0
    %3884 = vmatprep.mubr.f32.mxu0 0.0
    %3885 = vmatmul.mubr.f32.gmra.mxu0 %v3511
    %v3886 = vpop.f32.mrf.mxu0
    %v3887 = vadd.f32 %v3331, %v3886
    %v3888 = vpop.f32.mrf.mxu0
    %3889 = vmatprep.mubr.f32.mxu0 0.0
    %3890 = vmatmul.mubr.f32.gmra.mxu0 %v3514
    %v3891 = vpop.f32.mrf.mxu0
    %v3892 = vadd.f32 %v3331, %v3891
    %v3893 = vpop.f32.mrf.mxu0
    %3894 = vmatprep.mubr.f32.mxu0 0.0
    %3895 = vmatmul.mubr.f32.gmra.mxu0 %v3517
    %v3896 = vpop.f32.mrf.mxu0
    %v3897 = vadd.f32 %v3331, %v3896
    %v3898 = vpop.f32.mrf.mxu0
    %3899 = vmatprep.mubr.f32.mxu0 0.0
    %3900 = vmatmul.mubr.f32.gmra.mxu0 %v3520
    %v3901 = vpop.f32.mrf.mxu0
    %v3902 = vadd.f32 %v3331, %v3901
    %v3903 = vpop.f32.mrf.mxu0
    %3904 = vmatprep.mubr.f32.mxu0 0.0
    %3905 = vmatmul.mubr.f32.gmra.mxu0 %v3523
    %v3906 = vpop.f32.mrf.mxu0
    %v3907 = vadd.f32 %v3331, %v3906
    %v3908 = vpop.f32.mrf.mxu0
    %3909 = vdwg.mxu0
    %vm3910 = vcmp.eq.s32.totalorder %v112, 1
    %vm3911 = vcmp.eq.s32.totalorder %v113, 1
    %vm3912 = vcmp.eq.s32.totalorder %v114, 1
    %vm3913 = vcmp.eq.s32.totalorder %v115, 1
    %vm3914 = vcmp.eq.s32.totalorder %v116, 1
    %vm3915 = vcmp.eq.s32.totalorder %v117, 1
    %vm3916 = vcmp.eq.s32.totalorder %v118, 1
    %vm3917 = vcmp.eq.s32.totalorder %v119, 1
    %vm3918 = vcmp.eq.s32.totalorder %v120, 1
    %vm3919 = vcmp.eq.s32.totalorder %v121, 1
    %vm3920 = vcmp.eq.s32.totalorder %v122, 1
    %vm3921 = vcmp.eq.s32.totalorder %v123, 1
    %vm3922 = vcmp.eq.s32.totalorder %v124, 1
    %vm3923 = vcmp.eq.s32.totalorder %v125, 1
    %vm3924 = vcmp.eq.s32.totalorder %v126, 1
    %vm3925 = vcmp.eq.s32.totalorder %v127, 1
    %vm3926 = vcmp.eq.s32.totalorder %v128, 1
    %vm3927 = vcmp.eq.s32.totalorder %v129, 1
    %vm3928 = vcmp.eq.s32.totalorder %v130, 1
    %vm3929 = vcmp.eq.s32.totalorder %v131, 1
    %vm3930 = vcmp.eq.s32.totalorder %v132, 1
    %vm3931 = vcmp.eq.s32.totalorder %v133, 1
    %vm3932 = vcmp.eq.s32.totalorder %v134, 1
    %vm3933 = vcmp.eq.s32.totalorder %v135, 1
    %vm3934 = vcmp.eq.s32.totalorder %v136, 1
    %vm3935 = vcmp.eq.s32.totalorder %v137, 1
    %vm3936 = vcmp.eq.s32.totalorder %v138, 1
    %vm3937 = vcmp.eq.s32.totalorder %v139, 1
    %vm3938 = vcmp.eq.s32.totalorder %v140, 1
    %vm3939 = vcmp.eq.s32.totalorder %v141, 1
    %vm3940 = vcmp.eq.s32.totalorder %v142, 1
    %vm3941 = vcmp.eq.s32.totalorder %v143, 1
    %vm3942 = vcmp.eq.s32.totalorder %v144, 1
    %vm3943 = vcmp.eq.s32.totalorder %v145, 1
    %vm3944 = vcmp.eq.s32.totalorder %v146, 1
    %vm3945 = vcmp.eq.s32.totalorder %v147, 1
    %vm3946 = vcmp.eq.s32.totalorder %v148, 1
    %vm3947 = vcmp.eq.s32.totalorder %v149, 1
    %vm3948 = vcmp.eq.s32.totalorder %v150, 1
    %vm3949 = vcmp.eq.s32.totalorder %v151, 1
    %vm3950 = vcmp.eq.s32.totalorder %v152, 1
    %vm3951 = vcmp.eq.s32.totalorder %v153, 1
    %vm3952 = vcmp.eq.s32.totalorder %v154, 1
    %vm3953 = vcmp.eq.s32.totalorder %v155, 1
    %vm3954 = vcmp.eq.s32.totalorder %v156, 1
    %vm3955 = vcmp.eq.s32.totalorder %v157, 1
    %vm3956 = vcmp.eq.s32.totalorder %v158, 1
    %vm3957 = vcmp.eq.s32.totalorder %v159, 1
    %vm3958 = vcmp.eq.s32.totalorder %v160, 1
    %vm3959 = vcmp.eq.s32.totalorder %v161, 1
    %vm3960 = vcmp.eq.s32.totalorder %v162, 1
    %vm3961 = vcmp.eq.s32.totalorder %v163, 1
    %vm3962 = vcmp.eq.s32.totalorder %v164, 1
    %vm3963 = vcmp.eq.s32.totalorder %v165, 1
    %vm3964 = vcmp.eq.s32.totalorder %v166, 1
    %vm3965 = vcmp.eq.s32.totalorder %v167, 1
    %vm3966 = vcmp.eq.s32.totalorder %v168, 1
    %vm3967 = vcmp.eq.s32.totalorder %v169, 1
    %vm3968 = vcmp.eq.s32.totalorder %v170, 1
    %vm3969 = vcmp.eq.s32.totalorder %v171, 1
    %vm3970 = vcmp.eq.s32.totalorder %v172, 1
    %vm3971 = vcmp.eq.s32.totalorder %v173, 1
    %vm3972 = vcmp.eq.s32.totalorder %v174, 1
    %vm3973 = vcmp.eq.s32.totalorder %v175, 1
    %v3974 = vsel %vm3910, 1, 0
    %v3975 = vsel %vm3911, 1, 0
    %v3976 = vsel %vm3912, 1, 0
    %v3977 = vsel %vm3913, 1, 0
    %v3978 = vsel %vm3914, 1, 0
    %v3979 = vsel %vm3915, 1, 0
    %v3980 = vsel %vm3916, 1, 0
    %v3981 = vsel %vm3917, 1, 0
    %v3982 = vsel %vm3918, 1, 0
    %v3983 = vsel %vm3919, 1, 0
    %v3984 = vsel %vm3920, 1, 0
    %v3985 = vsel %vm3921, 1, 0
    %v3986 = vsel %vm3922, 1, 0
    %v3987 = vsel %vm3923, 1, 0
    %v3988 = vsel %vm3924, 1, 0
    %v3989 = vsel %vm3925, 1, 0
    %v3990 = vsel %vm3926, 1, 0
    %v3991 = vsel %vm3927, 1, 0
    %v3992 = vsel %vm3928, 1, 0
    %v3993 = vsel %vm3929, 1, 0
    %v3994 = vsel %vm3930, 1, 0
    %v3995 = vsel %vm3931, 1, 0
    %v3996 = vsel %vm3932, 1, 0
    %v3997 = vsel %vm3933, 1, 0
    %v3998 = vsel %vm3934, 1, 0
    %v3999 = vsel %vm3935, 1, 0
    %v4000 = vsel %vm3936, 1, 0
    %v4001 = vsel %vm3937, 1, 0
    %v4002 = vsel %vm3938, 1, 0
    %v4003 = vsel %vm3939, 1, 0
    %v4004 = vsel %vm3940, 1, 0
    %v4005 = vsel %vm3941, 1, 0
    %v4006 = vsel %vm3942, 1, 0
    %v4007 = vsel %vm3943, 1, 0
    %v4008 = vsel %vm3944, 1, 0
    %v4009 = vsel %vm3945, 1, 0
    %v4010 = vsel %vm3946, 1, 0
    %v4011 = vsel %vm3947, 1, 0
    %v4012 = vsel %vm3948, 1, 0
    %v4013 = vsel %vm3949, 1, 0
    %v4014 = vsel %vm3950, 1, 0
    %v4015 = vsel %vm3951, 1, 0
    %v4016 = vsel %vm3952, 1, 0
    %v4017 = vsel %vm3953, 1, 0
    %v4018 = vsel %vm3954, 1, 0
    %v4019 = vsel %vm3955, 1, 0
    %v4020 = vsel %vm3956, 1, 0
    %v4021 = vsel %vm3957, 1, 0
    %v4022 = vsel %vm3958, 1, 0
    %v4023 = vsel %vm3959, 1, 0
    %v4024 = vsel %vm3960, 1, 0
    %v4025 = vsel %vm3961, 1, 0
    %v4026 = vsel %vm3962, 1, 0
    %v4027 = vsel %vm3963, 1, 0
    %v4028 = vsel %vm3964, 1, 0
    %v4029 = vsel %vm3965, 1, 0
    %v4030 = vsel %vm3966, 1, 0
    %v4031 = vsel %vm3967, 1, 0
    %v4032 = vsel %vm3968, 1, 0
    %v4033 = vsel %vm3969, 1, 0
    %v4034 = vsel %vm3970, 1, 0
    %v4035 = vsel %vm3971, 1, 0
    %v4036 = vsel %vm3972, 1, 0
    %v4037 = vsel %vm3973, 1, 0
    %4038 = vset.pattern.permute.xlu0 0
    %4039 = vperm.xlu0 %4038, %v3974
    %v4040 = vpop.permute.xlu0 %4039
    %4041 = vset.pattern.permute.xlu0 0
    %4042 = vperm.xlu0 %4041, %v3975
    %v4043 = vpop.permute.xlu0 %4042
    %4044 = vset.pattern.permute.xlu0 0
    %4045 = vperm.xlu0 %4044, %v3976
    %v4046 = vpop.permute.xlu0 %4045
    %4047 = vset.pattern.permute.xlu0 0
    %4048 = vperm.xlu0 %4047, %v3977
    %v4049 = vpop.permute.xlu0 %4048
    %4050 = vset.pattern.permute.xlu0 0
    %4051 = vperm.xlu0 %4050, %v3978
    %v4052 = vpop.permute.xlu0 %4051
    %4053 = vset.pattern.permute.xlu0 0
    %4054 = vperm.xlu0 %4053, %v3979
    %v4055 = vpop.permute.xlu0 %4054
    %4056 = vset.pattern.permute.xlu0 0
    %4057 = vperm.xlu0 %4056, %v3980
    %v4058 = vpop.permute.xlu0 %4057
    %4059 = vset.pattern.permute.xlu0 0
    %4060 = vperm.xlu0 %4059, %v3981
    %v4061 = vpop.permute.xlu0 %4060
    %4062 = vset.pattern.permute.xlu0 0
    %4063 = vperm.xlu0 %4062, %v3982
    %v4064 = vpop.permute.xlu0 %4063
    %4065 = vset.pattern.permute.xlu0 0
    %4066 = vperm.xlu0 %4065, %v3983
    %v4067 = vpop.permute.xlu0 %4066
    %4068 = vset.pattern.permute.xlu0 0
    %4069 = vperm.xlu0 %4068, %v3984
    %v4070 = vpop.permute.xlu0 %4069
    %4071 = vset.pattern.permute.xlu0 0
    %4072 = vperm.xlu0 %4071, %v3985
    %v4073 = vpop.permute.xlu0 %4072
    %4074 = vset.pattern.permute.xlu0 0
    %4075 = vperm.xlu0 %4074, %v3986
    %v4076 = vpop.permute.xlu0 %4075
    %4077 = vset.pattern.permute.xlu0 0
    %4078 = vperm.xlu0 %4077, %v3987
    %v4079 = vpop.permute.xlu0 %4078
    %4080 = vset.pattern.permute.xlu0 0
    %4081 = vperm.xlu0 %4080, %v3988
    %v4082 = vpop.permute.xlu0 %4081
    %4083 = vset.pattern.permute.xlu0 0
    %4084 = vperm.xlu0 %4083, %v3989
    %v4085 = vpop.permute.xlu0 %4084
    %4086 = vset.pattern.permute.xlu0 0
    %4087 = vperm.xlu0 %4086, %v3990
    %v4088 = vpop.permute.xlu0 %4087
    %4089 = vset.pattern.permute.xlu0 0
    %4090 = vperm.xlu0 %4089, %v3991
    %v4091 = vpop.permute.xlu0 %4090
    %4092 = vset.pattern.permute.xlu0 0
    %4093 = vperm.xlu0 %4092, %v3992
    %v4094 = vpop.permute.xlu0 %4093
    %4095 = vset.pattern.permute.xlu0 0
    %4096 = vperm.xlu0 %4095, %v3993
    %v4097 = vpop.permute.xlu0 %4096
    %4098 = vset.pattern.permute.xlu0 0
    %4099 = vperm.xlu0 %4098, %v3994
    %v4100 = vpop.permute.xlu0 %4099
    %4101 = vset.pattern.permute.xlu0 0
    %4102 = vperm.xlu0 %4101, %v3995
    %v4103 = vpop.permute.xlu0 %4102
    %4104 = vset.pattern.permute.xlu0 0
    %4105 = vperm.xlu0 %4104, %v3996
    %v4106 = vpop.permute.xlu0 %4105
    %4107 = vset.pattern.permute.xlu0 0
    %4108 = vperm.xlu0 %4107, %v3997
    %v4109 = vpop.permute.xlu0 %4108
    %4110 = vset.pattern.permute.xlu0 0
    %4111 = vperm.xlu0 %4110, %v3998
    %v4112 = vpop.permute.xlu0 %4111
    %4113 = vset.pattern.permute.xlu0 0
    %4114 = vperm.xlu0 %4113, %v3999
    %v4115 = vpop.permute.xlu0 %4114
    %4116 = vset.pattern.permute.xlu0 0
    %4117 = vperm.xlu0 %4116, %v4000
    %v4118 = vpop.permute.xlu0 %4117
    %4119 = vset.pattern.permute.xlu0 0
    %4120 = vperm.xlu0 %4119, %v4001
    %v4121 = vpop.permute.xlu0 %4120
    %4122 = vset.pattern.permute.xlu0 0
    %4123 = vperm.xlu0 %4122, %v4002
    %v4124 = vpop.permute.xlu0 %4123
    %4125 = vset.pattern.permute.xlu0 0
    %4126 = vperm.xlu0 %4125, %v4003
    %v4127 = vpop.permute.xlu0 %4126
    %4128 = vset.pattern.permute.xlu0 0
    %4129 = vperm.xlu0 %4128, %v4004
    %v4130 = vpop.permute.xlu0 %4129
    %4131 = vset.pattern.permute.xlu0 0
    %4132 = vperm.xlu0 %4131, %v4005
    %v4133 = vpop.permute.xlu0 %4132
    %4134 = vset.pattern.permute.xlu0 0
    %4135 = vperm.xlu0 %4134, %v4006
    %v4136 = vpop.permute.xlu0 %4135
    %4137 = vset.pattern.permute.xlu0 0
    %4138 = vperm.xlu0 %4137, %v4007
    %v4139 = vpop.permute.xlu0 %4138
    %4140 = vset.pattern.permute.xlu0 0
    %4141 = vperm.xlu0 %4140, %v4008
    %v4142 = vpop.permute.xlu0 %4141
    %4143 = vset.pattern.permute.xlu0 0
    %4144 = vperm.xlu0 %4143, %v4009
    %v4145 = vpop.permute.xlu0 %4144
    %4146 = vset.pattern.permute.xlu0 0
    %4147 = vperm.xlu0 %4146, %v4010
    %v4148 = vpop.permute.xlu0 %4147
    %4149 = vset.pattern.permute.xlu0 0
    %4150 = vperm.xlu0 %4149, %v4011
    %v4151 = vpop.permute.xlu0 %4150
    %4152 = vset.pattern.permute.xlu0 0
    %4153 = vperm.xlu0 %4152, %v4012
    %v4154 = vpop.permute.xlu0 %4153
    %4155 = vset.pattern.permute.xlu0 0
    %4156 = vperm.xlu0 %4155, %v4013
    %v4157 = vpop.permute.xlu0 %4156
    %4158 = vset.pattern.permute.xlu0 0
    %4159 = vperm.xlu0 %4158, %v4014
    %v4160 = vpop.permute.xlu0 %4159
    %4161 = vset.pattern.permute.xlu0 0
    %4162 = vperm.xlu0 %4161, %v4015
    %v4163 = vpop.permute.xlu0 %4162
    %4164 = vset.pattern.permute.xlu0 0
    %4165 = vperm.xlu0 %4164, %v4016
    %v4166 = vpop.permute.xlu0 %4165
    %4167 = vset.pattern.permute.xlu0 0
    %4168 = vperm.xlu0 %4167, %v4017
    %v4169 = vpop.permute.xlu0 %4168
    %4170 = vset.pattern.permute.xlu0 0
    %4171 = vperm.xlu0 %4170, %v4018
    %v4172 = vpop.permute.xlu0 %4171
    %4173 = vset.pattern.permute.xlu0 0
    %4174 = vperm.xlu0 %4173, %v4019
    %v4175 = vpop.permute.xlu0 %4174
    %4176 = vset.pattern.permute.xlu0 0
    %4177 = vperm.xlu0 %4176, %v4020
    %v4178 = vpop.permute.xlu0 %4177
    %4179 = vset.pattern.permute.xlu0 0
    %4180 = vperm.xlu0 %4179, %v4021
    %v4181 = vpop.permute.xlu0 %4180
    %4182 = vset.pattern.permute.xlu0 0
    %4183 = vperm.xlu0 %4182, %v4022
    %v4184 = vpop.permute.xlu0 %4183
    %4185 = vset.pattern.permute.xlu0 0
    %4186 = vperm.xlu0 %4185, %v4023
    %v4187 = vpop.permute.xlu0 %4186
    %4188 = vset.pattern.permute.xlu0 0
    %4189 = vperm.xlu0 %4188, %v4024
    %v4190 = vpop.permute.xlu0 %4189
    %4191 = vset.pattern.permute.xlu0 0
    %4192 = vperm.xlu0 %4191, %v4025
    %v4193 = vpop.permute.xlu0 %4192
    %4194 = vset.pattern.permute.xlu0 0
    %4195 = vperm.xlu0 %4194, %v4026
    %v4196 = vpop.permute.xlu0 %4195
    %4197 = vset.pattern.permute.xlu0 0
    %4198 = vperm.xlu0 %4197, %v4027
    %v4199 = vpop.permute.xlu0 %4198
    %4200 = vset.pattern.permute.xlu0 0
    %4201 = vperm.xlu0 %4200, %v4028
    %v4202 = vpop.permute.xlu0 %4201
    %4203 = vset.pattern.permute.xlu0 0
    %4204 = vperm.xlu0 %4203, %v4029
    %v4205 = vpop.permute.xlu0 %4204
    %4206 = vset.pattern.permute.xlu0 0
    %4207 = vperm.xlu0 %4206, %v4030
    %v4208 = vpop.permute.xlu0 %4207
    %4209 = vset.pattern.permute.xlu0 0
    %4210 = vperm.xlu0 %4209, %v4031
    %v4211 = vpop.permute.xlu0 %4210
    %4212 = vset.pattern.permute.xlu0 0
    %4213 = vperm.xlu0 %4212, %v4032
    %v4214 = vpop.permute.xlu0 %4213
    %4215 = vset.pattern.permute.xlu0 0
    %4216 = vperm.xlu0 %4215, %v4033
    %v4217 = vpop.permute.xlu0 %4216
    %4218 = vset.pattern.permute.xlu0 0
    %4219 = vperm.xlu0 %4218, %v4034
    %v4220 = vpop.permute.xlu0 %4219
    %4221 = vset.pattern.permute.xlu0 0
    %4222 = vperm.xlu0 %4221, %v4035
    %v4223 = vpop.permute.xlu0 %4222
    %4224 = vset.pattern.permute.xlu0 0
    %4225 = vperm.xlu0 %4224, %v4036
    %v4226 = vpop.permute.xlu0 %4225
    %4227 = vset.pattern.permute.xlu0 0
    %4228 = vperm.xlu0 %4227, %v4037
    %v4229 = vpop.permute.xlu0 %4228
    %vm4230 = vcmp.eq.s32.totalorder %v4040, 1
    %vm4231 = vcmp.eq.s32.totalorder %v4043, 1
    %vm4232 = vcmp.eq.s32.totalorder %v4046, 1
    %vm4233 = vcmp.eq.s32.totalorder %v4049, 1
    %vm4234 = vcmp.eq.s32.totalorder %v4052, 1
    %vm4235 = vcmp.eq.s32.totalorder %v4055, 1
    %vm4236 = vcmp.eq.s32.totalorder %v4058, 1
    %vm4237 = vcmp.eq.s32.totalorder %v4061, 1
    %vm4238 = vcmp.eq.s32.totalorder %v4064, 1
    %vm4239 = vcmp.eq.s32.totalorder %v4067, 1
    %vm4240 = vcmp.eq.s32.totalorder %v4070, 1
    %vm4241 = vcmp.eq.s32.totalorder %v4073, 1
    %vm4242 = vcmp.eq.s32.totalorder %v4076, 1
    %vm4243 = vcmp.eq.s32.totalorder %v4079, 1
    %vm4244 = vcmp.eq.s32.totalorder %v4082, 1
    %vm4245 = vcmp.eq.s32.totalorder %v4085, 1
    %vm4246 = vcmp.eq.s32.totalorder %v4088, 1
    %vm4247 = vcmp.eq.s32.totalorder %v4091, 1
    %vm4248 = vcmp.eq.s32.totalorder %v4094, 1
    %vm4249 = vcmp.eq.s32.totalorder %v4097, 1
    %vm4250 = vcmp.eq.s32.totalorder %v4100, 1
    %vm4251 = vcmp.eq.s32.totalorder %v4103, 1
    %vm4252 = vcmp.eq.s32.totalorder %v4106, 1
    %vm4253 = vcmp.eq.s32.totalorder %v4109, 1
    %vm4254 = vcmp.eq.s32.totalorder %v4112, 1
    %vm4255 = vcmp.eq.s32.totalorder %v4115, 1
    %vm4256 = vcmp.eq.s32.totalorder %v4118, 1
    %vm4257 = vcmp.eq.s32.totalorder %v4121, 1
    %vm4258 = vcmp.eq.s32.totalorder %v4124, 1
    %vm4259 = vcmp.eq.s32.totalorder %v4127, 1
    %vm4260 = vcmp.eq.s32.totalorder %v4130, 1
    %vm4261 = vcmp.eq.s32.totalorder %v4133, 1
    %vm4262 = vcmp.eq.s32.totalorder %v4136, 1
    %vm4263 = vcmp.eq.s32.totalorder %v4139, 1
    %vm4264 = vcmp.eq.s32.totalorder %v4142, 1
    %vm4265 = vcmp.eq.s32.totalorder %v4145, 1
    %vm4266 = vcmp.eq.s32.totalorder %v4148, 1
    %vm4267 = vcmp.eq.s32.totalorder %v4151, 1
    %vm4268 = vcmp.eq.s32.totalorder %v4154, 1
    %vm4269 = vcmp.eq.s32.totalorder %v4157, 1
    %vm4270 = vcmp.eq.s32.totalorder %v4160, 1
    %vm4271 = vcmp.eq.s32.totalorder %v4163, 1
    %vm4272 = vcmp.eq.s32.totalorder %v4166, 1
    %vm4273 = vcmp.eq.s32.totalorder %v4169, 1
    %vm4274 = vcmp.eq.s32.totalorder %v4172, 1
    %vm4275 = vcmp.eq.s32.totalorder %v4175, 1
    %vm4276 = vcmp.eq.s32.totalorder %v4178, 1
    %vm4277 = vcmp.eq.s32.totalorder %v4181, 1
    %vm4278 = vcmp.eq.s32.totalorder %v4184, 1
    %vm4279 = vcmp.eq.s32.totalorder %v4187, 1
    %vm4280 = vcmp.eq.s32.totalorder %v4190, 1
    %vm4281 = vcmp.eq.s32.totalorder %v4193, 1
    %vm4282 = vcmp.eq.s32.totalorder %v4196, 1
    %vm4283 = vcmp.eq.s32.totalorder %v4199, 1
    %vm4284 = vcmp.eq.s32.totalorder %v4202, 1
    %vm4285 = vcmp.eq.s32.totalorder %v4205, 1
    %vm4286 = vcmp.eq.s32.totalorder %v4208, 1
    %vm4287 = vcmp.eq.s32.totalorder %v4211, 1
    %vm4288 = vcmp.eq.s32.totalorder %v4214, 1
    %vm4289 = vcmp.eq.s32.totalorder %v4217, 1
    %vm4290 = vcmp.eq.s32.totalorder %v4220, 1
    %vm4291 = vcmp.eq.s32.totalorder %v4223, 1
    %vm4292 = vcmp.eq.s32.totalorder %v4226, 1
    %vm4293 = vcmp.eq.s32.totalorder %v4229, 1
    %v4294 = vsel %vm4230, %v3592, 0.0
    %v4295 = vsel %vm4231, %v3597, 0.0
    %v4296 = vsel %vm4232, %v3602, 0.0
    %v4297 = vsel %vm4233, %v3607, 0.0
    %v4298 = vsel %vm4234, %v3612, 0.0
    %v4299 = vsel %vm4235, %v3617, 0.0
    %v4300 = vsel %vm4236, %v3622, 0.0
    %v4301 = vsel %vm4237, %v3627, 0.0
    %v4302 = vsel %vm4238, %v3632, 0.0
    %v4303 = vsel %vm4239, %v3637, 0.0
    %v4304 = vsel %vm4240, %v3642, 0.0
    %v4305 = vsel %vm4241, %v3647, 0.0
    %v4306 = vsel %vm4242, %v3652, 0.0
    %v4307 = vsel %vm4243, %v3657, 0.0
    %v4308 = vsel %vm4244, %v3662, 0.0
    %v4309 = vsel %vm4245, %v3667, 0.0
    %v4310 = vsel %vm4246, %v3672, 0.0
    %v4311 = vsel %vm4247, %v3677, 0.0
    %v4312 = vsel %vm4248, %v3682, 0.0
    %v4313 = vsel %vm4249, %v3687, 0.0
    %v4314 = vsel %vm4250, %v3692, 0.0
    %v4315 = vsel %vm4251, %v3697, 0.0
    %v4316 = vsel %vm4252, %v3702, 0.0
    %v4317 = vsel %vm4253, %v3707, 0.0
    %v4318 = vsel %vm4254, %v3712, 0.0
    %v4319 = vsel %vm4255, %v3717, 0.0
    %v4320 = vsel %vm4256, %v3722, 0.0
    %v4321 = vsel %vm4257, %v3727, 0.0
    %v4322 = vsel %vm4258, %v3732, 0.0
    %v4323 = vsel %vm4259, %v3737, 0.0
    %v4324 = vsel %vm4260, %v3742, 0.0
    %v4325 = vsel %vm4261, %v3747, 0.0
    %v4326 = vsel %vm4262, %v3752, 0.0
    %v4327 = vsel %vm4263, %v3757, 0.0
    %v4328 = vsel %vm4264, %v3762, 0.0
    %v4329 = vsel %vm4265, %v3767, 0.0
    %v4330 = vsel %vm4266, %v3772, 0.0
    %v4331 = vsel %vm4267, %v3777, 0.0
    %v4332 = vsel %vm4268, %v3782, 0.0
    %v4333 = vsel %vm4269, %v3787, 0.0
    %v4334 = vsel %vm4270, %v3792, 0.0
    %v4335 = vsel %vm4271, %v3797, 0.0
    %v4336 = vsel %vm4272, %v3802, 0.0
    %v4337 = vsel %vm4273, %v3807, 0.0
    %v4338 = vsel %vm4274, %v3812, 0.0
    %v4339 = vsel %vm4275, %v3817, 0.0
    %v4340 = vsel %vm4276, %v3822, 0.0
    %v4341 = vsel %vm4277, %v3827, 0.0
    %v4342 = vsel %vm4278, %v3832, 0.0
    %v4343 = vsel %vm4279, %v3837, 0.0
    %v4344 = vsel %vm4280, %v3842, 0.0
    %v4345 = vsel %vm4281, %v3847, 0.0
    %v4346 = vsel %vm4282, %v3852, 0.0
    %v4347 = vsel %vm4283, %v3857, 0.0
    %v4348 = vsel %vm4284, %v3862, 0.0
    %v4349 = vsel %vm4285, %v3867, 0.0
    %v4350 = vsel %vm4286, %v3872, 0.0
    %v4351 = vsel %vm4287, %v3877, 0.0
    %v4352 = vsel %vm4288, %v3882, 0.0
    %v4353 = vsel %vm4289, %v3887, 0.0
    %v4354 = vsel %vm4290, %v3892, 0.0
    %v4355 = vsel %vm4291, %v3897, 0.0
    %v4356 = vsel %vm4292, %v3902, 0.0
    %v4357 = vsel %vm4293, %v3907, 0.0
    %v4358 = vadd.f32 %v2396, %v4294
    %v4359 = vadd.f32 %v2397, %v4295
    %v4360 = vadd.f32 %v2398, %v4296
    %v4361 = vadd.f32 %v2399, %v4297
    %v4362 = vadd.f32 %v2400, %v4298
    %v4363 = vadd.f32 %v2401, %v4299
    %v4364 = vadd.f32 %v2402, %v4300
    %v4365 = vadd.f32 %v2403, %v4301
    %v4366 = vadd.f32 %v2404, %v4302
    %v4367 = vadd.f32 %v2405, %v4303
    %v4368 = vadd.f32 %v2406, %v4304
    %v4369 = vadd.f32 %v2407, %v4305
    %v4370 = vadd.f32 %v2408, %v4306
    %v4371 = vadd.f32 %v2409, %v4307
    %v4372 = vadd.f32 %v2410, %v4308
    %v4373 = vadd.f32 %v2411, %v4309
    %v4374 = vadd.f32 %v2412, %v4310
    %v4375 = vadd.f32 %v2413, %v4311
    %v4376 = vadd.f32 %v2414, %v4312
    %v4377 = vadd.f32 %v2415, %v4313
    %v4378 = vadd.f32 %v2416, %v4314
    %v4379 = vadd.f32 %v2417, %v4315
    %v4380 = vadd.f32 %v2418, %v4316
    %v4381 = vadd.f32 %v2419, %v4317
    %v4382 = vadd.f32 %v2420, %v4318
    %v4383 = vadd.f32 %v2421, %v4319
    %v4384 = vadd.f32 %v2422, %v4320
    %v4385 = vadd.f32 %v2423, %v4321
    %v4386 = vadd.f32 %v2424, %v4322
    %v4387 = vadd.f32 %v2425, %v4323
    %v4388 = vadd.f32 %v2426, %v4324
    %v4389 = vadd.f32 %v2427, %v4325
    %v4390 = vadd.f32 %v2428, %v4326
    %v4391 = vadd.f32 %v2429, %v4327
    %v4392 = vadd.f32 %v2430, %v4328
    %v4393 = vadd.f32 %v2431, %v4329
    %v4394 = vadd.f32 %v2432, %v4330
    %v4395 = vadd.f32 %v2433, %v4331
    %v4396 = vadd.f32 %v2434, %v4332
    %v4397 = vadd.f32 %v2435, %v4333
    %v4398 = vadd.f32 %v2436, %v4334
    %v4399 = vadd.f32 %v2437, %v4335
    %v4400 = vadd.f32 %v2438, %v4336
    %v4401 = vadd.f32 %v2439, %v4337
    %v4402 = vadd.f32 %v2440, %v4338
    %v4403 = vadd.f32 %v2441, %v4339
    %v4404 = vadd.f32 %v2442, %v4340
    %v4405 = vadd.f32 %v2443, %v4341
    %v4406 = vadd.f32 %v2444, %v4342
    %v4407 = vadd.f32 %v2445, %v4343
    %v4408 = vadd.f32 %v2446, %v4344
    %v4409 = vadd.f32 %v2447, %v4345
    %v4410 = vadd.f32 %v2448, %v4346
    %v4411 = vadd.f32 %v2449, %v4347
    %v4412 = vadd.f32 %v2450, %v4348
    %v4413 = vadd.f32 %v2451, %v4349
    %v4414 = vadd.f32 %v2452, %v4350
    %v4415 = vadd.f32 %v2453, %v4351
    %v4416 = vadd.f32 %v2454, %v4352
    %v4417 = vadd.f32 %v2455, %v4353
    %v4418 = vadd.f32 %v2456, %v4354
    %v4419 = vadd.f32 %v2457, %v4355
    %v4420 = vadd.f32 %v2458, %v4356
    %v4421 = vadd.f32 %v2459, %v4357
    %4422 = vst [vmem:[#allocation2] sm:$0xff] %v4358
    %4423 = vst [vmem:[#allocation2 + $0x8] sm:$0xff] %v4359
    %4424 = vst [vmem:[#allocation2 + $0x10] sm:$0xff] %v4360
    %4425 = vst [vmem:[#allocation2 + $0x18] sm:$0xff] %v4361
    %4426 = vst [vmem:[#allocation2 + $0x20] sm:$0xff] %v4362
    %4427 = vst [vmem:[#allocation2 + $0x28] sm:$0xff] %v4363
    %4428 = vst [vmem:[#allocation2 + $0x30] sm:$0xff] %v4364
    %4429 = vst [vmem:[#allocation2 + $0x38] sm:$0xff] %v4365
    %4430 = vst [vmem:[#allocation2 + $0x40] sm:$0xff] %v4366
    %4431 = vst [vmem:[#allocation2 + $0x48] sm:$0xff] %v4367
    %4432 = vst [vmem:[#allocation2 + $0x50] sm:$0xff] %v4368
    %4433 = vst [vmem:[#allocation2 + $0x58] sm:$0xff] %v4369
    %4434 = vst [vmem:[#allocation2 + $0x60] sm:$0xff] %v4370
    %4435 = vst [vmem:[#allocation2 + $0x68] sm:$0xff] %v4371
    %4436 = vst [vmem:[#allocation2 + $0x70] sm:$0xff] %v4372
    %4437 = vst [vmem:[#allocation2 + $0x78] sm:$0xff] %v4373
    %4438 = vst [vmem:[#allocation2 + $0x80] sm:$0xff] %v4374
    %4439 = vst [vmem:[#allocation2 + $0x88] sm:$0xff] %v4375
    %4440 = vst [vmem:[#allocation2 + $0x90] sm:$0xff] %v4376
    %4441 = vst [vmem:[#allocation2 + $0x98] sm:$0xff] %v4377
    %4442 = vst [vmem:[#allocation2 + $0xa0] sm:$0xff] %v4378
    %4443 = vst [vmem:[#allocation2 + $0xa8] sm:$0xff] %v4379
    %4444 = vst [vmem:[#allocation2 + $0xb0] sm:$0xff] %v4380
    %4445 = vst [vmem:[#allocation2 + $0xb8] sm:$0xff] %v4381
    %4446 = vst [vmem:[#allocation2 + $0xc0] sm:$0xff] %v4382
    %4447 = vst [vmem:[#allocation2 + $0xc8] sm:$0xff] %v4383
    %4448 = vst [vmem:[#allocation2 + $0xd0] sm:$0xff] %v4384
    %4449 = vst [vmem:[#allocation2 + $0xd8] sm:$0xff] %v4385
    %4450 = vst [vmem:[#allocation2 + $0xe0] sm:$0xff] %v4386
    %4451 = vst [vmem:[#allocation2 + $0xe8] sm:$0xff] %v4387
    %4452 = vst [vmem:[#allocation2 + $0xf0] sm:$0xff] %v4388
    %4453 = vst [vmem:[#allocation2 + $0xf8] sm:$0xff] %v4389
    %4454 = vst [vmem:[#allocation2 + $0x100] sm:$0xff] %v4390
    %4455 = vst [vmem:[#allocation2 + $0x108] sm:$0xff] %v4391
    %4456 = vst [vmem:[#allocation2 + $0x110] sm:$0xff] %v4392
    %4457 = vst [vmem:[#allocation2 + $0x118] sm:$0xff] %v4393
    %4458 = vst [vmem:[#allocation2 + $0x120] sm:$0xff] %v4394
    %4459 = vst [vmem:[#allocation2 + $0x128] sm:$0xff] %v4395
    %4460 = vst [vmem:[#allocation2 + $0x130] sm:$0xff] %v4396
    %4461 = vst [vmem:[#allocation2 + $0x138] sm:$0xff] %v4397
    %4462 = vst [vmem:[#allocation2 + $0x140] sm:$0xff] %v4398
    %4463 = vst [vmem:[#allocation2 + $0x148] sm:$0xff] %v4399
    %4464 = vst [vmem:[#allocation2 + $0x150] sm:$0xff] %v4400
    %4465 = vst [vmem:[#allocation2 + $0x158] sm:$0xff] %v4401
    %4466 = vst [vmem:[#allocation2 + $0x160] sm:$0xff] %v4402
    %4467 = vst [vmem:[#allocation2 + $0x168] sm:$0xff] %v4403
    %4468 = vst [vmem:[#allocation2 + $0x170] sm:$0xff] %v4404
    %4469 = vst [vmem:[#allocation2 + $0x178] sm:$0xff] %v4405
    %4470 = vst [vmem:[#allocation2 + $0x180] sm:$0xff] %v4406
    %4471 = vst [vmem:[#allocation2 + $0x188] sm:$0xff] %v4407
    %4472 = vst [vmem:[#allocation2 + $0x190] sm:$0xff] %v4408
    %4473 = vst [vmem:[#allocation2 + $0x198] sm:$0xff] %v4409
    %4474 = vst [vmem:[#allocation2 + $0x1a0] sm:$0xff] %v4410
    %4475 = vst [vmem:[#allocation2 + $0x1a8] sm:$0xff] %v4411
    %4476 = vst [vmem:[#allocation2 + $0x1b0] sm:$0xff] %v4412
    %4477 = vst [vmem:[#allocation2 + $0x1b8] sm:$0xff] %v4413
    %4478 = vst [vmem:[#allocation2 + $0x1c0] sm:$0xff] %v4414
    %4479 = vst [vmem:[#allocation2 + $0x1c8] sm:$0xff] %v4415
    %4480 = vst [vmem:[#allocation2 + $0x1d0] sm:$0xff] %v4416
    %4481 = vst [vmem:[#allocation2 + $0x1d8] sm:$0xff] %v4417
    %4482 = vst [vmem:[#allocation2 + $0x1e0] sm:$0xff] %v4418
    %4483 = vst [vmem:[#allocation2 + $0x1e8] sm:$0xff] %v4419
    %4484 = vst [vmem:[#allocation2 + $0x1f0] sm:$0xff] %v4420
    %4485 = vst [vmem:[#allocation2 + $0x1f8] sm:$0xff] %v4421
    // Predicated region
    $region58: #{tpu_custom_call.1} parent=1 // pred_check
      _
    $region59: #{tpu_custom_call.1} parent=1 // pred_check_branch
      %4487 = sbr.rel (0) target = $region61
    $region60: #{tpu_custom_call.1} parent=1 // pred_region
      %s4489 = ssub.s32 8192, 8192
      %4490 = vsyncadd [#allocation3], %s4489
      %s4491 = sshll.u32 [#allocation2], 4
      %s4492 = int_to_ptr.vmem [resolvable:$true] %s4491
      %4497 = dma.vmem_to_hbm [thread:$0]  %s4492, 8192, %s14, [#allocation3], 128, 128, 8
    $region61: #{tpu_custom_call.1} parent=1 // pred_fallthru
      _
    // Predicated region
    $region62: #{tpu_custom_call.1} parent=1 // pred_check
      _
    $region63: #{tpu_custom_call.1} parent=1 // pred_check_branch
      %4499 = sbr.rel (0) target = $region65
    $region64: #{tpu_custom_call.1} parent=1 // pred_region
      %4500 = dma.done [#allocation3], 8192
    $region65: #{tpu_custom_call.1} parent=1 // pred_fallthru
      _
    %4501 = vsyncpa [#allocation3], 1

</llo_original>
